<compile_context>
chip_gen: v7x
topology: tpu7x:2x2x1
jax: 0.10.0
libtpu: 0.0.40
codegen_flags: <defaults>
</compile_context>

<pallas_src>
import math
from functools import partial

import jax
import jax.numpy as jnp
from jax.experimental import pallas as pl
from jax.experimental.pallas import tpu as pltpu


# ------------------------------ tiling helper ------------------------------

def _pick_tile_m(M):
    for t in (512, 256, 128, 64, 32, 16, 8):
        if M % t == 0:
            return t
    return M


# --------------------- fused LN + pos + projections kernel ------------------

def _proj_kernel(*refs, n_out, use_pos, apply_ln, eps):
    x_ref, pos_ref, g_ref, b_ref = refs[:4]
    w_refs = refs[4:4 + n_out]
    bias_refs = refs[4 + n_out:4 + 2 * n_out]
    out_refs = refs[4 + 2 * n_out:]

    x = x_ref[...].astype(jnp.float32)
    if apply_ln:
        mean = jnp.mean(x, axis=-1, keepdims=True)
        var = jnp.mean(jnp.square(x - mean), axis=-1, keepdims=True)  # biased (torch LN)
        x = (x - mean) * jax.lax.rsqrt(var + eps)
        x = x * g_ref[...] + b_ref[...]
    xp = x + pos_ref[...].astype(jnp.float32)

    x_bf = x.astype(jnp.bfloat16)
    xp_bf = xp.astype(jnp.bfloat16)
    for i in range(n_out):
        src = xp_bf if use_pos[i] else x_bf
        y = jnp.dot(src, w_refs[i][...], preferred_element_type=jnp.float32)
        y = y + bias_refs[i][...]
        out_refs[i][...] = y.astype(out_refs[i].dtype)


def fused_ln_pos_proj(x, pos, g, b, weights, biases, use_pos, apply_ln, eps=1e-5):
    """out_i = (optional LN(x)) (+ pos if use_pos[i]) @ W_i + b_i, one kernel."""
    M, D = x.shape
    n_out = len(weights)
    tm = _pick_tile_m(M)

    in_specs = [
        pl.BlockSpec((tm, D), lambda i: (i, 0)),
        pl.BlockSpec((tm, D), lambda i: (i, 0)),
        pl.BlockSpec((1, D), lambda i: (0, 0)),
        pl.BlockSpec((1, D), lambda i: (0, 0)),
    ]
    in_specs += [pl.BlockSpec(w.shape, lambda i: (0, 0)) for w in weights]
    in_specs += [pl.BlockSpec(bb.shape, lambda i: (0, 0)) for bb in biases]
    out_specs = [pl.BlockSpec((tm, w.shape[1]), lambda i: (i, 0)) for w in weights]
    out_shape = [jax.ShapeDtypeStruct((M, w.shape[1]), jnp.float32) for w in weights]

    outs = pl.pallas_call(
        partial(_proj_kernel, n_out=n_out, use_pos=tuple(use_pos),
                apply_ln=apply_ln, eps=eps),
        grid=(M // tm,),
        in_specs=in_specs,
        out_specs=out_specs,
        out_shape=out_shape,
        compiler_params=pltpu.CompilerParams(dimension_semantics=("parallel",)),
    )(x, pos, g, b, *weights, *biases)
    return outs if isinstance(outs, (list, tuple)) else (outs,)


# -------- fused RoPE + multi-head attention + out-proj + residual kernel -----

def _attention_kernel(q_ref, k_ref, v_ref, cq_ref, sq_ref, ck_ref, sk_ref,
                      wo_ref, bo_ref, res_ref, o_ref, *, n_heads, scale):
    q = q_ref[0].astype(jnp.float32)          # (Nq, D)  (split-half rotary layout)
    k = k_ref[0].astype(jnp.float32)          # (Nk, D)
    v = v_ref[0].astype(jnp.bfloat16)         # (Nk, D)  (original layout)
    cq, sq = cq_ref[...], sq_ref[...]         # (Nq, dh)
    ck, sk = ck_ref[...], sk_ref[...]         # (Nk, dh)

    D = q.shape[-1]
    dh = D // n_heads
    half = dh // 2

    def rope(xh, cos, sin):
        rot = jnp.concatenate([-xh[:, half:], xh[:, :half]], axis=-1)
        return xh * cos + rot * sin

    heads = []
    for h in range(n_heads):
        lo, hi = h * dh, (h + 1) * dh
        qh = (rope(q[:, lo:hi], cq, sq) * scale).astype(jnp.bfloat16)
        kh = rope(k[:, lo:hi], ck, sk).astype(jnp.bfloat16)
        s = jax.lax.dot_general(qh, kh, (((1,), (1,)), ((), ())),
                                preferred_element_type=jnp.float32)   # (Nq, Nk)
        m = jnp.max(s, axis=-1, keepdims=True)
        p = jnp.exp(s - m)
        p = p * pl.reciprocal(jnp.sum(p, axis=-1, keepdims=True), approx=True)
        heads.append(jnp.dot(p.astype(jnp.bfloat16), v[:, lo:hi],
                             preferred_element_type=jnp.float32))
    attn = jnp.concatenate(heads, axis=-1)                            # (Nq, D) lane-dense
    y = jnp.dot(attn.astype(jnp.bfloat16), wo_ref[...],
                preferred_element_type=jnp.float32)
    o_ref[0] = (y + bo_ref[...] + res_ref[0]).astype(o_ref.dtype)


def fused_rope_attention(q, k, v, cos_q, sin_q, cos_k, sin_k, wo, bo, residual, n_heads):
    B, Nq, D = q.shape
    Nk = k.shape[1]
    dh = D // n_heads
    scale = 1.0 / math.sqrt(dh)
    return pl.pallas_call(
        partial(_attention_kernel, n_heads=n_heads, scale=scale),
        grid=(B,),
        in_specs=[
            pl.BlockSpec((1, Nq, D), lambda b: (b, 0, 0)),
            pl.BlockSpec((1, Nk, D), lambda b: (b, 0, 0)),
            pl.BlockSpec((1, Nk, D), lambda b: (b, 0, 0)),
            pl.BlockSpec((Nq, dh), lambda b: (0, 0)),
            pl.BlockSpec((Nq, dh), lambda b: (0, 0)),
            pl.BlockSpec((Nk, dh), lambda b: (0, 0)),
            pl.BlockSpec((Nk, dh), lambda b: (0, 0)),
            pl.BlockSpec((D, D), lambda b: (0, 0)),
            pl.BlockSpec((1, D), lambda b: (0, 0)),
            pl.BlockSpec((1, Nq, D), lambda b: (b, 0, 0)),
        ],
        out_specs=pl.BlockSpec((1, Nq, D), lambda b: (b, 0, 0)),
        out_shape=jax.ShapeDtypeStruct((B, Nq, D), jnp.float32),
        compiler_params=pltpu.CompilerParams(dimension_semantics=("parallel",)),
    )(q, k, v, cos_q, sin_q, cos_k, sin_k, wo, bo, residual)


# ---------------- fused LN + FFN + residual + post-LN kernel -----------------

def _ffn_kernel(x_ref, g_ref, b_ref, w1_ref, b1_ref, w2_ref, b2_ref,
                pg_ref, pb_ref, o_ref, *, eps):
    x = x_ref[...].astype(jnp.float32)
    mean = jnp.mean(x, axis=-1, keepdims=True)
    var = jnp.mean(jnp.square(x - mean), axis=-1, keepdims=True)
    xn = (x - mean) * jax.lax.rsqrt(var + eps) * g_ref[...] + b_ref[...]
    h = jnp.dot(xn.astype(jnp.bfloat16), w1_ref[...], preferred_element_type=jnp.float32)
    h = jnp.maximum(h + b1_ref[...], 0.0)
    y = jnp.dot(h.astype(jnp.bfloat16), w2_ref[...], preferred_element_type=jnp.float32)
    y = x + y + b2_ref[...]                                    # residual
    # fused DecoderLayer-level LayerNorm that follows this MemoryAttentionLayer
    mean2 = jnp.mean(y, axis=-1, keepdims=True)
    var2 = jnp.mean(jnp.square(y - mean2), axis=-1, keepdims=True)
    y = (y - mean2) * jax.lax.rsqrt(var2 + eps) * pg_ref[...] + pb_ref[...]
    o_ref[...] = y.astype(o_ref.dtype)


def fused_ffn(x2d, g, b, w1, b1, w2, b2, post_g, post_b, eps=1e-5):
    M, D = x2d.shape
    F = w1.shape[1]
    tm = _pick_tile_m(M)
    return pl.pallas_call(
        partial(_ffn_kernel, eps=eps),
        grid=(M // tm,),
        in_specs=[pl.BlockSpec((tm, D), lambda i: (i, 0)),
                  pl.BlockSpec((1, D), lambda i: (0, 0)),
                  pl.BlockSpec((1, D), lambda i: (0, 0)),
                  pl.BlockSpec((D, F), lambda i: (0, 0)),
                  pl.BlockSpec((1, F), lambda i: (0, 0)),
                  pl.BlockSpec((F, D), lambda i: (0, 0)),
                  pl.BlockSpec((1, D), lambda i: (0, 0)),
                  pl.BlockSpec((1, D), lambda i: (0, 0)),
                  pl.BlockSpec((1, D), lambda i: (0, 0))],
        out_specs=pl.BlockSpec((tm, D), lambda i: (i, 0)),
        out_shape=jax.ShapeDtypeStruct((M, D), jnp.float32),
        compiler_params=pltpu.CompilerParams(dimension_semantics=("parallel",)),
    )(x2d, g, b, w1, b1, w2, b2, post_g, post_b)


# --------------------------- standalone LayerNorm ---------------------------

def _ln_kernel(x_ref, g_ref, b_ref, o_ref, *, eps):
    x = x_ref[...].astype(jnp.float32)
    mean = jnp.mean(x, axis=-1, keepdims=True)
    var = jnp.mean(jnp.square(x - mean), axis=-1, keepdims=True)
    o_ref[...] = ((x - mean) * jax.lax.rsqrt(var + eps) * g_ref[...]
                  + b_ref[...]).astype(o_ref.dtype)


def layernorm(x2d, g, b, eps=1e-5):
    M, D = x2d.shape
    tm = _pick_tile_m(M)
    return pl.pallas_call(
        partial(_ln_kernel, eps=eps),
        grid=(M // tm,),
        in_specs=[pl.BlockSpec((tm, D), lambda i: (i, 0)),
                  pl.BlockSpec((1, D), lambda i: (0, 0)),
                  pl.BlockSpec((1, D), lambda i: (0, 0))],
        out_specs=pl.BlockSpec((tm, D), lambda i: (i, 0)),
        out_shape=jax.ShapeDtypeStruct((M, D), jnp.float32),
        compiler_params=pltpu.CompilerParams(dimension_semantics=("parallel",)),
    )(x2d, g, b)


# ----------------------------- RoPE tables ----------------------------------
# Split-half layout: table column j < dh/2 pairs with column dh/2 + j.
# Q/K projection weights are column-permuted (prepare_params) into this layout;
# dot products q.k are invariant to a shared per-head permutation, so scores match
# the interleaved-pair reference exactly.

def rope_tables(dh, end_x, end_y, theta=10000.0):
    freqs = 1.0 / (theta ** (jnp.arange(0, dh, 4)[: dh // 4].astype(jnp.float32) / dh))
    t = jnp.arange(end_x * end_y, dtype=jnp.float32)
    t_x = t % end_x
    t_y = jnp.floor(t / end_x)
    ang = jnp.concatenate([jnp.outer(t_x, freqs), jnp.outer(t_y, freqs)], axis=-1)  # (N, dh//2)
    cos = jnp.cos(ang)
    sin = jnp.sin(ang)
    return (jnp.concatenate([cos, cos], axis=-1),   # (N, dh)
            jnp.concatenate([sin, sin], axis=-1))


def _rope_perm(d_model, n_heads):
    dh = d_model // n_heads
    half = dh // 2
    idx = []
    for h in range(n_heads):
        base = h * dh
        idx += [base + 2 * j for j in range(half)]        # "real" components
        idx += [base + 2 * j + 1 for j in range(half)]    # "imag" components
    return jnp.array(idx, dtype=jnp.int32)


# -------------------------- model (forward pass) -----------------------------

def memory_attention_layer(mp, tgt, memory, pos, query_pos, n_heads,
                           post_g, post_b, rope_k_repeat):
    B, Nq, D = tgt.shape
    Nk = memory.shape[1]
    dh = D // n_heads

    side = int(round(math.sqrt(Nq)))
    assert side * side == Nq, "RoPEAttention requires a square query token grid"
    cos_q, sin_q = rope_tables(dh, side, side)
    if Nk == Nq:
        cos_k, sin_k = cos_q, sin_q
    else:
        assert rope_k_repeat and Nk % Nq == 0
        r = Nk // Nq
        cos_k, sin_k = jnp.tile(cos_q, (r, 1)), jnp.tile(sin_q, (r, 1))

    qpos2d = query_pos.reshape(B * Nq, D)
    ones_d = jnp.ones((1, D), jnp.float32)
    zeros_d = jnp.zeros((1, D), jnp.float32)

    # ---- self-attention block (pos_enc_at_attn=True) ----
    sa = mp["self_attn"]
    q, k, v = fused_ln_pos_proj(
        tgt.reshape(B * Nq, D), qpos2d, mp["norm1_g"], mp["norm1_b"],
        weights=(sa["wq"], sa["wk"], sa["wv"]),
        biases=(sa["bq"], sa["bk"], sa["bv"]),
        use_pos=(True, True, False), apply_ln=True)
    tgt = fused_rope_attention(
        q.reshape(B, Nq, D), k.reshape(B, Nq, D), v.reshape(B, Nq, D),
        cos_q, sin_q, cos_q, sin_q, sa["wo"], sa["bo"], tgt, n_heads)

    # ---- cross-attention block (pos enc on queries and keys) ----
    ca = mp["cross_attn"]
    (qc,) = fused_ln_pos_proj(
        tgt.reshape(B * Nq, D), qpos2d, mp["norm2_g"], mp["norm2_b"],
        weights=(ca["wq"],), biases=(ca["bq"],),
        use_pos=(True,), apply_ln=True)
    kc, vc = fused_ln_pos_proj(
        memory.reshape(B * Nk, D), pos.reshape(B * Nk, D), ones_d, zeros_d,
        weights=(ca["wk"], ca["wv"]), biases=(ca["bk"], ca["bv"]),
        use_pos=(True, False), apply_ln=False)
    tgt = fused_rope_attention(
        qc.reshape(B, Nq, D), kc.reshape(B, Nk, D), vc.reshape(B, Nk, D),
        cos_q, sin_q, cos_k, sin_k, ca["wo"], ca["bo"], tgt, n_heads)

    # ---- FFN block (relu) + residual + fused DecoderLayer post-norm ----
    out2d = fused_ffn(tgt.reshape(B * Nq, D), mp["norm3_g"], mp["norm3_b"],
                      mp["w1"], mp["b1"], mp["w2"], mp["b2"], post_g, post_b)
    return out2d.reshape(B, Nq, D)


def decoder_layer(lp, x, memory, src_pos, tgt_pos, n_heads):
    x = memory_attention_layer(lp["self_mal"], x, x, tgt_pos, tgt_pos, n_heads,
                               lp["norm1_g"], lp["norm1_b"], rope_k_repeat=False)
    x = memory_attention_layer(lp["cross_mal"], x, memory, src_pos, tgt_pos, n_heads,
                               lp["norm2_g"], lp["norm2_b"], rope_k_repeat=True)
    return x


def decoder_forward(params, x, memory, src_pos, tgt_pos, n_heads):
    for lp in params["layers"]:
        x = decoder_layer(lp, x, memory, src_pos, tgt_pos, n_heads)
    B, N, D = x.shape
    out = layernorm(x.reshape(B * N, D), params["norm_g"], params["norm_b"])
    return out.reshape(B, N, D)


# -------------------- parameter init (reference layout) ----------------------

def _init_linear(key, d_in, d_out):
    k1, k2 = jax.random.split(key)
    w = jax.random.normal(k1, (d_in, d_out), jnp.float32) * 0.02
    b = jax.random.normal(k2, (d_out,), jnp.float32) * 0.02
    return w, b


def _init_attn(key, d_model):
    ks = jax.random.split(key, 4)
    p = {}
    for name, k in zip("qkvo", ks):
        w, b = _init_linear(k, d_model, d_model)
        p["w" + name], p["b" + name] = w, b
    return p


def _init_mal(key, d_model, d_ff):
    ks = jax.random.split(key, 4)
    p = {"self_attn": _init_attn(ks[0], d_model),
         "cross_attn": _init_attn(ks[1], d_model)}
    p["w1"], p["b1"] = _init_linear(ks[2], d_model, d_ff)
    p["w2"], p["b2"] = _init_linear(ks[3], d_ff, d_model)
    for n in ("norm1", "norm2", "norm3"):
        p[n + "_g"] = jnp.ones((d_model,), jnp.float32)
        p[n + "_b"] = jnp.zeros((d_model,), jnp.float32)
    return p


def init_decoder(key, d_model, d_ff, n_layers):
    params = {"layers": []}
    for lk in jax.random.split(key, n_layers):
        k1, k2 = jax.random.split(lk)
        params["layers"].append({
            "self_mal": _init_mal(k1, d_model, d_ff),
            "cross_mal": _init_mal(k2, d_model, d_ff),
            "norm1_g": jnp.ones((d_model,), jnp.float32),
            "norm1_b": jnp.zeros((d_model,), jnp.float32),
            "norm2_g": jnp.ones((d_model,), jnp.float32),
            "norm2_b": jnp.zeros((d_model,), jnp.float32),
        })
    params["norm_g"] = jnp.ones((d_model,), jnp.float32)
    params["norm_b"] = jnp.zeros((d_model,), jnp.float32)
    return params


# -------- convert reference-layout params to kernel layout (one-time) --------
#   * Q/K weight/bias columns permuted into split-half rotary layout.
#   * Weight matrices cast to bf16 (f32 accumulation in-kernel); biases/LN stay f32.

def prepare_params(params, d_model, n_heads):
    perm = _rope_perm(d_model, n_heads)

    def prep_attn(a):
        return {"wq": a["wq"][:, perm].astype(jnp.bfloat16),
                "bq": a["bq"][perm].reshape(1, -1),
                "wk": a["wk"][:, perm].astype(jnp.bfloat16),
                "bk": a["bk"][perm].reshape(1, -1),
                "wv": a["wv"].astype(jnp.bfloat16),
                "bv": a["bv"].reshape(1, -1),
                "wo": a["wo"].astype(jnp.bfloat16),
                "bo": a["bo"].reshape(1, -1)}

    def prep_mal(m):
        q = {"self_attn": prep_attn(m["self_attn"]),
             "cross_attn": prep_attn(m["cross_attn"]),
             "w1": m["w1"].astype(jnp.bfloat16), "b1": m["b1"].reshape(1, -1),
             "w2": m["w2"].astype(jnp.bfloat16), "b2": m["b2"].reshape(1, -1)}
        for n in ("norm1", "norm2", "norm3"):
            q[n + "_g"] = m[n + "_g"].reshape(1, -1)
            q[n + "_b"] = m[n + "_b"].reshape(1, -1)
        return q

    out = {"layers": []}
    for layer in params["layers"]:
        out["layers"].append({
            "self_mal": prep_mal(layer["self_mal"]),
            "cross_mal": prep_mal(layer["cross_mal"]),
            "norm1_g": layer["norm1_g"].reshape(1, -1),
            "norm1_b": layer["norm1_b"].reshape(1, -1),
            "norm2_g": layer["norm2_g"].reshape(1, -1),
            "norm2_b": layer["norm2_b"].reshape(1, -1),
        })
    out["norm_g"] = params["norm_g"].reshape(1, -1)
    out["norm_b"] = params["norm_b"].reshape(1, -1)
    return out


# ----------------------------------- main ------------------------------------

if __name__ == "__main__":
    d_model, d_ff, n_heads, n_layers = 64, 128, 4, 2
    B, Nq, Nk = 2, 16, 32   # Nq must be a square (4x4 RoPE grid); Nk a multiple of Nq

    root = jax.random.PRNGKey(0)
    k_param, kx, km, ksp, ktp = jax.random.split(root, 5)

    raw_params = init_decoder(k_param, d_model, d_ff, n_layers)
    params = prepare_params(raw_params, d_model, n_heads)

    x = jax.random.normal(kx, (B, Nq, d_model), jnp.float32)
    memory = jax.random.normal(km, (B, Nk, d_model), jnp.float32)
    src_pos = jax.random.normal(ksp, (B, Nk, d_model), jnp.float32)
    tgt_pos = jax.random.normal(ktp, (B, Nq, d_model), jnp.float32)

    fwd = jax.jit(partial(decoder_forward, n_heads=n_heads))
    out = jax.block_until_ready(fwd(params, x, memory, src_pos, tgt_pos))

    assert out.shape == (B, Nq, d_model)
    assert bool(jnp.all(jnp.isfinite(out)))
    print("KERNEL_OK")
</pallas_src>

<mosaic_0001>
module attributes {stable_mosaic.version = 11 : i64} {
  func.func @_attention_kernel(%arg0: i32, %arg1: memref<1x16x64xf32, #tpu.memory_space<vmem>>, %arg2: memref<1x16x64xf32, #tpu.memory_space<vmem>>, %arg3: memref<1x16x64xf32, #tpu.memory_space<vmem>>, %arg4: memref<16x16xf32, #tpu.memory_space<vmem>>, %arg5: memref<16x16xf32, #tpu.memory_space<vmem>>, %arg6: memref<16x16xf32, #tpu.memory_space<vmem>>, %arg7: memref<16x16xf32, #tpu.memory_space<vmem>>, %arg8: memref<64x64xbf16, #tpu.memory_space<vmem>>, %arg9: memref<1x64xf32, #tpu.memory_space<vmem>>, %arg10: memref<1x16x64xf32, #tpu.memory_space<vmem>>, %arg11: memref<1x16x64xf32, #tpu.memory_space<vmem>>) attributes {dimension_semantics = [#tpu.dimension_semantics<parallel>], iteration_bounds = array<i64: 2>, scalar_prefetch = 0 : i64, scratch_operands = 0 : i64, tpu.core_type = #tpu.core_type<tc>, window_params = [{transform_indices = @transform_0, window_bounds = array<i64: 1, 16, 64>}, {transform_indices = @transform_1, window_bounds = array<i64: 1, 16, 64>}, {transform_indices = @transform_2, window_bounds = array<i64: 1, 16, 64>}, {pipeline_mode = #tpu.pipeline_mode<synchronous>, transform_indices = @transform_3, window_bounds = array<i64: 16, 16>}, {pipeline_mode = #tpu.pipeline_mode<synchronous>, transform_indices = @transform_4, window_bounds = array<i64: 16, 16>}, {pipeline_mode = #tpu.pipeline_mode<synchronous>, transform_indices = @transform_5, window_bounds = array<i64: 16, 16>}, {pipeline_mode = #tpu.pipeline_mode<synchronous>, transform_indices = @transform_6, window_bounds = array<i64: 16, 16>}, {pipeline_mode = #tpu.pipeline_mode<synchronous>, transform_indices = @transform_7, window_bounds = array<i64: 64, 64>}, {pipeline_mode = #tpu.pipeline_mode<synchronous>, transform_indices = @transform_8, window_bounds = array<i64: 1, 64>}, {transform_indices = @transform_9, window_bounds = array<i64: 1, 16, 64>}, {transform_indices = @transform_10, window_bounds = array<i64: 1, 16, 64>}]} {
    %c0 = arith.constant 0 : index
    %c0_0 = arith.constant 0 : index
    %c0_1 = arith.constant 0 : index
    %0 = vector.load %arg1[%c0, %c0_0, %c0_1] : memref<1x16x64xf32, #tpu.memory_space<vmem>>, vector<1x16x64xf32>
    %1 = vector.shape_cast %0 : vector<1x16x64xf32> to vector<16x64xf32>
    %c0_2 = arith.constant 0 : index
    %c0_3 = arith.constant 0 : index
    %c0_4 = arith.constant 0 : index
    %2 = vector.load %arg2[%c0_2, %c0_3, %c0_4] : memref<1x16x64xf32, #tpu.memory_space<vmem>>, vector<1x16x64xf32>
    %3 = vector.shape_cast %2 : vector<1x16x64xf32> to vector<16x64xf32>
    %c0_5 = arith.constant 0 : index
    %c0_6 = arith.constant 0 : index
    %c0_7 = arith.constant 0 : index
    %4 = vector.load %arg3[%c0_5, %c0_6, %c0_7] : memref<1x16x64xf32, #tpu.memory_space<vmem>>, vector<1x16x64xf32>
    %5 = vector.shape_cast %4 : vector<1x16x64xf32> to vector<16x64xf32>
    %6 = arith.truncf %5 : vector<16x64xf32> to vector<16x64xbf16>
    %c0_8 = arith.constant 0 : index
    %c0_9 = arith.constant 0 : index
    %7 = vector.load %arg4[%c0_8, %c0_9] : memref<16x16xf32, #tpu.memory_space<vmem>>, vector<16x16xf32>
    %c0_10 = arith.constant 0 : index
    %c0_11 = arith.constant 0 : index
    %8 = vector.load %arg5[%c0_10, %c0_11] : memref<16x16xf32, #tpu.memory_space<vmem>>, vector<16x16xf32>
    %c0_12 = arith.constant 0 : index
    %c0_13 = arith.constant 0 : index
    %9 = vector.load %arg6[%c0_12, %c0_13] : memref<16x16xf32, #tpu.memory_space<vmem>>, vector<16x16xf32>
    %c0_14 = arith.constant 0 : index
    %c0_15 = arith.constant 0 : index
    %10 = vector.load %arg7[%c0_14, %c0_15] : memref<16x16xf32, #tpu.memory_space<vmem>>, vector<16x16xf32>
    %11 = vector.extract_strided_slice %1 {offsets = [0, 0], sizes = [16, 16], strides = [1, 1]} : vector<16x64xf32> to vector<16x16xf32>
    %12 = vector.extract_strided_slice %11 {offsets = [0, 8], sizes = [16, 8], strides = [1, 1]} : vector<16x16xf32> to vector<16x8xf32>
    %cst = arith.constant 0.000000e+00 : f32
    %13 = vector.broadcast %cst : f32 to vector<16x8xf32>
    %14 = arith.subf %13, %12 : vector<16x8xf32>
    %15 = vector.extract_strided_slice %11 {offsets = [0, 0], sizes = [16, 8], strides = [1, 1]} : vector<16x16xf32> to vector<16x8xf32>
    %16 = tpu.concatenate %14, %15 in 1 : vector<16x8xf32>, vector<16x8xf32> -> vector<16x16xf32>
    %17 = arith.mulf %11, %7 : vector<16x16xf32>
    %18 = arith.mulf %16, %8 : vector<16x16xf32>
    %19 = arith.addf %17, %18 : vector<16x16xf32>
    %cst_16 = arith.constant 2.500000e-01 : f32
    %20 = vector.broadcast %cst_16 : f32 to vector<16x16xf32>
    %21 = arith.mulf %19, %20 : vector<16x16xf32>
    %22 = arith.truncf %21 : vector<16x16xf32> to vector<16x16xbf16>
    %23 = vector.extract_strided_slice %3 {offsets = [0, 0], sizes = [16, 16], strides = [1, 1]} : vector<16x64xf32> to vector<16x16xf32>
    %24 = vector.extract_strided_slice %23 {offsets = [0, 8], sizes = [16, 8], strides = [1, 1]} : vector<16x16xf32> to vector<16x8xf32>
    %cst_17 = arith.constant 0.000000e+00 : f32
    %25 = vector.broadcast %cst_17 : f32 to vector<16x8xf32>
    %26 = arith.subf %25, %24 : vector<16x8xf32>
    %27 = vector.extract_strided_slice %23 {offsets = [0, 0], sizes = [16, 8], strides = [1, 1]} : vector<16x16xf32> to vector<16x8xf32>
    %28 = tpu.concatenate %26, %27 in 1 : vector<16x8xf32>, vector<16x8xf32> -> vector<16x16xf32>
    %29 = arith.mulf %23, %9 : vector<16x16xf32>
    %30 = arith.mulf %28, %10 : vector<16x16xf32>
    %31 = arith.addf %29, %30 : vector<16x16xf32>
    %32 = arith.truncf %31 : vector<16x16xf32> to vector<16x16xbf16>
    %cst_18 = arith.constant dense<0.000000e+00> : vector<16x16xf32>
    %33 = tpu.matmul %22, %32, %cst_18 {dimension_numbers = #tpu.dot_dimension_numbers<[1], [1], [0], [0], [0, 0, 1, 0], [], []>} : vector<16x16xbf16>, vector<16x16xbf16>, vector<16x16xf32> -> vector<16x16xf32>
    %cst_19 = arith.constant dense<0xFF800000> : vector<16xf32>
    %34 = vector.multi_reduction <maximumf>, %33, %cst_19 [1] : vector<16x16xf32> to vector<16xf32>
    %35 = vector.shape_cast %34 : vector<16xf32> to vector<16x1xf32>
    %36 = vector.broadcast %35 : vector<16x1xf32> to vector<16x16xf32>
    %37 = arith.subf %33, %36 : vector<16x16xf32>
    %38 = math.exp %37 : vector<16x16xf32>
    %cst_20 = arith.constant dense<0.000000e+00> : vector<16xf32>
    %39 = vector.multi_reduction <add>, %38, %cst_20 [1] : vector<16x16xf32> to vector<16xf32>
    %40 = vector.shape_cast %39 : vector<16xf32> to vector<16x1xf32>
    %41 = tpu.reciprocal %40 {approx = true} : vector<16x1xf32> -> vector<16x1xf32>
    %42 = vector.broadcast %41 : vector<16x1xf32> to vector<16x16xf32>
    %43 = arith.mulf %38, %42 : vector<16x16xf32>
    %44 = arith.truncf %43 : vector<16x16xf32> to vector<16x16xbf16>
    %45 = vector.extract_strided_slice %6 {offsets = [0, 0], sizes = [16, 16], strides = [1, 1]} : vector<16x64xbf16> to vector<16x16xbf16>
    %cst_21 = arith.constant dense<0.000000e+00> : vector<16x16xf32>
    %46 = tpu.matmul %44, %45, %cst_21 {dimension_numbers = #tpu.dot_dimension_numbers<[1], [0], [0], [1], [0, 0, 1, 1], [], []>} : vector<16x16xbf16>, vector<16x16xbf16>, vector<16x16xf32> -> vector<16x16xf32>
    %47 = vector.extract_strided_slice %1 {offsets = [0, 16], sizes = [16, 16], strides = [1, 1]} : vector<16x64xf32> to vector<16x16xf32>
    %48 = vector.extract_strided_slice %47 {offsets = [0, 8], sizes = [16, 8], strides = [1, 1]} : vector<16x16xf32> to vector<16x8xf32>
    %cst_22 = arith.constant 0.000000e+00 : f32
    %49 = vector.broadcast %cst_22 : f32 to vector<16x8xf32>
    %50 = arith.subf %49, %48 : vector<16x8xf32>
    %51 = vector.extract_strided_slice %47 {offsets = [0, 0], sizes = [16, 8], strides = [1, 1]} : vector<16x16xf32> to vector<16x8xf32>
    %52 = tpu.concatenate %50, %51 in 1 : vector<16x8xf32>, vector<16x8xf32> -> vector<16x16xf32>
    %53 = arith.mulf %47, %7 : vector<16x16xf32>
    %54 = arith.mulf %52, %8 : vector<16x16xf32>
    %55 = arith.addf %53, %54 : vector<16x16xf32>
    %cst_23 = arith.constant 2.500000e-01 : f32
    %56 = vector.broadcast %cst_23 : f32 to vector<16x16xf32>
    %57 = arith.mulf %55, %56 : vector<16x16xf32>
    %58 = arith.truncf %57 : vector<16x16xf32> to vector<16x16xbf16>
    %59 = vector.extract_strided_slice %3 {offsets = [0, 16], sizes = [16, 16], strides = [1, 1]} : vector<16x64xf32> to vector<16x16xf32>
    %60 = vector.extract_strided_slice %59 {offsets = [0, 8], sizes = [16, 8], strides = [1, 1]} : vector<16x16xf32> to vector<16x8xf32>
    %cst_24 = arith.constant 0.000000e+00 : f32
    %61 = vector.broadcast %cst_24 : f32 to vector<16x8xf32>
    %62 = arith.subf %61, %60 : vector<16x8xf32>
    %63 = vector.extract_strided_slice %59 {offsets = [0, 0], sizes = [16, 8], strides = [1, 1]} : vector<16x16xf32> to vector<16x8xf32>
    %64 = tpu.concatenate %62, %63 in 1 : vector<16x8xf32>, vector<16x8xf32> -> vector<16x16xf32>
    %65 = arith.mulf %59, %9 : vector<16x16xf32>
    %66 = arith.mulf %64, %10 : vector<16x16xf32>
    %67 = arith.addf %65, %66 : vector<16x16xf32>
    %68 = arith.truncf %67 : vector<16x16xf32> to vector<16x16xbf16>
    %cst_25 = arith.constant dense<0.000000e+00> : vector<16x16xf32>
    %69 = tpu.matmul %58, %68, %cst_25 {dimension_numbers = #tpu.dot_dimension_numbers<[1], [1], [0], [0], [0, 0, 1, 0], [], []>} : vector<16x16xbf16>, vector<16x16xbf16>, vector<16x16xf32> -> vector<16x16xf32>
    %cst_26 = arith.constant dense<0xFF800000> : vector<16xf32>
    %70 = vector.multi_reduction <maximumf>, %69, %cst_26 [1] : vector<16x16xf32> to vector<16xf32>
    %71 = vector.shape_cast %70 : vector<16xf32> to vector<16x1xf32>
    %72 = vector.broadcast %71 : vector<16x1xf32> to vector<16x16xf32>
    %73 = arith.subf %69, %72 : vector<16x16xf32>
    %74 = math.exp %73 : vector<16x16xf32>
    %cst_27 = arith.constant dense<0.000000e+00> : vector<16xf32>
    %75 = vector.multi_reduction <add>, %74, %cst_27 [1] : vector<16x16xf32> to vector<16xf32>
    %76 = vector.shape_cast %75 : vector<16xf32> to vector<16x1xf32>
    %77 = tpu.reciprocal %76 {approx = true} : vector<16x1xf32> -> vector<16x1xf32>
    %78 = vector.broadcast %77 : vector<16x1xf32> to vector<16x16xf32>
    %79 = arith.mulf %74, %78 : vector<16x16xf32>
    %80 = arith.truncf %79 : vector<16x16xf32> to vector<16x16xbf16>
    %81 = vector.extract_strided_slice %6 {offsets = [0, 16], sizes = [16, 16], strides = [1, 1]} : vector<16x64xbf16> to vector<16x16xbf16>
    %cst_28 = arith.constant dense<0.000000e+00> : vector<16x16xf32>
    %82 = tpu.matmul %80, %81, %cst_28 {dimension_numbers = #tpu.dot_dimension_numbers<[1], [0], [0], [1], [0, 0, 1, 1], [], []>} : vector<16x16xbf16>, vector<16x16xbf16>, vector<16x16xf32> -> vector<16x16xf32>
    %83 = vector.extract_strided_slice %1 {offsets = [0, 32], sizes = [16, 16], strides = [1, 1]} : vector<16x64xf32> to vector<16x16xf32>
    %84 = vector.extract_strided_slice %83 {offsets = [0, 8], sizes = [16, 8], strides = [1, 1]} : vector<16x16xf32> to vector<16x8xf32>
    %cst_29 = arith.constant 0.000000e+00 : f32
    %85 = vector.broadcast %cst_29 : f32 to vector<16x8xf32>
    %86 = arith.subf %85, %84 : vector<16x8xf32>
    %87 = vector.extract_strided_slice %83 {offsets = [0, 0], sizes = [16, 8], strides = [1, 1]} : vector<16x16xf32> to vector<16x8xf32>
    %88 = tpu.concatenate %86, %87 in 1 : vector<16x8xf32>, vector<16x8xf32> -> vector<16x16xf32>
    %89 = arith.mulf %83, %7 : vector<16x16xf32>
    %90 = arith.mulf %88, %8 : vector<16x16xf32>
    %91 = arith.addf %89, %90 : vector<16x16xf32>
    %cst_30 = arith.constant 2.500000e-01 : f32
    %92 = vector.broadcast %cst_30 : f32 to vector<16x16xf32>
    %93 = arith.mulf %91, %92 : vector<16x16xf32>
    %94 = arith.truncf %93 : vector<16x16xf32> to vector<16x16xbf16>
    %95 = vector.extract_strided_slice %3 {offsets = [0, 32], sizes = [16, 16], strides = [1, 1]} : vector<16x64xf32> to vector<16x16xf32>
    %96 = vector.extract_strided_slice %95 {offsets = [0, 8], sizes = [16, 8], strides = [1, 1]} : vector<16x16xf32> to vector<16x8xf32>
    %cst_31 = arith.constant 0.000000e+00 : f32
    %97 = vector.broadcast %cst_31 : f32 to vector<16x8xf32>
    %98 = arith.subf %97, %96 : vector<16x8xf32>
    %99 = vector.extract_strided_slice %95 {offsets = [0, 0], sizes = [16, 8], strides = [1, 1]} : vector<16x16xf32> to vector<16x8xf32>
    %100 = tpu.concatenate %98, %99 in 1 : vector<16x8xf32>, vector<16x8xf32> -> vector<16x16xf32>
    %101 = arith.mulf %95, %9 : vector<16x16xf32>
    %102 = arith.mulf %100, %10 : vector<16x16xf32>
    %103 = arith.addf %101, %102 : vector<16x16xf32>
    %104 = arith.truncf %103 : vector<16x16xf32> to vector<16x16xbf16>
    %cst_32 = arith.constant dense<0.000000e+00> : vector<16x16xf32>
    %105 = tpu.matmul %94, %104, %cst_32 {dimension_numbers = #tpu.dot_dimension_numbers<[1], [1], [0], [0], [0, 0, 1, 0], [], []>} : vector<16x16xbf16>, vector<16x16xbf16>, vector<16x16xf32> -> vector<16x16xf32>
    %cst_33 = arith.constant dense<0xFF800000> : vector<16xf32>
    %106 = vector.multi_reduction <maximumf>, %105, %cst_33 [1] : vector<16x16xf32> to vector<16xf32>
    %107 = vector.shape_cast %106 : vector<16xf32> to vector<16x1xf32>
    %108 = vector.broadcast %107 : vector<16x1xf32> to vector<16x16xf32>
    %109 = arith.subf %105, %108 : vector<16x16xf32>
    %110 = math.exp %109 : vector<16x16xf32>
    %cst_34 = arith.constant dense<0.000000e+00> : vector<16xf32>
    %111 = vector.multi_reduction <add>, %110, %cst_34 [1] : vector<16x16xf32> to vector<16xf32>
    %112 = vector.shape_cast %111 : vector<16xf32> to vector<16x1xf32>
    %113 = tpu.reciprocal %112 {approx = true} : vector<16x1xf32> -> vector<16x1xf32>
    %114 = vector.broadcast %113 : vector<16x1xf32> to vector<16x16xf32>
    %115 = arith.mulf %110, %114 : vector<16x16xf32>
    %116 = arith.truncf %115 : vector<16x16xf32> to vector<16x16xbf16>
    %117 = vector.extract_strided_slice %6 {offsets = [0, 32], sizes = [16, 16], strides = [1, 1]} : vector<16x64xbf16> to vector<16x16xbf16>
    %cst_35 = arith.constant dense<0.000000e+00> : vector<16x16xf32>
    %118 = tpu.matmul %116, %117, %cst_35 {dimension_numbers = #tpu.dot_dimension_numbers<[1], [0], [0], [1], [0, 0, 1, 1], [], []>} : vector<16x16xbf16>, vector<16x16xbf16>, vector<16x16xf32> -> vector<16x16xf32>
    %119 = vector.extract_strided_slice %1 {offsets = [0, 48], sizes = [16, 16], strides = [1, 1]} : vector<16x64xf32> to vector<16x16xf32>
    %120 = vector.extract_strided_slice %119 {offsets = [0, 8], sizes = [16, 8], strides = [1, 1]} : vector<16x16xf32> to vector<16x8xf32>
    %cst_36 = arith.constant 0.000000e+00 : f32
    %121 = vector.broadcast %cst_36 : f32 to vector<16x8xf32>
    %122 = arith.subf %121, %120 : vector<16x8xf32>
    %123 = vector.extract_strided_slice %119 {offsets = [0, 0], sizes = [16, 8], strides = [1, 1]} : vector<16x16xf32> to vector<16x8xf32>
    %124 = tpu.concatenate %122, %123 in 1 : vector<16x8xf32>, vector<16x8xf32> -> vector<16x16xf32>
    %125 = arith.mulf %119, %7 : vector<16x16xf32>
    %126 = arith.mulf %124, %8 : vector<16x16xf32>
    %127 = arith.addf %125, %126 : vector<16x16xf32>
    %cst_37 = arith.constant 2.500000e-01 : f32
    %128 = vector.broadcast %cst_37 : f32 to vector<16x16xf32>
    %129 = arith.mulf %127, %128 : vector<16x16xf32>
    %130 = arith.truncf %129 : vector<16x16xf32> to vector<16x16xbf16>
    %131 = vector.extract_strided_slice %3 {offsets = [0, 48], sizes = [16, 16], strides = [1, 1]} : vector<16x64xf32> to vector<16x16xf32>
    %132 = vector.extract_strided_slice %131 {offsets = [0, 8], sizes = [16, 8], strides = [1, 1]} : vector<16x16xf32> to vector<16x8xf32>
    %cst_38 = arith.constant 0.000000e+00 : f32
    %133 = vector.broadcast %cst_38 : f32 to vector<16x8xf32>
    %134 = arith.subf %133, %132 : vector<16x8xf32>
    %135 = vector.extract_strided_slice %131 {offsets = [0, 0], sizes = [16, 8], strides = [1, 1]} : vector<16x16xf32> to vector<16x8xf32>
    %136 = tpu.concatenate %134, %135 in 1 : vector<16x8xf32>, vector<16x8xf32> -> vector<16x16xf32>
    %137 = arith.mulf %131, %9 : vector<16x16xf32>
    %138 = arith.mulf %136, %10 : vector<16x16xf32>
    %139 = arith.addf %137, %138 : vector<16x16xf32>
    %140 = arith.truncf %139 : vector<16x16xf32> to vector<16x16xbf16>
    %cst_39 = arith.constant dense<0.000000e+00> : vector<16x16xf32>
    %141 = tpu.matmul %130, %140, %cst_39 {dimension_numbers = #tpu.dot_dimension_numbers<[1], [1], [0], [0], [0, 0, 1, 0], [], []>} : vector<16x16xbf16>, vector<16x16xbf16>, vector<16x16xf32> -> vector<16x16xf32>
    %cst_40 = arith.constant dense<0xFF800000> : vector<16xf32>
    %142 = vector.multi_reduction <maximumf>, %141, %cst_40 [1] : vector<16x16xf32> to vector<16xf32>
    %143 = vector.shape_cast %142 : vector<16xf32> to vector<16x1xf32>
    %144 = vector.broadcast %143 : vector<16x1xf32> to vector<16x16xf32>
    %145 = arith.subf %141, %144 : vector<16x16xf32>
    %146 = math.exp %145 : vector<16x16xf32>
    %cst_41 = arith.constant dense<0.000000e+00> : vector<16xf32>
    %147 = vector.multi_reduction <add>, %146, %cst_41 [1] : vector<16x16xf32> to vector<16xf32>
    %148 = vector.shape_cast %147 : vector<16xf32> to vector<16x1xf32>
    %149 = tpu.reciprocal %148 {approx = true} : vector<16x1xf32> -> vector<16x1xf32>
    %150 = vector.broadcast %149 : vector<16x1xf32> to vector<16x16xf32>
    %151 = arith.mulf %146, %150 : vector<16x16xf32>
    %152 = arith.truncf %151 : vector<16x16xf32> to vector<16x16xbf16>
    %153 = vector.extract_strided_slice %6 {offsets = [0, 48], sizes = [16, 16], strides = [1, 1]} : vector<16x64xbf16> to vector<16x16xbf16>
    %cst_42 = arith.constant dense<0.000000e+00> : vector<16x16xf32>
    %154 = tpu.matmul %152, %153, %cst_42 {dimension_numbers = #tpu.dot_dimension_numbers<[1], [0], [0], [1], [0, 0, 1, 1], [], []>} : vector<16x16xbf16>, vector<16x16xbf16>, vector<16x16xf32> -> vector<16x16xf32>
    %155 = tpu.concatenate %46, %82, %118, %154 in 1 : vector<16x16xf32>, vector<16x16xf32>, vector<16x16xf32>, vector<16x16xf32> -> vector<16x64xf32>
    %156 = arith.truncf %155 : vector<16x64xf32> to vector<16x64xbf16>
    %c0_43 = arith.constant 0 : index
    %c0_44 = arith.constant 0 : index
    %157 = vector.load %arg8[%c0_43, %c0_44] : memref<64x64xbf16, #tpu.memory_space<vmem>>, vector<64x64xbf16>
    %cst_45 = arith.constant dense<0.000000e+00> : vector<16x64xf32>
    %158 = tpu.matmul %156, %157, %cst_45 {dimension_numbers = #tpu.dot_dimension_numbers<[1], [0], [0], [1], [0, 0, 1, 1], [], []>} : vector<16x64xbf16>, vector<64x64xbf16>, vector<16x64xf32> -> vector<16x64xf32>
    %c0_46 = arith.constant 0 : index
    %c0_47 = arith.constant 0 : index
    %159 = vector.load %arg9[%c0_46, %c0_47] : memref<1x64xf32, #tpu.memory_space<vmem>>, vector<1x64xf32>
    %160 = vector.broadcast %159 : vector<1x64xf32> to vector<16x64xf32>
    %161 = arith.addf %158, %160 : vector<16x64xf32>
    %c0_48 = arith.constant 0 : index
    %c0_49 = arith.constant 0 : index
    %c0_50 = arith.constant 0 : index
    %162 = vector.load %arg10[%c0_48, %c0_49, %c0_50] : memref<1x16x64xf32, #tpu.memory_space<vmem>>, vector<1x16x64xf32>
    %163 = vector.shape_cast %162 : vector<1x16x64xf32> to vector<16x64xf32>
    %164 = arith.addf %161, %163 : vector<16x64xf32>
    %c0_51 = arith.constant 0 : index
    %c0_52 = arith.constant 0 : index
    %c0_53 = arith.constant 0 : index
    %165 = vector.load %arg11[%c0_51, %c0_52, %c0_53] : memref<1x16x64xf32, #tpu.memory_space<vmem>>, vector<1x16x64xf32>
    %166 = vector.shape_cast %165 : vector<1x16x64xf32> to vector<16x64xf32>
    %167 = vector.shape_cast %164 : vector<16x64xf32> to vector<1x16x64xf32>
    tpu.vector_store %arg11[%c0_51, %c0_52, %c0_53], %167 {strides = array<i32>} : memref<1x16x64xf32, #tpu.memory_space<vmem>>, vector<1x16x64xf32>,
    return
  }
  func.func @transform_0(%arg0: i32) -> (i32, i32, i32) {
    %c0_i32 = arith.constant 0 : i32
    %c0_i32_0 = arith.constant 0 : i32
    %c0_i32_1 = arith.constant 0 : i32
    return %arg0, %c0_i32, %c0_i32_0 : i32, i32, i32
  }
  func.func @transform_1(%arg0: i32) -> (i32, i32, i32) {
    %c0_i32 = arith.constant 0 : i32
    %c0_i32_0 = arith.constant 0 : i32
    %c0_i32_1 = arith.constant 0 : i32
    return %arg0, %c0_i32, %c0_i32_0 : i32, i32, i32
  }
  func.func @transform_2(%arg0: i32) -> (i32, i32, i32) {
    %c0_i32 = arith.constant 0 : i32
    %c0_i32_0 = arith.constant 0 : i32
    %c0_i32_1 = arith.constant 0 : i32
    return %arg0, %c0_i32, %c0_i32_0 : i32, i32, i32
  }
  func.func @transform_3(%arg0: i32) -> (i32, i32) {
    %c0_i32 = arith.constant 0 : i32
    %c0_i32_0 = arith.constant 0 : i32
    %c0_i32_1 = arith.constant 0 : i32
    return %c0_i32, %c0_i32_0 : i32, i32
  }
  func.func @transform_4(%arg0: i32) -> (i32, i32) {
    %c0_i32 = arith.constant 0 : i32
    %c0_i32_0 = arith.constant 0 : i32
    %c0_i32_1 = arith.constant 0 : i32
    return %c0_i32, %c0_i32_0 : i32, i32
  }
  func.func @transform_5(%arg0: i32) -> (i32, i32) {
    %c0_i32 = arith.constant 0 : i32
    %c0_i32_0 = arith.constant 0 : i32
    %c0_i32_1 = arith.constant 0 : i32
    return %c0_i32, %c0_i32_0 : i32, i32
  }
  func.func @transform_6(%arg0: i32) -> (i32, i32) {
    %c0_i32 = arith.constant 0 : i32
    %c0_i32_0 = arith.constant 0 : i32
    %c0_i32_1 = arith.constant 0 : i32
    return %c0_i32, %c0_i32_0 : i32, i32
  }
  func.func @transform_7(%arg0: i32) -> (i32, i32) {
    %c0_i32 = arith.constant 0 : i32
    %c0_i32_0 = arith.constant 0 : i32
    %c0_i32_1 = arith.constant 0 : i32
    return %c0_i32, %c0_i32_0 : i32, i32
  }
  func.func @transform_8(%arg0: i32) -> (i32, i32) {
    %c0_i32 = arith.constant 0 : i32
    %c0_i32_0 = arith.constant 0 : i32
    %c0_i32_1 = arith.constant 0 : i32
    return %c0_i32, %c0_i32_0 : i32, i32
  }
  func.func @transform_9(%arg0: i32) -> (i32, i32, i32) {
    %c0_i32 = arith.constant 0 : i32
    %c0_i32_0 = arith.constant 0 : i32
    %c0_i32_1 = arith.constant 0 : i32
    return %arg0, %c0_i32, %c0_i32_0 : i32, i32, i32
  }
  func.func @transform_10(%arg0: i32) -> (i32, i32, i32) {
    %c0_i32 = arith.constant 0 : i32
    %c0_i32_0 = arith.constant 0 : i32
    %c0_i32_1 = arith.constant 0 : i32
    return %arg0, %c0_i32, %c0_i32_0 : i32, i32, i32
  }
}

module attributes {stable_mosaic.version = 11 : i64} {
  func.func @_proj_kernel(%arg0: i32, %arg1: memref<32x64xf32, #tpu.memory_space<vmem>>, %arg2: memref<32x64xf32, #tpu.memory_space<vmem>>, %arg3: memref<1x64xf32, #tpu.memory_space<vmem>>, %arg4: memref<1x64xf32, #tpu.memory_space<vmem>>, %arg5: memref<64x64xbf16, #tpu.memory_space<vmem>>, %arg6: memref<64x64xbf16, #tpu.memory_space<vmem>>, %arg7: memref<64x64xbf16, #tpu.memory_space<vmem>>, %arg8: memref<1x64xf32, #tpu.memory_space<vmem>>, %arg9: memref<1x64xf32, #tpu.memory_space<vmem>>, %arg10: memref<1x64xf32, #tpu.memory_space<vmem>>, %arg11: memref<32x64xf32, #tpu.memory_space<vmem>>, %arg12: memref<32x64xf32, #tpu.memory_space<vmem>>, %arg13: memref<32x64xf32, #tpu.memory_space<vmem>>) attributes {dimension_semantics = [#tpu.dimension_semantics<parallel>], iteration_bounds = array<i64: 1>, scalar_prefetch = 0 : i64, scratch_operands = 0 : i64, tpu.core_type = #tpu.core_type<tc>, window_params = [{transform_indices = @transform_0, window_bounds = array<i64: 32, 64>}, {transform_indices = @transform_1, window_bounds = array<i64: 32, 64>}, {pipeline_mode = #tpu.pipeline_mode<synchronous>, transform_indices = @transform_2, window_bounds = array<i64: 1, 64>}, {pipeline_mode = #tpu.pipeline_mode<synchronous>, transform_indices = @transform_3, window_bounds = array<i64: 1, 64>}, {pipeline_mode = #tpu.pipeline_mode<synchronous>, transform_indices = @transform_4, window_bounds = array<i64: 64, 64>}, {pipeline_mode = #tpu.pipeline_mode<synchronous>, transform_indices = @transform_5, window_bounds = array<i64: 64, 64>}, {pipeline_mode = #tpu.pipeline_mode<synchronous>, transform_indices = @transform_6, window_bounds = array<i64: 64, 64>}, {pipeline_mode = #tpu.pipeline_mode<synchronous>, transform_indices = @transform_7, window_bounds = array<i64: 1, 64>}, {pipeline_mode = #tpu.pipeline_mode<synchronous>, transform_indices = @transform_8, window_bounds = array<i64: 1, 64>}, {pipeline_mode = #tpu.pipeline_mode<synchronous>, transform_indices = @transform_9, window_bounds = array<i64: 1, 64>}, {transform_indices = @transform_10, window_bounds = array<i64: 32, 64>}, {transform_indices = @transform_11, window_bounds = array<i64: 32, 64>}, {transform_indices = @transform_12, window_bounds = array<i64: 32, 64>}]} {
    %c0 = arith.constant 0 : index
    %c0_0 = arith.constant 0 : index
    %0 = vector.load %arg1[%c0, %c0_0] : memref<32x64xf32, #tpu.memory_space<vmem>>, vector<32x64xf32>
    %cst = arith.constant dense<0.000000e+00> : vector<32xf32>
    %1 = vector.multi_reduction <add>, %0, %cst [1] : vector<32x64xf32> to vector<32xf32>
    %2 = vector.shape_cast %1 : vector<32xf32> to vector<32x1xf32>
    %cst_1 = arith.constant 6.400000e+01 : f32
    %3 = vector.broadcast %cst_1 : f32 to vector<32x1xf32>
    %4 = arith.divf %2, %3 : vector<32x1xf32>
    %5 = vector.broadcast %4 : vector<32x1xf32> to vector<32x64xf32>
    %6 = arith.subf %0, %5 : vector<32x64xf32>
    %7 = arith.mulf %6, %6 : vector<32x64xf32>
    %cst_2 = arith.constant dense<0.000000e+00> : vector<32xf32>
    %8 = vector.multi_reduction <add>, %7, %cst_2 [1] : vector<32x64xf32> to vector<32xf32>
    %9 = vector.shape_cast %8 : vector<32xf32> to vector<32x1xf32>
    %cst_3 = arith.constant 6.400000e+01 : f32
    %10 = vector.broadcast %cst_3 : f32 to vector<32x1xf32>
    %11 = arith.divf %9, %10 : vector<32x1xf32>
    %12 = vector.broadcast %4 : vector<32x1xf32> to vector<32x64xf32>
    %13 = arith.subf %0, %12 : vector<32x64xf32>
    %cst_4 = arith.constant 9.99999974E-6 : f32
    %14 = vector.broadcast %cst_4 : f32 to vector<32x1xf32>
    %15 = arith.addf %11, %14 : vector<32x1xf32>
    %16 = math.rsqrt %15 : vector<32x1xf32>
    %17 = vector.broadcast %16 : vector<32x1xf32> to vector<32x64xf32>
    %18 = arith.mulf %13, %17 : vector<32x64xf32>
    %c0_5 = arith.constant 0 : index
    %c0_6 = arith.constant 0 : index
    %19 = vector.load %arg3[%c0_5, %c0_6] : memref<1x64xf32, #tpu.memory_space<vmem>>, vector<1x64xf32>
    %20 = vector.broadcast %19 : vector<1x64xf32> to vector<32x64xf32>
    %21 = arith.mulf %18, %20 : vector<32x64xf32>
    %c0_7 = arith.constant 0 : index
    %c0_8 = arith.constant 0 : index
    %22 = vector.load %arg4[%c0_7, %c0_8] : memref<1x64xf32, #tpu.memory_space<vmem>>, vector<1x64xf32>
    %23 = vector.broadcast %22 : vector<1x64xf32> to vector<32x64xf32>
    %24 = arith.addf %21, %23 : vector<32x64xf32>
    %c0_9 = arith.constant 0 : index
    %c0_10 = arith.constant 0 : index
    %25 = vector.load %arg2[%c0_9, %c0_10] : memref<32x64xf32, #tpu.memory_space<vmem>>, vector<32x64xf32>
    %26 = arith.addf %24, %25 : vector<32x64xf32>
    %27 = arith.truncf %24 : vector<32x64xf32> to vector<32x64xbf16>
    %28 = arith.truncf %26 : vector<32x64xf32> to vector<32x64xbf16>
    %c0_11 = arith.constant 0 : index
    %c0_12 = arith.constant 0 : index
    %29 = vector.load %arg5[%c0_11, %c0_12] : memref<64x64xbf16, #tpu.memory_space<vmem>>, vector<64x64xbf16>
    %cst_13 = arith.constant dense<0.000000e+00> : vector<32x64xf32>
    %30 = tpu.matmul %28, %29, %cst_13 {dimension_numbers = #tpu.dot_dimension_numbers<[1], [0], [0], [1], [0, 0, 1, 1], [], []>} : vector<32x64xbf16>, vector<64x64xbf16>, vector<32x64xf32> -> vector<32x64xf32>
    %c0_14 = arith.constant 0 : index
    %c0_15 = arith.constant 0 : index
    %31 = vector.load %arg8[%c0_14, %c0_15] : memref<1x64xf32, #tpu.memory_space<vmem>>, vector<1x64xf32>
    %32 = vector.broadcast %31 : vector<1x64xf32> to vector<32x64xf32>
    %33 = arith.addf %30, %32 : vector<32x64xf32>
    %c0_16 = arith.constant 0 : index
    %c0_17 = arith.constant 0 : index
    %34 = vector.load %arg11[%c0_16, %c0_17] : memref<32x64xf32, #tpu.memory_space<vmem>>, vector<32x64xf32>
    tpu.vector_store %arg11[%c0_16, %c0_17], %33 {strides = array<i32>} : memref<32x64xf32, #tpu.memory_space<vmem>>, vector<32x64xf32>,
    %c0_18 = arith.constant 0 : index
    %c0_19 = arith.constant 0 : index
    %35 = vector.load %arg6[%c0_18, %c0_19] : memref<64x64xbf16, #tpu.memory_space<vmem>>, vector<64x64xbf16>
    %cst_20 = arith.constant dense<0.000000e+00> : vector<32x64xf32>
    %36 = tpu.matmul %28, %35, %cst_20 {dimension_numbers = #tpu.dot_dimension_numbers<[1], [0], [0], [1], [0, 0, 1, 1], [], []>} : vector<32x64xbf16>, vector<64x64xbf16>, vector<32x64xf32> -> vector<32x64xf32>
    %c0_21 = arith.constant 0 : index
    %c0_22 = arith.constant 0 : index
    %37 = vector.load %arg9[%c0_21, %c0_22] : memref<1x64xf32, #tpu.memory_space<vmem>>, vector<1x64xf32>
    %38 = vector.broadcast %37 : vector<1x64xf32> to vector<32x64xf32>
    %39 = arith.addf %36, %38 : vector<32x64xf32>
    %c0_23 = arith.constant 0 : index
    %c0_24 = arith.constant 0 : index
    %40 = vector.load %arg12[%c0_23, %c0_24] : memref<32x64xf32, #tpu.memory_space<vmem>>, vector<32x64xf32>
    tpu.vector_store %arg12[%c0_23, %c0_24], %39 {strides = array<i32>} : memref<32x64xf32, #tpu.memory_space<vmem>>, vector<32x64xf32>,
    %c0_25 = arith.constant 0 : index
    %c0_26 = arith.constant 0 : index
    %41 = vector.load %arg7[%c0_25, %c0_26] : memref<64x64xbf16, #tpu.memory_space<vmem>>, vector<64x64xbf16>
    %cst_27 = arith.constant dense<0.000000e+00> : vector<32x64xf32>
    %42 = tpu.matmul %27, %41, %cst_27 {dimension_numbers = #tpu.dot_dimension_numbers<[1], [0], [0], [1], [0, 0, 1, 1], [], []>} : vector<32x64xbf16>, vector<64x64xbf16>, vector<32x64xf32> -> vector<32x64xf32>
    %c0_28 = arith.constant 0 : index
    %c0_29 = arith.constant 0 : index
    %43 = vector.load %arg10[%c0_28, %c0_29] : memref<1x64xf32, #tpu.memory_space<vmem>>, vector<1x64xf32>
    %44 = vector.broadcast %43 : vector<1x64xf32> to vector<32x64xf32>
    %45 = arith.addf %42, %44 : vector<32x64xf32>
    %c0_30 = arith.constant 0 : index
    %c0_31 = arith.constant 0 : index
    %46 = vector.load %arg13[%c0_30, %c0_31] : memref<32x64xf32, #tpu.memory_space<vmem>>, vector<32x64xf32>
    tpu.vector_store %arg13[%c0_30, %c0_31], %45 {strides = array<i32>} : memref<32x64xf32, #tpu.memory_space<vmem>>, vector<32x64xf32>,
    return
  }
  func.func @transform_0(%arg0: i32) -> (i32, i32) {
    %c0_i32 = arith.constant 0 : i32
    %c0_i32_0 = arith.constant 0 : i32
    return %arg0, %c0_i32 : i32, i32
  }
  func.func @transform_1(%arg0: i32) -> (i32, i32) {
    %c0_i32 = arith.constant 0 : i32
    %c0_i32_0 = arith.constant 0 : i32
    return %arg0, %c0_i32 : i32, i32
  }
  func.func @transform_2(%arg0: i32) -> (i32, i32) {
    %c0_i32 = arith.constant 0 : i32
    %c0_i32_0 = arith.constant 0 : i32
    %c0_i32_1 = arith.constant 0 : i32
    return %c0_i32, %c0_i32_0 : i32, i32
  }
  func.func @transform_3(%arg0: i32) -> (i32, i32) {
    %c0_i32 = arith.constant 0 : i32
    %c0_i32_0 = arith.constant 0 : i32
    %c0_i32_1 = arith.constant 0 : i32
    return %c0_i32, %c0_i32_0 : i32, i32
  }
  func.func @transform_4(%arg0: i32) -> (i32, i32) {
    %c0_i32 = arith.constant 0 : i32
    %c0_i32_0 = arith.constant 0 : i32
    %c0_i32_1 = arith.constant 0 : i32
    return %c0_i32, %c0_i32_0 : i32, i32
  }
  func.func @transform_5(%arg0: i32) -> (i32, i32) {
    %c0_i32 = arith.constant 0 : i32
    %c0_i32_0 = arith.constant 0 : i32
    %c0_i32_1 = arith.constant 0 : i32
    return %c0_i32, %c0_i32_0 : i32, i32
  }
  func.func @transform_6(%arg0: i32) -> (i32, i32) {
    %c0_i32 = arith.constant 0 : i32
    %c0_i32_0 = arith.constant 0 : i32
    %c0_i32_1 = arith.constant 0 : i32
    return %c0_i32, %c0_i32_0 : i32, i32
  }
  func.func @transform_7(%arg0: i32) -> (i32, i32) {
    %c0_i32 = arith.constant 0 : i32
    %c0_i32_0 = arith.constant 0 : i32
    %c0_i32_1 = arith.constant 0 : i32
    return %c0_i32, %c0_i32_0 : i32, i32
  }
  func.func @transform_8(%arg0: i32) -> (i32, i32) {
    %c0_i32 = arith.constant 0 : i32
    %c0_i32_0 = arith.constant 0 : i32
    %c0_i32_1 = arith.constant 0 : i32
    return %c0_i32, %c0_i32_0 : i32, i32
  }
  func.func @transform_9(%arg0: i32) -> (i32, i32) {
    %c0_i32 = arith.constant 0 : i32
    %c0_i32_0 = arith.constant 0 : i32
    %c0_i32_1 = arith.constant 0 : i32
    return %c0_i32, %c0_i32_0 : i32, i32
  }
  func.func @transform_10(%arg0: i32) -> (i32, i32) {
    %c0_i32 = arith.constant 0 : i32
    %c0_i32_0 = arith.constant 0 : i32
    return %arg0, %c0_i32 : i32, i32
  }
  func.func @transform_11(%arg0: i32) -> (i32, i32) {
    %c0_i32 = arith.constant 0 : i32
    %c0_i32_0 = arith.constant 0 : i32
    return %arg0, %c0_i32 : i32, i32
  }
  func.func @transform_12(%arg0: i32) -> (i32, i32) {
    %c0_i32 = arith.constant 0 : i32
    %c0_i32_0 = arith.constant 0 : i32
    return %arg0, %c0_i32 : i32, i32
  }
}

module attributes {stable_mosaic.version = 11 : i64} {
  func.func @_proj_kernel(%arg0: i32, %arg1: memref<32x64xf32, #tpu.memory_space<vmem>>, %arg2: memref<32x64xf32, #tpu.memory_space<vmem>>, %arg3: memref<1x64xf32, #tpu.memory_space<vmem>>, %arg4: memref<1x64xf32, #tpu.memory_space<vmem>>, %arg5: memref<64x64xbf16, #tpu.memory_space<vmem>>, %arg6: memref<1x64xf32, #tpu.memory_space<vmem>>, %arg7: memref<32x64xf32, #tpu.memory_space<vmem>>) attributes {dimension_semantics = [#tpu.dimension_semantics<parallel>], iteration_bounds = array<i64: 1>, scalar_prefetch = 0 : i64, scratch_operands = 0 : i64, tpu.core_type = #tpu.core_type<tc>, window_params = [{transform_indices = @transform_0, window_bounds = array<i64: 32, 64>}, {transform_indices = @transform_1, window_bounds = array<i64: 32, 64>}, {pipeline_mode = #tpu.pipeline_mode<synchronous>, transform_indices = @transform_2, window_bounds = array<i64: 1, 64>}, {pipeline_mode = #tpu.pipeline_mode<synchronous>, transform_indices = @transform_3, window_bounds = array<i64: 1, 64>}, {pipeline_mode = #tpu.pipeline_mode<synchronous>, transform_indices = @transform_4, window_bounds = array<i64: 64, 64>}, {pipeline_mode = #tpu.pipeline_mode<synchronous>, transform_indices = @transform_5, window_bounds = array<i64: 1, 64>}, {transform_indices = @transform_6, window_bounds = array<i64: 32, 64>}]} {
    %c0 = arith.constant 0 : index
    %c0_0 = arith.constant 0 : index
    %0 = vector.load %arg1[%c0, %c0_0] : memref<32x64xf32, #tpu.memory_space<vmem>>, vector<32x64xf32>
    %cst = arith.constant dense<0.000000e+00> : vector<32xf32>
    %1 = vector.multi_reduction <add>, %0, %cst [1] : vector<32x64xf32> to vector<32xf32>
    %2 = vector.shape_cast %1 : vector<32xf32> to vector<32x1xf32>
    %cst_1 = arith.constant 6.400000e+01 : f32
    %3 = vector.broadcast %cst_1 : f32 to vector<32x1xf32>
    %4 = arith.divf %2, %3 : vector<32x1xf32>
    %5 = vector.broadcast %4 : vector<32x1xf32> to vector<32x64xf32>
    %6 = arith.subf %0, %5 : vector<32x64xf32>
    %7 = arith.mulf %6, %6 : vector<32x64xf32>
    %cst_2 = arith.constant dense<0.000000e+00> : vector<32xf32>
    %8 = vector.multi_reduction <add>, %7, %cst_2 [1] : vector<32x64xf32> to vector<32xf32>
    %9 = vector.shape_cast %8 : vector<32xf32> to vector<32x1xf32>
    %cst_3 = arith.constant 6.400000e+01 : f32
    %10 = vector.broadcast %cst_3 : f32 to vector<32x1xf32>
    %11 = arith.divf %9, %10 : vector<32x1xf32>
    %12 = vector.broadcast %4 : vector<32x1xf32> to vector<32x64xf32>
    %13 = arith.subf %0, %12 : vector<32x64xf32>
    %cst_4 = arith.constant 9.99999974E-6 : f32
    %14 = vector.broadcast %cst_4 : f32 to vector<32x1xf32>
    %15 = arith.addf %11, %14 : vector<32x1xf32>
    %16 = math.rsqrt %15 : vector<32x1xf32>
    %17 = vector.broadcast %16 : vector<32x1xf32> to vector<32x64xf32>
    %18 = arith.mulf %13, %17 : vector<32x64xf32>
    %c0_5 = arith.constant 0 : index
    %c0_6 = arith.constant 0 : index
    %19 = vector.load %arg3[%c0_5, %c0_6] : memref<1x64xf32, #tpu.memory_space<vmem>>, vector<1x64xf32>
    %20 = vector.broadcast %19 : vector<1x64xf32> to vector<32x64xf32>
    %21 = arith.mulf %18, %20 : vector<32x64xf32>
    %c0_7 = arith.constant 0 : index
    %c0_8 = arith.constant 0 : index
    %22 = vector.load %arg4[%c0_7, %c0_8] : memref<1x64xf32, #tpu.memory_space<vmem>>, vector<1x64xf32>
    %23 = vector.broadcast %22 : vector<1x64xf32> to vector<32x64xf32>
    %24 = arith.addf %21, %23 : vector<32x64xf32>
    %c0_9 = arith.constant 0 : index
    %c0_10 = arith.constant 0 : index
    %25 = vector.load %arg2[%c0_9, %c0_10] : memref<32x64xf32, #tpu.memory_space<vmem>>, vector<32x64xf32>
    %26 = arith.addf %24, %25 : vector<32x64xf32>
    %27 = arith.truncf %26 : vector<32x64xf32> to vector<32x64xbf16>
    %c0_11 = arith.constant 0 : index
    %c0_12 = arith.constant 0 : index
    %28 = vector.load %arg5[%c0_11, %c0_12] : memref<64x64xbf16, #tpu.memory_space<vmem>>, vector<64x64xbf16>
    %cst_13 = arith.constant dense<0.000000e+00> : vector<32x64xf32>
    %29 = tpu.matmul %27, %28, %cst_13 {dimension_numbers = #tpu.dot_dimension_numbers<[1], [0], [0], [1], [0, 0, 1, 1], [], []>} : vector<32x64xbf16>, vector<64x64xbf16>, vector<32x64xf32> -> vector<32x64xf32>
    %c0_14 = arith.constant 0 : index
    %c0_15 = arith.constant 0 : index
    %30 = vector.load %arg6[%c0_14, %c0_15] : memref<1x64xf32, #tpu.memory_space<vmem>>, vector<1x64xf32>
    %31 = vector.broadcast %30 : vector<1x64xf32> to vector<32x64xf32>
    %32 = arith.addf %29, %31 : vector<32x64xf32>
    %c0_16 = arith.constant 0 : index
    %c0_17 = arith.constant 0 : index
    %33 = vector.load %arg7[%c0_16, %c0_17] : memref<32x64xf32, #tpu.memory_space<vmem>>, vector<32x64xf32>
    tpu.vector_store %arg7[%c0_16, %c0_17], %32 {strides = array<i32>} : memref<32x64xf32, #tpu.memory_space<vmem>>, vector<32x64xf32>,
    return
  }
  func.func @transform_0(%arg0: i32) -> (i32, i32) {
    %c0_i32 = arith.constant 0 : i32
    %c0_i32_0 = arith.constant 0 : i32
    return %arg0, %c0_i32 : i32, i32
  }
  func.func @transform_1(%arg0: i32) -> (i32, i32) {
    %c0_i32 = arith.constant 0 : i32
    %c0_i32_0 = arith.constant 0 : i32
    return %arg0, %c0_i32 : i32, i32
  }
  func.func @transform_2(%arg0: i32) -> (i32, i32) {
    %c0_i32 = arith.constant 0 : i32
    %c0_i32_0 = arith.constant 0 : i32
    %c0_i32_1 = arith.constant 0 : i32
    return %c0_i32, %c0_i32_0 : i32, i32
  }
  func.func @transform_3(%arg0: i32) -> (i32, i32) {
    %c0_i32 = arith.constant 0 : i32
    %c0_i32_0 = arith.constant 0 : i32
    %c0_i32_1 = arith.constant 0 : i32
    return %c0_i32, %c0_i32_0 : i32, i32
  }
  func.func @transform_4(%arg0: i32) -> (i32, i32) {
    %c0_i32 = arith.constant 0 : i32
    %c0_i32_0 = arith.constant 0 : i32
    %c0_i32_1 = arith.constant 0 : i32
    return %c0_i32, %c0_i32_0 : i32, i32
  }
  func.func @transform_5(%arg0: i32) -> (i32, i32) {
    %c0_i32 = arith.constant 0 : i32
    %c0_i32_0 = arith.constant 0 : i32
    %c0_i32_1 = arith.constant 0 : i32
    return %c0_i32, %c0_i32_0 : i32, i32
  }
  func.func @transform_6(%arg0: i32) -> (i32, i32) {
    %c0_i32 = arith.constant 0 : i32
    %c0_i32_0 = arith.constant 0 : i32
    return %arg0, %c0_i32 : i32, i32
  }
}

module attributes {stable_mosaic.version = 11 : i64} {
  func.func @_proj_kernel(%arg0: i32, %arg1: memref<32x64xf32, #tpu.memory_space<vmem>>, %arg2: memref<32x64xf32, #tpu.memory_space<vmem>>, %arg3: memref<1x64xf32, #tpu.memory_space<vmem>>, %arg4: memref<1x64xf32, #tpu.memory_space<vmem>>, %arg5: memref<64x64xbf16, #tpu.memory_space<vmem>>, %arg6: memref<64x64xbf16, #tpu.memory_space<vmem>>, %arg7: memref<1x64xf32, #tpu.memory_space<vmem>>, %arg8: memref<1x64xf32, #tpu.memory_space<vmem>>, %arg9: memref<32x64xf32, #tpu.memory_space<vmem>>, %arg10: memref<32x64xf32, #tpu.memory_space<vmem>>) attributes {dimension_semantics = [#tpu.dimension_semantics<parallel>], iteration_bounds = array<i64: 1>, scalar_prefetch = 0 : i64, scratch_operands = 0 : i64, tpu.core_type = #tpu.core_type<tc>, window_params = [{transform_indices = @transform_0, window_bounds = array<i64: 32, 64>}, {transform_indices = @transform_1, window_bounds = array<i64: 32, 64>}, {pipeline_mode = #tpu.pipeline_mode<synchronous>, transform_indices = @transform_2, window_bounds = array<i64: 1, 64>}, {pipeline_mode = #tpu.pipeline_mode<synchronous>, transform_indices = @transform_3, window_bounds = array<i64: 1, 64>}, {pipeline_mode = #tpu.pipeline_mode<synchronous>, transform_indices = @transform_4, window_bounds = array<i64: 64, 64>}, {pipeline_mode = #tpu.pipeline_mode<synchronous>, transform_indices = @transform_5, window_bounds = array<i64: 64, 64>}, {pipeline_mode = #tpu.pipeline_mode<synchronous>, transform_indices = @transform_6, window_bounds = array<i64: 1, 64>}, {pipeline_mode = #tpu.pipeline_mode<synchronous>, transform_indices = @transform_7, window_bounds = array<i64: 1, 64>}, {transform_indices = @transform_8, window_bounds = array<i64: 32, 64>}, {transform_indices = @transform_9, window_bounds = array<i64: 32, 64>}]} {
    %c0 = arith.constant 0 : index
    %c0_0 = arith.constant 0 : index
    %0 = vector.load %arg1[%c0, %c0_0] : memref<32x64xf32, #tpu.memory_space<vmem>>, vector<32x64xf32>
    %c0_1 = arith.constant 0 : index
    %c0_2 = arith.constant 0 : index
    %1 = vector.load %arg2[%c0_1, %c0_2] : memref<32x64xf32, #tpu.memory_space<vmem>>, vector<32x64xf32>
    %2 = arith.addf %0, %1 : vector<32x64xf32>
    %3 = arith.truncf %0 : vector<32x64xf32> to vector<32x64xbf16>
    %4 = arith.truncf %2 : vector<32x64xf32> to vector<32x64xbf16>
    %c0_3 = arith.constant 0 : index
    %c0_4 = arith.constant 0 : index
    %5 = vector.load %arg5[%c0_3, %c0_4] : memref<64x64xbf16, #tpu.memory_space<vmem>>, vector<64x64xbf16>
    %cst = arith.constant dense<0.000000e+00> : vector<32x64xf32>
    %6 = tpu.matmul %4, %5, %cst {dimension_numbers = #tpu.dot_dimension_numbers<[1], [0], [0], [1], [0, 0, 1, 1], [], []>} : vector<32x64xbf16>, vector<64x64xbf16>, vector<32x64xf32> -> vector<32x64xf32>
    %c0_5 = arith.constant 0 : index
    %c0_6 = arith.constant 0 : index
    %7 = vector.load %arg7[%c0_5, %c0_6] : memref<1x64xf32, #tpu.memory_space<vmem>>, vector<1x64xf32>
    %8 = vector.broadcast %7 : vector<1x64xf32> to vector<32x64xf32>
    %9 = arith.addf %6, %8 : vector<32x64xf32>
    %c0_7 = arith.constant 0 : index
    %c0_8 = arith.constant 0 : index
    %10 = vector.load %arg9[%c0_7, %c0_8] : memref<32x64xf32, #tpu.memory_space<vmem>>, vector<32x64xf32>
    tpu.vector_store %arg9[%c0_7, %c0_8], %9 {strides = array<i32>} : memref<32x64xf32, #tpu.memory_space<vmem>>, vector<32x64xf32>,
    %c0_9 = arith.constant 0 : index
    %c0_10 = arith.constant 0 : index
    %11 = vector.load %arg6[%c0_9, %c0_10] : memref<64x64xbf16, #tpu.memory_space<vmem>>, vector<64x64xbf16>
    %cst_11 = arith.constant dense<0.000000e+00> : vector<32x64xf32>
    %12 = tpu.matmul %3, %11, %cst_11 {dimension_numbers = #tpu.dot_dimension_numbers<[1], [0], [0], [1], [0, 0, 1, 1], [], []>} : vector<32x64xbf16>, vector<64x64xbf16>, vector<32x64xf32> -> vector<32x64xf32>
    %c0_12 = arith.constant 0 : index
    %c0_13 = arith.constant 0 : index
    %13 = vector.load %arg8[%c0_12, %c0_13] : memref<1x64xf32, #tpu.memory_space<vmem>>, vector<1x64xf32>
    %14 = vector.broadcast %13 : vector<1x64xf32> to vector<32x64xf32>
    %15 = arith.addf %12, %14 : vector<32x64xf32>
    %c0_14 = arith.constant 0 : index
    %c0_15 = arith.constant 0 : index
    %16 = vector.load %arg10[%c0_14, %c0_15] : memref<32x64xf32, #tpu.memory_space<vmem>>, vector<32x64xf32>
    tpu.vector_store %arg10[%c0_14, %c0_15], %15 {strides = array<i32>} : memref<32x64xf32, #tpu.memory_space<vmem>>, vector<32x64xf32>,
    return
  }
  func.func @transform_0(%arg0: i32) -> (i32, i32) {
    %c0_i32 = arith.constant 0 : i32
    %c0_i32_0 = arith.constant 0 : i32
    return %arg0, %c0_i32 : i32, i32
  }
  func.func @transform_1(%arg0: i32) -> (i32, i32) {
    %c0_i32 = arith.constant 0 : i32
    %c0_i32_0 = arith.constant 0 : i32
    return %arg0, %c0_i32 : i32, i32
  }
  func.func @transform_2(%arg0: i32) -> (i32, i32) {
    %c0_i32 = arith.constant 0 : i32
    %c0_i32_0 = arith.constant 0 : i32
    %c0_i32_1 = arith.constant 0 : i32
    return %c0_i32, %c0_i32_0 : i32, i32
  }
  func.func @transform_3(%arg0: i32) -> (i32, i32) {
    %c0_i32 = arith.constant 0 : i32
    %c0_i32_0 = arith.constant 0 : i32
    %c0_i32_1 = arith.constant 0 : i32
    return %c0_i32, %c0_i32_0 : i32, i32
  }
  func.func @transform_4(%arg0: i32) -> (i32, i32) {
    %c0_i32 = arith.constant 0 : i32
    %c0_i32_0 = arith.constant 0 : i32
    %c0_i32_1 = arith.constant 0 : i32
    return %c0_i32, %c0_i32_0 : i32, i32
  }
  func.func @transform_5(%arg0: i32) -> (i32, i32) {
    %c0_i32 = arith.constant 0 : i32
    %c0_i32_0 = arith.constant 0 : i32
    %c0_i32_1 = arith.constant 0 : i32
    return %c0_i32, %c0_i32_0 : i32, i32
  }
  func.func @transform_6(%arg0: i32) -> (i32, i32) {
    %c0_i32 = arith.constant 0 : i32
    %c0_i32_0 = arith.constant 0 : i32
    %c0_i32_1 = arith.constant 0 : i32
    return %c0_i32, %c0_i32_0 : i32, i32
  }
  func.func @transform_7(%arg0: i32) -> (i32, i32) {
    %c0_i32 = arith.constant 0 : i32
    %c0_i32_0 = arith.constant 0 : i32
    %c0_i32_1 = arith.constant 0 : i32
    return %c0_i32, %c0_i32_0 : i32, i32
  }
  func.func @transform_8(%arg0: i32) -> (i32, i32) {
    %c0_i32 = arith.constant 0 : i32
    %c0_i32_0 = arith.constant 0 : i32
    return %arg0, %c0_i32 : i32, i32
  }
  func.func @transform_9(%arg0: i32) -> (i32, i32) {
    %c0_i32 = arith.constant 0 : i32
    %c0_i32_0 = arith.constant 0 : i32
    return %arg0, %c0_i32 : i32, i32
  }
}

module attributes {stable_mosaic.version = 11 : i64} {
  func.func @_ffn_kernel(%arg0: i32, %arg1: memref<32x64xf32, #tpu.memory_space<vmem>>, %arg2: memref<1x64xf32, #tpu.memory_space<vmem>>, %arg3: memref<1x64xf32, #tpu.memory_space<vmem>>, %arg4: memref<64x128xbf16, #tpu.memory_space<vmem>>, %arg5: memref<1x128xf32, #tpu.memory_space<vmem>>, %arg6: memref<128x64xbf16, #tpu.memory_space<vmem>>, %arg7: memref<1x64xf32, #tpu.memory_space<vmem>>, %arg8: memref<1x64xf32, #tpu.memory_space<vmem>>, %arg9: memref<1x64xf32, #tpu.memory_space<vmem>>, %arg10: memref<32x64xf32, #tpu.memory_space<vmem>>) attributes {dimension_semantics = [#tpu.dimension_semantics<parallel>], iteration_bounds = array<i64: 1>, scalar_prefetch = 0 : i64, scratch_operands = 0 : i64, tpu.core_type = #tpu.core_type<tc>, window_params = [{transform_indices = @transform_0, window_bounds = array<i64: 32, 64>}, {pipeline_mode = #tpu.pipeline_mode<synchronous>, transform_indices = @transform_1, window_bounds = array<i64: 1, 64>}, {pipeline_mode = #tpu.pipeline_mode<synchronous>, transform_indices = @transform_2, window_bounds = array<i64: 1, 64>}, {pipeline_mode = #tpu.pipeline_mode<synchronous>, transform_indices = @transform_3, window_bounds = array<i64: 64, 128>}, {pipeline_mode = #tpu.pipeline_mode<synchronous>, transform_indices = @transform_4, window_bounds = array<i64: 1, 128>}, {pipeline_mode = #tpu.pipeline_mode<synchronous>, transform_indices = @transform_5, window_bounds = array<i64: 128, 64>}, {pipeline_mode = #tpu.pipeline_mode<synchronous>, transform_indices = @transform_6, window_bounds = array<i64: 1, 64>}, {pipeline_mode = #tpu.pipeline_mode<synchronous>, transform_indices = @transform_7, window_bounds = array<i64: 1, 64>}, {pipeline_mode = #tpu.pipeline_mode<synchronous>, transform_indices = @transform_8, window_bounds = array<i64: 1, 64>}, {transform_indices = @transform_9, window_bounds = array<i64: 32, 64>}]} {
    %c0 = arith.constant 0 : index
    %c0_0 = arith.constant 0 : index
    %0 = vector.load %arg1[%c0, %c0_0] : memref<32x64xf32, #tpu.memory_space<vmem>>, vector<32x64xf32>
    %cst = arith.constant dense<0.000000e+00> : vector<32xf32>
    %1 = vector.multi_reduction <add>, %0, %cst [1] : vector<32x64xf32> to vector<32xf32>
    %2 = vector.shape_cast %1 : vector<32xf32> to vector<32x1xf32>
    %cst_1 = arith.constant 6.400000e+01 : f32
    %3 = vector.broadcast %cst_1 : f32 to vector<32x1xf32>
    %4 = arith.divf %2, %3 : vector<32x1xf32>
    %5 = vector.broadcast %4 : vector<32x1xf32> to vector<32x64xf32>
    %6 = arith.subf %0, %5 : vector<32x64xf32>
    %7 = arith.mulf %6, %6 : vector<32x64xf32>
    %cst_2 = arith.constant dense<0.000000e+00> : vector<32xf32>
    %8 = vector.multi_reduction <add>, %7, %cst_2 [1] : vector<32x64xf32> to vector<32xf32>
    %9 = vector.shape_cast %8 : vector<32xf32> to vector<32x1xf32>
    %cst_3 = arith.constant 6.400000e+01 : f32
    %10 = vector.broadcast %cst_3 : f32 to vector<32x1xf32>
    %11 = arith.divf %9, %10 : vector<32x1xf32>
    %12 = vector.broadcast %4 : vector<32x1xf32> to vector<32x64xf32>
    %13 = arith.subf %0, %12 : vector<32x64xf32>
    %cst_4 = arith.constant 9.99999974E-6 : f32
    %14 = vector.broadcast %cst_4 : f32 to vector<32x1xf32>
    %15 = arith.addf %11, %14 : vector<32x1xf32>
    %16 = math.rsqrt %15 : vector<32x1xf32>
    %17 = vector.broadcast %16 : vector<32x1xf32> to vector<32x64xf32>
    %18 = arith.mulf %13, %17 : vector<32x64xf32>
    %c0_5 = arith.constant 0 : index
    %c0_6 = arith.constant 0 : index
    %19 = vector.load %arg2[%c0_5, %c0_6] : memref<1x64xf32, #tpu.memory_space<vmem>>, vector<1x64xf32>
    %20 = vector.broadcast %19 : vector<1x64xf32> to vector<32x64xf32>
    %21 = arith.mulf %18, %20 : vector<32x64xf32>
    %c0_7 = arith.constant 0 : index
    %c0_8 = arith.constant 0 : index
    %22 = vector.load %arg3[%c0_7, %c0_8] : memref<1x64xf32, #tpu.memory_space<vmem>>, vector<1x64xf32>
    %23 = vector.broadcast %22 : vector<1x64xf32> to vector<32x64xf32>
    %24 = arith.addf %21, %23 : vector<32x64xf32>
    %25 = arith.truncf %24 : vector<32x64xf32> to vector<32x64xbf16>
    %c0_9 = arith.constant 0 : index
    %c0_10 = arith.constant 0 : index
    %26 = vector.load %arg4[%c0_9, %c0_10] : memref<64x128xbf16, #tpu.memory_space<vmem>>, vector<64x128xbf16>
    %cst_11 = arith.constant dense<0.000000e+00> : vector<32x128xf32>
    %27 = tpu.matmul %25, %26, %cst_11 {dimension_numbers = #tpu.dot_dimension_numbers<[1], [0], [0], [1], [0, 0, 1, 1], [], []>} : vector<32x64xbf16>, vector<64x128xbf16>, vector<32x128xf32> -> vector<32x128xf32>
    %c0_12 = arith.constant 0 : index
    %c0_13 = arith.constant 0 : index
    %28 = vector.load %arg5[%c0_12, %c0_13] : memref<1x128xf32, #tpu.memory_space<vmem>>, vector<1x128xf32>
    %29 = vector.broadcast %28 : vector<1x128xf32> to vector<32x128xf32>
    %30 = arith.addf %27, %29 : vector<32x128xf32>
    %cst_14 = arith.constant 0.000000e+00 : f32
    %31 = vector.broadcast %cst_14 : f32 to vector<32x128xf32>
    %32 = arith.maximumf %30, %31 : vector<32x128xf32>
    %33 = arith.truncf %32 : vector<32x128xf32> to vector<32x128xbf16>
    %c0_15 = arith.constant 0 : index
    %c0_16 = arith.constant 0 : index
    %34 = vector.load %arg6[%c0_15, %c0_16] : memref<128x64xbf16, #tpu.memory_space<vmem>>, vector<128x64xbf16>
    %cst_17 = arith.constant dense<0.000000e+00> : vector<32x64xf32>
    %35 = tpu.matmul %33, %34, %cst_17 {dimension_numbers = #tpu.dot_dimension_numbers<[1], [0], [0], [1], [0, 0, 1, 1], [], []>} : vector<32x128xbf16>, vector<128x64xbf16>, vector<32x64xf32> -> vector<32x64xf32>
    %36 = arith.addf %0, %35 : vector<32x64xf32>
    %c0_18 = arith.constant 0 : index
    %c0_19 = arith.constant 0 : index
    %37 = vector.load %arg7[%c0_18, %c0_19] : memref<1x64xf32, #tpu.memory_space<vmem>>, vector<1x64xf32>
    %38 = vector.broadcast %37 : vector<1x64xf32> to vector<32x64xf32>
    %39 = arith.addf %36, %38 : vector<32x64xf32>
    %cst_20 = arith.constant dense<0.000000e+00> : vector<32xf32>
    %40 = vector.multi_reduction <add>, %39, %cst_20 [1] : vector<32x64xf32> to vector<32xf32>
    %41 = vector.shape_cast %40 : vector<32xf32> to vector<32x1xf32>
    %cst_21 = arith.constant 6.400000e+01 : f32
    %42 = vector.broadcast %cst_21 : f32 to vector<32x1xf32>
    %43 = arith.divf %41, %42 : vector<32x1xf32>
    %44 = vector.broadcast %43 : vector<32x1xf32> to vector<32x64xf32>
    %45 = arith.subf %39, %44 : vector<32x64xf32>
    %46 = arith.mulf %45, %45 : vector<32x64xf32>
    %cst_22 = arith.constant dense<0.000000e+00> : vector<32xf32>
    %47 = vector.multi_reduction <add>, %46, %cst_22 [1] : vector<32x64xf32> to vector<32xf32>
    %48 = vector.shape_cast %47 : vector<32xf32> to vector<32x1xf32>
    %cst_23 = arith.constant 6.400000e+01 : f32
    %49 = vector.broadcast %cst_23 : f32 to vector<32x1xf32>
    %50 = arith.divf %48, %49 : vector<32x1xf32>
    %51 = vector.broadcast %43 : vector<32x1xf32> to vector<32x64xf32>
    %52 = arith.subf %39, %51 : vector<32x64xf32>
    %cst_24 = arith.constant 9.99999974E-6 : f32
    %53 = vector.broadcast %cst_24 : f32 to vector<32x1xf32>
    %54 = arith.addf %50, %53 : vector<32x1xf32>
    %55 = math.rsqrt %54 : vector<32x1xf32>
    %56 = vector.broadcast %55 : vector<32x1xf32> to vector<32x64xf32>
    %57 = arith.mulf %52, %56 : vector<32x64xf32>
    %c0_25 = arith.constant 0 : index
    %c0_26 = arith.constant 0 : index
    %58 = vector.load %arg8[%c0_25, %c0_26] : memref<1x64xf32, #tpu.memory_space<vmem>>, vector<1x64xf32>
    %59 = vector.broadcast %58 : vector<1x64xf32> to vector<32x64xf32>
    %60 = arith.mulf %57, %59 : vector<32x64xf32>
    %c0_27 = arith.constant 0 : index
    %c0_28 = arith.constant 0 : index
    %61 = vector.load %arg9[%c0_27, %c0_28] : memref<1x64xf32, #tpu.memory_space<vmem>>, vector<1x64xf32>
    %62 = vector.broadcast %61 : vector<1x64xf32> to vector<32x64xf32>
    %63 = arith.addf %60, %62 : vector<32x64xf32>
    %c0_29 = arith.constant 0 : index
    %c0_30 = arith.constant 0 : index
    %64 = vector.load %arg10[%c0_29, %c0_30] : memref<32x64xf32, #tpu.memory_space<vmem>>, vector<32x64xf32>
    tpu.vector_store %arg10[%c0_29, %c0_30], %63 {strides = array<i32>} : memref<32x64xf32, #tpu.memory_space<vmem>>, vector<32x64xf32>,
    return
  }
  func.func @transform_0(%arg0: i32) -> (i32, i32) {
    %c0_i32 = arith.constant 0 : i32
    %c0_i32_0 = arith.constant 0 : i32
    return %arg0, %c0_i32 : i32, i32
  }
  func.func @transform_1(%arg0: i32) -> (i32, i32) {
    %c0_i32 = arith.constant 0 : i32
    %c0_i32_0 = arith.constant 0 : i32
    %c0_i32_1 = arith.constant 0 : i32
    return %c0_i32, %c0_i32_0 : i32, i32
  }
  func.func @transform_2(%arg0: i32) -> (i32, i32) {
    %c0_i32 = arith.constant 0 : i32
    %c0_i32_0 = arith.constant 0 : i32
    %c0_i32_1 = arith.constant 0 : i32
    return %c0_i32, %c0_i32_0 : i32, i32
  }
  func.func @transform_3(%arg0: i32) -> (i32, i32) {
    %c0_i32 = arith.constant 0 : i32
    %c0_i32_0 = arith.constant 0 : i32
    %c0_i32_1 = arith.constant 0 : i32
    return %c0_i32, %c0_i32_0 : i32, i32
  }
  func.func @transform_4(%arg0: i32) -> (i32, i32) {
    %c0_i32 = arith.constant 0 : i32
    %c0_i32_0 = arith.constant 0 : i32
    %c0_i32_1 = arith.constant 0 : i32
    return %c0_i32, %c0_i32_0 : i32, i32
  }
  func.func @transform_5(%arg0: i32) -> (i32, i32) {
    %c0_i32 = arith.constant 0 : i32
    %c0_i32_0 = arith.constant 0 : i32
    %c0_i32_1 = arith.constant 0 : i32
    return %c0_i32, %c0_i32_0 : i32, i32
  }
  func.func @transform_6(%arg0: i32) -> (i32, i32) {
    %c0_i32 = arith.constant 0 : i32
    %c0_i32_0 = arith.constant 0 : i32
    %c0_i32_1 = arith.constant 0 : i32
    return %c0_i32, %c0_i32_0 : i32, i32
  }
  func.func @transform_7(%arg0: i32) -> (i32, i32) {
    %c0_i32 = arith.constant 0 : i32
    %c0_i32_0 = arith.constant 0 : i32
    %c0_i32_1 = arith.constant 0 : i32
    return %c0_i32, %c0_i32_0 : i32, i32
  }
  func.func @transform_8(%arg0: i32) -> (i32, i32) {
    %c0_i32 = arith.constant 0 : i32
    %c0_i32_0 = arith.constant 0 : i32
    %c0_i32_1 = arith.constant 0 : i32
    return %c0_i32, %c0_i32_0 : i32, i32
  }
  func.func @transform_9(%arg0: i32) -> (i32, i32) {
    %c0_i32 = arith.constant 0 : i32
    %c0_i32_0 = arith.constant 0 : i32
    return %arg0, %c0_i32 : i32, i32
  }
}

module attributes {stable_mosaic.version = 11 : i64} {
  func.func @_proj_kernel(%arg0: i32, %arg1: memref<64x64xf32, #tpu.memory_space<vmem>>, %arg2: memref<64x64xf32, #tpu.memory_space<vmem>>, %arg3: memref<1x64xf32, #tpu.memory_space<vmem>>, %arg4: memref<1x64xf32, #tpu.memory_space<vmem>>, %arg5: memref<64x64xbf16, #tpu.memory_space<vmem>>, %arg6: memref<64x64xbf16, #tpu.memory_space<vmem>>, %arg7: memref<1x64xf32, #tpu.memory_space<vmem>>, %arg8: memref<1x64xf32, #tpu.memory_space<vmem>>, %arg9: memref<64x64xf32, #tpu.memory_space<vmem>>, %arg10: memref<64x64xf32, #tpu.memory_space<vmem>>) attributes {dimension_semantics = [#tpu.dimension_semantics<parallel>], iteration_bounds = array<i64: 1>, scalar_prefetch = 0 : i64, scratch_operands = 0 : i64, tpu.core_type = #tpu.core_type<tc>, window_params = [{transform_indices = @transform_0, window_bounds = array<i64: 64, 64>}, {transform_indices = @transform_1, window_bounds = array<i64: 64, 64>}, {pipeline_mode = #tpu.pipeline_mode<synchronous>, transform_indices = @transform_2, window_bounds = array<i64: 1, 64>}, {pipeline_mode = #tpu.pipeline_mode<synchronous>, transform_indices = @transform_3, window_bounds = array<i64: 1, 64>}, {pipeline_mode = #tpu.pipeline_mode<synchronous>, transform_indices = @transform_4, window_bounds = array<i64: 64, 64>}, {pipeline_mode = #tpu.pipeline_mode<synchronous>, transform_indices = @transform_5, window_bounds = array<i64: 64, 64>}, {pipeline_mode = #tpu.pipeline_mode<synchronous>, transform_indices = @transform_6, window_bounds = array<i64: 1, 64>}, {pipeline_mode = #tpu.pipeline_mode<synchronous>, transform_indices = @transform_7, window_bounds = array<i64: 1, 64>}, {transform_indices = @transform_8, window_bounds = array<i64: 64, 64>}, {transform_indices = @transform_9, window_bounds = array<i64: 64, 64>}]} {
    %c0 = arith.constant 0 : index
    %c0_0 = arith.constant 0 : index
    %0 = vector.load %arg1[%c0, %c0_0] : memref<64x64xf32, #tpu.memory_space<vmem>>, vector<64x64xf32>
    %c0_1 = arith.constant 0 : index
    %c0_2 = arith.constant 0 : index
    %1 = vector.load %arg2[%c0_1, %c0_2] : memref<64x64xf32, #tpu.memory_space<vmem>>, vector<64x64xf32>
    %2 = arith.addf %0, %1 : vector<64x64xf32>
    %3 = arith.truncf %0 : vector<64x64xf32> to vector<64x64xbf16>
    %4 = arith.truncf %2 : vector<64x64xf32> to vector<64x64xbf16>
    %c0_3 = arith.constant 0 : index
    %c0_4 = arith.constant 0 : index
    %5 = vector.load %arg5[%c0_3, %c0_4] : memref<64x64xbf16, #tpu.memory_space<vmem>>, vector<64x64xbf16>
    %cst = arith.constant dense<0.000000e+00> : vector<64x64xf32>
    %6 = tpu.matmul %4, %5, %cst {dimension_numbers = #tpu.dot_dimension_numbers<[1], [0], [0], [1], [0, 0, 1, 1], [], []>} : vector<64x64xbf16>, vector<64x64xbf16>, vector<64x64xf32> -> vector<64x64xf32>
    %c0_5 = arith.constant 0 : index
    %c0_6 = arith.constant 0 : index
    %7 = vector.load %arg7[%c0_5, %c0_6] : memref<1x64xf32, #tpu.memory_space<vmem>>, vector<1x64xf32>
    %8 = vector.broadcast %7 : vector<1x64xf32> to vector<64x64xf32>
    %9 = arith.addf %6, %8 : vector<64x64xf32>
    %c0_7 = arith.constant 0 : index
    %c0_8 = arith.constant 0 : index
    %10 = vector.load %arg9[%c0_7, %c0_8] : memref<64x64xf32, #tpu.memory_space<vmem>>, vector<64x64xf32>
    tpu.vector_store %arg9[%c0_7, %c0_8], %9 {strides = array<i32>} : memref<64x64xf32, #tpu.memory_space<vmem>>, vector<64x64xf32>,
    %c0_9 = arith.constant 0 : index
    %c0_10 = arith.constant 0 : index
    %11 = vector.load %arg6[%c0_9, %c0_10] : memref<64x64xbf16, #tpu.memory_space<vmem>>, vector<64x64xbf16>
    %cst_11 = arith.constant dense<0.000000e+00> : vector<64x64xf32>
    %12 = tpu.matmul %3, %11, %cst_11 {dimension_numbers = #tpu.dot_dimension_numbers<[1], [0], [0], [1], [0, 0, 1, 1], [], []>} : vector<64x64xbf16>, vector<64x64xbf16>, vector<64x64xf32> -> vector<64x64xf32>
    %c0_12 = arith.constant 0 : index
    %c0_13 = arith.constant 0 : index
    %13 = vector.load %arg8[%c0_12, %c0_13] : memref<1x64xf32, #tpu.memory_space<vmem>>, vector<1x64xf32>
    %14 = vector.broadcast %13 : vector<1x64xf32> to vector<64x64xf32>
    %15 = arith.addf %12, %14 : vector<64x64xf32>
    %c0_14 = arith.constant 0 : index
    %c0_15 = arith.constant 0 : index
    %16 = vector.load %arg10[%c0_14, %c0_15] : memref<64x64xf32, #tpu.memory_space<vmem>>, vector<64x64xf32>
    tpu.vector_store %arg10[%c0_14, %c0_15], %15 {strides = array<i32>} : memref<64x64xf32, #tpu.memory_space<vmem>>, vector<64x64xf32>,
    return
  }
  func.func @transform_0(%arg0: i32) -> (i32, i32) {
    %c0_i32 = arith.constant 0 : i32
    %c0_i32_0 = arith.constant 0 : i32
    return %arg0, %c0_i32 : i32, i32
  }
  func.func @transform_1(%arg0: i32) -> (i32, i32) {
    %c0_i32 = arith.constant 0 : i32
    %c0_i32_0 = arith.constant 0 : i32
    return %arg0, %c0_i32 : i32, i32
  }
  func.func @transform_2(%arg0: i32) -> (i32, i32) {
    %c0_i32 = arith.constant 0 : i32
    %c0_i32_0 = arith.constant 0 : i32
    %c0_i32_1 = arith.constant 0 : i32
    return %c0_i32, %c0_i32_0 : i32, i32
  }
  func.func @transform_3(%arg0: i32) -> (i32, i32) {
    %c0_i32 = arith.constant 0 : i32
    %c0_i32_0 = arith.constant 0 : i32
    %c0_i32_1 = arith.constant 0 : i32
    return %c0_i32, %c0_i32_0 : i32, i32
  }
  func.func @transform_4(%arg0: i32) -> (i32, i32) {
    %c0_i32 = arith.constant 0 : i32
    %c0_i32_0 = arith.constant 0 : i32
    %c0_i32_1 = arith.constant 0 : i32
    return %c0_i32, %c0_i32_0 : i32, i32
  }
  func.func @transform_5(%arg0: i32) -> (i32, i32) {
    %c0_i32 = arith.constant 0 : i32
    %c0_i32_0 = arith.constant 0 : i32
    %c0_i32_1 = arith.constant 0 : i32
    return %c0_i32, %c0_i32_0 : i32, i32
  }
  func.func @transform_6(%arg0: i32) -> (i32, i32) {
    %c0_i32 = arith.constant 0 : i32
    %c0_i32_0 = arith.constant 0 : i32
    %c0_i32_1 = arith.constant 0 : i32
    return %c0_i32, %c0_i32_0 : i32, i32
  }
  func.func @transform_7(%arg0: i32) -> (i32, i32) {
    %c0_i32 = arith.constant 0 : i32
    %c0_i32_0 = arith.constant 0 : i32
    %c0_i32_1 = arith.constant 0 : i32
    return %c0_i32, %c0_i32_0 : i32, i32
  }
  func.func @transform_8(%arg0: i32) -> (i32, i32) {
    %c0_i32 = arith.constant 0 : i32
    %c0_i32_0 = arith.constant 0 : i32
    return %arg0, %c0_i32 : i32, i32
  }
  func.func @transform_9(%arg0: i32) -> (i32, i32) {
    %c0_i32 = arith.constant 0 : i32
    %c0_i32_0 = arith.constant 0 : i32
    return %arg0, %c0_i32 : i32, i32
  }
}

module attributes {stable_mosaic.version = 11 : i64} {
  func.func @_attention_kernel(%arg0: i32, %arg1: memref<1x16x64xf32, #tpu.memory_space<vmem>>, %arg2: memref<1x32x64xf32, #tpu.memory_space<vmem>>, %arg3: memref<1x32x64xf32, #tpu.memory_space<vmem>>, %arg4: memref<16x16xf32, #tpu.memory_space<vmem>>, %arg5: memref<16x16xf32, #tpu.memory_space<vmem>>, %arg6: memref<32x16xf32, #tpu.memory_space<vmem>>, %arg7: memref<32x16xf32, #tpu.memory_space<vmem>>, %arg8: memref<64x64xbf16, #tpu.memory_space<vmem>>, %arg9: memref<1x64xf32, #tpu.memory_space<vmem>>, %arg10: memref<1x16x64xf32, #tpu.memory_space<vmem>>, %arg11: memref<1x16x64xf32, #tpu.memory_space<vmem>>) attributes {dimension_semantics = [#tpu.dimension_semantics<parallel>], iteration_bounds = array<i64: 2>, scalar_prefetch = 0 : i64, scratch_operands = 0 : i64, tpu.core_type = #tpu.core_type<tc>, window_params = [{transform_indices = @transform_0, window_bounds = array<i64: 1, 16, 64>}, {transform_indices = @transform_1, window_bounds = array<i64: 1, 32, 64>}, {transform_indices = @transform_2, window_bounds = array<i64: 1, 32, 64>}, {pipeline_mode = #tpu.pipeline_mode<synchronous>, transform_indices = @transform_3, window_bounds = array<i64: 16, 16>}, {pipeline_mode = #tpu.pipeline_mode<synchronous>, transform_indices = @transform_4, window_bounds = array<i64: 16, 16>}, {pipeline_mode = #tpu.pipeline_mode<synchronous>, transform_indices = @transform_5, window_bounds = array<i64: 32, 16>}, {pipeline_mode = #tpu.pipeline_mode<synchronous>, transform_indices = @transform_6, window_bounds = array<i64: 32, 16>}, {pipeline_mode = #tpu.pipeline_mode<synchronous>, transform_indices = @transform_7, window_bounds = array<i64: 64, 64>}, {pipeline_mode = #tpu.pipeline_mode<synchronous>, transform_indices = @transform_8, window_bounds = array<i64: 1, 64>}, {transform_indices = @transform_9, window_bounds = array<i64: 1, 16, 64>}, {transform_indices = @transform_10, window_bounds = array<i64: 1, 16, 64>}]} {
    %c0 = arith.constant 0 : index
    %c0_0 = arith.constant 0 : index
    %c0_1 = arith.constant 0 : index
    %0 = vector.load %arg1[%c0, %c0_0, %c0_1] : memref<1x16x64xf32, #tpu.memory_space<vmem>>, vector<1x16x64xf32>
    %1 = vector.shape_cast %0 : vector<1x16x64xf32> to vector<16x64xf32>
    %c0_2 = arith.constant 0 : index
    %c0_3 = arith.constant 0 : index
    %c0_4 = arith.constant 0 : index
    %2 = vector.load %arg2[%c0_2, %c0_3, %c0_4] : memref<1x32x64xf32, #tpu.memory_space<vmem>>, vector<1x32x64xf32>
    %3 = vector.shape_cast %2 : vector<1x32x64xf32> to vector<32x64xf32>
    %c0_5 = arith.constant 0 : index
    %c0_6 = arith.constant 0 : index
    %c0_7 = arith.constant 0 : index
    %4 = vector.load %arg3[%c0_5, %c0_6, %c0_7] : memref<1x32x64xf32, #tpu.memory_space<vmem>>, vector<1x32x64xf32>
    %5 = vector.shape_cast %4 : vector<1x32x64xf32> to vector<32x64xf32>
    %6 = arith.truncf %5 : vector<32x64xf32> to vector<32x64xbf16>
    %c0_8 = arith.constant 0 : index
    %c0_9 = arith.constant 0 : index
    %7 = vector.load %arg4[%c0_8, %c0_9] : memref<16x16xf32, #tpu.memory_space<vmem>>, vector<16x16xf32>
    %c0_10 = arith.constant 0 : index
    %c0_11 = arith.constant 0 : index
    %8 = vector.load %arg5[%c0_10, %c0_11] : memref<16x16xf32, #tpu.memory_space<vmem>>, vector<16x16xf32>
    %c0_12 = arith.constant 0 : index
    %c0_13 = arith.constant 0 : index
    %9 = vector.load %arg6[%c0_12, %c0_13] : memref<32x16xf32, #tpu.memory_space<vmem>>, vector<32x16xf32>
    %c0_14 = arith.constant 0 : index
    %c0_15 = arith.constant 0 : index
    %10 = vector.load %arg7[%c0_14, %c0_15] : memref<32x16xf32, #tpu.memory_space<vmem>>, vector<32x16xf32>
    %11 = vector.extract_strided_slice %1 {offsets = [0, 0], sizes = [16, 16], strides = [1, 1]} : vector<16x64xf32> to vector<16x16xf32>
    %12 = vector.extract_strided_slice %11 {offsets = [0, 8], sizes = [16, 8], strides = [1, 1]} : vector<16x16xf32> to vector<16x8xf32>
    %cst = arith.constant 0.000000e+00 : f32
    %13 = vector.broadcast %cst : f32 to vector<16x8xf32>
    %14 = arith.subf %13, %12 : vector<16x8xf32>
    %15 = vector.extract_strided_slice %11 {offsets = [0, 0], sizes = [16, 8], strides = [1, 1]} : vector<16x16xf32> to vector<16x8xf32>
    %16 = tpu.concatenate %14, %15 in 1 : vector<16x8xf32>, vector<16x8xf32> -> vector<16x16xf32>
    %17 = arith.mulf %11, %7 : vector<16x16xf32>
    %18 = arith.mulf %16, %8 : vector<16x16xf32>
    %19 = arith.addf %17, %18 : vector<16x16xf32>
    %cst_16 = arith.constant 2.500000e-01 : f32
    %20 = vector.broadcast %cst_16 : f32 to vector<16x16xf32>
    %21 = arith.mulf %19, %20 : vector<16x16xf32>
    %22 = arith.truncf %21 : vector<16x16xf32> to vector<16x16xbf16>
    %23 = vector.extract_strided_slice %3 {offsets = [0, 0], sizes = [32, 16], strides = [1, 1]} : vector<32x64xf32> to vector<32x16xf32>
    %24 = vector.extract_strided_slice %23 {offsets = [0, 8], sizes = [32, 8], strides = [1, 1]} : vector<32x16xf32> to vector<32x8xf32>
    %cst_17 = arith.constant 0.000000e+00 : f32
    %25 = vector.broadcast %cst_17 : f32 to vector<32x8xf32>
    %26 = arith.subf %25, %24 : vector<32x8xf32>
    %27 = vector.extract_strided_slice %23 {offsets = [0, 0], sizes = [32, 8], strides = [1, 1]} : vector<32x16xf32> to vector<32x8xf32>
    %28 = tpu.concatenate %26, %27 in 1 : vector<32x8xf32>, vector<32x8xf32> -> vector<32x16xf32>
    %29 = arith.mulf %23, %9 : vector<32x16xf32>
    %30 = arith.mulf %28, %10 : vector<32x16xf32>
    %31 = arith.addf %29, %30 : vector<32x16xf32>
    %32 = arith.truncf %31 : vector<32x16xf32> to vector<32x16xbf16>
    %cst_18 = arith.constant dense<0.000000e+00> : vector<16x32xf32>
    %33 = tpu.matmul %22, %32, %cst_18 {dimension_numbers = #tpu.dot_dimension_numbers<[1], [1], [0], [0], [0, 0, 1, 0], [], []>} : vector<16x16xbf16>, vector<32x16xbf16>, vector<16x32xf32> -> vector<16x32xf32>
    %cst_19 = arith.constant dense<0xFF800000> : vector<16xf32>
    %34 = vector.multi_reduction <maximumf>, %33, %cst_19 [1] : vector<16x32xf32> to vector<16xf32>
    %35 = vector.shape_cast %34 : vector<16xf32> to vector<16x1xf32>
    %36 = vector.broadcast %35 : vector<16x1xf32> to vector<16x32xf32>
    %37 = arith.subf %33, %36 : vector<16x32xf32>
    %38 = math.exp %37 : vector<16x32xf32>
    %cst_20 = arith.constant dense<0.000000e+00> : vector<16xf32>
    %39 = vector.multi_reduction <add>, %38, %cst_20 [1] : vector<16x32xf32> to vector<16xf32>
    %40 = vector.shape_cast %39 : vector<16xf32> to vector<16x1xf32>
    %41 = tpu.reciprocal %40 {approx = true} : vector<16x1xf32> -> vector<16x1xf32>
    %42 = vector.broadcast %41 : vector<16x1xf32> to vector<16x32xf32>
    %43 = arith.mulf %38, %42 : vector<16x32xf32>
    %44 = arith.truncf %43 : vector<16x32xf32> to vector<16x32xbf16>
    %45 = vector.extract_strided_slice %6 {offsets = [0, 0], sizes = [32, 16], strides = [1, 1]} : vector<32x64xbf16> to vector<32x16xbf16>
    %cst_21 = arith.constant dense<0.000000e+00> : vector<16x16xf32>
    %46 = tpu.matmul %44, %45, %cst_21 {dimension_numbers = #tpu.dot_dimension_numbers<[1], [0], [0], [1], [0, 0, 1, 1], [], []>} : vector<16x32xbf16>, vector<32x16xbf16>, vector<16x16xf32> -> vector<16x16xf32>
    %47 = vector.extract_strided_slice %1 {offsets = [0, 16], sizes = [16, 16], strides = [1, 1]} : vector<16x64xf32> to vector<16x16xf32>
    %48 = vector.extract_strided_slice %47 {offsets = [0, 8], sizes = [16, 8], strides = [1, 1]} : vector<16x16xf32> to vector<16x8xf32>
    %cst_22 = arith.constant 0.000000e+00 : f32
    %49 = vector.broadcast %cst_22 : f32 to vector<16x8xf32>
    %50 = arith.subf %49, %48 : vector<16x8xf32>
    %51 = vector.extract_strided_slice %47 {offsets = [0, 0], sizes = [16, 8], strides = [1, 1]} : vector<16x16xf32> to vector<16x8xf32>
    %52 = tpu.concatenate %50, %51 in 1 : vector<16x8xf32>, vector<16x8xf32> -> vector<16x16xf32>
    %53 = arith.mulf %47, %7 : vector<16x16xf32>
    %54 = arith.mulf %52, %8 : vector<16x16xf32>
    %55 = arith.addf %53, %54 : vector<16x16xf32>
    %cst_23 = arith.constant 2.500000e-01 : f32
    %56 = vector.broadcast %cst_23 : f32 to vector<16x16xf32>
    %57 = arith.mulf %55, %56 : vector<16x16xf32>
    %58 = arith.truncf %57 : vector<16x16xf32> to vector<16x16xbf16>
    %59 = vector.extract_strided_slice %3 {offsets = [0, 16], sizes = [32, 16], strides = [1, 1]} : vector<32x64xf32> to vector<32x16xf32>
    %60 = vector.extract_strided_slice %59 {offsets = [0, 8], sizes = [32, 8], strides = [1, 1]} : vector<32x16xf32> to vector<32x8xf32>
    %cst_24 = arith.constant 0.000000e+00 : f32
    %61 = vector.broadcast %cst_24 : f32 to vector<32x8xf32>
    %62 = arith.subf %61, %60 : vector<32x8xf32>
    %63 = vector.extract_strided_slice %59 {offsets = [0, 0], sizes = [32, 8], strides = [1, 1]} : vector<32x16xf32> to vector<32x8xf32>
    %64 = tpu.concatenate %62, %63 in 1 : vector<32x8xf32>, vector<32x8xf32> -> vector<32x16xf32>
    %65 = arith.mulf %59, %9 : vector<32x16xf32>
    %66 = arith.mulf %64, %10 : vector<32x16xf32>
    %67 = arith.addf %65, %66 : vector<32x16xf32>
    %68 = arith.truncf %67 : vector<32x16xf32> to vector<32x16xbf16>
    %cst_25 = arith.constant dense<0.000000e+00> : vector<16x32xf32>
    %69 = tpu.matmul %58, %68, %cst_25 {dimension_numbers = #tpu.dot_dimension_numbers<[1], [1], [0], [0], [0, 0, 1, 0], [], []>} : vector<16x16xbf16>, vector<32x16xbf16>, vector<16x32xf32> -> vector<16x32xf32>
    %cst_26 = arith.constant dense<0xFF800000> : vector<16xf32>
    %70 = vector.multi_reduction <maximumf>, %69, %cst_26 [1] : vector<16x32xf32> to vector<16xf32>
    %71 = vector.shape_cast %70 : vector<16xf32> to vector<16x1xf32>
    %72 = vector.broadcast %71 : vector<16x1xf32> to vector<16x32xf32>
    %73 = arith.subf %69, %72 : vector<16x32xf32>
    %74 = math.exp %73 : vector<16x32xf32>
    %cst_27 = arith.constant dense<0.000000e+00> : vector<16xf32>
    %75 = vector.multi_reduction <add>, %74, %cst_27 [1] : vector<16x32xf32> to vector<16xf32>
    %76 = vector.shape_cast %75 : vector<16xf32> to vector<16x1xf32>
    %77 = tpu.reciprocal %76 {approx = true} : vector<16x1xf32> -> vector<16x1xf32>
    %78 = vector.broadcast %77 : vector<16x1xf32> to vector<16x32xf32>
    %79 = arith.mulf %74, %78 : vector<16x32xf32>
    %80 = arith.truncf %79 : vector<16x32xf32> to vector<16x32xbf16>
    %81 = vector.extract_strided_slice %6 {offsets = [0, 16], sizes = [32, 16], strides = [1, 1]} : vector<32x64xbf16> to vector<32x16xbf16>
    %cst_28 = arith.constant dense<0.000000e+00> : vector<16x16xf32>
    %82 = tpu.matmul %80, %81, %cst_28 {dimension_numbers = #tpu.dot_dimension_numbers<[1], [0], [0], [1], [0, 0, 1, 1], [], []>} : vector<16x32xbf16>, vector<32x16xbf16>, vector<16x16xf32> -> vector<16x16xf32>
    %83 = vector.extract_strided_slice %1 {offsets = [0, 32], sizes = [16, 16], strides = [1, 1]} : vector<16x64xf32> to vector<16x16xf32>
    %84 = vector.extract_strided_slice %83 {offsets = [0, 8], sizes = [16, 8], strides = [1, 1]} : vector<16x16xf32> to vector<16x8xf32>
    %cst_29 = arith.constant 0.000000e+00 : f32
    %85 = vector.broadcast %cst_29 : f32 to vector<16x8xf32>
    %86 = arith.subf %85, %84 : vector<16x8xf32>
    %87 = vector.extract_strided_slice %83 {offsets = [0, 0], sizes = [16, 8], strides = [1, 1]} : vector<16x16xf32> to vector<16x8xf32>
    %88 = tpu.concatenate %86, %87 in 1 : vector<16x8xf32>, vector<16x8xf32> -> vector<16x16xf32>
    %89 = arith.mulf %83, %7 : vector<16x16xf32>
    %90 = arith.mulf %88, %8 : vector<16x16xf32>
    %91 = arith.addf %89, %90 : vector<16x16xf32>
    %cst_30 = arith.constant 2.500000e-01 : f32
    %92 = vector.broadcast %cst_30 : f32 to vector<16x16xf32>
    %93 = arith.mulf %91, %92 : vector<16x16xf32>
    %94 = arith.truncf %93 : vector<16x16xf32> to vector<16x16xbf16>
    %95 = vector.extract_strided_slice %3 {offsets = [0, 32], sizes = [32, 16], strides = [1, 1]} : vector<32x64xf32> to vector<32x16xf32>
    %96 = vector.extract_strided_slice %95 {offsets = [0, 8], sizes = [32, 8], strides = [1, 1]} : vector<32x16xf32> to vector<32x8xf32>
    %cst_31 = arith.constant 0.000000e+00 : f32
    %97 = vector.broadcast %cst_31 : f32 to vector<32x8xf32>
    %98 = arith.subf %97, %96 : vector<32x8xf32>
    %99 = vector.extract_strided_slice %95 {offsets = [0, 0], sizes = [32, 8], strides = [1, 1]} : vector<32x16xf32> to vector<32x8xf32>
    %100 = tpu.concatenate %98, %99 in 1 : vector<32x8xf32>, vector<32x8xf32> -> vector<32x16xf32>
    %101 = arith.mulf %95, %9 : vector<32x16xf32>
    %102 = arith.mulf %100, %10 : vector<32x16xf32>
    %103 = arith.addf %101, %102 : vector<32x16xf32>
    %104 = arith.truncf %103 : vector<32x16xf32> to vector<32x16xbf16>
    %cst_32 = arith.constant dense<0.000000e+00> : vector<16x32xf32>
    %105 = tpu.matmul %94, %104, %cst_32 {dimension_numbers = #tpu.dot_dimension_numbers<[1], [1], [0], [0], [0, 0, 1, 0], [], []>} : vector<16x16xbf16>, vector<32x16xbf16>, vector<16x32xf32> -> vector<16x32xf32>
    %cst_33 = arith.constant dense<0xFF800000> : vector<16xf32>
    %106 = vector.multi_reduction <maximumf>, %105, %cst_33 [1] : vector<16x32xf32> to vector<16xf32>
    %107 = vector.shape_cast %106 : vector<16xf32> to vector<16x1xf32>
    %108 = vector.broadcast %107 : vector<16x1xf32> to vector<16x32xf32>
    %109 = arith.subf %105, %108 : vector<16x32xf32>
    %110 = math.exp %109 : vector<16x32xf32>
    %cst_34 = arith.constant dense<0.000000e+00> : vector<16xf32>
    %111 = vector.multi_reduction <add>, %110, %cst_34 [1] : vector<16x32xf32> to vector<16xf32>
    %112 = vector.shape_cast %111 : vector<16xf32> to vector<16x1xf32>
    %113 = tpu.reciprocal %112 {approx = true} : vector<16x1xf32> -> vector<16x1xf32>
    %114 = vector.broadcast %113 : vector<16x1xf32> to vector<16x32xf32>
    %115 = arith.mulf %110, %114 : vector<16x32xf32>
    %116 = arith.truncf %115 : vector<16x32xf32> to vector<16x32xbf16>
    %117 = vector.extract_strided_slice %6 {offsets = [0, 32], sizes = [32, 16], strides = [1, 1]} : vector<32x64xbf16> to vector<32x16xbf16>
    %cst_35 = arith.constant dense<0.000000e+00> : vector<16x16xf32>
    %118 = tpu.matmul %116, %117, %cst_35 {dimension_numbers = #tpu.dot_dimension_numbers<[1], [0], [0], [1], [0, 0, 1, 1], [], []>} : vector<16x32xbf16>, vector<32x16xbf16>, vector<16x16xf32> -> vector<16x16xf32>
    %119 = vector.extract_strided_slice %1 {offsets = [0, 48], sizes = [16, 16], strides = [1, 1]} : vector<16x64xf32> to vector<16x16xf32>
    %120 = vector.extract_strided_slice %119 {offsets = [0, 8], sizes = [16, 8], strides = [1, 1]} : vector<16x16xf32> to vector<16x8xf32>
    %cst_36 = arith.constant 0.000000e+00 : f32
    %121 = vector.broadcast %cst_36 : f32 to vector<16x8xf32>
    %122 = arith.subf %121, %120 : vector<16x8xf32>
    %123 = vector.extract_strided_slice %119 {offsets = [0, 0], sizes = [16, 8], strides = [1, 1]} : vector<16x16xf32> to vector<16x8xf32>
    %124 = tpu.concatenate %122, %123 in 1 : vector<16x8xf32>, vector<16x8xf32> -> vector<16x16xf32>
    %125 = arith.mulf %119, %7 : vector<16x16xf32>
    %126 = arith.mulf %124, %8 : vector<16x16xf32>
    %127 = arith.addf %125, %126 : vector<16x16xf32>
    %cst_37 = arith.constant 2.500000e-01 : f32
    %128 = vector.broadcast %cst_37 : f32 to vector<16x16xf32>
    %129 = arith.mulf %127, %128 : vector<16x16xf32>
    %130 = arith.truncf %129 : vector<16x16xf32> to vector<16x16xbf16>
    %131 = vector.extract_strided_slice %3 {offsets = [0, 48], sizes = [32, 16], strides = [1, 1]} : vector<32x64xf32> to vector<32x16xf32>
    %132 = vector.extract_strided_slice %131 {offsets = [0, 8], sizes = [32, 8], strides = [1, 1]} : vector<32x16xf32> to vector<32x8xf32>
    %cst_38 = arith.constant 0.000000e+00 : f32
    %133 = vector.broadcast %cst_38 : f32 to vector<32x8xf32>
    %134 = arith.subf %133, %132 : vector<32x8xf32>
    %135 = vector.extract_strided_slice %131 {offsets = [0, 0], sizes = [32, 8], strides = [1, 1]} : vector<32x16xf32> to vector<32x8xf32>
    %136 = tpu.concatenate %134, %135 in 1 : vector<32x8xf32>, vector<32x8xf32> -> vector<32x16xf32>
    %137 = arith.mulf %131, %9 : vector<32x16xf32>
    %138 = arith.mulf %136, %10 : vector<32x16xf32>
    %139 = arith.addf %137, %138 : vector<32x16xf32>
    %140 = arith.truncf %139 : vector<32x16xf32> to vector<32x16xbf16>
    %cst_39 = arith.constant dense<0.000000e+00> : vector<16x32xf32>
    %141 = tpu.matmul %130, %140, %cst_39 {dimension_numbers = #tpu.dot_dimension_numbers<[1], [1], [0], [0], [0, 0, 1, 0], [], []>} : vector<16x16xbf16>, vector<32x16xbf16>, vector<16x32xf32> -> vector<16x32xf32>
    %cst_40 = arith.constant dense<0xFF800000> : vector<16xf32>
    %142 = vector.multi_reduction <maximumf>, %141, %cst_40 [1] : vector<16x32xf32> to vector<16xf32>
    %143 = vector.shape_cast %142 : vector<16xf32> to vector<16x1xf32>
    %144 = vector.broadcast %143 : vector<16x1xf32> to vector<16x32xf32>
    %145 = arith.subf %141, %144 : vector<16x32xf32>
    %146 = math.exp %145 : vector<16x32xf32>
    %cst_41 = arith.constant dense<0.000000e+00> : vector<16xf32>
    %147 = vector.multi_reduction <add>, %146, %cst_41 [1] : vector<16x32xf32> to vector<16xf32>
    %148 = vector.shape_cast %147 : vector<16xf32> to vector<16x1xf32>
    %149 = tpu.reciprocal %148 {approx = true} : vector<16x1xf32> -> vector<16x1xf32>
    %150 = vector.broadcast %149 : vector<16x1xf32> to vector<16x32xf32>
    %151 = arith.mulf %146, %150 : vector<16x32xf32>
    %152 = arith.truncf %151 : vector<16x32xf32> to vector<16x32xbf16>
    %153 = vector.extract_strided_slice %6 {offsets = [0, 48], sizes = [32, 16], strides = [1, 1]} : vector<32x64xbf16> to vector<32x16xbf16>
    %cst_42 = arith.constant dense<0.000000e+00> : vector<16x16xf32>
    %154 = tpu.matmul %152, %153, %cst_42 {dimension_numbers = #tpu.dot_dimension_numbers<[1], [0], [0], [1], [0, 0, 1, 1], [], []>} : vector<16x32xbf16>, vector<32x16xbf16>, vector<16x16xf32> -> vector<16x16xf32>
    %155 = tpu.concatenate %46, %82, %118, %154 in 1 : vector<16x16xf32>, vector<16x16xf32>, vector<16x16xf32>, vector<16x16xf32> -> vector<16x64xf32>
    %156 = arith.truncf %155 : vector<16x64xf32> to vector<16x64xbf16>
    %c0_43 = arith.constant 0 : index
    %c0_44 = arith.constant 0 : index
    %157 = vector.load %arg8[%c0_43, %c0_44] : memref<64x64xbf16, #tpu.memory_space<vmem>>, vector<64x64xbf16>
    %cst_45 = arith.constant dense<0.000000e+00> : vector<16x64xf32>
    %158 = tpu.matmul %156, %157, %cst_45 {dimension_numbers = #tpu.dot_dimension_numbers<[1], [0], [0], [1], [0, 0, 1, 1], [], []>} : vector<16x64xbf16>, vector<64x64xbf16>, vector<16x64xf32> -> vector<16x64xf32>
    %c0_46 = arith.constant 0 : index
    %c0_47 = arith.constant 0 : index
    %159 = vector.load %arg9[%c0_46, %c0_47] : memref<1x64xf32, #tpu.memory_space<vmem>>, vector<1x64xf32>
    %160 = vector.broadcast %159 : vector<1x64xf32> to vector<16x64xf32>
    %161 = arith.addf %158, %160 : vector<16x64xf32>
    %c0_48 = arith.constant 0 : index
    %c0_49 = arith.constant 0 : index
    %c0_50 = arith.constant 0 : index
    %162 = vector.load %arg10[%c0_48, %c0_49, %c0_50] : memref<1x16x64xf32, #tpu.memory_space<vmem>>, vector<1x16x64xf32>
    %163 = vector.shape_cast %162 : vector<1x16x64xf32> to vector<16x64xf32>
    %164 = arith.addf %161, %163 : vector<16x64xf32>
    %c0_51 = arith.constant 0 : index
    %c0_52 = arith.constant 0 : index
    %c0_53 = arith.constant 0 : index
    %165 = vector.load %arg11[%c0_51, %c0_52, %c0_53] : memref<1x16x64xf32, #tpu.memory_space<vmem>>, vector<1x16x64xf32>
    %166 = vector.shape_cast %165 : vector<1x16x64xf32> to vector<16x64xf32>
    %167 = vector.shape_cast %164 : vector<16x64xf32> to vector<1x16x64xf32>
    tpu.vector_store %arg11[%c0_51, %c0_52, %c0_53], %167 {strides = array<i32>} : memref<1x16x64xf32, #tpu.memory_space<vmem>>, vector<1x16x64xf32>,
    return
  }
  func.func @transform_0(%arg0: i32) -> (i32, i32, i32) {
    %c0_i32 = arith.constant 0 : i32
    %c0_i32_0 = arith.constant 0 : i32
    %c0_i32_1 = arith.constant 0 : i32
    return %arg0, %c0_i32, %c0_i32_0 : i32, i32, i32
  }
  func.func @transform_1(%arg0: i32) -> (i32, i32, i32) {
    %c0_i32 = arith.constant 0 : i32
    %c0_i32_0 = arith.constant 0 : i32
    %c0_i32_1 = arith.constant 0 : i32
    return %arg0, %c0_i32, %c0_i32_0 : i32, i32, i32
  }
  func.func @transform_2(%arg0: i32) -> (i32, i32, i32) {
    %c0_i32 = arith.constant 0 : i32
    %c0_i32_0 = arith.constant 0 : i32
    %c0_i32_1 = arith.constant 0 : i32
    return %arg0, %c0_i32, %c0_i32_0 : i32, i32, i32
  }
  func.func @transform_3(%arg0: i32) -> (i32, i32) {
    %c0_i32 = arith.constant 0 : i32
    %c0_i32_0 = arith.constant 0 : i32
    %c0_i32_1 = arith.constant 0 : i32
    return %c0_i32, %c0_i32_0 : i32, i32
  }
  func.func @transform_4(%arg0: i32) -> (i32, i32) {
    %c0_i32 = arith.constant 0 : i32
    %c0_i32_0 = arith.constant 0 : i32
    %c0_i32_1 = arith.constant 0 : i32
    return %c0_i32, %c0_i32_0 : i32, i32
  }
  func.func @transform_5(%arg0: i32) -> (i32, i32) {
    %c0_i32 = arith.constant 0 : i32
    %c0_i32_0 = arith.constant 0 : i32
    %c0_i32_1 = arith.constant 0 : i32
    return %c0_i32, %c0_i32_0 : i32, i32
  }
  func.func @transform_6(%arg0: i32) -> (i32, i32) {
    %c0_i32 = arith.constant 0 : i32
    %c0_i32_0 = arith.constant 0 : i32
    %c0_i32_1 = arith.constant 0 : i32
    return %c0_i32, %c0_i32_0 : i32, i32
  }
  func.func @transform_7(%arg0: i32) -> (i32, i32) {
    %c0_i32 = arith.constant 0 : i32
    %c0_i32_0 = arith.constant 0 : i32
    %c0_i32_1 = arith.constant 0 : i32
    return %c0_i32, %c0_i32_0 : i32, i32
  }
  func.func @transform_8(%arg0: i32) -> (i32, i32) {
    %c0_i32 = arith.constant 0 : i32
    %c0_i32_0 = arith.constant 0 : i32
    %c0_i32_1 = arith.constant 0 : i32
    return %c0_i32, %c0_i32_0 : i32, i32
  }
  func.func @transform_9(%arg0: i32) -> (i32, i32, i32) {
    %c0_i32 = arith.constant 0 : i32
    %c0_i32_0 = arith.constant 0 : i32
    %c0_i32_1 = arith.constant 0 : i32
    return %arg0, %c0_i32, %c0_i32_0 : i32, i32, i32
  }
  func.func @transform_10(%arg0: i32) -> (i32, i32, i32) {
    %c0_i32 = arith.constant 0 : i32
    %c0_i32_0 = arith.constant 0 : i32
    %c0_i32_1 = arith.constant 0 : i32
    return %arg0, %c0_i32, %c0_i32_0 : i32, i32, i32
  }
}

module attributes {stable_mosaic.version = 11 : i64} {
  func.func @_ln_kernel(%arg0: i32, %arg1: memref<32x64xf32, #tpu.memory_space<vmem>>, %arg2: memref<1x64xf32, #tpu.memory_space<vmem>>, %arg3: memref<1x64xf32, #tpu.memory_space<vmem>>, %arg4: memref<32x64xf32, #tpu.memory_space<vmem>>) attributes {dimension_semantics = [#tpu.dimension_semantics<parallel>], iteration_bounds = array<i64: 1>, scalar_prefetch = 0 : i64, scratch_operands = 0 : i64, tpu.core_type = #tpu.core_type<tc>, window_params = [{transform_indices = @transform_0, window_bounds = array<i64: 32, 64>}, {pipeline_mode = #tpu.pipeline_mode<synchronous>, transform_indices = @transform_1, window_bounds = array<i64: 1, 64>}, {pipeline_mode = #tpu.pipeline_mode<synchronous>, transform_indices = @transform_2, window_bounds = array<i64: 1, 64>}, {transform_indices = @transform_3, window_bounds = array<i64: 32, 64>}]} {
    %c0 = arith.constant 0 : index
    %c0_0 = arith.constant 0 : index
    %0 = vector.load %arg1[%c0, %c0_0] : memref<32x64xf32, #tpu.memory_space<vmem>>, vector<32x64xf32>
    %cst = arith.constant dense<0.000000e+00> : vector<32xf32>
    %1 = vector.multi_reduction <add>, %0, %cst [1] : vector<32x64xf32> to vector<32xf32>
    %2 = vector.shape_cast %1 : vector<32xf32> to vector<32x1xf32>
    %cst_1 = arith.constant 6.400000e+01 : f32
    %3 = vector.broadcast %cst_1 : f32 to vector<32x1xf32>
    %4 = arith.divf %2, %3 : vector<32x1xf32>
    %5 = vector.broadcast %4 : vector<32x1xf32> to vector<32x64xf32>
    %6 = arith.subf %0, %5 : vector<32x64xf32>
    %7 = arith.mulf %6, %6 : vector<32x64xf32>
    %cst_2 = arith.constant dense<0.000000e+00> : vector<32xf32>
    %8 = vector.multi_reduction <add>, %7, %cst_2 [1] : vector<32x64xf32> to vector<32xf32>
    %9 = vector.shape_cast %8 : vector<32xf32> to vector<32x1xf32>
    %cst_3 = arith.constant 6.400000e+01 : f32
    %10 = vector.broadcast %cst_3 : f32 to vector<32x1xf32>
    %11 = arith.divf %9, %10 : vector<32x1xf32>
    %12 = vector.broadcast %4 : vector<32x1xf32> to vector<32x64xf32>
    %13 = arith.subf %0, %12 : vector<32x64xf32>
    %cst_4 = arith.constant 9.99999974E-6 : f32
    %14 = vector.broadcast %cst_4 : f32 to vector<32x1xf32>
    %15 = arith.addf %11, %14 : vector<32x1xf32>
    %16 = math.rsqrt %15 : vector<32x1xf32>
    %17 = vector.broadcast %16 : vector<32x1xf32> to vector<32x64xf32>
    %18 = arith.mulf %13, %17 : vector<32x64xf32>
    %c0_5 = arith.constant 0 : index
    %c0_6 = arith.constant 0 : index
    %19 = vector.load %arg2[%c0_5, %c0_6] : memref<1x64xf32, #tpu.memory_space<vmem>>, vector<1x64xf32>
    %20 = vector.broadcast %19 : vector<1x64xf32> to vector<32x64xf32>
    %21 = arith.mulf %18, %20 : vector<32x64xf32>
    %c0_7 = arith.constant 0 : index
    %c0_8 = arith.constant 0 : index
    %22 = vector.load %arg3[%c0_7, %c0_8] : memref<1x64xf32, #tpu.memory_space<vmem>>, vector<1x64xf32>
    %23 = vector.broadcast %22 : vector<1x64xf32> to vector<32x64xf32>
    %24 = arith.addf %21, %23 : vector<32x64xf32>
    %c0_9 = arith.constant 0 : index
    %c0_10 = arith.constant 0 : index
    %25 = vector.load %arg4[%c0_9, %c0_10] : memref<32x64xf32, #tpu.memory_space<vmem>>, vector<32x64xf32>
    tpu.vector_store %arg4[%c0_9, %c0_10], %24 {strides = array<i32>} : memref<32x64xf32, #tpu.memory_space<vmem>>, vector<32x64xf32>,
    return
  }
  func.func @transform_0(%arg0: i32) -> (i32, i32) {
    %c0_i32 = arith.constant 0 : i32
    %c0_i32_0 = arith.constant 0 : i32
    return %arg0, %c0_i32 : i32, i32
  }
  func.func @transform_1(%arg0: i32) -> (i32, i32) {
    %c0_i32 = arith.constant 0 : i32
    %c0_i32_0 = arith.constant 0 : i32
    %c0_i32_1 = arith.constant 0 : i32
    return %c0_i32, %c0_i32_0 : i32, i32
  }
  func.func @transform_2(%arg0: i32) -> (i32, i32) {
    %c0_i32 = arith.constant 0 : i32
    %c0_i32_0 = arith.constant 0 : i32
    %c0_i32_1 = arith.constant 0 : i32
    return %c0_i32, %c0_i32_0 : i32, i32
  }
  func.func @transform_3(%arg0: i32) -> (i32, i32) {
    %c0_i32 = arith.constant 0 : i32
    %c0_i32_0 = arith.constant 0 : i32
    return %arg0, %c0_i32 : i32, i32
  }
}

</mosaic_0001>

<llo_original>
// kernel: decoder_forward.28
$region0: #{decoder_forward.28}
  #allocation0 [shape = 'u32[]', space=smem, size = 0x4, offset = 0x4, fixed_abs, tag = 'smem constant byte address 0x4 - core index']
  #allocation1 [shape = 'u32[144,128]{1,0:T(1,128)}', space=vmem, size = 0x12000, scoped, tag = 'internal scratch']
  %s0 = inlined_call_operand.vmem [shape: f32[32,64], index: 0, kind: input, shape index: {}]
  %s1 = inlined_call_operand.vmem [shape: f32[32,64], index: 1, kind: input, shape index: {}]
  %s2 = inlined_call_operand.vmem [shape: f32[1,64], index: 2, kind: input, shape index: {}]
  %s3 = inlined_call_operand.vmem [shape: f32[1,64], index: 3, kind: input, shape index: {}]
  %s4 = inlined_call_operand.vmem [shape: bf16[64,64], index: 4, kind: input, shape index: {}]
  %s5 = inlined_call_operand.vmem [shape: bf16[64,64], index: 5, kind: input, shape index: {}]
  %s6 = inlined_call_operand.vmem [shape: f32[1,64], index: 6, kind: input, shape index: {}]
  %s7 = inlined_call_operand.vmem [shape: f32[1,64], index: 7, kind: input, shape index: {}]
  %s8 = inlined_call_operand.vmem [shape: f32[32,64], index: 8, kind: output, shape index: {0}]
  %s9 = inlined_call_operand.vmem [shape: f32[32,64], index: 9, kind: output, shape index: {1}]
  %10 = xla_tuple %s8, %s9
  %s11 = sld [smem:[#allocation0]]
  $region50: #{decoder_forward.28} parent=0
    _
  %s13 = ssub.s32 1, %s11
  %s14 = scalar_select 0, %s13, %s11
  // Predicated region
  $region2: #{decoder_forward.28} parent=0 // pred_check
    _
  $region3: #{decoder_forward.28} parent=0 // pred_check_branch
    %16 = sbr.rel (0) target = $region5
  $region4: #{decoder_forward.28} parent=0 // pred_region
    _
  $region5: #{decoder_forward.28} parent=0 // pred_fallthru
    _
  // Predicated region
  $region6: #{decoder_forward.28} parent=0 // pred_check
    _
  $region7: #{decoder_forward.28} parent=0 // pred_check_branch
    %18 = sbr.rel (0) target = $region9
  $region8: #{decoder_forward.28} parent=0 // pred_region
    _
  $region9: #{decoder_forward.28} parent=0 // pred_fallthru
    _
  // Predicated region
  $region10: #{decoder_forward.28} parent=0 // pred_check
    _
  $region11: #{decoder_forward.28} parent=0 // pred_check_branch
    %20 = sbr.rel (0) target = $region13
  $region12: #{decoder_forward.28} parent=0 // pred_region
    _
  $region13: #{decoder_forward.28} parent=0 // pred_fallthru
    _
  // Predicated region
  $region14: #{decoder_forward.28} parent=0 // pred_check
    _
  $region15: #{decoder_forward.28} parent=0 // pred_check_branch
    %22 = sbr.rel (0) target = $region17
  $region16: #{decoder_forward.28} parent=0 // pred_region
    _
  $region17: #{decoder_forward.28} parent=0 // pred_fallthru
    _
  // Predicated region
  $region18: #{decoder_forward.28} parent=0 // pred_check
    _
  $region19: #{decoder_forward.28} parent=0 // pred_check_branch
    %24 = sbr.rel (0) target = $region21
  $region20: #{decoder_forward.28} parent=0 // pred_region
    _
  $region21: #{decoder_forward.28} parent=0 // pred_fallthru
    _
  // Predicated region
  $region22: #{decoder_forward.28} parent=0 // pred_check
    _
  $region23: #{decoder_forward.28} parent=0 // pred_check_branch
    %26 = sbr.rel (0) target = $region25
  $region24: #{decoder_forward.28} parent=0 // pred_region
    _
  $region25: #{decoder_forward.28} parent=0 // pred_fallthru
    _
  // Predicated region
  $region26: #{decoder_forward.28} parent=0 // pred_check
    _
  $region27: #{decoder_forward.28} parent=0 // pred_check_branch
    %28 = sbr.rel (0) target = $region29
  $region28: #{decoder_forward.28} parent=0 // pred_region
    _
  $region29: #{decoder_forward.28} parent=0 // pred_fallthru
    _
  // Predicated region
  $region30: #{decoder_forward.28} parent=0 // pred_check
    _
  $region31: #{decoder_forward.28} parent=0 // pred_check_branch
    %30 = sbr.rel (0) target = $region33
  $region32: #{decoder_forward.28} parent=0 // pred_region
    _
  $region33: #{decoder_forward.28} parent=0 // pred_fallthru
    _
  %v32 = vld [vmem:[%s0] sm:$0xff]
  %v33 = vld [vmem:[%s0 + $0x8] sm:$0xff]
  %v34 = vld [vmem:[%s0 + $0x10] sm:$0xff]
  %v35 = vld [vmem:[%s0 + $0x18] sm:$0xff]
  %v36 = vld [vmem:[%s1] sm:$0xff]
  %v37 = vld [vmem:[%s1 + $0x8] sm:$0xff]
  %v38 = vld [vmem:[%s1 + $0x10] sm:$0xff]
  %v39 = vld [vmem:[%s1 + $0x18] sm:$0xff]
  %v40 = vadd.f32 %v32, %v36
  %v41 = vadd.f32 %v33, %v37
  %v42 = vadd.f32 %v34, %v38
  %v43 = vadd.f32 %v35, %v39
  %v44 = vpack.c.bf16 %v33, %v32
  %v45 = vpack.c.bf16 %v35, %v34
  %v46 = vpack.c.bf16 %v41, %v40
  %v47 = vpack.c.bf16 %v43, %v42
  %v48 = vld [vmem:[%s4] sm:$0xf]
  %v49 = vld [vmem:[%s4 + $0x4] sm:$0xf]
  %v50 = vld [vmem:[%s4 + $0x8] sm:$0xf]
  %v51 = vld [vmem:[%s4 + $0xc] sm:$0xf]
  %v52 = vld [vmem:[%s4 + $0x10] sm:$0xf]
  %v53 = vld [vmem:[%s4 + $0x14] sm:$0xf]
  %v54 = vld [vmem:[%s4 + $0x18] sm:$0xf]
  %v55 = vld [vmem:[%s4 + $0x1c] sm:$0xf]
  %v56 = vld [vmem:[%s6] sm:$0x1]
  %v58 = vlaneseq
  %v59 = vshrl.u32 %v58, 7
  %v60 = vsub.s32 0, %v59
  %v61 = vrot.slane %v56, %v60
  %v71 = vunpack.c.l.b16 %v48
  %v72 = vunpack.c.l.b16 %v49
  %v73 = vunpack.c.l.b16 %v50
  %v74 = vunpack.c.l.b16 %v51
  %v75 = vunpack.c.l.b16 %v52
  %v76 = vunpack.c.l.b16 %v53
  %v77 = vunpack.c.l.b16 %v54
  %v78 = vunpack.c.l.b16 %v55
  %v79 = vpack.c.b16 %v72, %v71
  %v80 = vpack.c.b16 %v74, %v73
  %v81 = vpack.c.b16 %v76, %v75
  %v82 = vpack.c.b16 %v78, %v77
  %vm87 = vcmask 523264
  %v89 = vsel %vm87, %v46, 0
  %v92 = vsel %vm87, %v47, 0
  %94 = vmatprep.subr.bf16.mxu0 0
  %95 = vmatpush1.bf16.msra.mxu0 %v79
  %96 = vmatprep.subr.bf16.mxu0 0
  %97 = vmatpush1.bf16.msra.mxu0 %v80
  %98 = vmatprep.subr.bf16.mxu0 0
  %99 = vmatpush1.bf16.msra.mxu0 %v81
  %100 = vmatprep.subr.bf16.mxu0 0
  %101 = vmatpush1.bf16.msra.mxu0 %v82
  %102 = vmatprep.subr.bf16.mxu0 0
  %103 = vmatpush1.bf16.msra.mxu0 0
  %104 = vmatprep.subr.bf16.mxu0 0
  %105 = vmatpush1.bf16.msra.mxu0 0
  %106 = vmatprep.subr.bf16.mxu0 0
  %107 = vmatpush1.bf16.msra.mxu0 0
  %108 = vmatprep.subr.bf16.mxu0 0
  %109 = vmatpush1.bf16.msra.mxu0 0
  %110 = vmatprep.subr.bf16.mxu0 0
  %111 = vmatpush1.bf16.msra.mxu0 0
  %112 = vmatprep.subr.bf16.mxu0 0
  %113 = vmatpush1.bf16.msra.mxu0 0
  %114 = vmatprep.subr.bf16.mxu0 0
  %115 = vmatpush1.bf16.msra.mxu0 0
  %116 = vmatprep.subr.bf16.mxu0 0
  %117 = vmatpush1.bf16.msra.mxu0 0
  %118 = vmatprep.subr.bf16.mxu0 0
  %119 = vmatpush1.bf16.msra.mxu0 0
  %120 = vmatprep.subr.bf16.mxu0 0
  %121 = vmatpush1.bf16.msra.mxu0 0
  %122 = vmatprep.subr.bf16.mxu0 0
  %123 = vmatpush1.bf16.msra.mxu0 0
  %124 = vmatprep.subr.bf16.mxu0 0
  %125 = vmatpush1.bf16.msra.mxu0 0
  %126 = vmatprep.mubr.bf16.mxu0 0
  %127 = vmatmul.mubr.bf16.gmra.mrb[0].mxu0 %v89
  %v128 = vpop.f32.mrb[0].mxu0
  %v129 = vadd.f32 %v61, %v128
  %v130 = vpop.f32.mrb[0].mxu0
  %v131 = vpop.f32.mrb[0].mxu0
  %v132 = vadd.f32 %v61, %v131
  %v133 = vpop.f32.mrb[0].mxu0
  %134 = vmatprep.mubr.bf16.mxu0 0
  %135 = vmatmul.mubr.bf16.gmra.mrb[0].mxu0 %v92
  %v136 = vpop.f32.mrb[0].mxu0
  %v137 = vadd.f32 %v61, %v136
  %v138 = vpop.f32.mrb[0].mxu0
  %v139 = vpop.f32.mrb[0].mxu0
  %v140 = vadd.f32 %v61, %v139
  %v141 = vpop.f32.mrb[0].mxu0
  %142 = vdwg.mxu0
  %143 = vst.msk [vmem:[%s8] sm:$0xff] %vm87, %v129
  %144 = vst.msk [vmem:[%s8 + $0x8] sm:$0xff] %vm87, %v132
  %145 = vst.msk [vmem:[%s8 + $0x10] sm:$0xff] %vm87, %v137
  %146 = vst.msk [vmem:[%s8 + $0x18] sm:$0xff] %vm87, %v140
  %v147 = vld [vmem:[%s5] sm:$0xf]
  %v148 = vld [vmem:[%s5 + $0x4] sm:$0xf]
  %v149 = vld [vmem:[%s5 + $0x8] sm:$0xf]
  %v150 = vld [vmem:[%s5 + $0xc] sm:$0xf]
  %v151 = vld [vmem:[%s5 + $0x10] sm:$0xf]
  %v152 = vld [vmem:[%s5 + $0x14] sm:$0xf]
  %v153 = vld [vmem:[%s5 + $0x18] sm:$0xf]
  %v154 = vld [vmem:[%s5 + $0x1c] sm:$0xf]
  %v155 = vld [vmem:[%s7] sm:$0x1]
  %v157 = vlaneseq
  %v158 = vshrl.u32 %v157, 7
  %v159 = vsub.s32 0, %v158
  %v160 = vrot.slane %v155, %v159
  %v170 = vunpack.c.l.b16 %v147
  %v171 = vunpack.c.l.b16 %v148
  %v172 = vunpack.c.l.b16 %v149
  %v173 = vunpack.c.l.b16 %v150
  %v174 = vunpack.c.l.b16 %v151
  %v175 = vunpack.c.l.b16 %v152
  %v176 = vunpack.c.l.b16 %v153
  %v177 = vunpack.c.l.b16 %v154
  %v178 = vpack.c.b16 %v171, %v170
  %v179 = vpack.c.b16 %v173, %v172
  %v180 = vpack.c.b16 %v175, %v174
  %v181 = vpack.c.b16 %v177, %v176
  %v187 = vsel %vm87, %v44, 0
  %v190 = vsel %vm87, %v45, 0
  %192 = vmatprep.subr.bf16.mxu0 0
  %193 = vmatpush1.bf16.msra.mxu0 %v178
  %194 = vmatprep.subr.bf16.mxu0 0
  %195 = vmatpush1.bf16.msra.mxu0 %v179
  %196 = vmatprep.subr.bf16.mxu0 0
  %197 = vmatpush1.bf16.msra.mxu0 %v180
  %198 = vmatprep.subr.bf16.mxu0 0
  %199 = vmatpush1.bf16.msra.mxu0 %v181
  %200 = vmatprep.subr.bf16.mxu0 0
  %201 = vmatpush1.bf16.msra.mxu0 0
  %202 = vmatprep.subr.bf16.mxu0 0
  %203 = vmatpush1.bf16.msra.mxu0 0
  %204 = vmatprep.subr.bf16.mxu0 0
  %205 = vmatpush1.bf16.msra.mxu0 0
  %206 = vmatprep.subr.bf16.mxu0 0
  %207 = vmatpush1.bf16.msra.mxu0 0
  %208 = vmatprep.subr.bf16.mxu0 0
  %209 = vmatpush1.bf16.msra.mxu0 0
  %210 = vmatprep.subr.bf16.mxu0 0
  %211 = vmatpush1.bf16.msra.mxu0 0
  %212 = vmatprep.subr.bf16.mxu0 0
  %213 = vmatpush1.bf16.msra.mxu0 0
  %214 = vmatprep.subr.bf16.mxu0 0
  %215 = vmatpush1.bf16.msra.mxu0 0
  %216 = vmatprep.subr.bf16.mxu0 0
  %217 = vmatpush1.bf16.msra.mxu0 0
  %218 = vmatprep.subr.bf16.mxu0 0
  %219 = vmatpush1.bf16.msra.mxu0 0
  %220 = vmatprep.subr.bf16.mxu0 0
  %221 = vmatpush1.bf16.msra.mxu0 0
  %222 = vmatprep.subr.bf16.mxu0 0
  %223 = vmatpush1.bf16.msra.mxu0 0
  %224 = vmatprep.mubr.bf16.mxu0 0
  %225 = vmatmul.mubr.bf16.gmra.mrb[0].mxu0 %v187
  %v226 = vpop.f32.mrb[0].mxu0
  %v227 = vadd.f32 %v160, %v226
  %v228 = vpop.f32.mrb[0].mxu0
  %v229 = vpop.f32.mrb[0].mxu0
  %v230 = vadd.f32 %v160, %v229
  %v231 = vpop.f32.mrb[0].mxu0
  %232 = vmatprep.mubr.bf16.mxu0 0
  %233 = vmatmul.mubr.bf16.gmra.mrb[0].mxu0 %v190
  %v234 = vpop.f32.mrb[0].mxu0
  %v235 = vadd.f32 %v160, %v234
  %v236 = vpop.f32.mrb[0].mxu0
  %v237 = vpop.f32.mrb[0].mxu0
  %v238 = vadd.f32 %v160, %v237
  %v239 = vpop.f32.mrb[0].mxu0
  %240 = vdwg.mxu0
  %241 = vst.msk [vmem:[%s9] sm:$0xff] %vm87, %v227
  %242 = vst.msk [vmem:[%s9 + $0x8] sm:$0xff] %vm87, %v230
  %243 = vst.msk [vmem:[%s9 + $0x10] sm:$0xff] %vm87, %v235
  %244 = vst.msk [vmem:[%s9 + $0x18] sm:$0xff] %vm87, %v238
  // Predicated region
  $region34: #{decoder_forward.28} parent=0 // pred_check
    _
  $region35: #{decoder_forward.28} parent=0 // pred_check_branch
    %246 = sbr.rel (0) target = $region37
  $region36: #{decoder_forward.28} parent=0 // pred_region
    _
  $region37: #{decoder_forward.28} parent=0 // pred_fallthru
    _
  // Predicated region
  $region38: #{decoder_forward.28} parent=0 // pred_check
    _
  $region39: #{decoder_forward.28} parent=0 // pred_check_branch
    %248 = sbr.rel (0) target = $region41
  $region40: #{decoder_forward.28} parent=0 // pred_region
    _
  $region41: #{decoder_forward.28} parent=0 // pred_fallthru
    _
  // Predicated region
  $region42: #{decoder_forward.28} parent=0 // pred_check
    _
  $region43: #{decoder_forward.28} parent=0 // pred_check_branch
    %250 = sbr.rel (0) target = $region45
  $region44: #{decoder_forward.28} parent=0 // pred_region
    _
  $region45: #{decoder_forward.28} parent=0 // pred_fallthru
    _
  // Predicated region
  $region46: #{decoder_forward.28} parent=0 // pred_check
    _
  $region47: #{decoder_forward.28} parent=0 // pred_check_branch
    %252 = sbr.rel (0) target = $region49
  $region48: #{decoder_forward.28} parent=0 // pred_region
    _
  $region49: #{decoder_forward.28} parent=0 // pred_fallthru
    _

// kernel: decoder_forward.27
$region0: #{decoder_forward.27}
  #allocation0 [shape = 'u32[]', space=smem, size = 0x4, offset = 0x4, fixed_abs, tag = 'smem constant byte address 0x4 - core index']
  #allocation1 [shape = 'u32[144,128]{1,0:T(1,128)}', space=vmem, size = 0x12000, scoped, tag = 'internal scratch']
  %s0 = inlined_call_operand.vmem [shape: f32[32,64], index: 0, kind: input, shape index: {}]
  %s1 = inlined_call_operand.vmem [shape: f32[32,64], index: 1, kind: input, shape index: {}]
  %s2 = inlined_call_operand.vmem [shape: f32[1,64], index: 2, kind: input, shape index: {}]
  %s3 = inlined_call_operand.vmem [shape: f32[1,64], index: 3, kind: input, shape index: {}]
  %s4 = inlined_call_operand.vmem [shape: bf16[64,64], index: 4, kind: input, shape index: {}]
  %s5 = inlined_call_operand.vmem [shape: f32[1,64], index: 5, kind: input, shape index: {}]
  %s6 = inlined_call_operand.vmem [shape: f32[32,64], index: 6, kind: output, shape index: {}]
  %s7 = sld [smem:[#allocation0]]
  $region34: #{decoder_forward.27} parent=0
    _
  %s9 = ssub.s32 1, %s7
  %s10 = scalar_select 0, %s9, %s7
  // Predicated region
  $region2: #{decoder_forward.27} parent=0 // pred_check
    _
  $region3: #{decoder_forward.27} parent=0 // pred_check_branch
    %12 = sbr.rel (0) target = $region5
  $region4: #{decoder_forward.27} parent=0 // pred_region
    _
  $region5: #{decoder_forward.27} parent=0 // pred_fallthru
    _
  // Predicated region
  $region6: #{decoder_forward.27} parent=0 // pred_check
    _
  $region7: #{decoder_forward.27} parent=0 // pred_check_branch
    %14 = sbr.rel (0) target = $region9
  $region8: #{decoder_forward.27} parent=0 // pred_region
    _
  $region9: #{decoder_forward.27} parent=0 // pred_fallthru
    _
  // Predicated region
  $region10: #{decoder_forward.27} parent=0 // pred_check
    _
  $region11: #{decoder_forward.27} parent=0 // pred_check_branch
    %16 = sbr.rel (0) target = $region13
  $region12: #{decoder_forward.27} parent=0 // pred_region
    _
  $region13: #{decoder_forward.27} parent=0 // pred_fallthru
    _
  // Predicated region
  $region14: #{decoder_forward.27} parent=0 // pred_check
    _
  $region15: #{decoder_forward.27} parent=0 // pred_check_branch
    %18 = sbr.rel (0) target = $region17
  $region16: #{decoder_forward.27} parent=0 // pred_region
    _
  $region17: #{decoder_forward.27} parent=0 // pred_fallthru
    _
  // Predicated region
  $region18: #{decoder_forward.27} parent=0 // pred_check
    _
  $region19: #{decoder_forward.27} parent=0 // pred_check_branch
    %20 = sbr.rel (0) target = $region21
  $region20: #{decoder_forward.27} parent=0 // pred_region
    _
  $region21: #{decoder_forward.27} parent=0 // pred_fallthru
    _
  // Predicated region
  $region22: #{decoder_forward.27} parent=0 // pred_check
    _
  $region23: #{decoder_forward.27} parent=0 // pred_check_branch
    %22 = sbr.rel (0) target = $region25
  $region24: #{decoder_forward.27} parent=0 // pred_region
    _
  $region25: #{decoder_forward.27} parent=0 // pred_fallthru
    _
  %v24 = vld [vmem:[%s0] sm:$0xff]
  %v25 = vld [vmem:[%s0 + $0x8] sm:$0xff]
  %v26 = vld [vmem:[%s0 + $0x10] sm:$0xff]
  %v27 = vld [vmem:[%s0 + $0x18] sm:$0xff]
  %vm28 = vcmask 523264
  %v29 = vsel %vm28, %v24, 0.0
  %30 = vadd.xlane.f32.xlu0 %v29
  %v31 = vpop.xlane.xlu0 %30
  %v32 = vsel %vm28, %v25, 0.0
  %33 = vadd.xlane.f32.xlu0 %v32
  %v34 = vpop.xlane.xlu0 %33
  %v35 = vsel %vm28, %v26, 0.0
  %36 = vadd.xlane.f32.xlu0 %v35
  %v37 = vpop.xlane.xlu0 %36
  %v38 = vsel %vm28, %v27, 0.0
  %39 = vadd.xlane.f32.xlu0 %v38
  %v40 = vpop.xlane.xlu0 %39
  %v41 = vrcp.pop 64.0
  %v42 = vmul.f32 %v31, %v41
  %v43 = vmul.f32 %v34, %v41
  %v44 = vmul.f32 %v37, %v41
  %v45 = vmul.f32 %v40, %v41
  %v46 = vsub.f32 %v24, %v42
  %v47 = vsub.f32 %v25, %v43
  %v48 = vsub.f32 %v26, %v44
  %v49 = vsub.f32 %v27, %v45
  %v50 = vmul.f32 %v46, %v46
  %v51 = vmul.f32 %v47, %v47
  %v52 = vmul.f32 %v48, %v48
  %v53 = vmul.f32 %v49, %v49
  %v54 = vsel %vm28, %v50, 0.0
  %55 = vadd.xlane.f32.xlu0 %v54
  %v56 = vpop.xlane.xlu0 %55
  %v57 = vsel %vm28, %v51, 0.0
  %58 = vadd.xlane.f32.xlu0 %v57
  %v59 = vpop.xlane.xlu0 %58
  %v60 = vsel %vm28, %v52, 0.0
  %61 = vadd.xlane.f32.xlu0 %v60
  %v62 = vpop.xlane.xlu0 %61
  %v63 = vsel %vm28, %v53, 0.0
  %64 = vadd.xlane.f32.xlu0 %v63
  %v65 = vpop.xlane.xlu0 %64
  %v66 = vmul.f32 %v56, %v41
  %v67 = vmul.f32 %v59, %v41
  %v68 = vmul.f32 %v62, %v41
  %v69 = vmul.f32 %v65, %v41
  %v70 = vadd.f32 %v66, 1e-05
  %v71 = vadd.f32 %v67, 1e-05
  %v72 = vadd.f32 %v68, 1e-05
  %v73 = vadd.f32 %v69, 1e-05
  %v74 = vrsqrt.pop %v70
  %v75 = vrsqrt.pop %v71
  %v76 = vrsqrt.pop %v72
  %v77 = vrsqrt.pop %v73
  %v78 = vmul.f32 %v46, %v74
  %v79 = vmul.f32 %v47, %v75
  %v80 = vmul.f32 %v48, %v76
  %v81 = vmul.f32 %v49, %v77
  %v82 = vld [vmem:[%s2] sm:$0x1]
  %v84 = vlaneseq
  %v85 = vshrl.u32 %v84, 7
  %v86 = vsub.s32 0, %v85
  %v87 = vrot.slane %v82, %v86
  %v89 = vmul.f32 %v78, %v87
  %v90 = vmul.f32 %v79, %v87
  %v91 = vmul.f32 %v80, %v87
  %v92 = vmul.f32 %v81, %v87
  %v93 = vld [vmem:[%s3] sm:$0x1]
  %v95 = vlaneseq
  %v96 = vshrl.u32 %v95, 7
  %v97 = vsub.s32 0, %v96
  %v98 = vrot.slane %v93, %v97
  %v100 = vadd.f32 %v89, %v98
  %v101 = vadd.f32 %v90, %v98
  %v102 = vadd.f32 %v91, %v98
  %v103 = vadd.f32 %v92, %v98
  %v104 = vld [vmem:[%s1] sm:$0xff]
  %v105 = vld [vmem:[%s1 + $0x8] sm:$0xff]
  %v106 = vld [vmem:[%s1 + $0x10] sm:$0xff]
  %v107 = vld [vmem:[%s1 + $0x18] sm:$0xff]
  %v108 = vadd.f32 %v100, %v104
  %v109 = vadd.f32 %v101, %v105
  %v110 = vadd.f32 %v102, %v106
  %v111 = vadd.f32 %v103, %v107
  %v112 = vpack.c.bf16 %v109, %v108
  %v113 = vpack.c.bf16 %v111, %v110
  %v114 = vld [vmem:[%s4] sm:$0xf]
  %v115 = vld [vmem:[%s4 + $0x4] sm:$0xf]
  %v116 = vld [vmem:[%s4 + $0x8] sm:$0xf]
  %v117 = vld [vmem:[%s4 + $0xc] sm:$0xf]
  %v118 = vld [vmem:[%s4 + $0x10] sm:$0xf]
  %v119 = vld [vmem:[%s4 + $0x14] sm:$0xf]
  %v120 = vld [vmem:[%s4 + $0x18] sm:$0xf]
  %v121 = vld [vmem:[%s4 + $0x1c] sm:$0xf]
  %v122 = vld [vmem:[%s5] sm:$0x1]
  %v124 = vlaneseq
  %v125 = vshrl.u32 %v124, 7
  %v126 = vsub.s32 0, %v125
  %v127 = vrot.slane %v122, %v126
  %v137 = vunpack.c.l.b16 %v114
  %v138 = vunpack.c.l.b16 %v115
  %v139 = vunpack.c.l.b16 %v116
  %v140 = vunpack.c.l.b16 %v117
  %v141 = vunpack.c.l.b16 %v118
  %v142 = vunpack.c.l.b16 %v119
  %v143 = vunpack.c.l.b16 %v120
  %v144 = vunpack.c.l.b16 %v121
  %v145 = vpack.c.b16 %v138, %v137
  %v146 = vpack.c.b16 %v140, %v139
  %v147 = vpack.c.b16 %v142, %v141
  %v148 = vpack.c.b16 %v144, %v143
  %v154 = vsel %vm28, %v112, 0
  %v157 = vsel %vm28, %v113, 0
  %159 = vmatprep.subr.bf16.mxu0 0
  %160 = vmatpush1.bf16.msra.mxu0 %v145
  %161 = vmatprep.subr.bf16.mxu0 0
  %162 = vmatpush1.bf16.msra.mxu0 %v146
  %163 = vmatprep.subr.bf16.mxu0 0
  %164 = vmatpush1.bf16.msra.mxu0 %v147
  %165 = vmatprep.subr.bf16.mxu0 0
  %166 = vmatpush1.bf16.msra.mxu0 %v148
  %167 = vmatprep.subr.bf16.mxu0 0
  %168 = vmatpush1.bf16.msra.mxu0 0
  %169 = vmatprep.subr.bf16.mxu0 0
  %170 = vmatpush1.bf16.msra.mxu0 0
  %171 = vmatprep.subr.bf16.mxu0 0
  %172 = vmatpush1.bf16.msra.mxu0 0
  %173 = vmatprep.subr.bf16.mxu0 0
  %174 = vmatpush1.bf16.msra.mxu0 0
  %175 = vmatprep.subr.bf16.mxu0 0
  %176 = vmatpush1.bf16.msra.mxu0 0
  %177 = vmatprep.subr.bf16.mxu0 0
  %178 = vmatpush1.bf16.msra.mxu0 0
  %179 = vmatprep.subr.bf16.mxu0 0
  %180 = vmatpush1.bf16.msra.mxu0 0
  %181 = vmatprep.subr.bf16.mxu0 0
  %182 = vmatpush1.bf16.msra.mxu0 0
  %183 = vmatprep.subr.bf16.mxu0 0
  %184 = vmatpush1.bf16.msra.mxu0 0
  %185 = vmatprep.subr.bf16.mxu0 0
  %186 = vmatpush1.bf16.msra.mxu0 0
  %187 = vmatprep.subr.bf16.mxu0 0
  %188 = vmatpush1.bf16.msra.mxu0 0
  %189 = vmatprep.subr.bf16.mxu0 0
  %190 = vmatpush1.bf16.msra.mxu0 0
  %191 = vmatprep.mubr.bf16.mxu0 0
  %192 = vmatmul.mubr.bf16.gmra.mrb[0].mxu0 %v154
  %v193 = vpop.f32.mrb[0].mxu0
  %v194 = vadd.f32 %v127, %v193
  %v195 = vpop.f32.mrb[0].mxu0
  %v196 = vpop.f32.mrb[0].mxu0
  %v197 = vadd.f32 %v127, %v196
  %v198 = vpop.f32.mrb[0].mxu0
  %199 = vmatprep.mubr.bf16.mxu0 0
  %200 = vmatmul.mubr.bf16.gmra.mrb[0].mxu0 %v157
  %v201 = vpop.f32.mrb[0].mxu0
  %v202 = vadd.f32 %v127, %v201
  %v203 = vpop.f32.mrb[0].mxu0
  %v204 = vpop.f32.mrb[0].mxu0
  %v205 = vadd.f32 %v127, %v204
  %v206 = vpop.f32.mrb[0].mxu0
  %207 = vdwg.mxu0
  %208 = vst.msk [vmem:[%s6] sm:$0xff] %vm28, %v194
  %209 = vst.msk [vmem:[%s6 + $0x8] sm:$0xff] %vm28, %v197
  %210 = vst.msk [vmem:[%s6 + $0x10] sm:$0xff] %vm28, %v202
  %211 = vst.msk [vmem:[%s6 + $0x18] sm:$0xff] %vm28, %v205
  // Predicated region
  $region26: #{decoder_forward.27} parent=0 // pred_check
    _
  $region27: #{decoder_forward.27} parent=0 // pred_check_branch
    %213 = sbr.rel (0) target = $region29
  $region28: #{decoder_forward.27} parent=0 // pred_region
    _
  $region29: #{decoder_forward.27} parent=0 // pred_fallthru
    _
  // Predicated region
  $region30: #{decoder_forward.27} parent=0 // pred_check
    _
  $region31: #{decoder_forward.27} parent=0 // pred_check_branch
    %215 = sbr.rel (0) target = $region33
  $region32: #{decoder_forward.27} parent=0 // pred_region
    _
  $region33: #{decoder_forward.27} parent=0 // pred_fallthru
    _

// kernel: decoder_forward.25
$region0: #{decoder_forward.25}
  #allocation0 [shape = 'u32[]', space=smem, size = 0x4, offset = 0x4, fixed_abs, tag = 'smem constant byte address 0x4 - core index']
  #allocation1 [shape = 'u32[144,128]{1,0:T(1,128)}', space=vmem, size = 0x12000, scoped, tag = 'internal scratch']
  %s0 = inlined_call_operand.vmem [shape: f32[32,64], index: 0, kind: input, shape index: {}]
  %s1 = inlined_call_operand.vmem [shape: f32[32,64], index: 1, kind: input, shape index: {}]
  %s2 = inlined_call_operand.vmem [shape: f32[1,64], index: 2, kind: input, shape index: {}]
  %s3 = inlined_call_operand.vmem [shape: f32[1,64], index: 3, kind: input, shape index: {}]
  %s4 = inlined_call_operand.vmem [shape: bf16[64,64], index: 4, kind: input, shape index: {}]
  %s5 = inlined_call_operand.vmem [shape: bf16[64,64], index: 5, kind: input, shape index: {}]
  %s6 = inlined_call_operand.vmem [shape: bf16[64,64], index: 6, kind: input, shape index: {}]
  %s7 = inlined_call_operand.vmem [shape: f32[1,64], index: 7, kind: input, shape index: {}]
  %s8 = inlined_call_operand.vmem [shape: f32[1,64], index: 8, kind: input, shape index: {}]
  %s9 = inlined_call_operand.vmem [shape: f32[1,64], index: 9, kind: input, shape index: {}]
  %s10 = inlined_call_operand.vmem [shape: f32[32,64], index: 10, kind: output, shape index: {0}]
  %s11 = inlined_call_operand.vmem [shape: f32[32,64], index: 11, kind: output, shape index: {1}]
  %s12 = inlined_call_operand.vmem [shape: f32[32,64], index: 12, kind: output, shape index: {2}]
  %13 = xla_tuple %s10, %s11, %s12
  %s14 = sld [smem:[#allocation0]]
  $region66: #{decoder_forward.25} parent=0
    _
  %s16 = ssub.s32 1, %s14
  %s17 = scalar_select 0, %s16, %s14
  // Predicated region
  $region2: #{decoder_forward.25} parent=0 // pred_check
    _
  $region3: #{decoder_forward.25} parent=0 // pred_check_branch
    %19 = sbr.rel (0) target = $region5
  $region4: #{decoder_forward.25} parent=0 // pred_region
    _
  $region5: #{decoder_forward.25} parent=0 // pred_fallthru
    _
  // Predicated region
  $region6: #{decoder_forward.25} parent=0 // pred_check
    _
  $region7: #{decoder_forward.25} parent=0 // pred_check_branch
    %21 = sbr.rel (0) target = $region9
  $region8: #{decoder_forward.25} parent=0 // pred_region
    _
  $region9: #{decoder_forward.25} parent=0 // pred_fallthru
    _
  // Predicated region
  $region10: #{decoder_forward.25} parent=0 // pred_check
    _
  $region11: #{decoder_forward.25} parent=0 // pred_check_branch
    %23 = sbr.rel (0) target = $region13
  $region12: #{decoder_forward.25} parent=0 // pred_region
    _
  $region13: #{decoder_forward.25} parent=0 // pred_fallthru
    _
  // Predicated region
  $region14: #{decoder_forward.25} parent=0 // pred_check
    _
  $region15: #{decoder_forward.25} parent=0 // pred_check_branch
    %25 = sbr.rel (0) target = $region17
  $region16: #{decoder_forward.25} parent=0 // pred_region
    _
  $region17: #{decoder_forward.25} parent=0 // pred_fallthru
    _
  // Predicated region
  $region18: #{decoder_forward.25} parent=0 // pred_check
    _
  $region19: #{decoder_forward.25} parent=0 // pred_check_branch
    %27 = sbr.rel (0) target = $region21
  $region20: #{decoder_forward.25} parent=0 // pred_region
    _
  $region21: #{decoder_forward.25} parent=0 // pred_fallthru
    _
  // Predicated region
  $region22: #{decoder_forward.25} parent=0 // pred_check
    _
  $region23: #{decoder_forward.25} parent=0 // pred_check_branch
    %29 = sbr.rel (0) target = $region25
  $region24: #{decoder_forward.25} parent=0 // pred_region
    _
  $region25: #{decoder_forward.25} parent=0 // pred_fallthru
    _
  // Predicated region
  $region26: #{decoder_forward.25} parent=0 // pred_check
    _
  $region27: #{decoder_forward.25} parent=0 // pred_check_branch
    %31 = sbr.rel (0) target = $region29
  $region28: #{decoder_forward.25} parent=0 // pred_region
    _
  $region29: #{decoder_forward.25} parent=0 // pred_fallthru
    _
  // Predicated region
  $region30: #{decoder_forward.25} parent=0 // pred_check
    _
  $region31: #{decoder_forward.25} parent=0 // pred_check_branch
    %33 = sbr.rel (0) target = $region33
  $region32: #{decoder_forward.25} parent=0 // pred_region
    _
  $region33: #{decoder_forward.25} parent=0 // pred_fallthru
    _
  // Predicated region
  $region34: #{decoder_forward.25} parent=0 // pred_check
    _
  $region35: #{decoder_forward.25} parent=0 // pred_check_branch
    %35 = sbr.rel (0) target = $region37
  $region36: #{decoder_forward.25} parent=0 // pred_region
    _
  $region37: #{decoder_forward.25} parent=0 // pred_fallthru
    _
  // Predicated region
  $region38: #{decoder_forward.25} parent=0 // pred_check
    _
  $region39: #{decoder_forward.25} parent=0 // pred_check_branch
    %37 = sbr.rel (0) target = $region41
  $region40: #{decoder_forward.25} parent=0 // pred_region
    _
  $region41: #{decoder_forward.25} parent=0 // pred_fallthru
    _
  %v39 = vld [vmem:[%s0] sm:$0xff]
  %v40 = vld [vmem:[%s0 + $0x8] sm:$0xff]
  %v41 = vld [vmem:[%s0 + $0x10] sm:$0xff]
  %v42 = vld [vmem:[%s0 + $0x18] sm:$0xff]
  %vm43 = vcmask 523264
  %v44 = vsel %vm43, %v39, 0.0
  %45 = vadd.xlane.f32.xlu0 %v44
  %v46 = vpop.xlane.xlu0 %45
  %v47 = vsel %vm43, %v40, 0.0
  %48 = vadd.xlane.f32.xlu0 %v47
  %v49 = vpop.xlane.xlu0 %48
  %v50 = vsel %vm43, %v41, 0.0
  %51 = vadd.xlane.f32.xlu0 %v50
  %v52 = vpop.xlane.xlu0 %51
  %v53 = vsel %vm43, %v42, 0.0
  %54 = vadd.xlane.f32.xlu0 %v53
  %v55 = vpop.xlane.xlu0 %54
  %v56 = vrcp.pop 64.0
  %v57 = vmul.f32 %v46, %v56
  %v58 = vmul.f32 %v49, %v56
  %v59 = vmul.f32 %v52, %v56
  %v60 = vmul.f32 %v55, %v56
  %v61 = vsub.f32 %v39, %v57
  %v62 = vsub.f32 %v40, %v58
  %v63 = vsub.f32 %v41, %v59
  %v64 = vsub.f32 %v42, %v60
  %v65 = vmul.f32 %v61, %v61
  %v66 = vmul.f32 %v62, %v62
  %v67 = vmul.f32 %v63, %v63
  %v68 = vmul.f32 %v64, %v64
  %v69 = vsel %vm43, %v65, 0.0
  %70 = vadd.xlane.f32.xlu0 %v69
  %v71 = vpop.xlane.xlu0 %70
  %v72 = vsel %vm43, %v66, 0.0
  %73 = vadd.xlane.f32.xlu0 %v72
  %v74 = vpop.xlane.xlu0 %73
  %v75 = vsel %vm43, %v67, 0.0
  %76 = vadd.xlane.f32.xlu0 %v75
  %v77 = vpop.xlane.xlu0 %76
  %v78 = vsel %vm43, %v68, 0.0
  %79 = vadd.xlane.f32.xlu0 %v78
  %v80 = vpop.xlane.xlu0 %79
  %v81 = vmul.f32 %v71, %v56
  %v82 = vmul.f32 %v74, %v56
  %v83 = vmul.f32 %v77, %v56
  %v84 = vmul.f32 %v80, %v56
  %v85 = vadd.f32 %v81, 1e-05
  %v86 = vadd.f32 %v82, 1e-05
  %v87 = vadd.f32 %v83, 1e-05
  %v88 = vadd.f32 %v84, 1e-05
  %v89 = vrsqrt.pop %v85
  %v90 = vrsqrt.pop %v86
  %v91 = vrsqrt.pop %v87
  %v92 = vrsqrt.pop %v88
  %v93 = vmul.f32 %v61, %v89
  %v94 = vmul.f32 %v62, %v90
  %v95 = vmul.f32 %v63, %v91
  %v96 = vmul.f32 %v64, %v92
  %v97 = vld [vmem:[%s2] sm:$0x1]
  %v99 = vlaneseq
  %v100 = vshrl.u32 %v99, 7
  %v101 = vsub.s32 0, %v100
  %v102 = vrot.slane %v97, %v101
  %v104 = vmul.f32 %v93, %v102
  %v105 = vmul.f32 %v94, %v102
  %v106 = vmul.f32 %v95, %v102
  %v107 = vmul.f32 %v96, %v102
  %v108 = vld [vmem:[%s3] sm:$0x1]
  %v110 = vlaneseq
  %v111 = vshrl.u32 %v110, 7
  %v112 = vsub.s32 0, %v111
  %v113 = vrot.slane %v108, %v112
  %v115 = vadd.f32 %v104, %v113
  %v116 = vadd.f32 %v105, %v113
  %v117 = vadd.f32 %v106, %v113
  %v118 = vadd.f32 %v107, %v113
  %v119 = vld [vmem:[%s1] sm:$0xff]
  %v120 = vld [vmem:[%s1 + $0x8] sm:$0xff]
  %v121 = vld [vmem:[%s1 + $0x10] sm:$0xff]
  %v122 = vld [vmem:[%s1 + $0x18] sm:$0xff]
  %v123 = vadd.f32 %v115, %v119
  %v124 = vadd.f32 %v116, %v120
  %v125 = vadd.f32 %v117, %v121
  %v126 = vadd.f32 %v118, %v122
  %v127 = vpack.c.bf16 %v116, %v115
  %v128 = vpack.c.bf16 %v118, %v117
  %v129 = vpack.c.bf16 %v124, %v123
  %v130 = vpack.c.bf16 %v126, %v125
  %v131 = vld [vmem:[%s4] sm:$0xf]
  %v132 = vld [vmem:[%s4 + $0x4] sm:$0xf]
  %v133 = vld [vmem:[%s4 + $0x8] sm:$0xf]
  %v134 = vld [vmem:[%s4 + $0xc] sm:$0xf]
  %v135 = vld [vmem:[%s4 + $0x10] sm:$0xf]
  %v136 = vld [vmem:[%s4 + $0x14] sm:$0xf]
  %v137 = vld [vmem:[%s4 + $0x18] sm:$0xf]
  %v138 = vld [vmem:[%s4 + $0x1c] sm:$0xf]
  %v139 = vld [vmem:[%s7] sm:$0x1]
  %v141 = vlaneseq
  %v142 = vshrl.u32 %v141, 7
  %v143 = vsub.s32 0, %v142
  %v144 = vrot.slane %v139, %v143
  %v154 = vunpack.c.l.b16 %v131
  %v155 = vunpack.c.l.b16 %v132
  %v156 = vunpack.c.l.b16 %v133
  %v157 = vunpack.c.l.b16 %v134
  %v158 = vunpack.c.l.b16 %v135
  %v159 = vunpack.c.l.b16 %v136
  %v160 = vunpack.c.l.b16 %v137
  %v161 = vunpack.c.l.b16 %v138
  %v162 = vpack.c.b16 %v155, %v154
  %v163 = vpack.c.b16 %v157, %v156
  %v164 = vpack.c.b16 %v159, %v158
  %v165 = vpack.c.b16 %v161, %v160
  %v171 = vsel %vm43, %v129, 0
  %v174 = vsel %vm43, %v130, 0
  %176 = vmatprep.subr.bf16.mxu0 0
  %177 = vmatpush1.bf16.msra.mxu0 %v162
  %178 = vmatprep.subr.bf16.mxu0 0
  %179 = vmatpush1.bf16.msra.mxu0 %v163
  %180 = vmatprep.subr.bf16.mxu0 0
  %181 = vmatpush1.bf16.msra.mxu0 %v164
  %182 = vmatprep.subr.bf16.mxu0 0
  %183 = vmatpush1.bf16.msra.mxu0 %v165
  %184 = vmatprep.subr.bf16.mxu0 0
  %185 = vmatpush1.bf16.msra.mxu0 0
  %186 = vmatprep.subr.bf16.mxu0 0
  %187 = vmatpush1.bf16.msra.mxu0 0
  %188 = vmatprep.subr.bf16.mxu0 0
  %189 = vmatpush1.bf16.msra.mxu0 0
  %190 = vmatprep.subr.bf16.mxu0 0
  %191 = vmatpush1.bf16.msra.mxu0 0
  %192 = vmatprep.subr.bf16.mxu0 0
  %193 = vmatpush1.bf16.msra.mxu0 0
  %194 = vmatprep.subr.bf16.mxu0 0
  %195 = vmatpush1.bf16.msra.mxu0 0
  %196 = vmatprep.subr.bf16.mxu0 0
  %197 = vmatpush1.bf16.msra.mxu0 0
  %198 = vmatprep.subr.bf16.mxu0 0
  %199 = vmatpush1.bf16.msra.mxu0 0
  %200 = vmatprep.subr.bf16.mxu0 0
  %201 = vmatpush1.bf16.msra.mxu0 0
  %202 = vmatprep.subr.bf16.mxu0 0
  %203 = vmatpush1.bf16.msra.mxu0 0
  %204 = vmatprep.subr.bf16.mxu0 0
  %205 = vmatpush1.bf16.msra.mxu0 0
  %206 = vmatprep.subr.bf16.mxu0 0
  %207 = vmatpush1.bf16.msra.mxu0 0
  %208 = vmatprep.mubr.bf16.mxu0 0
  %209 = vmatmul.mubr.bf16.gmra.mrb[0].mxu0 %v171
  %v210 = vpop.f32.mrb[0].mxu0
  %v211 = vadd.f32 %v144, %v210
  %v212 = vpop.f32.mrb[0].mxu0
  %v213 = vpop.f32.mrb[0].mxu0
  %v214 = vadd.f32 %v144, %v213
  %v215 = vpop.f32.mrb[0].mxu0
  %216 = vmatprep.mubr.bf16.mxu0 0
  %217 = vmatmul.mubr.bf16.gmra.mrb[0].mxu0 %v174
  %v218 = vpop.f32.mrb[0].mxu0
  %v219 = vadd.f32 %v144, %v218
  %v220 = vpop.f32.mrb[0].mxu0
  %v221 = vpop.f32.mrb[0].mxu0
  %v222 = vadd.f32 %v144, %v221
  %v223 = vpop.f32.mrb[0].mxu0
  %224 = vdwg.mxu0
  %225 = vst.msk [vmem:[%s10] sm:$0xff] %vm43, %v211
  %226 = vst.msk [vmem:[%s10 + $0x8] sm:$0xff] %vm43, %v214
  %227 = vst.msk [vmem:[%s10 + $0x10] sm:$0xff] %vm43, %v219
  %228 = vst.msk [vmem:[%s10 + $0x18] sm:$0xff] %vm43, %v222
  %v229 = vld [vmem:[%s5] sm:$0xf]
  %v230 = vld [vmem:[%s5 + $0x4] sm:$0xf]
  %v231 = vld [vmem:[%s5 + $0x8] sm:$0xf]
  %v232 = vld [vmem:[%s5 + $0xc] sm:$0xf]
  %v233 = vld [vmem:[%s5 + $0x10] sm:$0xf]
  %v234 = vld [vmem:[%s5 + $0x14] sm:$0xf]
  %v235 = vld [vmem:[%s5 + $0x18] sm:$0xf]
  %v236 = vld [vmem:[%s5 + $0x1c] sm:$0xf]
  %v237 = vld [vmem:[%s8] sm:$0x1]
  %v239 = vlaneseq
  %v240 = vshrl.u32 %v239, 7
  %v241 = vsub.s32 0, %v240
  %v242 = vrot.slane %v237, %v241
  %v252 = vunpack.c.l.b16 %v229
  %v253 = vunpack.c.l.b16 %v230
  %v254 = vunpack.c.l.b16 %v231
  %v255 = vunpack.c.l.b16 %v232
  %v256 = vunpack.c.l.b16 %v233
  %v257 = vunpack.c.l.b16 %v234
  %v258 = vunpack.c.l.b16 %v235
  %v259 = vunpack.c.l.b16 %v236
  %v260 = vpack.c.b16 %v253, %v252
  %v261 = vpack.c.b16 %v255, %v254
  %v262 = vpack.c.b16 %v257, %v256
  %v263 = vpack.c.b16 %v259, %v258
  %268 = vmatprep.subr.bf16.mxu0 0
  %269 = vmatpush1.bf16.msra.mxu0 %v260
  %270 = vmatprep.subr.bf16.mxu0 0
  %271 = vmatpush1.bf16.msra.mxu0 %v261
  %272 = vmatprep.subr.bf16.mxu0 0
  %273 = vmatpush1.bf16.msra.mxu0 %v262
  %274 = vmatprep.subr.bf16.mxu0 0
  %275 = vmatpush1.bf16.msra.mxu0 %v263
  %276 = vmatprep.subr.bf16.mxu0 0
  %277 = vmatpush1.bf16.msra.mxu0 0
  %278 = vmatprep.subr.bf16.mxu0 0
  %279 = vmatpush1.bf16.msra.mxu0 0
  %280 = vmatprep.subr.bf16.mxu0 0
  %281 = vmatpush1.bf16.msra.mxu0 0
  %282 = vmatprep.subr.bf16.mxu0 0
  %283 = vmatpush1.bf16.msra.mxu0 0
  %284 = vmatprep.subr.bf16.mxu0 0
  %285 = vmatpush1.bf16.msra.mxu0 0
  %286 = vmatprep.subr.bf16.mxu0 0
  %287 = vmatpush1.bf16.msra.mxu0 0
  %288 = vmatprep.subr.bf16.mxu0 0
  %289 = vmatpush1.bf16.msra.mxu0 0
  %290 = vmatprep.subr.bf16.mxu0 0
  %291 = vmatpush1.bf16.msra.mxu0 0
  %292 = vmatprep.subr.bf16.mxu0 0
  %293 = vmatpush1.bf16.msra.mxu0 0
  %294 = vmatprep.subr.bf16.mxu0 0
  %295 = vmatpush1.bf16.msra.mxu0 0
  %296 = vmatprep.subr.bf16.mxu0 0
  %297 = vmatpush1.bf16.msra.mxu0 0
  %298 = vmatprep.subr.bf16.mxu0 0
  %299 = vmatpush1.bf16.msra.mxu0 0
  %300 = vmatprep.mubr.bf16.mxu0 0
  %301 = vmatmul.mubr.bf16.gmra.mrb[0].mxu0 %v171
  %v302 = vpop.f32.mrb[0].mxu0
  %v303 = vadd.f32 %v242, %v302
  %v304 = vpop.f32.mrb[0].mxu0
  %v305 = vpop.f32.mrb[0].mxu0
  %v306 = vadd.f32 %v242, %v305
  %v307 = vpop.f32.mrb[0].mxu0
  %308 = vmatprep.mubr.bf16.mxu0 0
  %309 = vmatmul.mubr.bf16.gmra.mrb[0].mxu0 %v174
  %v310 = vpop.f32.mrb[0].mxu0
  %v311 = vadd.f32 %v242, %v310
  %v312 = vpop.f32.mrb[0].mxu0
  %v313 = vpop.f32.mrb[0].mxu0
  %v314 = vadd.f32 %v242, %v313
  %v315 = vpop.f32.mrb[0].mxu0
  %316 = vdwg.mxu0
  %317 = vst.msk [vmem:[%s11] sm:$0xff] %vm43, %v303
  %318 = vst.msk [vmem:[%s11 + $0x8] sm:$0xff] %vm43, %v306
  %319 = vst.msk [vmem:[%s11 + $0x10] sm:$0xff] %vm43, %v311
  %320 = vst.msk [vmem:[%s11 + $0x18] sm:$0xff] %vm43, %v314
  %v321 = vld [vmem:[%s6] sm:$0xf]
  %v322 = vld [vmem:[%s6 + $0x4] sm:$0xf]
  %v323 = vld [vmem:[%s6 + $0x8] sm:$0xf]
  %v324 = vld [vmem:[%s6 + $0xc] sm:$0xf]
  %v325 = vld [vmem:[%s6 + $0x10] sm:$0xf]
  %v326 = vld [vmem:[%s6 + $0x14] sm:$0xf]
  %v327 = vld [vmem:[%s6 + $0x18] sm:$0xf]
  %v328 = vld [vmem:[%s6 + $0x1c] sm:$0xf]
  %v329 = vld [vmem:[%s9] sm:$0x1]
  %v331 = vlaneseq
  %v332 = vshrl.u32 %v331, 7
  %v333 = vsub.s32 0, %v332
  %v334 = vrot.slane %v329, %v333
  %v344 = vunpack.c.l.b16 %v321
  %v345 = vunpack.c.l.b16 %v322
  %v346 = vunpack.c.l.b16 %v323
  %v347 = vunpack.c.l.b16 %v324
  %v348 = vunpack.c.l.b16 %v325
  %v349 = vunpack.c.l.b16 %v326
  %v350 = vunpack.c.l.b16 %v327
  %v351 = vunpack.c.l.b16 %v328
  %v352 = vpack.c.b16 %v345, %v344
  %v353 = vpack.c.b16 %v347, %v346
  %v354 = vpack.c.b16 %v349, %v348
  %v355 = vpack.c.b16 %v351, %v350
  %v361 = vsel %vm43, %v127, 0
  %v364 = vsel %vm43, %v128, 0
  %366 = vmatprep.subr.bf16.mxu0 0
  %367 = vmatpush1.bf16.msra.mxu0 %v352
  %368 = vmatprep.subr.bf16.mxu0 0
  %369 = vmatpush1.bf16.msra.mxu0 %v353
  %370 = vmatprep.subr.bf16.mxu0 0
  %371 = vmatpush1.bf16.msra.mxu0 %v354
  %372 = vmatprep.subr.bf16.mxu0 0
  %373 = vmatpush1.bf16.msra.mxu0 %v355
  %374 = vmatprep.subr.bf16.mxu0 0
  %375 = vmatpush1.bf16.msra.mxu0 0
  %376 = vmatprep.subr.bf16.mxu0 0
  %377 = vmatpush1.bf16.msra.mxu0 0
  %378 = vmatprep.subr.bf16.mxu0 0
  %379 = vmatpush1.bf16.msra.mxu0 0
  %380 = vmatprep.subr.bf16.mxu0 0
  %381 = vmatpush1.bf16.msra.mxu0 0
  %382 = vmatprep.subr.bf16.mxu0 0
  %383 = vmatpush1.bf16.msra.mxu0 0
  %384 = vmatprep.subr.bf16.mxu0 0
  %385 = vmatpush1.bf16.msra.mxu0 0
  %386 = vmatprep.subr.bf16.mxu0 0
  %387 = vmatpush1.bf16.msra.mxu0 0
  %388 = vmatprep.subr.bf16.mxu0 0
  %389 = vmatpush1.bf16.msra.mxu0 0
  %390 = vmatprep.subr.bf16.mxu0 0
  %391 = vmatpush1.bf16.msra.mxu0 0
  %392 = vmatprep.subr.bf16.mxu0 0
  %393 = vmatpush1.bf16.msra.mxu0 0
  %394 = vmatprep.subr.bf16.mxu0 0
  %395 = vmatpush1.bf16.msra.mxu0 0
  %396 = vmatprep.subr.bf16.mxu0 0
  %397 = vmatpush1.bf16.msra.mxu0 0
  %398 = vmatprep.mubr.bf16.mxu0 0
  %399 = vmatmul.mubr.bf16.gmra.mrb[0].mxu0 %v361
  %v400 = vpop.f32.mrb[0].mxu0
  %v401 = vadd.f32 %v334, %v400
  %v402 = vpop.f32.mrb[0].mxu0
  %v403 = vpop.f32.mrb[0].mxu0
  %v404 = vadd.f32 %v334, %v403
  %v405 = vpop.f32.mrb[0].mxu0
  %406 = vmatprep.mubr.bf16.mxu0 0
  %407 = vmatmul.mubr.bf16.gmra.mrb[0].mxu0 %v364
  %v408 = vpop.f32.mrb[0].mxu0
  %v409 = vadd.f32 %v334, %v408
  %v410 = vpop.f32.mrb[0].mxu0
  %v411 = vpop.f32.mrb[0].mxu0
  %v412 = vadd.f32 %v334, %v411
  %v413 = vpop.f32.mrb[0].mxu0
  %414 = vdwg.mxu0
  %415 = vst.msk [vmem:[%s12] sm:$0xff] %vm43, %v401
  %416 = vst.msk [vmem:[%s12 + $0x8] sm:$0xff] %vm43, %v404
  %417 = vst.msk [vmem:[%s12 + $0x10] sm:$0xff] %vm43, %v409
  %418 = vst.msk [vmem:[%s12 + $0x18] sm:$0xff] %vm43, %v412
  // Predicated region
  $region42: #{decoder_forward.25} parent=0 // pred_check
    _
  $region43: #{decoder_forward.25} parent=0 // pred_check_branch
    %420 = sbr.rel (0) target = $region45
  $region44: #{decoder_forward.25} parent=0 // pred_region
    _
  $region45: #{decoder_forward.25} parent=0 // pred_fallthru
    _
  // Predicated region
  $region46: #{decoder_forward.25} parent=0 // pred_check
    _
  $region47: #{decoder_forward.25} parent=0 // pred_check_branch
    %422 = sbr.rel (0) target = $region49
  $region48: #{decoder_forward.25} parent=0 // pred_region
    _
  $region49: #{decoder_forward.25} parent=0 // pred_fallthru
    _
  // Predicated region
  $region50: #{decoder_forward.25} parent=0 // pred_check
    _
  $region51: #{decoder_forward.25} parent=0 // pred_check_branch
    %424 = sbr.rel (0) target = $region53
  $region52: #{decoder_forward.25} parent=0 // pred_region
    _
  $region53: #{decoder_forward.25} parent=0 // pred_fallthru
    _
  // Predicated region
  $region54: #{decoder_forward.25} parent=0 // pred_check
    _
  $region55: #{decoder_forward.25} parent=0 // pred_check_branch
    %426 = sbr.rel (0) target = $region57
  $region56: #{decoder_forward.25} parent=0 // pred_region
    _
  $region57: #{decoder_forward.25} parent=0 // pred_fallthru
    _
  // Predicated region
  $region58: #{decoder_forward.25} parent=0 // pred_check
    _
  $region59: #{decoder_forward.25} parent=0 // pred_check_branch
    %428 = sbr.rel (0) target = $region61
  $region60: #{decoder_forward.25} parent=0 // pred_region
    _
  $region61: #{decoder_forward.25} parent=0 // pred_fallthru
    _
  // Predicated region
  $region62: #{decoder_forward.25} parent=0 // pred_check
    _
  $region63: #{decoder_forward.25} parent=0 // pred_check_branch
    %430 = sbr.rel (0) target = $region65
  $region64: #{decoder_forward.25} parent=0 // pred_region
    _
  $region65: #{decoder_forward.25} parent=0 // pred_fallthru
    _

// kernel: decoder_forward.26
$region0: #{decoder_forward.26}
  #allocation0 [shape = 'u32[]', space=smem, size = 0x4, offset = 0x4, fixed_abs, tag = 'smem constant byte address 0x4 - core index']
  #allocation1 [shape = 'u32[144,128]{1,0:T(1,128)}', space=vmem, size = 0x12000, scoped, tag = 'internal scratch']
  %s0 = inlined_call_operand.vmem [shape: f32[2,16,64], index: 0, kind: input, shape index: {}]
  %s1 = inlined_call_operand.vmem [shape: f32[2,16,64], index: 1, kind: input, shape index: {}]
  %s2 = inlined_call_operand.vmem [shape: f32[2,16,64], index: 2, kind: input, shape index: {}]
  %s3 = inlined_call_operand.vmem [shape: f32[16,16], index: 3, kind: input, shape index: {}, may-alias: {3,5}]
  %s4 = inlined_call_operand.vmem [shape: f32[16,16], index: 4, kind: input, shape index: {}, may-alias: {4,6}]
  %s5 = inlined_call_operand.vmem [shape: f32[16,16], index: 5, kind: input, shape index: {}, may-alias: {3,5}]
  %s6 = inlined_call_operand.vmem [shape: f32[16,16], index: 6, kind: input, shape index: {}, may-alias: {4,6}]
  %s7 = inlined_call_operand.vmem [shape: bf16[64,64], index: 7, kind: input, shape index: {}]
  %s8 = inlined_call_operand.vmem [shape: f32[1,64], index: 8, kind: input, shape index: {}]
  %s9 = inlined_call_operand.vmem [shape: f32[2,16,64], index: 9, kind: input, shape index: {}]
  %s10 = inlined_call_operand.vmem [shape: f32[2,16,64], index: 10, kind: output, shape index: {}]
  %s11 = sld [smem:[#allocation0]]
  $region73: #{decoder_forward.26} parent=0
    _
  %s13 = ssub.s32 1, %s11
  %s14 = scalar_select 0, %s13, %s11
  loop: start=0, step=1, limit=4
  $region2: #{decoder_forward.26} parent=0 // loop_pre_header
    _
  $region3: #{decoder_forward.26} parent=0 // loop_header
    %s16 = sphi 0, %s20
    %p17 = scmp.ge.s32.totalorder %s16, 4
    %s26 = sphi 0, %s28
    %s29 = sphi 0, %s26
    %s30 = sphi 0, %s29
    %s46 = sphi 0, %s30
    %s52 = sphi 0, %s54
    %s55 = sphi 0, %s52
    %s56 = sphi 0, %s55
    %s72 = sphi 0, %s56
    %s78 = sphi 0, %s80
    %s81 = sphi 0, %s78
    %s82 = sphi 0, %s81
    %s98 = sphi 0, %s82
    %s102 = sphi 0, %s102
    %s104 = sphi 0, %s102
    %s105 = sphi 0, %s104
    %s119 = sphi 0, %s105
    %s123 = sphi 0, %s123
    %s125 = sphi 0, %s123
    %s126 = sphi 0, %s125
    %s140 = sphi 0, %s126
    %s144 = sphi 0, %s144
    %s146 = sphi 0, %s144
    %s147 = sphi 0, %s146
    %s161 = sphi 0, %s147
    %s165 = sphi 0, %s165
    %s167 = sphi 0, %s165
    %s168 = sphi 0, %s167
    %s182 = sphi 0, %s168
    %s186 = sphi 0, %s186
    %s188 = sphi 0, %s186
    %s189 = sphi 0, %s188
    %s203 = sphi 0, %s189
    %s207 = sphi 0, %s207
    %s209 = sphi 0, %s207
    %s210 = sphi 0, %s209
    %s224 = sphi 0, %s210
    %s230 = sphi 0, %s232
    %s233 = sphi 0, %s230
    %s234 = sphi 0, %s233
    %s250 = sphi 0, %s234
    %s256 = sphi 0, %s258
    %s259 = sphi 0, %s256
    %s260 = sphi 0, %s259
    %s276 = sphi 0, %s260
  $region4: #{decoder_forward.26} parent=0 // loop_header_branch
    %19 = sbr.rel (%p17) target = $region8
  $region5: #{decoder_forward.26} parent=0 // loop_body
    %s21 = ssub.s32 %s16, 1
    %s22 = ssub.s32 %s16, 2
    %s23 = sadd.s32 %s16, 1
    %s24 = ssub.s32 %s16, %s23
    %p25 = scmp.eq.s32.totalorder %s24, 0
    %s27 = sadd.s32 %s26, 1
    %s28 = scalar_select %p25, %s26, %s27
    %p31 = pneg %p25
    %p32 = scmp.eq.s32.totalorder %s16, 1
    %p33 = por %p31, %p32
    %p34 = scmp.ne.s32.totalorder %s26, %s29
    %p35 = scmp.eq.s32.totalorder %s16, 0
    %p36 = por %p34, %p35
    %p37 = scmp.ne.s32.totalorder %s26, %s29
    %p38 = scmp.eq.s32.totalorder %s21, 1
    %p39 = por %p37, %p38
    %p40 = scmp.ne.s32.totalorder %s29, %s30
    %p41 = scmp.eq.s32.totalorder %s21, 0
    %p42 = por %p40, %p41
    %p43 = scmp.ne.s32.totalorder %s29, %s30
    %p44 = scmp.eq.s32.totalorder %s22, 1
    %p45 = por %p43, %p44
    %p47 = scmp.ne.s32.totalorder %s30, %s46
    %p48 = scmp.eq.s32.totalorder %s22, 0
    %p49 = por %p47, %p48
    %s50 = ssub.s32 %s16, %s23
    %p51 = scmp.eq.s32.totalorder %s50, 0
    %s53 = sadd.s32 %s52, 1
    %s54 = scalar_select %p51, %s52, %s53
    %p57 = pneg %p51
    %p58 = scmp.eq.s32.totalorder %s16, 1
    %p59 = por %p57, %p58
    %p60 = scmp.ne.s32.totalorder %s52, %s55
    %p61 = scmp.eq.s32.totalorder %s16, 0
    %p62 = por %p60, %p61
    %p63 = scmp.ne.s32.totalorder %s52, %s55
    %p64 = scmp.eq.s32.totalorder %s21, 1
    %p65 = por %p63, %p64
    %p66 = scmp.ne.s32.totalorder %s55, %s56
    %p67 = scmp.eq.s32.totalorder %s21, 0
    %p68 = por %p66, %p67
    %p69 = scmp.ne.s32.totalorder %s55, %s56
    %p70 = scmp.eq.s32.totalorder %s22, 1
    %p71 = por %p69, %p70
    %p73 = scmp.ne.s32.totalorder %s56, %s72
    %p74 = scmp.eq.s32.totalorder %s22, 0
    %p75 = por %p73, %p74
    %s76 = ssub.s32 %s16, %s23
    %p77 = scmp.eq.s32.totalorder %s76, 0
    %s79 = sadd.s32 %s78, 1
    %s80 = scalar_select %p77, %s78, %s79
    %p83 = pneg %p77
    %p84 = scmp.eq.s32.totalorder %s16, 1
    %p85 = por %p83, %p84
    %p86 = scmp.ne.s32.totalorder %s78, %s81
    %p87 = scmp.eq.s32.totalorder %s16, 0
    %p88 = por %p86, %p87
    %p89 = scmp.ne.s32.totalorder %s78, %s81
    %p90 = scmp.eq.s32.totalorder %s21, 1
    %p91 = por %p89, %p90
    %p92 = scmp.ne.s32.totalorder %s81, %s82
    %p93 = scmp.eq.s32.totalorder %s21, 0
    %p94 = por %p92, %p93
    %p95 = scmp.ne.s32.totalorder %s81, %s82
    %p96 = scmp.eq.s32.totalorder %s22, 1
    %p97 = por %p95, %p96
    %p99 = scmp.ne.s32.totalorder %s82, %s98
    %p100 = scmp.eq.s32.totalorder %s22, 0
    %p101 = por %p99, %p100
    %s103 = sadd.s32 %s102, 1
    %p106 = scmp.eq.s32.totalorder %s16, 1
    %p107 = scmp.ne.s32.totalorder %s102, %s104
    %p108 = scmp.eq.s32.totalorder %s16, 0
    %p109 = por %p107, %p108
    %p110 = scmp.ne.s32.totalorder %s102, %s104
    %p111 = scmp.eq.s32.totalorder %s21, 1
    %p112 = por %p110, %p111
    %p113 = scmp.ne.s32.totalorder %s104, %s105
    %p114 = scmp.eq.s32.totalorder %s21, 0
    %p115 = por %p113, %p114
    %p116 = scmp.ne.s32.totalorder %s104, %s105
    %p117 = scmp.eq.s32.totalorder %s22, 1
    %p118 = por %p116, %p117
    %p120 = scmp.ne.s32.totalorder %s105, %s119
    %p121 = scmp.eq.s32.totalorder %s22, 0
    %p122 = por %p120, %p121
    %s124 = sadd.s32 %s123, 1
    %p127 = scmp.eq.s32.totalorder %s16, 1
    %p128 = scmp.ne.s32.totalorder %s123, %s125
    %p129 = scmp.eq.s32.totalorder %s16, 0
    %p130 = por %p128, %p129
    %p131 = scmp.ne.s32.totalorder %s123, %s125
    %p132 = scmp.eq.s32.totalorder %s21, 1
    %p133 = por %p131, %p132
    %p134 = scmp.ne.s32.totalorder %s125, %s126
    %p135 = scmp.eq.s32.totalorder %s21, 0
    %p136 = por %p134, %p135
    %p137 = scmp.ne.s32.totalorder %s125, %s126
    %p138 = scmp.eq.s32.totalorder %s22, 1
    %p139 = por %p137, %p138
    %p141 = scmp.ne.s32.totalorder %s126, %s140
    %p142 = scmp.eq.s32.totalorder %s22, 0
    %p143 = por %p141, %p142
    %s145 = sadd.s32 %s144, 1
    %p148 = scmp.eq.s32.totalorder %s16, 1
    %p149 = scmp.ne.s32.totalorder %s144, %s146
    %p150 = scmp.eq.s32.totalorder %s16, 0
    %p151 = por %p149, %p150
    %p152 = scmp.ne.s32.totalorder %s144, %s146
    %p153 = scmp.eq.s32.totalorder %s21, 1
    %p154 = por %p152, %p153
    %p155 = scmp.ne.s32.totalorder %s146, %s147
    %p156 = scmp.eq.s32.totalorder %s21, 0
    %p157 = por %p155, %p156
    %p158 = scmp.ne.s32.totalorder %s146, %s147
    %p159 = scmp.eq.s32.totalorder %s22, 1
    %p160 = por %p158, %p159
    %p162 = scmp.ne.s32.totalorder %s147, %s161
    %p163 = scmp.eq.s32.totalorder %s22, 0
    %p164 = por %p162, %p163
    %s166 = sadd.s32 %s165, 1
    %p169 = scmp.eq.s32.totalorder %s16, 1
    %p170 = scmp.ne.s32.totalorder %s165, %s167
    %p171 = scmp.eq.s32.totalorder %s16, 0
    %p172 = por %p170, %p171
    %p173 = scmp.ne.s32.totalorder %s165, %s167
    %p174 = scmp.eq.s32.totalorder %s21, 1
    %p175 = por %p173, %p174
    %p176 = scmp.ne.s32.totalorder %s167, %s168
    %p177 = scmp.eq.s32.totalorder %s21, 0
    %p178 = por %p176, %p177
    %p179 = scmp.ne.s32.totalorder %s167, %s168
    %p180 = scmp.eq.s32.totalorder %s22, 1
    %p181 = por %p179, %p180
    %p183 = scmp.ne.s32.totalorder %s168, %s182
    %p184 = scmp.eq.s32.totalorder %s22, 0
    %p185 = por %p183, %p184
    %s187 = sadd.s32 %s186, 1
    %p190 = scmp.eq.s32.totalorder %s16, 1
    %p191 = scmp.ne.s32.totalorder %s186, %s188
    %p192 = scmp.eq.s32.totalorder %s16, 0
    %p193 = por %p191, %p192
    %p194 = scmp.ne.s32.totalorder %s186, %s188
    %p195 = scmp.eq.s32.totalorder %s21, 1
    %p196 = por %p194, %p195
    %p197 = scmp.ne.s32.totalorder %s188, %s189
    %p198 = scmp.eq.s32.totalorder %s21, 0
    %p199 = por %p197, %p198
    %p200 = scmp.ne.s32.totalorder %s188, %s189
    %p201 = scmp.eq.s32.totalorder %s22, 1
    %p202 = por %p200, %p201
    %p204 = scmp.ne.s32.totalorder %s189, %s203
    %p205 = scmp.eq.s32.totalorder %s22, 0
    %p206 = por %p204, %p205
    %s208 = sadd.s32 %s207, 1
    %p211 = scmp.eq.s32.totalorder %s16, 1
    %p212 = scmp.ne.s32.totalorder %s207, %s209
    %p213 = scmp.eq.s32.totalorder %s16, 0
    %p214 = por %p212, %p213
    %p215 = scmp.ne.s32.totalorder %s207, %s209
    %p216 = scmp.eq.s32.totalorder %s21, 1
    %p217 = por %p215, %p216
    %p218 = scmp.ne.s32.totalorder %s209, %s210
    %p219 = scmp.eq.s32.totalorder %s21, 0
    %p220 = por %p218, %p219
    %p221 = scmp.ne.s32.totalorder %s209, %s210
    %p222 = scmp.eq.s32.totalorder %s22, 1
    %p223 = por %p221, %p222
    %p225 = scmp.ne.s32.totalorder %s210, %s224
    %p226 = scmp.eq.s32.totalorder %s22, 0
    %p227 = por %p225, %p226
    %s228 = ssub.s32 %s16, %s23
    %p229 = scmp.eq.s32.totalorder %s228, 0
    %s231 = sadd.s32 %s230, 1
    %s232 = scalar_select %p229, %s230, %s231
    %p235 = pneg %p229
    %p236 = scmp.eq.s32.totalorder %s16, 1
    %p237 = por %p235, %p236
    %p238 = scmp.ne.s32.totalorder %s230, %s233
    %p239 = scmp.eq.s32.totalorder %s16, 0
    %p240 = por %p238, %p239
    %p241 = scmp.ne.s32.totalorder %s230, %s233
    %p242 = scmp.eq.s32.totalorder %s21, 1
    %p243 = por %p241, %p242
    %p244 = scmp.ne.s32.totalorder %s233, %s234
    %p245 = scmp.eq.s32.totalorder %s21, 0
    %p246 = por %p244, %p245
    %p247 = scmp.ne.s32.totalorder %s233, %s234
    %p248 = scmp.eq.s32.totalorder %s22, 1
    %p249 = por %p247, %p248
    %p251 = scmp.ne.s32.totalorder %s234, %s250
    %p252 = scmp.eq.s32.totalorder %s22, 0
    %p253 = por %p251, %p252
    %s254 = ssub.s32 %s16, %s23
    %p255 = scmp.eq.s32.totalorder %s254, 0
    %s257 = sadd.s32 %s256, 1
    %s258 = scalar_select %p255, %s256, %s257
    %p261 = pneg %p255
    %p262 = scmp.eq.s32.totalorder %s16, 1
    %p263 = por %p261, %p262
    %p264 = scmp.ne.s32.totalorder %s256, %s259
    %p265 = scmp.eq.s32.totalorder %s16, 0
    %p266 = por %p264, %p265
    %p267 = scmp.ne.s32.totalorder %s256, %s259
    %p268 = scmp.eq.s32.totalorder %s21, 1
    %p269 = por %p267, %p268
    %p270 = scmp.ne.s32.totalorder %s259, %s260
    %p271 = scmp.eq.s32.totalorder %s21, 0
    %p272 = por %p270, %p271
    %p273 = scmp.ne.s32.totalorder %s259, %s260
    %p274 = scmp.eq.s32.totalorder %s22, 1
    %p275 = por %p273, %p274
    %p277 = scmp.ne.s32.totalorder %s260, %s276
    %p278 = scmp.eq.s32.totalorder %s22, 0
    %p279 = por %p277, %p278
    %p280 = scmp.le.s32.totalorder 1, %s16
    %p281 = scmp.lt.s32.totalorder %s16, 3
    %p282 = pnand %p280, %p281
    %p283 = pneg %p282
    // Predicated region
    $region9: #{decoder_forward.26} parent=5 // pred_check
      _
    $region10: #{decoder_forward.26} parent=5 // pred_check_branch
      %285 = sbr.rel (%p282) target = $region12
    $region11: #{decoder_forward.26} parent=5 // pred_region
      %s286 = ssub.s32 %s16, 1
      // Predicated region
      $region13: #{decoder_forward.26} parent=11 // pred_check
        %p287 = pneg %p115
      $region14: #{decoder_forward.26} parent=11 // pred_check_branch
        %289 = sbr.rel (%p287) target = $region16
      $region15: #{decoder_forward.26} parent=11 // pred_region
        _
      $region16: #{decoder_forward.26} parent=11 // pred_fallthru
        _
      // Predicated region
      $region17: #{decoder_forward.26} parent=11 // pred_check
        %p290 = pneg %p136
      $region18: #{decoder_forward.26} parent=11 // pred_check_branch
        %292 = sbr.rel (%p290) target = $region20
      $region19: #{decoder_forward.26} parent=11 // pred_region
        _
      $region20: #{decoder_forward.26} parent=11 // pred_fallthru
        _
      // Predicated region
      $region21: #{decoder_forward.26} parent=11 // pred_check
        %p293 = pneg %p157
      $region22: #{decoder_forward.26} parent=11 // pred_check_branch
        %295 = sbr.rel (%p293) target = $region24
      $region23: #{decoder_forward.26} parent=11 // pred_region
        _
      $region24: #{decoder_forward.26} parent=11 // pred_fallthru
        _
      // Predicated region
      $region25: #{decoder_forward.26} parent=11 // pred_check
        %p296 = pneg %p178
      $region26: #{decoder_forward.26} parent=11 // pred_check_branch
        %298 = sbr.rel (%p296) target = $region28
      $region27: #{decoder_forward.26} parent=11 // pred_region
        _
      $region28: #{decoder_forward.26} parent=11 // pred_fallthru
        _
      // Predicated region
      $region29: #{decoder_forward.26} parent=11 // pred_check
        %p299 = pneg %p199
      $region30: #{decoder_forward.26} parent=11 // pred_check_branch
        %301 = sbr.rel (%p299) target = $region32
      $region31: #{decoder_forward.26} parent=11 // pred_region
        _
      $region32: #{decoder_forward.26} parent=11 // pred_fallthru
        _
      // Predicated region
      $region33: #{decoder_forward.26} parent=11 // pred_check
        %p302 = pneg %p220
      $region34: #{decoder_forward.26} parent=11 // pred_check_branch
        %304 = sbr.rel (%p302) target = $region36
      $region35: #{decoder_forward.26} parent=11 // pred_region
        _
      $region36: #{decoder_forward.26} parent=11 // pred_fallthru
        _
    $region12: #{decoder_forward.26} parent=5 // pred_fallthru
      _
    %p305 = scmp.lt.s32.totalorder %s16, 2
    // Predicated region
    $region37: #{decoder_forward.26} parent=5 // pred_check
      %p306 = pneg %p305
    $region38: #{decoder_forward.26} parent=5 // pred_check_branch
      %308 = sbr.rel (%p306) target = $region40
    $region39: #{decoder_forward.26} parent=5 // pred_region
      // Predicated region
      $region41: #{decoder_forward.26} parent=39 // pred_check
        %p309 = pneg %p36
      $region42: #{decoder_forward.26} parent=39 // pred_check_branch
        %311 = sbr.rel (%p309) target = $region44
      $region43: #{decoder_forward.26} parent=39 // pred_region
        %p312 = scmp.lt.s32.totalorder %s16, 1
        %s313 = scalar_select %p312, %s16, 1
        %s314 = smul.addr %s313, 2
        %s315 = smul.addr %s314, 8
        %s316 = scalar_lea.vmem %s0, %s315
      $region44: #{decoder_forward.26} parent=39 // pred_fallthru
        _
      // Predicated region
      $region45: #{decoder_forward.26} parent=39 // pred_check
        %p317 = pneg %p62
      $region46: #{decoder_forward.26} parent=39 // pred_check_branch
        %319 = sbr.rel (%p317) target = $region48
      $region47: #{decoder_forward.26} parent=39 // pred_region
        %p320 = scmp.lt.s32.totalorder %s16, 1
        %s321 = scalar_select %p320, %s16, 1
        %s322 = smul.addr %s321, 2
        %s323 = smul.addr %s322, 8
        %s324 = scalar_lea.vmem %s1, %s323
      $region48: #{decoder_forward.26} parent=39 // pred_fallthru
        _
      // Predicated region
      $region49: #{decoder_forward.26} parent=39 // pred_check
        %p325 = pneg %p88
      $region50: #{decoder_forward.26} parent=39 // pred_check_branch
        %327 = sbr.rel (%p325) target = $region52
      $region51: #{decoder_forward.26} parent=39 // pred_region
        %p328 = scmp.lt.s32.totalorder %s16, 1
        %s329 = scalar_select %p328, %s16, 1
        %s330 = smul.addr %s329, 2
        %s331 = smul.addr %s330, 8
        %s332 = scalar_lea.vmem %s2, %s331
      $region52: #{decoder_forward.26} parent=39 // pred_fallthru
        _
      // Predicated region
      $region53: #{decoder_forward.26} parent=39 // pred_check
        %p333 = pneg %p240
      $region54: #{decoder_forward.26} parent=39 // pred_check_branch
        %335 = sbr.rel (%p333) target = $region56
      $region55: #{decoder_forward.26} parent=39 // pred_region
        %p336 = scmp.lt.s32.totalorder %s16, 1
        %s337 = scalar_select %p336, %s16, 1
        %s338 = smul.addr %s337, 2
        %s339 = smul.addr %s338, 8
        %s340 = scalar_lea.vmem %s9, %s339
      $region56: #{decoder_forward.26} parent=39 // pred_fallthru
        _
    $region40: #{decoder_forward.26} parent=5 // pred_fallthru
      _
    %p341 = scmp.le.s32.totalorder 1, %s16
    %p342 = scmp.lt.s32.totalorder %s16, 3
    %p343 = pnand %p341, %p342
    %p344 = pneg %p343
    // Predicated region
    $region57: #{decoder_forward.26} parent=5 // pred_check
      _
    $region58: #{decoder_forward.26} parent=5 // pred_check_branch
      %346 = sbr.rel (%p343) target = $region60
    $region59: #{decoder_forward.26} parent=5 // pred_region
      %s347 = ssub.s32 %s16, 1
      %p348 = scmp.lt.s32.totalorder %s21, 1
      %s349 = scalar_select %p348, %s21, 1
      %s350 = smul.addr %s349, 2
      %s351 = smul.addr %s350, 8
      %s352 = scalar_lea.vmem %s0, %s351
      %p353 = pneg %p42
      %p354 = pneg %p39
      %p355 = scmp.lt.s32.totalorder %s21, 1
      %s356 = scalar_select %p355, %s21, 1
      %s357 = smul.addr %s356, 2
      %s358 = smul.addr %s357, 8
      %s359 = scalar_lea.vmem %s1, %s358
      %p360 = pneg %p68
      %p361 = pneg %p65
      %p362 = scmp.lt.s32.totalorder %s21, 1
      %s363 = scalar_select %p362, %s21, 1
      %s364 = smul.addr %s363, 2
      %s365 = smul.addr %s364, 8
      %s366 = scalar_lea.vmem %s2, %s365
      %p367 = pneg %p94
      %p368 = pneg %p91
      %p369 = pneg %p115
      %p370 = pneg %p112
      %p371 = pneg %p136
      %p372 = pneg %p133
      %p373 = pneg %p157
      %p374 = pneg %p154
      %p375 = pneg %p178
      %p376 = pneg %p175
      %p377 = pneg %p199
      %p378 = pneg %p196
      %p379 = pneg %p220
      %p380 = pneg %p217
      %p381 = scmp.lt.s32.totalorder %s21, 1
      %s382 = scalar_select %p381, %s21, 1
      %s383 = smul.addr %s382, 2
      %s384 = smul.addr %s383, 8
      %s385 = scalar_lea.vmem %s9, %s384
      %p386 = pneg %p246
      %p387 = pneg %p243
      %p388 = pneg %p272
      %p389 = pneg %p269
      %p390 = scmp.lt.s32.totalorder %s21, 1
      %s391 = scalar_select %p390, %s21, 1
      %s392 = smul.addr %s391, 2
      %s393 = smul.addr %s392, 8
      %s394 = scalar_lea.vmem %s10, %s393
      %p395 = scmp.lt.s32.totalorder %s21, 1
      %s396 = scalar_select %p395, %s21, 1
      %s397 = smul.addr %s396, 2
      %s398 = smul.addr %s397, 8
      %s399 = scalar_lea.vmem %s0, %s398
      %p400 = scmp.lt.s32.totalorder %s21, 1
      %s401 = scalar_select %p400, %s21, 1
      %s402 = smul.addr %s401, 2
      %s403 = smul.addr %s402, 8
      %s404 = scalar_lea.vmem %s1, %s403
      %p405 = scmp.lt.s32.totalorder %s21, 1
      %s406 = scalar_select %p405, %s21, 1
      %s407 = smul.addr %s406, 2
      %s408 = smul.addr %s407, 8
      %s409 = scalar_lea.vmem %s2, %s408
      %p410 = scmp.lt.s32.totalorder %s21, 1
      %s411 = scalar_select %p410, %s21, 1
      %s412 = smul.addr %s411, 2
      %s413 = smul.addr %s412, 8
      %s414 = scalar_lea.vmem %s9, %s413
      %p415 = scmp.lt.s32.totalorder %s21, 1
      %s416 = scalar_select %p415, %s21, 1
      %s417 = smul.addr %s416, 2
      %s418 = smul.addr %s417, 8
      %s419 = scalar_lea.vmem %s10, %s418
      %v421 = vld [vmem:[%s399] sm:$0xff]
      %v422 = vld [vmem:[%s399 + $0x8] sm:$0xff]
      %v423 = vld [vmem:[%s404] sm:$0xff]
      %v424 = vld [vmem:[%s404 + $0x8] sm:$0xff]
      %v425 = vld [vmem:[%s409] sm:$0xff]
      %v426 = vld [vmem:[%s409 + $0x8] sm:$0xff]
      %v427 = vpack.c.bf16 %v426, %v425
      %v428 = vld [vmem:[%s3] sm:$0xff]
      %v429 = vld [vmem:[%s3 + $0x8] sm:$0xff]
      %v430 = vld [vmem:[%s4] sm:$0xff]
      %v431 = vld [vmem:[%s4 + $0x8] sm:$0xff]
      %v432 = vld [vmem:[%s5] sm:$0xff]
      %v433 = vld [vmem:[%s5 + $0x8] sm:$0xff]
      %v434 = vld [vmem:[%s6] sm:$0xff]
      %v435 = vld [vmem:[%s6 + $0x8] sm:$0xff]
      %v436 = vsub.f32 0.0, %v421
      %v437 = vsub.f32 0.0, %v422
      %440 = vrot.lane.b32.xlu0 %v436, 120
      %v441 = vpop.permute.xlu0 %440
      %442 = vrot.lane.b32.xlu0 %v437, 120
      %v443 = vpop.permute.xlu0 %442
      %448 = vrot.lane.b32.xlu0 %v421, 8
      %v449 = vpop.permute.xlu0 %448
      %450 = vrot.lane.b32.xlu0 %v422, 8
      %v451 = vpop.permute.xlu0 %450
      %vm454 = vcmask 64512
      %v455 = vsel %vm454, %v441, %v449
      %v456 = vsel %vm454, %v443, %v451
      %v457 = vmul.f32 %v421, %v428
      %v458 = vmul.f32 %v422, %v429
      %v459 = vmul.f32 %v455, %v430
      %v460 = vmul.f32 %v456, %v431
      %v461 = vadd.f32 %v457, %v459
      %v462 = vadd.f32 %v458, %v460
      %v463 = vmul.f32 %v461, 0.25
      %v464 = vmul.f32 %v462, 0.25
      %v465 = vpack.c.bf16 %v464, %v463
      %v466 = vsub.f32 0.0, %v423
      %v467 = vsub.f32 0.0, %v424
      %470 = vrot.lane.b32.xlu0 %v466, 120
      %v471 = vpop.permute.xlu0 %470
      %472 = vrot.lane.b32.xlu0 %v467, 120
      %v473 = vpop.permute.xlu0 %472
      %478 = vrot.lane.b32.xlu0 %v423, 8
      %v479 = vpop.permute.xlu0 %478
      %480 = vrot.lane.b32.xlu0 %v424, 8
      %v481 = vpop.permute.xlu0 %480
      %v484 = vsel %vm454, %v471, %v479
      %v485 = vsel %vm454, %v473, %v481
      %v486 = vmul.f32 %v423, %v432
      %v487 = vmul.f32 %v424, %v433
      %v488 = vmul.f32 %v484, %v434
      %v489 = vmul.f32 %v485, %v435
      %v490 = vadd.f32 %v486, %v488
      %v491 = vadd.f32 %v487, %v489
      %v492 = vpack.c.bf16 %v491, %v490
      %vm493 = vcmask 130048
      %v495 = vsel %vm493, %v465, 0
      %v498 = vsel %vm493, %v492, 0
      %500 = vmatprep.subr.bf16.mxu0 0
      %501 = vmatpush1.bf16.xpose.msra.mxu0 %v498
      %502 = vmatprep.subr.bf16.mxu0 0
      %503 = vmatpush1.bf16.xpose.msra.mxu0 0
      %504 = vmatprep.subr.bf16.mxu0 0
      %505 = vmatpush1.bf16.xpose.msra.mxu0 0
      %506 = vmatprep.subr.bf16.mxu0 0
      %507 = vmatpush1.bf16.xpose.msra.mxu0 0
      %508 = vmatprep.subr.bf16.mxu0 0
      %509 = vmatpush1.bf16.xpose.msra.mxu0 0
      %510 = vmatprep.subr.bf16.mxu0 0
      %511 = vmatpush1.bf16.xpose.msra.mxu0 0
      %512 = vmatprep.subr.bf16.mxu0 0
      %513 = vmatpush1.bf16.xpose.msra.mxu0 0
      %514 = vmatprep.subr.bf16.mxu0 0
      %515 = vmatpush1.bf16.xpose.msra.mxu0 0
      %516 = vmatprep.subr.bf16.mxu0 0
      %517 = vmatpush1.bf16.xpose.msra.mxu0 0
      %518 = vmatprep.subr.bf16.mxu0 0
      %519 = vmatpush1.bf16.xpose.msra.mxu0 0
      %520 = vmatprep.subr.bf16.mxu0 0
      %521 = vmatpush1.bf16.xpose.msra.mxu0 0
      %522 = vmatprep.subr.bf16.mxu0 0
      %523 = vmatpush1.bf16.xpose.msra.mxu0 0
      %524 = vmatprep.subr.bf16.mxu0 0
      %525 = vmatpush1.bf16.xpose.msra.mxu0 0
      %526 = vmatprep.subr.bf16.mxu0 0
      %527 = vmatpush1.bf16.xpose.msra.mxu0 0
      %528 = vmatprep.subr.bf16.mxu0 0
      %529 = vmatpush1.bf16.xpose.msra.mxu0 0
      %530 = vmatprep.subr.bf16.mxu0 0
      %531 = vmatpush1.bf16.xpose.msra.mxu0 0
      %532 = vmatprep.mubr.bf16.mxu0 0
      %533 = vmatmul.mubr.bf16.gmra.mrb[0].mxu0 %v495
      %v534 = vpop.f32.mrb[0].mxu0
      %v535 = vadd.f32 0.0, %v534
      %v536 = vpop.f32.mrb[0].mxu0
      %v537 = vpop.f32.mrb[0].mxu0
      %v538 = vadd.f32 0.0, %v537
      %v539 = vpop.f32.mrb[0].mxu0
      %540 = vdwg.mxu0
      %v541 = vsel %vm493, %v535, -inf
      %542 = vmax.xlane.f32.xlu0 %v541
      %v543 = vpop.xlane.xlu0 %542
      %v544 = vsel %vm493, %v538, -inf
      %545 = vmax.xlane.f32.xlu0 %v544
      %v546 = vpop.xlane.xlu0 %545
      %v547 = vsub.f32 %v535, %v543
      %v548 = vsub.f32 %v538, %v546
      %v549 = vmul.f32 %v547, 1.442695
      %v550 = vpow.pop %v549
      %v551 = vmul.f32 %v548, 1.442695
      %v552 = vpow.pop %v551
      %v553 = vsel %vm493, %v550, 0.0
      %554 = vadd.xlane.f32.xlu0 %v553
      %v555 = vpop.xlane.xlu0 %554
      %v556 = vsel %vm493, %v552, 0.0
      %557 = vadd.xlane.f32.xlu0 %v556
      %v558 = vpop.xlane.xlu0 %557
      %v559 = vrcp.pop %v555
      %v560 = vrcp.pop %v558
      %v561 = vmul.f32 %v550, %v559
      %v562 = vmul.f32 %v552, %v560
      %v563 = vpack.c.bf16 %v562, %v561
      %v565 = vsel %vm493, %v563, 0
      %567 = vmatprep.subr.bf16.mxu0 0
      %568 = vmatpush1.bf16.msra.mxu0 %v427
      %569 = vmatprep.subr.bf16.mxu0 0
      %570 = vmatpush1.bf16.msra.mxu0 0
      %571 = vmatprep.subr.bf16.mxu0 0
      %572 = vmatpush1.bf16.msra.mxu0 0
      %573 = vmatprep.subr.bf16.mxu0 0
      %574 = vmatpush1.bf16.msra.mxu0 0
      %575 = vmatprep.subr.bf16.mxu0 0
      %576 = vmatpush1.bf16.msra.mxu0 0
      %577 = vmatprep.subr.bf16.mxu0 0
      %578 = vmatpush1.bf16.msra.mxu0 0
      %579 = vmatprep.subr.bf16.mxu0 0
      %580 = vmatpush1.bf16.msra.mxu0 0
      %581 = vmatprep.subr.bf16.mxu0 0
      %582 = vmatpush1.bf16.msra.mxu0 0
      %583 = vmatprep.subr.bf16.mxu0 0
      %584 = vmatpush1.bf16.msra.mxu0 0
      %585 = vmatprep.subr.bf16.mxu0 0
      %586 = vmatpush1.bf16.msra.mxu0 0
      %587 = vmatprep.subr.bf16.mxu0 0
      %588 = vmatpush1.bf16.msra.mxu0 0
      %589 = vmatprep.subr.bf16.mxu0 0
      %590 = vmatpush1.bf16.msra.mxu0 0
      %591 = vmatprep.subr.bf16.mxu0 0
      %592 = vmatpush1.bf16.msra.mxu0 0
      %593 = vmatprep.subr.bf16.mxu0 0
      %594 = vmatpush1.bf16.msra.mxu0 0
      %595 = vmatprep.subr.bf16.mxu0 0
      %596 = vmatpush1.bf16.msra.mxu0 0
      %597 = vmatprep.subr.bf16.mxu0 0
      %598 = vmatpush1.bf16.msra.mxu0 0
      %599 = vmatprep.mubr.bf16.mxu0 0
      %600 = vmatmul.mubr.bf16.gmra.mrb[0].mxu0 %v565
      %v601 = vpop.f32.mrb[0].mxu0
      %v602 = vadd.f32 0.0, %v601
      %v603 = vpop.f32.mrb[0].mxu0
      %v604 = vpop.f32.mrb[0].mxu0
      %v605 = vadd.f32 0.0, %v604
      %v606 = vpop.f32.mrb[0].mxu0
      %607 = vdwg.mxu0
      %608 = vrot.lane.b32.xlu0 %v436, 104
      %v609 = vpop.permute.xlu0 %608
      %610 = vrot.lane.b32.xlu0 %v437, 104
      %v611 = vpop.permute.xlu0 %610
      %614 = vrot.lane.b32.xlu0 %v421, 120
      %v615 = vpop.permute.xlu0 %614
      %616 = vrot.lane.b32.xlu0 %v422, 120
      %v617 = vpop.permute.xlu0 %616
      %v620 = vsel %vm454, %v609, %v615
      %v621 = vsel %vm454, %v611, %v617
      %624 = vrot.lane.b32.xlu0 %v428, 16
      %v625 = vpop.permute.xlu0 %624
      %626 = vrot.lane.b32.xlu0 %v429, 16
      %v627 = vpop.permute.xlu0 %626
      %v630 = vmul.f32 %v421, %v625
      %v631 = vmul.f32 %v422, %v627
      %v632 = vmul.f32 %v620, %v430
      %v633 = vmul.f32 %v621, %v431
      %636 = vrot.lane.b32.xlu0 %v632, 16
      %v637 = vpop.permute.xlu0 %636
      %638 = vrot.lane.b32.xlu0 %v633, 16
      %v639 = vpop.permute.xlu0 %638
      %v642 = vadd.f32 %v630, %v637
      %v643 = vadd.f32 %v631, %v639
      %v644 = vmul.f32 %v642, 0.25
      %v645 = vmul.f32 %v643, 0.25
      %v646 = vpack.c.bf16 %v645, %v644
      %647 = vrot.lane.b32.xlu0 %v466, 104
      %v648 = vpop.permute.xlu0 %647
      %649 = vrot.lane.b32.xlu0 %v467, 104
      %v650 = vpop.permute.xlu0 %649
      %653 = vrot.lane.b32.xlu0 %v423, 120
      %v654 = vpop.permute.xlu0 %653
      %655 = vrot.lane.b32.xlu0 %v424, 120
      %v656 = vpop.permute.xlu0 %655
      %v659 = vsel %vm454, %v648, %v654
      %v660 = vsel %vm454, %v650, %v656
      %663 = vrot.lane.b32.xlu0 %v432, 16
      %v664 = vpop.permute.xlu0 %663
      %665 = vrot.lane.b32.xlu0 %v433, 16
      %v666 = vpop.permute.xlu0 %665
      %v669 = vmul.f32 %v423, %v664
      %v670 = vmul.f32 %v424, %v666
      %v671 = vmul.f32 %v659, %v434
      %v672 = vmul.f32 %v660, %v435
      %675 = vrot.lane.b32.xlu0 %v671, 16
      %v676 = vpop.permute.xlu0 %675
      %677 = vrot.lane.b32.xlu0 %v672, 16
      %v678 = vpop.permute.xlu0 %677
      %v681 = vadd.f32 %v669, %v676
      %v682 = vadd.f32 %v670, %v678
      %v683 = vpack.c.bf16 %v682, %v681
      %685 = vrot.lane.b32.xlu0 %v646, 112
      %v686 = vpop.permute.xlu0 %685
      %688 = vrot.lane.b32.xlu0 %v683, 112
      %v689 = vpop.permute.xlu0 %688
      %v691 = vsel %vm493, %v686, 0
      %v694 = vsel %vm493, %v689, 0
      %696 = vmatprep.subr.bf16.mxu0 0
      %697 = vmatpush1.bf16.xpose.msra.mxu0 %v694
      %698 = vmatprep.subr.bf16.mxu0 0
      %699 = vmatpush1.bf16.xpose.msra.mxu0 0
      %700 = vmatprep.subr.bf16.mxu0 0
      %701 = vmatpush1.bf16.xpose.msra.mxu0 0
      %702 = vmatprep.subr.bf16.mxu0 0
      %703 = vmatpush1.bf16.xpose.msra.mxu0 0
      %704 = vmatprep.subr.bf16.mxu0 0
      %705 = vmatpush1.bf16.xpose.msra.mxu0 0
      %706 = vmatprep.subr.bf16.mxu0 0
      %707 = vmatpush1.bf16.xpose.msra.mxu0 0
      %708 = vmatprep.subr.bf16.mxu0 0
      %709 = vmatpush1.bf16.xpose.msra.mxu0 0
      %710 = vmatprep.subr.bf16.mxu0 0
      %711 = vmatpush1.bf16.xpose.msra.mxu0 0
      %712 = vmatprep.subr.bf16.mxu0 0
      %713 = vmatpush1.bf16.xpose.msra.mxu0 0
      %714 = vmatprep.subr.bf16.mxu0 0
      %715 = vmatpush1.bf16.xpose.msra.mxu0 0
      %716 = vmatprep.subr.bf16.mxu0 0
      %717 = vmatpush1.bf16.xpose.msra.mxu0 0
      %718 = vmatprep.subr.bf16.mxu0 0
      %719 = vmatpush1.bf16.xpose.msra.mxu0 0
      %720 = vmatprep.subr.bf16.mxu0 0
      %721 = vmatpush1.bf16.xpose.msra.mxu0 0
      %722 = vmatprep.subr.bf16.mxu0 0
      %723 = vmatpush1.bf16.xpose.msra.mxu0 0
      %724 = vmatprep.subr.bf16.mxu0 0
      %725 = vmatpush1.bf16.xpose.msra.mxu0 0
      %726 = vmatprep.subr.bf16.mxu0 0
      %727 = vmatpush1.bf16.xpose.msra.mxu0 0
      %728 = vmatprep.mubr.bf16.mxu0 0
      %729 = vmatmul.mubr.bf16.gmra.mrb[0].mxu0 %v691
      %v730 = vpop.f32.mrb[0].mxu0
      %v731 = vadd.f32 0.0, %v730
      %v732 = vpop.f32.mrb[0].mxu0
      %v733 = vpop.f32.mrb[0].mxu0
      %v734 = vadd.f32 0.0, %v733
      %v735 = vpop.f32.mrb[0].mxu0
      %736 = vdwg.mxu0
      %v737 = vsel %vm493, %v731, -inf
      %738 = vmax.xlane.f32.xlu0 %v737
      %v739 = vpop.xlane.xlu0 %738
      %v740 = vsel %vm493, %v734, -inf
      %741 = vmax.xlane.f32.xlu0 %v740
      %v742 = vpop.xlane.xlu0 %741
      %v743 = vsub.f32 %v731, %v739
      %v744 = vsub.f32 %v734, %v742
      %v745 = vmul.f32 %v743, 1.442695
      %v746 = vpow.pop %v745
      %v747 = vmul.f32 %v744, 1.442695
      %v748 = vpow.pop %v747
      %v749 = vsel %vm493, %v746, 0.0
      %750 = vadd.xlane.f32.xlu0 %v749
      %v751 = vpop.xlane.xlu0 %750
      %v752 = vsel %vm493, %v748, 0.0
      %753 = vadd.xlane.f32.xlu0 %v752
      %v754 = vpop.xlane.xlu0 %753
      %v755 = vrcp.pop %v751
      %v756 = vrcp.pop %v754
      %v757 = vmul.f32 %v746, %v755
      %v758 = vmul.f32 %v748, %v756
      %v759 = vpack.c.bf16 %v758, %v757
      %761 = vrot.lane.b32.xlu0 %v427, 112
      %v762 = vpop.permute.xlu0 %761
      %v765 = vsel %vm493, %v759, 0
      %767 = vmatprep.subr.bf16.mxu0 0
      %768 = vmatpush1.bf16.msra.mxu0 %v762
      %769 = vmatprep.subr.bf16.mxu0 0
      %770 = vmatpush1.bf16.msra.mxu0 0
      %771 = vmatprep.subr.bf16.mxu0 0
      %772 = vmatpush1.bf16.msra.mxu0 0
      %773 = vmatprep.subr.bf16.mxu0 0
      %774 = vmatpush1.bf16.msra.mxu0 0
      %775 = vmatprep.subr.bf16.mxu0 0
      %776 = vmatpush1.bf16.msra.mxu0 0
      %777 = vmatprep.subr.bf16.mxu0 0
      %778 = vmatpush1.bf16.msra.mxu0 0
      %779 = vmatprep.subr.bf16.mxu0 0
      %780 = vmatpush1.bf16.msra.mxu0 0
      %781 = vmatprep.subr.bf16.mxu0 0
      %782 = vmatpush1.bf16.msra.mxu0 0
      %783 = vmatprep.subr.bf16.mxu0 0
      %784 = vmatpush1.bf16.msra.mxu0 0
      %785 = vmatprep.subr.bf16.mxu0 0
      %786 = vmatpush1.bf16.msra.mxu0 0
      %787 = vmatprep.subr.bf16.mxu0 0
      %788 = vmatpush1.bf16.msra.mxu0 0
      %789 = vmatprep.subr.bf16.mxu0 0
      %790 = vmatpush1.bf16.msra.mxu0 0
      %791 = vmatprep.subr.bf16.mxu0 0
      %792 = vmatpush1.bf16.msra.mxu0 0
      %793 = vmatprep.subr.bf16.mxu0 0
      %794 = vmatpush1.bf16.msra.mxu0 0
      %795 = vmatprep.subr.bf16.mxu0 0
      %796 = vmatpush1.bf16.msra.mxu0 0
      %797 = vmatprep.subr.bf16.mxu0 0
      %798 = vmatpush1.bf16.msra.mxu0 0
      %799 = vmatprep.mubr.bf16.mxu0 0
      %800 = vmatmul.mubr.bf16.gmra.mrb[0].mxu0 %v765
      %v801 = vpop.f32.mrb[0].mxu0
      %v802 = vadd.f32 0.0, %v801
      %v803 = vpop.f32.mrb[0].mxu0
      %v804 = vpop.f32.mrb[0].mxu0
      %v805 = vadd.f32 0.0, %v804
      %v806 = vpop.f32.mrb[0].mxu0
      %807 = vdwg.mxu0
      %808 = vrot.lane.b32.xlu0 %v436, 88
      %v809 = vpop.permute.xlu0 %808
      %810 = vrot.lane.b32.xlu0 %v437, 88
      %v811 = vpop.permute.xlu0 %810
      %814 = vrot.lane.b32.xlu0 %v421, 104
      %v815 = vpop.permute.xlu0 %814
      %816 = vrot.lane.b32.xlu0 %v422, 104
      %v817 = vpop.permute.xlu0 %816
      %v820 = vsel %vm454, %v809, %v815
      %v821 = vsel %vm454, %v811, %v817
      %822 = vrot.lane.b32.xlu0 %v428, 32
      %v823 = vpop.permute.xlu0 %822
      %824 = vrot.lane.b32.xlu0 %v429, 32
      %v825 = vpop.permute.xlu0 %824
      %v828 = vmul.f32 %v421, %v823
      %v829 = vmul.f32 %v422, %v825
      %v830 = vmul.f32 %v820, %v430
      %v831 = vmul.f32 %v821, %v431
      %834 = vrot.lane.b32.xlu0 %v830, 32
      %v835 = vpop.permute.xlu0 %834
      %836 = vrot.lane.b32.xlu0 %v831, 32
      %v837 = vpop.permute.xlu0 %836
      %v840 = vadd.f32 %v828, %v835
      %v841 = vadd.f32 %v829, %v837
      %v842 = vmul.f32 %v840, 0.25
      %v843 = vmul.f32 %v841, 0.25
      %v844 = vpack.c.bf16 %v843, %v842
      %845 = vrot.lane.b32.xlu0 %v466, 88
      %v846 = vpop.permute.xlu0 %845
      %847 = vrot.lane.b32.xlu0 %v467, 88
      %v848 = vpop.permute.xlu0 %847
      %851 = vrot.lane.b32.xlu0 %v423, 104
      %v852 = vpop.permute.xlu0 %851
      %853 = vrot.lane.b32.xlu0 %v424, 104
      %v854 = vpop.permute.xlu0 %853
      %v857 = vsel %vm454, %v846, %v852
      %v858 = vsel %vm454, %v848, %v854
      %859 = vrot.lane.b32.xlu0 %v432, 32
      %v860 = vpop.permute.xlu0 %859
      %861 = vrot.lane.b32.xlu0 %v433, 32
      %v862 = vpop.permute.xlu0 %861
      %v865 = vmul.f32 %v423, %v860
      %v866 = vmul.f32 %v424, %v862
      %v867 = vmul.f32 %v857, %v434
      %v868 = vmul.f32 %v858, %v435
      %871 = vrot.lane.b32.xlu0 %v867, 32
      %v872 = vpop.permute.xlu0 %871
      %873 = vrot.lane.b32.xlu0 %v868, 32
      %v874 = vpop.permute.xlu0 %873
      %v877 = vadd.f32 %v865, %v872
      %v878 = vadd.f32 %v866, %v874
      %v879 = vpack.c.bf16 %v878, %v877
      %881 = vrot.lane.b32.xlu0 %v844, 96
      %v882 = vpop.permute.xlu0 %881
      %884 = vrot.lane.b32.xlu0 %v879, 96
      %v885 = vpop.permute.xlu0 %884
      %v887 = vsel %vm493, %v882, 0
      %v890 = vsel %vm493, %v885, 0
      %892 = vmatprep.subr.bf16.mxu0 0
      %893 = vmatpush1.bf16.xpose.msra.mxu0 %v890
      %894 = vmatprep.subr.bf16.mxu0 0
      %895 = vmatpush1.bf16.xpose.msra.mxu0 0
      %896 = vmatprep.subr.bf16.mxu0 0
      %897 = vmatpush1.bf16.xpose.msra.mxu0 0
      %898 = vmatprep.subr.bf16.mxu0 0
      %899 = vmatpush1.bf16.xpose.msra.mxu0 0
      %900 = vmatprep.subr.bf16.mxu0 0
      %901 = vmatpush1.bf16.xpose.msra.mxu0 0
      %902 = vmatprep.subr.bf16.mxu0 0
      %903 = vmatpush1.bf16.xpose.msra.mxu0 0
      %904 = vmatprep.subr.bf16.mxu0 0
      %905 = vmatpush1.bf16.xpose.msra.mxu0 0
      %906 = vmatprep.subr.bf16.mxu0 0
      %907 = vmatpush1.bf16.xpose.msra.mxu0 0
      %908 = vmatprep.subr.bf16.mxu0 0
      %909 = vmatpush1.bf16.xpose.msra.mxu0 0
      %910 = vmatprep.subr.bf16.mxu0 0
      %911 = vmatpush1.bf16.xpose.msra.mxu0 0
      %912 = vmatprep.subr.bf16.mxu0 0
      %913 = vmatpush1.bf16.xpose.msra.mxu0 0
      %914 = vmatprep.subr.bf16.mxu0 0
      %915 = vmatpush1.bf16.xpose.msra.mxu0 0
      %916 = vmatprep.subr.bf16.mxu0 0
      %917 = vmatpush1.bf16.xpose.msra.mxu0 0
      %918 = vmatprep.subr.bf16.mxu0 0
      %919 = vmatpush1.bf16.xpose.msra.mxu0 0
      %920 = vmatprep.subr.bf16.mxu0 0
      %921 = vmatpush1.bf16.xpose.msra.mxu0 0
      %922 = vmatprep.subr.bf16.mxu0 0
      %923 = vmatpush1.bf16.xpose.msra.mxu0 0
      %924 = vmatprep.mubr.bf16.mxu0 0
      %925 = vmatmul.mubr.bf16.gmra.mrb[0].mxu0 %v887
      %v926 = vpop.f32.mrb[0].mxu0
      %v927 = vadd.f32 0.0, %v926
      %v928 = vpop.f32.mrb[0].mxu0
      %v929 = vpop.f32.mrb[0].mxu0
      %v930 = vadd.f32 0.0, %v929
      %v931 = vpop.f32.mrb[0].mxu0
      %932 = vdwg.mxu0
      %v933 = vsel %vm493, %v927, -inf
      %934 = vmax.xlane.f32.xlu0 %v933
      %v935 = vpop.xlane.xlu0 %934
      %v936 = vsel %vm493, %v930, -inf
      %937 = vmax.xlane.f32.xlu0 %v936
      %v938 = vpop.xlane.xlu0 %937
      %v939 = vsub.f32 %v927, %v935
      %v940 = vsub.f32 %v930, %v938
      %v941 = vmul.f32 %v939, 1.442695
      %v942 = vpow.pop %v941
      %v943 = vmul.f32 %v940, 1.442695
      %v944 = vpow.pop %v943
      %v945 = vsel %vm493, %v942, 0.0
      %946 = vadd.xlane.f32.xlu0 %v945
      %v947 = vpop.xlane.xlu0 %946
      %v948 = vsel %vm493, %v944, 0.0
      %949 = vadd.xlane.f32.xlu0 %v948
      %v950 = vpop.xlane.xlu0 %949
      %v951 = vrcp.pop %v947
      %v952 = vrcp.pop %v950
      %v953 = vmul.f32 %v942, %v951
      %v954 = vmul.f32 %v944, %v952
      %v955 = vpack.c.bf16 %v954, %v953
      %956 = vrot.lane.b32.xlu0 %v427, 96
      %v957 = vpop.permute.xlu0 %956
      %v960 = vsel %vm493, %v955, 0
      %962 = vmatprep.subr.bf16.mxu0 0
      %963 = vmatpush1.bf16.msra.mxu0 %v957
      %964 = vmatprep.subr.bf16.mxu0 0
      %965 = vmatpush1.bf16.msra.mxu0 0
      %966 = vmatprep.subr.bf16.mxu0 0
      %967 = vmatpush1.bf16.msra.mxu0 0
      %968 = vmatprep.subr.bf16.mxu0 0
      %969 = vmatpush1.bf16.msra.mxu0 0
      %970 = vmatprep.subr.bf16.mxu0 0
      %971 = vmatpush1.bf16.msra.mxu0 0
      %972 = vmatprep.subr.bf16.mxu0 0
      %973 = vmatpush1.bf16.msra.mxu0 0
      %974 = vmatprep.subr.bf16.mxu0 0
      %975 = vmatpush1.bf16.msra.mxu0 0
      %976 = vmatprep.subr.bf16.mxu0 0
      %977 = vmatpush1.bf16.msra.mxu0 0
      %978 = vmatprep.subr.bf16.mxu0 0
      %979 = vmatpush1.bf16.msra.mxu0 0
      %980 = vmatprep.subr.bf16.mxu0 0
      %981 = vmatpush1.bf16.msra.mxu0 0
      %982 = vmatprep.subr.bf16.mxu0 0
      %983 = vmatpush1.bf16.msra.mxu0 0
      %984 = vmatprep.subr.bf16.mxu0 0
      %985 = vmatpush1.bf16.msra.mxu0 0
      %986 = vmatprep.subr.bf16.mxu0 0
      %987 = vmatpush1.bf16.msra.mxu0 0
      %988 = vmatprep.subr.bf16.mxu0 0
      %989 = vmatpush1.bf16.msra.mxu0 0
      %990 = vmatprep.subr.bf16.mxu0 0
      %991 = vmatpush1.bf16.msra.mxu0 0
      %992 = vmatprep.subr.bf16.mxu0 0
      %993 = vmatpush1.bf16.msra.mxu0 0
      %994 = vmatprep.mubr.bf16.mxu0 0
      %995 = vmatmul.mubr.bf16.gmra.mrb[0].mxu0 %v960
      %v996 = vpop.f32.mrb[0].mxu0
      %v997 = vadd.f32 0.0, %v996
      %v998 = vpop.f32.mrb[0].mxu0
      %v999 = vpop.f32.mrb[0].mxu0
      %v1000 = vadd.f32 0.0, %v999
      %v1001 = vpop.f32.mrb[0].mxu0
      %1002 = vdwg.mxu0
      %1003 = vrot.lane.b32.xlu0 %v436, 72
      %v1004 = vpop.permute.xlu0 %1003
      %1005 = vrot.lane.b32.xlu0 %v437, 72
      %v1006 = vpop.permute.xlu0 %1005
      %1009 = vrot.lane.b32.xlu0 %v421, 88
      %v1010 = vpop.permute.xlu0 %1009
      %1011 = vrot.lane.b32.xlu0 %v422, 88
      %v1012 = vpop.permute.xlu0 %1011
      %v1015 = vsel %vm454, %v1004, %v1010
      %v1016 = vsel %vm454, %v1006, %v1012
      %1017 = vrot.lane.b32.xlu0 %v428, 48
      %v1018 = vpop.permute.xlu0 %1017
      %1019 = vrot.lane.b32.xlu0 %v429, 48
      %v1020 = vpop.permute.xlu0 %1019
      %v1023 = vmul.f32 %v421, %v1018
      %v1024 = vmul.f32 %v422, %v1020
      %v1025 = vmul.f32 %v1015, %v430
      %v1026 = vmul.f32 %v1016, %v431
      %1029 = vrot.lane.b32.xlu0 %v1025, 48
      %v1030 = vpop.permute.xlu0 %1029
      %1031 = vrot.lane.b32.xlu0 %v1026, 48
      %v1032 = vpop.permute.xlu0 %1031
      %v1035 = vadd.f32 %v1023, %v1030
      %v1036 = vadd.f32 %v1024, %v1032
      %v1037 = vmul.f32 %v1035, 0.25
      %v1038 = vmul.f32 %v1036, 0.25
      %v1039 = vpack.c.bf16 %v1038, %v1037
      %1040 = vrot.lane.b32.xlu0 %v466, 72
      %v1041 = vpop.permute.xlu0 %1040
      %1042 = vrot.lane.b32.xlu0 %v467, 72
      %v1043 = vpop.permute.xlu0 %1042
      %1046 = vrot.lane.b32.xlu0 %v423, 88
      %v1047 = vpop.permute.xlu0 %1046
      %1048 = vrot.lane.b32.xlu0 %v424, 88
      %v1049 = vpop.permute.xlu0 %1048
      %v1052 = vsel %vm454, %v1041, %v1047
      %v1053 = vsel %vm454, %v1043, %v1049
      %1054 = vrot.lane.b32.xlu0 %v432, 48
      %v1055 = vpop.permute.xlu0 %1054
      %1056 = vrot.lane.b32.xlu0 %v433, 48
      %v1057 = vpop.permute.xlu0 %1056
      %v1060 = vmul.f32 %v423, %v1055
      %v1061 = vmul.f32 %v424, %v1057
      %v1062 = vmul.f32 %v1052, %v434
      %v1063 = vmul.f32 %v1053, %v435
      %1066 = vrot.lane.b32.xlu0 %v1062, 48
      %v1067 = vpop.permute.xlu0 %1066
      %1068 = vrot.lane.b32.xlu0 %v1063, 48
      %v1069 = vpop.permute.xlu0 %1068
      %v1072 = vadd.f32 %v1060, %v1067
      %v1073 = vadd.f32 %v1061, %v1069
      %v1074 = vpack.c.bf16 %v1073, %v1072
      %1076 = vrot.lane.b32.xlu0 %v1039, 80
      %v1077 = vpop.permute.xlu0 %1076
      %1079 = vrot.lane.b32.xlu0 %v1074, 80
      %v1080 = vpop.permute.xlu0 %1079
      %v1082 = vsel %vm493, %v1077, 0
      %v1085 = vsel %vm493, %v1080, 0
      %1087 = vmatprep.subr.bf16.mxu0 0
      %1088 = vmatpush1.bf16.xpose.msra.mxu0 %v1085
      %1089 = vmatprep.subr.bf16.mxu0 0
      %1090 = vmatpush1.bf16.xpose.msra.mxu0 0
      %1091 = vmatprep.subr.bf16.mxu0 0
      %1092 = vmatpush1.bf16.xpose.msra.mxu0 0
      %1093 = vmatprep.subr.bf16.mxu0 0
      %1094 = vmatpush1.bf16.xpose.msra.mxu0 0
      %1095 = vmatprep.subr.bf16.mxu0 0
      %1096 = vmatpush1.bf16.xpose.msra.mxu0 0
      %1097 = vmatprep.subr.bf16.mxu0 0
      %1098 = vmatpush1.bf16.xpose.msra.mxu0 0
      %1099 = vmatprep.subr.bf16.mxu0 0
      %1100 = vmatpush1.bf16.xpose.msra.mxu0 0
      %1101 = vmatprep.subr.bf16.mxu0 0
      %1102 = vmatpush1.bf16.xpose.msra.mxu0 0
      %1103 = vmatprep.subr.bf16.mxu0 0
      %1104 = vmatpush1.bf16.xpose.msra.mxu0 0
      %1105 = vmatprep.subr.bf16.mxu0 0
      %1106 = vmatpush1.bf16.xpose.msra.mxu0 0
      %1107 = vmatprep.subr.bf16.mxu0 0
      %1108 = vmatpush1.bf16.xpose.msra.mxu0 0
      %1109 = vmatprep.subr.bf16.mxu0 0
      %1110 = vmatpush1.bf16.xpose.msra.mxu0 0
      %1111 = vmatprep.subr.bf16.mxu0 0
      %1112 = vmatpush1.bf16.xpose.msra.mxu0 0
      %1113 = vmatprep.subr.bf16.mxu0 0
      %1114 = vmatpush1.bf16.xpose.msra.mxu0 0
      %1115 = vmatprep.subr.bf16.mxu0 0
      %1116 = vmatpush1.bf16.xpose.msra.mxu0 0
      %1117 = vmatprep.subr.bf16.mxu0 0
      %1118 = vmatpush1.bf16.xpose.msra.mxu0 0
      %1119 = vmatprep.mubr.bf16.mxu0 0
      %1120 = vmatmul.mubr.bf16.gmra.mrb[0].mxu0 %v1082
      %v1121 = vpop.f32.mrb[0].mxu0
      %v1122 = vadd.f32 0.0, %v1121
      %v1123 = vpop.f32.mrb[0].mxu0
      %v1124 = vpop.f32.mrb[0].mxu0
      %v1125 = vadd.f32 0.0, %v1124
      %v1126 = vpop.f32.mrb[0].mxu0
      %1127 = vdwg.mxu0
      %v1128 = vsel %vm493, %v1122, -inf
      %1129 = vmax.xlane.f32.xlu0 %v1128
      %v1130 = vpop.xlane.xlu0 %1129
      %v1131 = vsel %vm493, %v1125, -inf
      %1132 = vmax.xlane.f32.xlu0 %v1131
      %v1133 = vpop.xlane.xlu0 %1132
      %v1134 = vsub.f32 %v1122, %v1130
      %v1135 = vsub.f32 %v1125, %v1133
      %v1136 = vmul.f32 %v1134, 1.442695
      %v1137 = vpow.pop %v1136
      %v1138 = vmul.f32 %v1135, 1.442695
      %v1139 = vpow.pop %v1138
      %v1140 = vsel %vm493, %v1137, 0.0
      %1141 = vadd.xlane.f32.xlu0 %v1140
      %v1142 = vpop.xlane.xlu0 %1141
      %v1143 = vsel %vm493, %v1139, 0.0
      %1144 = vadd.xlane.f32.xlu0 %v1143
      %v1145 = vpop.xlane.xlu0 %1144
      %v1146 = vrcp.pop %v1142
      %v1147 = vrcp.pop %v1145
      %v1148 = vmul.f32 %v1137, %v1146
      %v1149 = vmul.f32 %v1139, %v1147
      %v1150 = vpack.c.bf16 %v1149, %v1148
      %1151 = vrot.lane.b32.xlu0 %v427, 80
      %v1152 = vpop.permute.xlu0 %1151
      %v1155 = vsel %vm493, %v1150, 0
      %1157 = vmatprep.subr.bf16.mxu0 0
      %1158 = vmatpush1.bf16.msra.mxu0 %v1152
      %1159 = vmatprep.subr.bf16.mxu0 0
      %1160 = vmatpush1.bf16.msra.mxu0 0
      %1161 = vmatprep.subr.bf16.mxu0 0
      %1162 = vmatpush1.bf16.msra.mxu0 0
      %1163 = vmatprep.subr.bf16.mxu0 0
      %1164 = vmatpush1.bf16.msra.mxu0 0
      %1165 = vmatprep.subr.bf16.mxu0 0
      %1166 = vmatpush1.bf16.msra.mxu0 0
      %1167 = vmatprep.subr.bf16.mxu0 0
      %1168 = vmatpush1.bf16.msra.mxu0 0
      %1169 = vmatprep.subr.bf16.mxu0 0
      %1170 = vmatpush1.bf16.msra.mxu0 0
      %1171 = vmatprep.subr.bf16.mxu0 0
      %1172 = vmatpush1.bf16.msra.mxu0 0
      %1173 = vmatprep.subr.bf16.mxu0 0
      %1174 = vmatpush1.bf16.msra.mxu0 0
      %1175 = vmatprep.subr.bf16.mxu0 0
      %1176 = vmatpush1.bf16.msra.mxu0 0
      %1177 = vmatprep.subr.bf16.mxu0 0
      %1178 = vmatpush1.bf16.msra.mxu0 0
      %1179 = vmatprep.subr.bf16.mxu0 0
      %1180 = vmatpush1.bf16.msra.mxu0 0
      %1181 = vmatprep.subr.bf16.mxu0 0
      %1182 = vmatpush1.bf16.msra.mxu0 0
      %1183 = vmatprep.subr.bf16.mxu0 0
      %1184 = vmatpush1.bf16.msra.mxu0 0
      %1185 = vmatprep.subr.bf16.mxu0 0
      %1186 = vmatpush1.bf16.msra.mxu0 0
      %1187 = vmatprep.subr.bf16.mxu0 0
      %1188 = vmatpush1.bf16.msra.mxu0 0
      %1189 = vmatprep.mubr.bf16.mxu0 0
      %1190 = vmatmul.mubr.bf16.gmra.mrb[0].mxu0 %v1155
      %v1191 = vpop.f32.mrb[0].mxu0
      %v1192 = vadd.f32 0.0, %v1191
      %v1193 = vpop.f32.mrb[0].mxu0
      %v1194 = vpop.f32.mrb[0].mxu0
      %v1195 = vadd.f32 0.0, %v1194
      %v1196 = vpop.f32.mrb[0].mxu0
      %1197 = vdwg.mxu0
      %1200 = vrot.lane.b32.xlu0 %v802, 16
      %v1201 = vpop.permute.xlu0 %1200
      %1202 = vrot.lane.b32.xlu0 %v805, 16
      %v1203 = vpop.permute.xlu0 %1202
      %1208 = vrot.lane.b32.xlu0 %v997, 32
      %v1209 = vpop.permute.xlu0 %1208
      %1210 = vrot.lane.b32.xlu0 %v1000, 32
      %v1211 = vpop.permute.xlu0 %1210
      %1216 = vrot.lane.b32.xlu0 %v1192, 48
      %v1217 = vpop.permute.xlu0 %1216
      %1218 = vrot.lane.b32.xlu0 %v1195, 48
      %v1219 = vpop.permute.xlu0 %1218
      %v1222 = vsel %vm493, %v602, %v1201
      %v1223 = vsel %vm493, %v605, %v1203
      %vm1224 = vcmask 261120
      %v1225 = vsel %vm1224, %v1222, %v1209
      %v1226 = vsel %vm1224, %v1223, %v1211
      %vm1227 = vcmask 392192
      %v1228 = vsel %vm1227, %v1225, %v1217
      %v1229 = vsel %vm1227, %v1226, %v1219
      %v1230 = vpack.c.bf16 %v1229, %v1228
      %v1231 = vld [vmem:[%s7] sm:$0xf]
      %v1232 = vld [vmem:[%s7 + $0x4] sm:$0xf]
      %v1233 = vld [vmem:[%s7 + $0x8] sm:$0xf]
      %v1234 = vld [vmem:[%s7 + $0xc] sm:$0xf]
      %v1235 = vld [vmem:[%s7 + $0x10] sm:$0xf]
      %v1236 = vld [vmem:[%s7 + $0x14] sm:$0xf]
      %v1237 = vld [vmem:[%s7 + $0x18] sm:$0xf]
      %v1238 = vld [vmem:[%s7 + $0x1c] sm:$0xf]
      %v1239 = vld [vmem:[%s8] sm:$0x1]
      %v1241 = vlaneseq
      %v1242 = vshrl.u32 %v1241, 7
      %v1243 = vsub.s32 0, %v1242
      %v1244 = vrot.slane %v1239, %v1243
      %v1254 = vunpack.c.l.b16 %v1231
      %v1255 = vunpack.c.l.b16 %v1232
      %v1256 = vunpack.c.l.b16 %v1233
      %v1257 = vunpack.c.l.b16 %v1234
      %v1258 = vunpack.c.l.b16 %v1235
      %v1259 = vunpack.c.l.b16 %v1236
      %v1260 = vunpack.c.l.b16 %v1237
      %v1261 = vunpack.c.l.b16 %v1238
      %v1262 = vpack.c.b16 %v1255, %v1254
      %v1263 = vpack.c.b16 %v1257, %v1256
      %v1264 = vpack.c.b16 %v1259, %v1258
      %v1265 = vpack.c.b16 %v1261, %v1260
      %vm1270 = vcmask 523264
      %v1272 = vsel %vm1270, %v1230, 0
      %1274 = vmatprep.subr.bf16.mxu0 0
      %1275 = vmatpush1.bf16.msra.mxu0 %v1262
      %1276 = vmatprep.subr.bf16.mxu0 0
      %1277 = vmatpush1.bf16.msra.mxu0 %v1263
      %1278 = vmatprep.subr.bf16.mxu0 0
      %1279 = vmatpush1.bf16.msra.mxu0 %v1264
      %1280 = vmatprep.subr.bf16.mxu0 0
      %1281 = vmatpush1.bf16.msra.mxu0 %v1265
      %1282 = vmatprep.subr.bf16.mxu0 0
      %1283 = vmatpush1.bf16.msra.mxu0 0
      %1284 = vmatprep.subr.bf16.mxu0 0
      %1285 = vmatpush1.bf16.msra.mxu0 0
      %1286 = vmatprep.subr.bf16.mxu0 0
      %1287 = vmatpush1.bf16.msra.mxu0 0
      %1288 = vmatprep.subr.bf16.mxu0 0
      %1289 = vmatpush1.bf16.msra.mxu0 0
      %1290 = vmatprep.subr.bf16.mxu0 0
      %1291 = vmatpush1.bf16.msra.mxu0 0
      %1292 = vmatprep.subr.bf16.mxu0 0
      %1293 = vmatpush1.bf16.msra.mxu0 0
      %1294 = vmatprep.subr.bf16.mxu0 0
      %1295 = vmatpush1.bf16.msra.mxu0 0
      %1296 = vmatprep.subr.bf16.mxu0 0
      %1297 = vmatpush1.bf16.msra.mxu0 0
      %1298 = vmatprep.subr.bf16.mxu0 0
      %1299 = vmatpush1.bf16.msra.mxu0 0
      %1300 = vmatprep.subr.bf16.mxu0 0
      %1301 = vmatpush1.bf16.msra.mxu0 0
      %1302 = vmatprep.subr.bf16.mxu0 0
      %1303 = vmatpush1.bf16.msra.mxu0 0
      %1304 = vmatprep.subr.bf16.mxu0 0
      %1305 = vmatpush1.bf16.msra.mxu0 0
      %1306 = vmatprep.mubr.bf16.mxu0 0
      %1307 = vmatmul.mubr.bf16.gmra.mrb[0].mxu0 %v1272
      %v1308 = vpop.f32.mrb[0].mxu0
      %v1309 = vadd.f32 %v1244, %v1308
      %v1310 = vpop.f32.mrb[0].mxu0
      %v1311 = vpop.f32.mrb[0].mxu0
      %v1312 = vadd.f32 %v1244, %v1311
      %v1313 = vpop.f32.mrb[0].mxu0
      %1314 = vdwg.mxu0
      %v1315 = vld [vmem:[%s414] sm:$0xff]
      %v1316 = vld [vmem:[%s414 + $0x8] sm:$0xff]
      %v1317 = vadd.f32 %v1309, %v1315
      %v1318 = vadd.f32 %v1312, %v1316
      %1319 = vst.msk [vmem:[%s419] sm:$0xff] %vm1270, %v1317
      %1320 = vst.msk [vmem:[%s419 + $0x8] sm:$0xff] %vm1270, %v1318
      %p1321 = scmp.lt.s32.totalorder %s21, 1
      %s1322 = scalar_select %p1321, %s21, 1
      %s1323 = smul.addr %s1322, 2
      %s1324 = smul.addr %s1323, 8
      %s1325 = scalar_lea.vmem %s10, %s1324
      // Predicated region
      $region61: #{decoder_forward.26} parent=59 // pred_check
        %p1326 = pneg %p269
      $region62: #{decoder_forward.26} parent=59 // pred_check_branch
        %1328 = sbr.rel (%p1326) target = $region64
      $region63: #{decoder_forward.26} parent=59 // pred_region
        _
      $region64: #{decoder_forward.26} parent=59 // pred_fallthru
        _
    $region60: #{decoder_forward.26} parent=5 // pred_fallthru
      _
    %p1329 = scmp.le.s32.totalorder 2, %s16
    // Predicated region
    $region65: #{decoder_forward.26} parent=5 // pred_check
      %p1330 = pneg %p1329
    $region66: #{decoder_forward.26} parent=5 // pred_check_branch
      %1332 = sbr.rel (%p1330) target = $region68
    $region67: #{decoder_forward.26} parent=5 // pred_region
      %s1333 = ssub.s32 %s16, 2
      // Predicated region
      $region69: #{decoder_forward.26} parent=67 // pred_check
        %p1334 = pneg %p275
      $region70: #{decoder_forward.26} parent=67 // pred_check_branch
        %1336 = sbr.rel (%p1334) target = $region72
      $region71: #{decoder_forward.26} parent=67 // pred_region
        %p1337 = scmp.lt.s32.totalorder %s22, 1
        %s1338 = scalar_select %p1337, %s22, 1
        %s1339 = smul.addr %s1338, 2
        %s1340 = smul.addr %s1339, 8
        %s1341 = scalar_lea.vmem %s10, %s1340
      $region72: #{decoder_forward.26} parent=67 // pred_fallthru
        _
    $region68: #{decoder_forward.26} parent=5 // pred_fallthru
      _
  $region6: #{decoder_forward.26} parent=0 // loop_footer
    %s20 = sadd.s32 1, %s16
  $region7: #{decoder_forward.26} parent=0 // loop_footer_branch
    %15 = sbr.rel target = $region3
  $region8: #{decoder_forward.26} parent=0 // loop_exit
    _

// kernel: decoder_forward.34
$region0: #{decoder_forward.34}
  #allocation0 [shape = 'u32[]', space=smem, size = 0x4, offset = 0x4, fixed_abs, tag = 'smem constant byte address 0x4 - core index']
  #allocation1 [shape = 'u32[144,128]{1,0:T(1,128)}', space=vmem, size = 0x12000, scoped, tag = 'internal scratch']
  %s0 = inlined_call_operand.vmem [shape: f32[64,64], index: 0, kind: input, shape index: {}]
  %s1 = inlined_call_operand.vmem [shape: f32[64,64], index: 1, kind: input, shape index: {}]
  %s2 = inlined_call_operand.vmem [shape: f32[1,64], index: 2, kind: input, shape index: {}]
  %s3 = inlined_call_operand.vmem [shape: f32[1,64], index: 3, kind: input, shape index: {}]
  %s4 = inlined_call_operand.vmem [shape: bf16[64,64], index: 4, kind: input, shape index: {}]
  %s5 = inlined_call_operand.vmem [shape: bf16[64,64], index: 5, kind: input, shape index: {}]
  %s6 = inlined_call_operand.vmem [shape: f32[1,64], index: 6, kind: input, shape index: {}]
  %s7 = inlined_call_operand.vmem [shape: f32[1,64], index: 7, kind: input, shape index: {}]
  %s8 = inlined_call_operand.vmem [shape: f32[64,64], index: 8, kind: output, shape index: {0}]
  %s9 = inlined_call_operand.vmem [shape: f32[64,64], index: 9, kind: output, shape index: {1}]
  %10 = xla_tuple %s8, %s9
  %s11 = sld [smem:[#allocation0]]
  $region50: #{decoder_forward.34} parent=0
    _
  %s13 = ssub.s32 1, %s11
  %s14 = scalar_select 0, %s13, %s11
  // Predicated region
  $region2: #{decoder_forward.34} parent=0 // pred_check
    _
  $region3: #{decoder_forward.34} parent=0 // pred_check_branch
    %16 = sbr.rel (0) target = $region5
  $region4: #{decoder_forward.34} parent=0 // pred_region
    _
  $region5: #{decoder_forward.34} parent=0 // pred_fallthru
    _
  // Predicated region
  $region6: #{decoder_forward.34} parent=0 // pred_check
    _
  $region7: #{decoder_forward.34} parent=0 // pred_check_branch
    %18 = sbr.rel (0) target = $region9
  $region8: #{decoder_forward.34} parent=0 // pred_region
    _
  $region9: #{decoder_forward.34} parent=0 // pred_fallthru
    _
  // Predicated region
  $region10: #{decoder_forward.34} parent=0 // pred_check
    _
  $region11: #{decoder_forward.34} parent=0 // pred_check_branch
    %20 = sbr.rel (0) target = $region13
  $region12: #{decoder_forward.34} parent=0 // pred_region
    _
  $region13: #{decoder_forward.34} parent=0 // pred_fallthru
    _
  // Predicated region
  $region14: #{decoder_forward.34} parent=0 // pred_check
    _
  $region15: #{decoder_forward.34} parent=0 // pred_check_branch
    %22 = sbr.rel (0) target = $region17
  $region16: #{decoder_forward.34} parent=0 // pred_region
    _
  $region17: #{decoder_forward.34} parent=0 // pred_fallthru
    _
  // Predicated region
  $region18: #{decoder_forward.34} parent=0 // pred_check
    _
  $region19: #{decoder_forward.34} parent=0 // pred_check_branch
    %24 = sbr.rel (0) target = $region21
  $region20: #{decoder_forward.34} parent=0 // pred_region
    _
  $region21: #{decoder_forward.34} parent=0 // pred_fallthru
    _
  // Predicated region
  $region22: #{decoder_forward.34} parent=0 // pred_check
    _
  $region23: #{decoder_forward.34} parent=0 // pred_check_branch
    %26 = sbr.rel (0) target = $region25
  $region24: #{decoder_forward.34} parent=0 // pred_region
    _
  $region25: #{decoder_forward.34} parent=0 // pred_fallthru
    _
  // Predicated region
  $region26: #{decoder_forward.34} parent=0 // pred_check
    _
  $region27: #{decoder_forward.34} parent=0 // pred_check_branch
    %28 = sbr.rel (0) target = $region29
  $region28: #{decoder_forward.34} parent=0 // pred_region
    _
  $region29: #{decoder_forward.34} parent=0 // pred_fallthru
    _
  // Predicated region
  $region30: #{decoder_forward.34} parent=0 // pred_check
    _
  $region31: #{decoder_forward.34} parent=0 // pred_check_branch
    %30 = sbr.rel (0) target = $region33
  $region32: #{decoder_forward.34} parent=0 // pred_region
    _
  $region33: #{decoder_forward.34} parent=0 // pred_fallthru
    _
  %v32 = vld [vmem:[%s0] sm:$0xff]
  %v33 = vld [vmem:[%s0 + $0x8] sm:$0xff]
  %v34 = vld [vmem:[%s0 + $0x10] sm:$0xff]
  %v35 = vld [vmem:[%s0 + $0x18] sm:$0xff]
  %v36 = vld [vmem:[%s0 + $0x20] sm:$0xff]
  %v37 = vld [vmem:[%s0 + $0x28] sm:$0xff]
  %v38 = vld [vmem:[%s0 + $0x30] sm:$0xff]
  %v39 = vld [vmem:[%s0 + $0x38] sm:$0xff]
  %v40 = vld [vmem:[%s1] sm:$0xff]
  %v41 = vld [vmem:[%s1 + $0x8] sm:$0xff]
  %v42 = vld [vmem:[%s1 + $0x10] sm:$0xff]
  %v43 = vld [vmem:[%s1 + $0x18] sm:$0xff]
  %v44 = vld [vmem:[%s1 + $0x20] sm:$0xff]
  %v45 = vld [vmem:[%s1 + $0x28] sm:$0xff]
  %v46 = vld [vmem:[%s1 + $0x30] sm:$0xff]
  %v47 = vld [vmem:[%s1 + $0x38] sm:$0xff]
  %v48 = vadd.f32 %v32, %v40
  %v49 = vadd.f32 %v33, %v41
  %v50 = vadd.f32 %v34, %v42
  %v51 = vadd.f32 %v35, %v43
  %v52 = vadd.f32 %v36, %v44
  %v53 = vadd.f32 %v37, %v45
  %v54 = vadd.f32 %v38, %v46
  %v55 = vadd.f32 %v39, %v47
  %v56 = vpack.c.bf16 %v33, %v32
  %v57 = vpack.c.bf16 %v35, %v34
  %v58 = vpack.c.bf16 %v37, %v36
  %v59 = vpack.c.bf16 %v39, %v38
  %v60 = vpack.c.bf16 %v49, %v48
  %v61 = vpack.c.bf16 %v51, %v50
  %v62 = vpack.c.bf16 %v53, %v52
  %v63 = vpack.c.bf16 %v55, %v54
  %v64 = vld [vmem:[%s4] sm:$0xf]
  %v65 = vld [vmem:[%s4 + $0x4] sm:$0xf]
  %v66 = vld [vmem:[%s4 + $0x8] sm:$0xf]
  %v67 = vld [vmem:[%s4 + $0xc] sm:$0xf]
  %v68 = vld [vmem:[%s4 + $0x10] sm:$0xf]
  %v69 = vld [vmem:[%s4 + $0x14] sm:$0xf]
  %v70 = vld [vmem:[%s4 + $0x18] sm:$0xf]
  %v71 = vld [vmem:[%s4 + $0x1c] sm:$0xf]
  %v72 = vld [vmem:[%s6] sm:$0x1]
  %v74 = vlaneseq
  %v75 = vshrl.u32 %v74, 7
  %v76 = vsub.s32 0, %v75
  %v77 = vrot.slane %v72, %v76
  %v87 = vunpack.c.l.b16 %v64
  %v88 = vunpack.c.l.b16 %v65
  %v89 = vunpack.c.l.b16 %v66
  %v90 = vunpack.c.l.b16 %v67
  %v91 = vunpack.c.l.b16 %v68
  %v92 = vunpack.c.l.b16 %v69
  %v93 = vunpack.c.l.b16 %v70
  %v94 = vunpack.c.l.b16 %v71
  %v95 = vpack.c.b16 %v88, %v87
  %v96 = vpack.c.b16 %v90, %v89
  %v97 = vpack.c.b16 %v92, %v91
  %v98 = vpack.c.b16 %v94, %v93
  %vm103 = vcmask 523264
  %v105 = vsel %vm103, %v60, 0
  %v108 = vsel %vm103, %v61, 0
  %v111 = vsel %vm103, %v62, 0
  %v114 = vsel %vm103, %v63, 0
  %116 = vmatprep.subr.bf16.mxu0 0
  %117 = vmatpush1.bf16.msra.mxu0 %v95
  %118 = vmatprep.subr.bf16.mxu0 0
  %119 = vmatpush1.bf16.msra.mxu0 %v96
  %120 = vmatprep.subr.bf16.mxu0 0
  %121 = vmatpush1.bf16.msra.mxu0 %v97
  %122 = vmatprep.subr.bf16.mxu0 0
  %123 = vmatpush1.bf16.msra.mxu0 %v98
  %124 = vmatprep.subr.bf16.mxu0 0
  %125 = vmatpush1.bf16.msra.mxu0 0
  %126 = vmatprep.subr.bf16.mxu0 0
  %127 = vmatpush1.bf16.msra.mxu0 0
  %128 = vmatprep.subr.bf16.mxu0 0
  %129 = vmatpush1.bf16.msra.mxu0 0
  %130 = vmatprep.subr.bf16.mxu0 0
  %131 = vmatpush1.bf16.msra.mxu0 0
  %132 = vmatprep.subr.bf16.mxu0 0
  %133 = vmatpush1.bf16.msra.mxu0 0
  %134 = vmatprep.subr.bf16.mxu0 0
  %135 = vmatpush1.bf16.msra.mxu0 0
  %136 = vmatprep.subr.bf16.mxu0 0
  %137 = vmatpush1.bf16.msra.mxu0 0
  %138 = vmatprep.subr.bf16.mxu0 0
  %139 = vmatpush1.bf16.msra.mxu0 0
  %140 = vmatprep.subr.bf16.mxu0 0
  %141 = vmatpush1.bf16.msra.mxu0 0
  %142 = vmatprep.subr.bf16.mxu0 0
  %143 = vmatpush1.bf16.msra.mxu0 0
  %144 = vmatprep.subr.bf16.mxu0 0
  %145 = vmatpush1.bf16.msra.mxu0 0
  %146 = vmatprep.subr.bf16.mxu0 0
  %147 = vmatpush1.bf16.msra.mxu0 0
  %148 = vmatprep.mubr.bf16.mxu0 0
  %149 = vmatmul.mubr.bf16.gmra.mrb[0].mxu0 %v105
  %v150 = vpop.f32.mrb[0].mxu0
  %v151 = vadd.f32 %v77, %v150
  %v152 = vpop.f32.mrb[0].mxu0
  %v153 = vpop.f32.mrb[0].mxu0
  %v154 = vadd.f32 %v77, %v153
  %v155 = vpop.f32.mrb[0].mxu0
  %156 = vmatprep.mubr.bf16.mxu0 0
  %157 = vmatmul.mubr.bf16.gmra.mrb[0].mxu0 %v108
  %v158 = vpop.f32.mrb[0].mxu0
  %v159 = vadd.f32 %v77, %v158
  %v160 = vpop.f32.mrb[0].mxu0
  %v161 = vpop.f32.mrb[0].mxu0
  %v162 = vadd.f32 %v77, %v161
  %v163 = vpop.f32.mrb[0].mxu0
  %164 = vmatprep.mubr.bf16.mxu0 0
  %165 = vmatmul.mubr.bf16.gmra.mrb[0].mxu0 %v111
  %v166 = vpop.f32.mrb[0].mxu0
  %v167 = vadd.f32 %v77, %v166
  %v168 = vpop.f32.mrb[0].mxu0
  %v169 = vpop.f32.mrb[0].mxu0
  %v170 = vadd.f32 %v77, %v169
  %v171 = vpop.f32.mrb[0].mxu0
  %172 = vmatprep.mubr.bf16.mxu0 0
  %173 = vmatmul.mubr.bf16.gmra.mrb[0].mxu0 %v114
  %v174 = vpop.f32.mrb[0].mxu0
  %v175 = vadd.f32 %v77, %v174
  %v176 = vpop.f32.mrb[0].mxu0
  %v177 = vpop.f32.mrb[0].mxu0
  %v178 = vadd.f32 %v77, %v177
  %v179 = vpop.f32.mrb[0].mxu0
  %180 = vdwg.mxu0
  %181 = vst.msk [vmem:[%s8] sm:$0xff] %vm103, %v151
  %182 = vst.msk [vmem:[%s8 + $0x8] sm:$0xff] %vm103, %v154
  %183 = vst.msk [vmem:[%s8 + $0x10] sm:$0xff] %vm103, %v159
  %184 = vst.msk [vmem:[%s8 + $0x18] sm:$0xff] %vm103, %v162
  %185 = vst.msk [vmem:[%s8 + $0x20] sm:$0xff] %vm103, %v167
  %186 = vst.msk [vmem:[%s8 + $0x28] sm:$0xff] %vm103, %v170
  %187 = vst.msk [vmem:[%s8 + $0x30] sm:$0xff] %vm103, %v175
  %188 = vst.msk [vmem:[%s8 + $0x38] sm:$0xff] %vm103, %v178
  %v189 = vld [vmem:[%s5] sm:$0xf]
  %v190 = vld [vmem:[%s5 + $0x4] sm:$0xf]
  %v191 = vld [vmem:[%s5 + $0x8] sm:$0xf]
  %v192 = vld [vmem:[%s5 + $0xc] sm:$0xf]
  %v193 = vld [vmem:[%s5 + $0x10] sm:$0xf]
  %v194 = vld [vmem:[%s5 + $0x14] sm:$0xf]
  %v195 = vld [vmem:[%s5 + $0x18] sm:$0xf]
  %v196 = vld [vmem:[%s5 + $0x1c] sm:$0xf]
  %v197 = vld [vmem:[%s7] sm:$0x1]
  %v199 = vlaneseq
  %v200 = vshrl.u32 %v199, 7
  %v201 = vsub.s32 0, %v200
  %v202 = vrot.slane %v197, %v201
  %v212 = vunpack.c.l.b16 %v189
  %v213 = vunpack.c.l.b16 %v190
  %v214 = vunpack.c.l.b16 %v191
  %v215 = vunpack.c.l.b16 %v192
  %v216 = vunpack.c.l.b16 %v193
  %v217 = vunpack.c.l.b16 %v194
  %v218 = vunpack.c.l.b16 %v195
  %v219 = vunpack.c.l.b16 %v196
  %v220 = vpack.c.b16 %v213, %v212
  %v221 = vpack.c.b16 %v215, %v214
  %v222 = vpack.c.b16 %v217, %v216
  %v223 = vpack.c.b16 %v219, %v218
  %v229 = vsel %vm103, %v56, 0
  %v232 = vsel %vm103, %v57, 0
  %v235 = vsel %vm103, %v58, 0
  %v238 = vsel %vm103, %v59, 0
  %240 = vmatprep.subr.bf16.mxu0 0
  %241 = vmatpush1.bf16.msra.mxu0 %v220
  %242 = vmatprep.subr.bf16.mxu0 0
  %243 = vmatpush1.bf16.msra.mxu0 %v221
  %244 = vmatprep.subr.bf16.mxu0 0
  %245 = vmatpush1.bf16.msra.mxu0 %v222
  %246 = vmatprep.subr.bf16.mxu0 0
  %247 = vmatpush1.bf16.msra.mxu0 %v223
  %248 = vmatprep.subr.bf16.mxu0 0
  %249 = vmatpush1.bf16.msra.mxu0 0
  %250 = vmatprep.subr.bf16.mxu0 0
  %251 = vmatpush1.bf16.msra.mxu0 0
  %252 = vmatprep.subr.bf16.mxu0 0
  %253 = vmatpush1.bf16.msra.mxu0 0
  %254 = vmatprep.subr.bf16.mxu0 0
  %255 = vmatpush1.bf16.msra.mxu0 0
  %256 = vmatprep.subr.bf16.mxu0 0
  %257 = vmatpush1.bf16.msra.mxu0 0
  %258 = vmatprep.subr.bf16.mxu0 0
  %259 = vmatpush1.bf16.msra.mxu0 0
  %260 = vmatprep.subr.bf16.mxu0 0
  %261 = vmatpush1.bf16.msra.mxu0 0
  %262 = vmatprep.subr.bf16.mxu0 0
  %263 = vmatpush1.bf16.msra.mxu0 0
  %264 = vmatprep.subr.bf16.mxu0 0
  %265 = vmatpush1.bf16.msra.mxu0 0
  %266 = vmatprep.subr.bf16.mxu0 0
  %267 = vmatpush1.bf16.msra.mxu0 0
  %268 = vmatprep.subr.bf16.mxu0 0
  %269 = vmatpush1.bf16.msra.mxu0 0
  %270 = vmatprep.subr.bf16.mxu0 0
  %271 = vmatpush1.bf16.msra.mxu0 0
  %272 = vmatprep.mubr.bf16.mxu0 0
  %273 = vmatmul.mubr.bf16.gmra.mrb[0].mxu0 %v229
  %v274 = vpop.f32.mrb[0].mxu0
  %v275 = vadd.f32 %v202, %v274
  %v276 = vpop.f32.mrb[0].mxu0
  %v277 = vpop.f32.mrb[0].mxu0
  %v278 = vadd.f32 %v202, %v277
  %v279 = vpop.f32.mrb[0].mxu0
  %280 = vmatprep.mubr.bf16.mxu0 0
  %281 = vmatmul.mubr.bf16.gmra.mrb[0].mxu0 %v232
  %v282 = vpop.f32.mrb[0].mxu0
  %v283 = vadd.f32 %v202, %v282
  %v284 = vpop.f32.mrb[0].mxu0
  %v285 = vpop.f32.mrb[0].mxu0
  %v286 = vadd.f32 %v202, %v285
  %v287 = vpop.f32.mrb[0].mxu0
  %288 = vmatprep.mubr.bf16.mxu0 0
  %289 = vmatmul.mubr.bf16.gmra.mrb[0].mxu0 %v235
  %v290 = vpop.f32.mrb[0].mxu0
  %v291 = vadd.f32 %v202, %v290
  %v292 = vpop.f32.mrb[0].mxu0
  %v293 = vpop.f32.mrb[0].mxu0
  %v294 = vadd.f32 %v202, %v293
  %v295 = vpop.f32.mrb[0].mxu0
  %296 = vmatprep.mubr.bf16.mxu0 0
  %297 = vmatmul.mubr.bf16.gmra.mrb[0].mxu0 %v238
  %v298 = vpop.f32.mrb[0].mxu0
  %v299 = vadd.f32 %v202, %v298
  %v300 = vpop.f32.mrb[0].mxu0
  %v301 = vpop.f32.mrb[0].mxu0
  %v302 = vadd.f32 %v202, %v301
  %v303 = vpop.f32.mrb[0].mxu0
  %304 = vdwg.mxu0
  %305 = vst.msk [vmem:[%s9] sm:$0xff] %vm103, %v275
  %306 = vst.msk [vmem:[%s9 + $0x8] sm:$0xff] %vm103, %v278
  %307 = vst.msk [vmem:[%s9 + $0x10] sm:$0xff] %vm103, %v283
  %308 = vst.msk [vmem:[%s9 + $0x18] sm:$0xff] %vm103, %v286
  %309 = vst.msk [vmem:[%s9 + $0x20] sm:$0xff] %vm103, %v291
  %310 = vst.msk [vmem:[%s9 + $0x28] sm:$0xff] %vm103, %v294
  %311 = vst.msk [vmem:[%s9 + $0x30] sm:$0xff] %vm103, %v299
  %312 = vst.msk [vmem:[%s9 + $0x38] sm:$0xff] %vm103, %v302
  // Predicated region
  $region34: #{decoder_forward.34} parent=0 // pred_check
    _
  $region35: #{decoder_forward.34} parent=0 // pred_check_branch
    %314 = sbr.rel (0) target = $region37
  $region36: #{decoder_forward.34} parent=0 // pred_region
    _
  $region37: #{decoder_forward.34} parent=0 // pred_fallthru
    _
  // Predicated region
  $region38: #{decoder_forward.34} parent=0 // pred_check
    _
  $region39: #{decoder_forward.34} parent=0 // pred_check_branch
    %316 = sbr.rel (0) target = $region41
  $region40: #{decoder_forward.34} parent=0 // pred_region
    _
  $region41: #{decoder_forward.34} parent=0 // pred_fallthru
    _
  // Predicated region
  $region42: #{decoder_forward.34} parent=0 // pred_check
    _
  $region43: #{decoder_forward.34} parent=0 // pred_check_branch
    %318 = sbr.rel (0) target = $region45
  $region44: #{decoder_forward.34} parent=0 // pred_region
    _
  $region45: #{decoder_forward.34} parent=0 // pred_fallthru
    _
  // Predicated region
  $region46: #{decoder_forward.34} parent=0 // pred_check
    _
  $region47: #{decoder_forward.34} parent=0 // pred_check_branch
    %320 = sbr.rel (0) target = $region49
  $region48: #{decoder_forward.34} parent=0 // pred_region
    _
  $region49: #{decoder_forward.34} parent=0 // pred_fallthru
    _

// kernel: decoder_forward.30
$region0: #{decoder_forward.30}
  #allocation0 [shape = 'u32[]', space=smem, size = 0x4, offset = 0x4, fixed_abs, tag = 'smem constant byte address 0x4 - core index']
  #allocation1 [shape = 'u32[144,128]{1,0:T(1,128)}', space=vmem, size = 0x12000, scoped, tag = 'internal scratch']
  %s0 = inlined_call_operand.vmem [shape: f32[32,64], index: 0, kind: input, shape index: {}]
  %s1 = inlined_call_operand.vmem [shape: f32[1,64], index: 1, kind: input, shape index: {}]
  %s2 = inlined_call_operand.vmem [shape: f32[1,64], index: 2, kind: input, shape index: {}]
  %s3 = inlined_call_operand.vmem [shape: bf16[64,128], index: 3, kind: input, shape index: {}]
  %s4 = inlined_call_operand.vmem [shape: f32[1,128], index: 4, kind: input, shape index: {}]
  %s5 = inlined_call_operand.vmem [shape: bf16[128,64], index: 5, kind: input, shape index: {}]
  %s6 = inlined_call_operand.vmem [shape: f32[1,64], index: 6, kind: input, shape index: {}]
  %s7 = inlined_call_operand.vmem [shape: f32[1,64], index: 7, kind: input, shape index: {}]
  %s8 = inlined_call_operand.vmem [shape: f32[1,64], index: 8, kind: input, shape index: {}]
  %s9 = inlined_call_operand.vmem [shape: f32[32,64], index: 9, kind: output, shape index: {}]
  %s10 = sld [smem:[#allocation0]]
  $region46: #{decoder_forward.30} parent=0
    _
  %s12 = ssub.s32 1, %s10
  %s13 = scalar_select 0, %s12, %s10
  // Predicated region
  $region2: #{decoder_forward.30} parent=0 // pred_check
    _
  $region3: #{decoder_forward.30} parent=0 // pred_check_branch
    %15 = sbr.rel (0) target = $region5
  $region4: #{decoder_forward.30} parent=0 // pred_region
    _
  $region5: #{decoder_forward.30} parent=0 // pred_fallthru
    _
  // Predicated region
  $region6: #{decoder_forward.30} parent=0 // pred_check
    _
  $region7: #{decoder_forward.30} parent=0 // pred_check_branch
    %17 = sbr.rel (0) target = $region9
  $region8: #{decoder_forward.30} parent=0 // pred_region
    _
  $region9: #{decoder_forward.30} parent=0 // pred_fallthru
    _
  // Predicated region
  $region10: #{decoder_forward.30} parent=0 // pred_check
    _
  $region11: #{decoder_forward.30} parent=0 // pred_check_branch
    %19 = sbr.rel (0) target = $region13
  $region12: #{decoder_forward.30} parent=0 // pred_region
    _
  $region13: #{decoder_forward.30} parent=0 // pred_fallthru
    _
  // Predicated region
  $region14: #{decoder_forward.30} parent=0 // pred_check
    _
  $region15: #{decoder_forward.30} parent=0 // pred_check_branch
    %21 = sbr.rel (0) target = $region17
  $region16: #{decoder_forward.30} parent=0 // pred_region
    _
  $region17: #{decoder_forward.30} parent=0 // pred_fallthru
    _
  // Predicated region
  $region18: #{decoder_forward.30} parent=0 // pred_check
    _
  $region19: #{decoder_forward.30} parent=0 // pred_check_branch
    %23 = sbr.rel (0) target = $region21
  $region20: #{decoder_forward.30} parent=0 // pred_region
    _
  $region21: #{decoder_forward.30} parent=0 // pred_fallthru
    _
  // Predicated region
  $region22: #{decoder_forward.30} parent=0 // pred_check
    _
  $region23: #{decoder_forward.30} parent=0 // pred_check_branch
    %25 = sbr.rel (0) target = $region25
  $region24: #{decoder_forward.30} parent=0 // pred_region
    _
  $region25: #{decoder_forward.30} parent=0 // pred_fallthru
    _
  // Predicated region
  $region26: #{decoder_forward.30} parent=0 // pred_check
    _
  $region27: #{decoder_forward.30} parent=0 // pred_check_branch
    %27 = sbr.rel (0) target = $region29
  $region28: #{decoder_forward.30} parent=0 // pred_region
    _
  $region29: #{decoder_forward.30} parent=0 // pred_fallthru
    _
  // Predicated region
  $region30: #{decoder_forward.30} parent=0 // pred_check
    _
  $region31: #{decoder_forward.30} parent=0 // pred_check_branch
    %29 = sbr.rel (0) target = $region33
  $region32: #{decoder_forward.30} parent=0 // pred_region
    _
  $region33: #{decoder_forward.30} parent=0 // pred_fallthru
    _
  // Predicated region
  $region34: #{decoder_forward.30} parent=0 // pred_check
    _
  $region35: #{decoder_forward.30} parent=0 // pred_check_branch
    %31 = sbr.rel (0) target = $region37
  $region36: #{decoder_forward.30} parent=0 // pred_region
    _
  $region37: #{decoder_forward.30} parent=0 // pred_fallthru
    _
  %v33 = vld [vmem:[%s0] sm:$0xff]
  %v34 = vld [vmem:[%s0 + $0x8] sm:$0xff]
  %v35 = vld [vmem:[%s0 + $0x10] sm:$0xff]
  %v36 = vld [vmem:[%s0 + $0x18] sm:$0xff]
  %vm37 = vcmask 523264
  %v38 = vsel %vm37, %v33, 0.0
  %39 = vadd.xlane.f32.xlu0 %v38
  %v40 = vpop.xlane.xlu0 %39
  %v41 = vsel %vm37, %v34, 0.0
  %42 = vadd.xlane.f32.xlu0 %v41
  %v43 = vpop.xlane.xlu0 %42
  %v44 = vsel %vm37, %v35, 0.0
  %45 = vadd.xlane.f32.xlu0 %v44
  %v46 = vpop.xlane.xlu0 %45
  %v47 = vsel %vm37, %v36, 0.0
  %48 = vadd.xlane.f32.xlu0 %v47
  %v49 = vpop.xlane.xlu0 %48
  %v50 = vrcp.pop 64.0
  %v51 = vmul.f32 %v40, %v50
  %v52 = vmul.f32 %v43, %v50
  %v53 = vmul.f32 %v46, %v50
  %v54 = vmul.f32 %v49, %v50
  %v55 = vsub.f32 %v33, %v51
  %v56 = vsub.f32 %v34, %v52
  %v57 = vsub.f32 %v35, %v53
  %v58 = vsub.f32 %v36, %v54
  %v59 = vmul.f32 %v55, %v55
  %v60 = vmul.f32 %v56, %v56
  %v61 = vmul.f32 %v57, %v57
  %v62 = vmul.f32 %v58, %v58
  %v63 = vsel %vm37, %v59, 0.0
  %64 = vadd.xlane.f32.xlu0 %v63
  %v65 = vpop.xlane.xlu0 %64
  %v66 = vsel %vm37, %v60, 0.0
  %67 = vadd.xlane.f32.xlu0 %v66
  %v68 = vpop.xlane.xlu0 %67
  %v69 = vsel %vm37, %v61, 0.0
  %70 = vadd.xlane.f32.xlu0 %v69
  %v71 = vpop.xlane.xlu0 %70
  %v72 = vsel %vm37, %v62, 0.0
  %73 = vadd.xlane.f32.xlu0 %v72
  %v74 = vpop.xlane.xlu0 %73
  %v75 = vmul.f32 %v65, %v50
  %v76 = vmul.f32 %v68, %v50
  %v77 = vmul.f32 %v71, %v50
  %v78 = vmul.f32 %v74, %v50
  %v79 = vadd.f32 %v75, 1e-05
  %v80 = vadd.f32 %v76, 1e-05
  %v81 = vadd.f32 %v77, 1e-05
  %v82 = vadd.f32 %v78, 1e-05
  %v83 = vrsqrt.pop %v79
  %v84 = vrsqrt.pop %v80
  %v85 = vrsqrt.pop %v81
  %v86 = vrsqrt.pop %v82
  %v87 = vmul.f32 %v55, %v83
  %v88 = vmul.f32 %v56, %v84
  %v89 = vmul.f32 %v57, %v85
  %v90 = vmul.f32 %v58, %v86
  %v91 = vld [vmem:[%s1] sm:$0x1]
  %v93 = vlaneseq
  %v94 = vshrl.u32 %v93, 7
  %v95 = vsub.s32 0, %v94
  %v96 = vrot.slane %v91, %v95
  %v98 = vmul.f32 %v87, %v96
  %v99 = vmul.f32 %v88, %v96
  %v100 = vmul.f32 %v89, %v96
  %v101 = vmul.f32 %v90, %v96
  %v102 = vld [vmem:[%s2] sm:$0x1]
  %v104 = vlaneseq
  %v105 = vshrl.u32 %v104, 7
  %v106 = vsub.s32 0, %v105
  %v107 = vrot.slane %v102, %v106
  %v109 = vadd.f32 %v98, %v107
  %v110 = vadd.f32 %v99, %v107
  %v111 = vadd.f32 %v100, %v107
  %v112 = vadd.f32 %v101, %v107
  %v113 = vpack.c.bf16 %v110, %v109
  %v114 = vpack.c.bf16 %v112, %v111
  %v115 = vld [vmem:[%s3] sm:$0xf]
  %v116 = vld [vmem:[%s3 + $0x4] sm:$0xf]
  %v117 = vld [vmem:[%s3 + $0x8] sm:$0xf]
  %v118 = vld [vmem:[%s3 + $0xc] sm:$0xf]
  %v119 = vld [vmem:[%s3 + $0x10] sm:$0xf]
  %v120 = vld [vmem:[%s3 + $0x14] sm:$0xf]
  %v121 = vld [vmem:[%s3 + $0x18] sm:$0xf]
  %v122 = vld [vmem:[%s3 + $0x1c] sm:$0xf]
  %v123 = vld [vmem:[%s4] sm:$0x1]
  %v125 = vlaneseq
  %v126 = vshrl.u32 %v125, 7
  %v127 = vsub.s32 0, %v126
  %v128 = vrot.slane %v123, %v127
  %v138 = vunpack.c.l.b16 %v115
  %v139 = vunpack.c.l.b16 %v116
  %v140 = vunpack.c.l.b16 %v117
  %v141 = vunpack.c.l.b16 %v118
  %v142 = vunpack.c.l.b16 %v119
  %v143 = vunpack.c.l.b16 %v120
  %v144 = vunpack.c.l.b16 %v121
  %v145 = vunpack.c.l.b16 %v122
  %v146 = vpack.c.b16 %v139, %v138
  %v147 = vpack.c.b16 %v141, %v140
  %v148 = vpack.c.b16 %v143, %v142
  %v149 = vpack.c.b16 %v145, %v144
  %v155 = vsel %vm37, %v113, 0
  %v158 = vsel %vm37, %v114, 0
  %160 = vmatprep.subr.bf16.mxu0 0
  %161 = vmatpush1.bf16.msra.mxu0 %v146
  %162 = vmatprep.subr.bf16.mxu0 0
  %163 = vmatpush1.bf16.msra.mxu0 %v147
  %164 = vmatprep.subr.bf16.mxu0 0
  %165 = vmatpush1.bf16.msra.mxu0 %v148
  %166 = vmatprep.subr.bf16.mxu0 0
  %167 = vmatpush1.bf16.msra.mxu0 %v149
  %168 = vmatprep.subr.bf16.mxu0 0
  %169 = vmatpush1.bf16.msra.mxu0 0
  %170 = vmatprep.subr.bf16.mxu0 0
  %171 = vmatpush1.bf16.msra.mxu0 0
  %172 = vmatprep.subr.bf16.mxu0 0
  %173 = vmatpush1.bf16.msra.mxu0 0
  %174 = vmatprep.subr.bf16.mxu0 0
  %175 = vmatpush1.bf16.msra.mxu0 0
  %176 = vmatprep.subr.bf16.mxu0 0
  %177 = vmatpush1.bf16.msra.mxu0 0
  %178 = vmatprep.subr.bf16.mxu0 0
  %179 = vmatpush1.bf16.msra.mxu0 0
  %180 = vmatprep.subr.bf16.mxu0 0
  %181 = vmatpush1.bf16.msra.mxu0 0
  %182 = vmatprep.subr.bf16.mxu0 0
  %183 = vmatpush1.bf16.msra.mxu0 0
  %184 = vmatprep.subr.bf16.mxu0 0
  %185 = vmatpush1.bf16.msra.mxu0 0
  %186 = vmatprep.subr.bf16.mxu0 0
  %187 = vmatpush1.bf16.msra.mxu0 0
  %188 = vmatprep.subr.bf16.mxu0 0
  %189 = vmatpush1.bf16.msra.mxu0 0
  %190 = vmatprep.subr.bf16.mxu0 0
  %191 = vmatpush1.bf16.msra.mxu0 0
  %192 = vmatprep.mubr.bf16.mxu0 0
  %193 = vmatmul.mubr.bf16.gmra.mrb[0].mxu0 %v155
  %v194 = vpop.f32.mrb[0].mxu0
  %v195 = vadd.f32 %v128, %v194
  %v196 = vpop.f32.mrb[0].mxu0
  %v197 = vpop.f32.mrb[0].mxu0
  %v198 = vadd.f32 %v128, %v197
  %v199 = vpop.f32.mrb[0].mxu0
  %200 = vmatprep.mubr.bf16.mxu0 0
  %201 = vmatmul.mubr.bf16.gmra.mrb[0].mxu0 %v158
  %v202 = vpop.f32.mrb[0].mxu0
  %v203 = vadd.f32 %v128, %v202
  %v204 = vpop.f32.mrb[0].mxu0
  %v205 = vpop.f32.mrb[0].mxu0
  %v206 = vadd.f32 %v128, %v205
  %v207 = vpop.f32.mrb[0].mxu0
  %208 = vdwg.mxu0
  %v209 = vmax.f32 %v195, 0.0
  %v210 = vmax.f32 %v198, 0.0
  %v211 = vmax.f32 %v203, 0.0
  %v212 = vmax.f32 %v206, 0.0
  %v213 = vpack.c.bf16 %v210, %v209
  %v214 = vpack.c.bf16 %v212, %v211
  %v215 = vld [vmem:[%s5] sm:$0xf]
  %v216 = vld [vmem:[%s5 + $0x4] sm:$0xf]
  %v217 = vld [vmem:[%s5 + $0x8] sm:$0xf]
  %v218 = vld [vmem:[%s5 + $0xc] sm:$0xf]
  %v219 = vld [vmem:[%s5 + $0x10] sm:$0xf]
  %v220 = vld [vmem:[%s5 + $0x14] sm:$0xf]
  %v221 = vld [vmem:[%s5 + $0x18] sm:$0xf]
  %v222 = vld [vmem:[%s5 + $0x1c] sm:$0xf]
  %v223 = vld [vmem:[%s5 + $0x20] sm:$0xf]
  %v224 = vld [vmem:[%s5 + $0x24] sm:$0xf]
  %v225 = vld [vmem:[%s5 + $0x28] sm:$0xf]
  %v226 = vld [vmem:[%s5 + $0x2c] sm:$0xf]
  %v227 = vld [vmem:[%s5 + $0x30] sm:$0xf]
  %v228 = vld [vmem:[%s5 + $0x34] sm:$0xf]
  %v229 = vld [vmem:[%s5 + $0x38] sm:$0xf]
  %v230 = vld [vmem:[%s5 + $0x3c] sm:$0xf]
  %v247 = vunpack.c.l.b16 %v215
  %v248 = vunpack.c.l.b16 %v216
  %v249 = vunpack.c.l.b16 %v217
  %v250 = vunpack.c.l.b16 %v218
  %v251 = vunpack.c.l.b16 %v219
  %v252 = vunpack.c.l.b16 %v220
  %v253 = vunpack.c.l.b16 %v221
  %v254 = vunpack.c.l.b16 %v222
  %v255 = vunpack.c.l.b16 %v223
  %v256 = vunpack.c.l.b16 %v224
  %v257 = vunpack.c.l.b16 %v225
  %v258 = vunpack.c.l.b16 %v226
  %v259 = vunpack.c.l.b16 %v227
  %v260 = vunpack.c.l.b16 %v228
  %v261 = vunpack.c.l.b16 %v229
  %v262 = vunpack.c.l.b16 %v230
  %v263 = vpack.c.b16 %v248, %v247
  %v264 = vpack.c.b16 %v250, %v249
  %v265 = vpack.c.b16 %v252, %v251
  %v266 = vpack.c.b16 %v254, %v253
  %v267 = vpack.c.b16 %v256, %v255
  %v268 = vpack.c.b16 %v258, %v257
  %v269 = vpack.c.b16 %v260, %v259
  %v270 = vpack.c.b16 %v262, %v261
  %279 = vmatprep.subr.bf16.mxu0 0
  %280 = vmatpush1.bf16.msra.mxu0 %v263
  %281 = vmatprep.subr.bf16.mxu0 0
  %282 = vmatpush1.bf16.msra.mxu0 %v264
  %283 = vmatprep.subr.bf16.mxu0 0
  %284 = vmatpush1.bf16.msra.mxu0 %v265
  %285 = vmatprep.subr.bf16.mxu0 0
  %286 = vmatpush1.bf16.msra.mxu0 %v266
  %287 = vmatprep.subr.bf16.mxu0 0
  %288 = vmatpush1.bf16.msra.mxu0 %v267
  %289 = vmatprep.subr.bf16.mxu0 0
  %290 = vmatpush1.bf16.msra.mxu0 %v268
  %291 = vmatprep.subr.bf16.mxu0 0
  %292 = vmatpush1.bf16.msra.mxu0 %v269
  %293 = vmatprep.subr.bf16.mxu0 0
  %294 = vmatpush1.bf16.msra.mxu0 %v270
  %295 = vmatprep.subr.bf16.mxu0 0
  %296 = vmatpush1.bf16.msra.mxu0 0
  %297 = vmatprep.subr.bf16.mxu0 0
  %298 = vmatpush1.bf16.msra.mxu0 0
  %299 = vmatprep.subr.bf16.mxu0 0
  %300 = vmatpush1.bf16.msra.mxu0 0
  %301 = vmatprep.subr.bf16.mxu0 0
  %302 = vmatpush1.bf16.msra.mxu0 0
  %303 = vmatprep.subr.bf16.mxu0 0
  %304 = vmatpush1.bf16.msra.mxu0 0
  %305 = vmatprep.subr.bf16.mxu0 0
  %306 = vmatpush1.bf16.msra.mxu0 0
  %307 = vmatprep.subr.bf16.mxu0 0
  %308 = vmatpush1.bf16.msra.mxu0 0
  %309 = vmatprep.subr.bf16.mxu0 0
  %310 = vmatpush1.bf16.msra.mxu0 0
  %311 = vmatprep.mubr.bf16.mxu0 0
  %312 = vmatmul.mubr.bf16.gmra.mrb[0].mxu0 %v213
  %v313 = vpop.f32.mrb[0].mxu0
  %v314 = vadd.f32 0.0, %v313
  %v315 = vpop.f32.mrb[0].mxu0
  %v316 = vpop.f32.mrb[0].mxu0
  %v317 = vadd.f32 0.0, %v316
  %v318 = vpop.f32.mrb[0].mxu0
  %319 = vmatprep.mubr.bf16.mxu0 0
  %320 = vmatmul.mubr.bf16.gmra.mrb[0].mxu0 %v214
  %v321 = vpop.f32.mrb[0].mxu0
  %v322 = vadd.f32 0.0, %v321
  %v323 = vpop.f32.mrb[0].mxu0
  %v324 = vpop.f32.mrb[0].mxu0
  %v325 = vadd.f32 0.0, %v324
  %v326 = vpop.f32.mrb[0].mxu0
  %327 = vdwg.mxu0
  %v328 = vadd.f32 %v33, %v314
  %v329 = vadd.f32 %v34, %v317
  %v330 = vadd.f32 %v35, %v322
  %v331 = vadd.f32 %v36, %v325
  %v332 = vld [vmem:[%s6] sm:$0x1]
  %v334 = vlaneseq
  %v335 = vshrl.u32 %v334, 7
  %v336 = vsub.s32 0, %v335
  %v337 = vrot.slane %v332, %v336
  %v339 = vadd.f32 %v328, %v337
  %v340 = vadd.f32 %v329, %v337
  %v341 = vadd.f32 %v330, %v337
  %v342 = vadd.f32 %v331, %v337
  %v343 = vsel %vm37, %v339, 0.0
  %344 = vadd.xlane.f32.xlu0 %v343
  %v345 = vpop.xlane.xlu0 %344
  %v346 = vsel %vm37, %v340, 0.0
  %347 = vadd.xlane.f32.xlu0 %v346
  %v348 = vpop.xlane.xlu0 %347
  %v349 = vsel %vm37, %v341, 0.0
  %350 = vadd.xlane.f32.xlu0 %v349
  %v351 = vpop.xlane.xlu0 %350
  %v352 = vsel %vm37, %v342, 0.0
  %353 = vadd.xlane.f32.xlu0 %v352
  %v354 = vpop.xlane.xlu0 %353
  %v355 = vmul.f32 %v345, %v50
  %v356 = vmul.f32 %v348, %v50
  %v357 = vmul.f32 %v351, %v50
  %v358 = vmul.f32 %v354, %v50
  %v359 = vsub.f32 %v339, %v355
  %v360 = vsub.f32 %v340, %v356
  %v361 = vsub.f32 %v341, %v357
  %v362 = vsub.f32 %v342, %v358
  %v363 = vmul.f32 %v359, %v359
  %v364 = vmul.f32 %v360, %v360
  %v365 = vmul.f32 %v361, %v361
  %v366 = vmul.f32 %v362, %v362
  %v367 = vsel %vm37, %v363, 0.0
  %368 = vadd.xlane.f32.xlu0 %v367
  %v369 = vpop.xlane.xlu0 %368
  %v370 = vsel %vm37, %v364, 0.0
  %371 = vadd.xlane.f32.xlu0 %v370
  %v372 = vpop.xlane.xlu0 %371
  %v373 = vsel %vm37, %v365, 0.0
  %374 = vadd.xlane.f32.xlu0 %v373
  %v375 = vpop.xlane.xlu0 %374
  %v376 = vsel %vm37, %v366, 0.0
  %377 = vadd.xlane.f32.xlu0 %v376
  %v378 = vpop.xlane.xlu0 %377
  %v379 = vmul.f32 %v369, %v50
  %v380 = vmul.f32 %v372, %v50
  %v381 = vmul.f32 %v375, %v50
  %v382 = vmul.f32 %v378, %v50
  %v383 = vadd.f32 %v379, 1e-05
  %v384 = vadd.f32 %v380, 1e-05
  %v385 = vadd.f32 %v381, 1e-05
  %v386 = vadd.f32 %v382, 1e-05
  %v387 = vrsqrt.pop %v383
  %v388 = vrsqrt.pop %v384
  %v389 = vrsqrt.pop %v385
  %v390 = vrsqrt.pop %v386
  %v391 = vmul.f32 %v359, %v387
  %v392 = vmul.f32 %v360, %v388
  %v393 = vmul.f32 %v361, %v389
  %v394 = vmul.f32 %v362, %v390
  %v395 = vld [vmem:[%s7] sm:$0x1]
  %v397 = vlaneseq
  %v398 = vshrl.u32 %v397, 7
  %v399 = vsub.s32 0, %v398
  %v400 = vrot.slane %v395, %v399
  %v402 = vmul.f32 %v391, %v400
  %v403 = vmul.f32 %v392, %v400
  %v404 = vmul.f32 %v393, %v400
  %v405 = vmul.f32 %v394, %v400
  %v406 = vld [vmem:[%s8] sm:$0x1]
  %v408 = vlaneseq
  %v409 = vshrl.u32 %v408, 7
  %v410 = vsub.s32 0, %v409
  %v411 = vrot.slane %v406, %v410
  %v413 = vadd.f32 %v402, %v411
  %v414 = vadd.f32 %v403, %v411
  %v415 = vadd.f32 %v404, %v411
  %v416 = vadd.f32 %v405, %v411
  %417 = vst.msk [vmem:[%s9] sm:$0xff] %vm37, %v413
  %418 = vst.msk [vmem:[%s9 + $0x8] sm:$0xff] %vm37, %v414
  %419 = vst.msk [vmem:[%s9 + $0x10] sm:$0xff] %vm37, %v415
  %420 = vst.msk [vmem:[%s9 + $0x18] sm:$0xff] %vm37, %v416
  // Predicated region
  $region38: #{decoder_forward.30} parent=0 // pred_check
    _
  $region39: #{decoder_forward.30} parent=0 // pred_check_branch
    %422 = sbr.rel (0) target = $region41
  $region40: #{decoder_forward.30} parent=0 // pred_region
    _
  $region41: #{decoder_forward.30} parent=0 // pred_fallthru
    _
  // Predicated region
  $region42: #{decoder_forward.30} parent=0 // pred_check
    _
  $region43: #{decoder_forward.30} parent=0 // pred_check_branch
    %424 = sbr.rel (0) target = $region45
  $region44: #{decoder_forward.30} parent=0 // pred_region
    _
  $region45: #{decoder_forward.30} parent=0 // pred_fallthru
    _

// kernel: decoder_forward.49
$region0: #{decoder_forward.49}
  #allocation0 [shape = 'u32[]', space=smem, size = 0x4, offset = 0x4, fixed_abs, tag = 'smem constant byte address 0x4 - core index']
  #allocation1 [shape = 'u32[144,128]{1,0:T(1,128)}', space=vmem, size = 0x12000, scoped, tag = 'internal scratch']
  %s0 = inlined_call_operand.vmem [shape: f32[32,64], index: 0, kind: input, shape index: {}]
  %s1 = inlined_call_operand.vmem [shape: f32[1,64], index: 1, kind: input, shape index: {}]
  %s2 = inlined_call_operand.vmem [shape: f32[1,64], index: 2, kind: input, shape index: {}]
  %s3 = inlined_call_operand.hbm [shape: f32[32,64], index: 3, kind: output, shape index: {}]
  %s4 = sld [smem:[#allocation0]]
  $region22: #{decoder_forward.49} parent=0
    _
  %s6 = ssub.s32 1, %s4
  %s7 = scalar_select 0, %s6, %s4
  $region1: #{decoder_forward.49} parent=0
    #allocation2 [shape = 'u8[16384]{0}', space=vmem, size = 0x4000, scoped, tag = 'output window, operand 0, single buffered']
    #allocation3 [shape = 's32[1]{0}', space=sflag, size = 0x4, scoped, tag = 'scoped memory for decoder_forward.49']
    %8 = vsyncpa [#allocation3], 0
    // Predicated region
    $region2: #{decoder_forward.49} parent=1 // pred_check
      _
    $region3: #{decoder_forward.49} parent=1 // pred_check_branch
      %10 = sbr.rel (0) target = $region5
    $region4: #{decoder_forward.49} parent=1 // pred_region
      _
    $region5: #{decoder_forward.49} parent=1 // pred_fallthru
      _
    // Predicated region
    $region6: #{decoder_forward.49} parent=1 // pred_check
      _
    $region7: #{decoder_forward.49} parent=1 // pred_check_branch
      %12 = sbr.rel (0) target = $region9
    $region8: #{decoder_forward.49} parent=1 // pred_region
      _
    $region9: #{decoder_forward.49} parent=1 // pred_fallthru
      _
    // Predicated region
    $region10: #{decoder_forward.49} parent=1 // pred_check
      _
    $region11: #{decoder_forward.49} parent=1 // pred_check_branch
      %14 = sbr.rel (0) target = $region13
    $region12: #{decoder_forward.49} parent=1 // pred_region
      _
    $region13: #{decoder_forward.49} parent=1 // pred_fallthru
      _
    %v15 = vld [vmem:[%s0] sm:$0xff]
    %v16 = vld [vmem:[%s0 + $0x8] sm:$0xff]
    %v17 = vld [vmem:[%s0 + $0x10] sm:$0xff]
    %v18 = vld [vmem:[%s0 + $0x18] sm:$0xff]
    %vm19 = vcmask 523264
    %v20 = vsel %vm19, %v15, 0.0
    %21 = vadd.xlane.f32.xlu0 %v20
    %v22 = vpop.xlane.xlu0 %21
    %v23 = vsel %vm19, %v16, 0.0
    %24 = vadd.xlane.f32.xlu0 %v23
    %v25 = vpop.xlane.xlu0 %24
    %v26 = vsel %vm19, %v17, 0.0
    %27 = vadd.xlane.f32.xlu0 %v26
    %v28 = vpop.xlane.xlu0 %27
    %v29 = vsel %vm19, %v18, 0.0
    %30 = vadd.xlane.f32.xlu0 %v29
    %v31 = vpop.xlane.xlu0 %30
    %v32 = vrcp.pop 64.0
    %v33 = vmul.f32 %v22, %v32
    %v34 = vmul.f32 %v25, %v32
    %v35 = vmul.f32 %v28, %v32
    %v36 = vmul.f32 %v31, %v32
    %v37 = vsub.f32 %v15, %v33
    %v38 = vsub.f32 %v16, %v34
    %v39 = vsub.f32 %v17, %v35
    %v40 = vsub.f32 %v18, %v36
    %v41 = vmul.f32 %v37, %v37
    %v42 = vmul.f32 %v38, %v38
    %v43 = vmul.f32 %v39, %v39
    %v44 = vmul.f32 %v40, %v40
    %v45 = vsel %vm19, %v41, 0.0
    %46 = vadd.xlane.f32.xlu0 %v45
    %v47 = vpop.xlane.xlu0 %46
    %v48 = vsel %vm19, %v42, 0.0
    %49 = vadd.xlane.f32.xlu0 %v48
    %v50 = vpop.xlane.xlu0 %49
    %v51 = vsel %vm19, %v43, 0.0
    %52 = vadd.xlane.f32.xlu0 %v51
    %v53 = vpop.xlane.xlu0 %52
    %v54 = vsel %vm19, %v44, 0.0
    %55 = vadd.xlane.f32.xlu0 %v54
    %v56 = vpop.xlane.xlu0 %55
    %v57 = vmul.f32 %v47, %v32
    %v58 = vmul.f32 %v50, %v32
    %v59 = vmul.f32 %v53, %v32
    %v60 = vmul.f32 %v56, %v32
    %v61 = vadd.f32 %v57, 1e-05
    %v62 = vadd.f32 %v58, 1e-05
    %v63 = vadd.f32 %v59, 1e-05
    %v64 = vadd.f32 %v60, 1e-05
    %v65 = vrsqrt.pop %v61
    %v66 = vrsqrt.pop %v62
    %v67 = vrsqrt.pop %v63
    %v68 = vrsqrt.pop %v64
    %v69 = vmul.f32 %v37, %v65
    %v70 = vmul.f32 %v38, %v66
    %v71 = vmul.f32 %v39, %v67
    %v72 = vmul.f32 %v40, %v68
    %v73 = vld [vmem:[%s1] sm:$0x1]
    %v75 = vlaneseq
    %v76 = vshrl.u32 %v75, 7
    %v77 = vsub.s32 0, %v76
    %v78 = vrot.slane %v73, %v77
    %v80 = vmul.f32 %v69, %v78
    %v81 = vmul.f32 %v70, %v78
    %v82 = vmul.f32 %v71, %v78
    %v83 = vmul.f32 %v72, %v78
    %v84 = vld [vmem:[%s2] sm:$0x1]
    %v86 = vlaneseq
    %v87 = vshrl.u32 %v86, 7
    %v88 = vsub.s32 0, %v87
    %v89 = vrot.slane %v84, %v88
    %v91 = vadd.f32 %v80, %v89
    %v92 = vadd.f32 %v81, %v89
    %v93 = vadd.f32 %v82, %v89
    %v94 = vadd.f32 %v83, %v89
    %95 = vst.msk [vmem:[#allocation2] sm:$0xff] %vm19, %v91
    %96 = vst.msk [vmem:[#allocation2 + $0x8] sm:$0xff] %vm19, %v92
    %97 = vst.msk [vmem:[#allocation2 + $0x10] sm:$0xff] %vm19, %v93
    %98 = vst.msk [vmem:[#allocation2 + $0x18] sm:$0xff] %vm19, %v94
    // Predicated region
    $region14: #{decoder_forward.49} parent=1 // pred_check
      _
    $region15: #{decoder_forward.49} parent=1 // pred_check_branch
      %100 = sbr.rel (0) target = $region17
    $region16: #{decoder_forward.49} parent=1 // pred_region
      %s102 = ssub.s32 512, 512
      %103 = vsyncadd [#allocation3], %s102
      %s104 = sshll.u32 [#allocation2], 4
      %s105 = int_to_ptr.vmem [resolvable:$true] %s104
      %110 = dma.vmem_to_hbm [thread:$0]  %s105, 512, %s3, [#allocation3], 128, 128, 8
    $region17: #{decoder_forward.49} parent=1 // pred_fallthru
      _
    // Predicated region
    $region18: #{decoder_forward.49} parent=1 // pred_check
      _
    $region19: #{decoder_forward.49} parent=1 // pred_check_branch
      %112 = sbr.rel (0) target = $region21
    $region20: #{decoder_forward.49} parent=1 // pred_region
      %113 = dma.done [#allocation3], 512
    $region21: #{decoder_forward.49} parent=1 // pred_fallthru
      _
    %114 = vsyncpa [#allocation3], 1

// kernel: decoder_forward.35
$region0: #{decoder_forward.35}
  #allocation0 [shape = 'u32[]', space=smem, size = 0x4, offset = 0x4, fixed_abs, tag = 'smem constant byte address 0x4 - core index']
  #allocation1 [shape = 'u32[144,128]{1,0:T(1,128)}', space=vmem, size = 0x12000, scoped, tag = 'internal scratch']
  %s0 = inlined_call_operand.vmem [shape: f32[2,16,64], index: 0, kind: input, shape index: {}]
  %s1 = inlined_call_operand.vmem [shape: f32[2,32,64], index: 1, kind: input, shape index: {}]
  %s2 = inlined_call_operand.vmem [shape: f32[2,32,64], index: 2, kind: input, shape index: {}]
  %s3 = inlined_call_operand.vmem [shape: f32[16,16], index: 3, kind: input, shape index: {}]
  %s4 = inlined_call_operand.vmem [shape: f32[16,16], index: 4, kind: input, shape index: {}]
  %s5 = inlined_call_operand.vmem [shape: f32[32,16], index: 5, kind: input, shape index: {}]
  %s6 = inlined_call_operand.vmem [shape: f32[32,16], index: 6, kind: input, shape index: {}]
  %s7 = inlined_call_operand.vmem [shape: bf16[64,64], index: 7, kind: input, shape index: {}]
  %s8 = inlined_call_operand.vmem [shape: f32[1,64], index: 8, kind: input, shape index: {}]
  %s9 = inlined_call_operand.vmem [shape: f32[2,16,64], index: 9, kind: input, shape index: {}]
  %s10 = inlined_call_operand.vmem [shape: f32[2,16,64], index: 10, kind: output, shape index: {}]
  %s11 = sld [smem:[#allocation0]]
  $region73: #{decoder_forward.35} parent=0
    _
  %s13 = ssub.s32 1, %s11
  %s14 = scalar_select 0, %s13, %s11
  loop: start=0, step=1, limit=4
  $region2: #{decoder_forward.35} parent=0 // loop_pre_header
    _
  $region3: #{decoder_forward.35} parent=0 // loop_header
    %s16 = sphi 0, %s20
    %p17 = scmp.ge.s32.totalorder %s16, 4
    %s26 = sphi 0, %s28
    %s29 = sphi 0, %s26
    %s30 = sphi 0, %s29
    %s46 = sphi 0, %s30
    %s52 = sphi 0, %s54
    %s55 = sphi 0, %s52
    %s56 = sphi 0, %s55
    %s72 = sphi 0, %s56
    %s78 = sphi 0, %s80
    %s81 = sphi 0, %s78
    %s82 = sphi 0, %s81
    %s98 = sphi 0, %s82
    %s102 = sphi 0, %s102
    %s104 = sphi 0, %s102
    %s105 = sphi 0, %s104
    %s119 = sphi 0, %s105
    %s123 = sphi 0, %s123
    %s125 = sphi 0, %s123
    %s126 = sphi 0, %s125
    %s140 = sphi 0, %s126
    %s144 = sphi 0, %s144
    %s146 = sphi 0, %s144
    %s147 = sphi 0, %s146
    %s161 = sphi 0, %s147
    %s165 = sphi 0, %s165
    %s167 = sphi 0, %s165
    %s168 = sphi 0, %s167
    %s182 = sphi 0, %s168
    %s186 = sphi 0, %s186
    %s188 = sphi 0, %s186
    %s189 = sphi 0, %s188
    %s203 = sphi 0, %s189
    %s207 = sphi 0, %s207
    %s209 = sphi 0, %s207
    %s210 = sphi 0, %s209
    %s224 = sphi 0, %s210
    %s230 = sphi 0, %s232
    %s233 = sphi 0, %s230
    %s234 = sphi 0, %s233
    %s250 = sphi 0, %s234
    %s256 = sphi 0, %s258
    %s259 = sphi 0, %s256
    %s260 = sphi 0, %s259
    %s276 = sphi 0, %s260
  $region4: #{decoder_forward.35} parent=0 // loop_header_branch
    %19 = sbr.rel (%p17) target = $region8
  $region5: #{decoder_forward.35} parent=0 // loop_body
    %s21 = ssub.s32 %s16, 1
    %s22 = ssub.s32 %s16, 2
    %s23 = sadd.s32 %s16, 1
    %s24 = ssub.s32 %s16, %s23
    %p25 = scmp.eq.s32.totalorder %s24, 0
    %s27 = sadd.s32 %s26, 1
    %s28 = scalar_select %p25, %s26, %s27
    %p31 = pneg %p25
    %p32 = scmp.eq.s32.totalorder %s16, 1
    %p33 = por %p31, %p32
    %p34 = scmp.ne.s32.totalorder %s26, %s29
    %p35 = scmp.eq.s32.totalorder %s16, 0
    %p36 = por %p34, %p35
    %p37 = scmp.ne.s32.totalorder %s26, %s29
    %p38 = scmp.eq.s32.totalorder %s21, 1
    %p39 = por %p37, %p38
    %p40 = scmp.ne.s32.totalorder %s29, %s30
    %p41 = scmp.eq.s32.totalorder %s21, 0
    %p42 = por %p40, %p41
    %p43 = scmp.ne.s32.totalorder %s29, %s30
    %p44 = scmp.eq.s32.totalorder %s22, 1
    %p45 = por %p43, %p44
    %p47 = scmp.ne.s32.totalorder %s30, %s46
    %p48 = scmp.eq.s32.totalorder %s22, 0
    %p49 = por %p47, %p48
    %s50 = ssub.s32 %s16, %s23
    %p51 = scmp.eq.s32.totalorder %s50, 0
    %s53 = sadd.s32 %s52, 1
    %s54 = scalar_select %p51, %s52, %s53
    %p57 = pneg %p51
    %p58 = scmp.eq.s32.totalorder %s16, 1
    %p59 = por %p57, %p58
    %p60 = scmp.ne.s32.totalorder %s52, %s55
    %p61 = scmp.eq.s32.totalorder %s16, 0
    %p62 = por %p60, %p61
    %p63 = scmp.ne.s32.totalorder %s52, %s55
    %p64 = scmp.eq.s32.totalorder %s21, 1
    %p65 = por %p63, %p64
    %p66 = scmp.ne.s32.totalorder %s55, %s56
    %p67 = scmp.eq.s32.totalorder %s21, 0
    %p68 = por %p66, %p67
    %p69 = scmp.ne.s32.totalorder %s55, %s56
    %p70 = scmp.eq.s32.totalorder %s22, 1
    %p71 = por %p69, %p70
    %p73 = scmp.ne.s32.totalorder %s56, %s72
    %p74 = scmp.eq.s32.totalorder %s22, 0
    %p75 = por %p73, %p74
    %s76 = ssub.s32 %s16, %s23
    %p77 = scmp.eq.s32.totalorder %s76, 0
    %s79 = sadd.s32 %s78, 1
    %s80 = scalar_select %p77, %s78, %s79
    %p83 = pneg %p77
    %p84 = scmp.eq.s32.totalorder %s16, 1
    %p85 = por %p83, %p84
    %p86 = scmp.ne.s32.totalorder %s78, %s81
    %p87 = scmp.eq.s32.totalorder %s16, 0
    %p88 = por %p86, %p87
    %p89 = scmp.ne.s32.totalorder %s78, %s81
    %p90 = scmp.eq.s32.totalorder %s21, 1
    %p91 = por %p89, %p90
    %p92 = scmp.ne.s32.totalorder %s81, %s82
    %p93 = scmp.eq.s32.totalorder %s21, 0
    %p94 = por %p92, %p93
    %p95 = scmp.ne.s32.totalorder %s81, %s82
    %p96 = scmp.eq.s32.totalorder %s22, 1
    %p97 = por %p95, %p96
    %p99 = scmp.ne.s32.totalorder %s82, %s98
    %p100 = scmp.eq.s32.totalorder %s22, 0
    %p101 = por %p99, %p100
    %s103 = sadd.s32 %s102, 1
    %p106 = scmp.eq.s32.totalorder %s16, 1
    %p107 = scmp.ne.s32.totalorder %s102, %s104
    %p108 = scmp.eq.s32.totalorder %s16, 0
    %p109 = por %p107, %p108
    %p110 = scmp.ne.s32.totalorder %s102, %s104
    %p111 = scmp.eq.s32.totalorder %s21, 1
    %p112 = por %p110, %p111
    %p113 = scmp.ne.s32.totalorder %s104, %s105
    %p114 = scmp.eq.s32.totalorder %s21, 0
    %p115 = por %p113, %p114
    %p116 = scmp.ne.s32.totalorder %s104, %s105
    %p117 = scmp.eq.s32.totalorder %s22, 1
    %p118 = por %p116, %p117
    %p120 = scmp.ne.s32.totalorder %s105, %s119
    %p121 = scmp.eq.s32.totalorder %s22, 0
    %p122 = por %p120, %p121
    %s124 = sadd.s32 %s123, 1
    %p127 = scmp.eq.s32.totalorder %s16, 1
    %p128 = scmp.ne.s32.totalorder %s123, %s125
    %p129 = scmp.eq.s32.totalorder %s16, 0
    %p130 = por %p128, %p129
    %p131 = scmp.ne.s32.totalorder %s123, %s125
    %p132 = scmp.eq.s32.totalorder %s21, 1
    %p133 = por %p131, %p132
    %p134 = scmp.ne.s32.totalorder %s125, %s126
    %p135 = scmp.eq.s32.totalorder %s21, 0
    %p136 = por %p134, %p135
    %p137 = scmp.ne.s32.totalorder %s125, %s126
    %p138 = scmp.eq.s32.totalorder %s22, 1
    %p139 = por %p137, %p138
    %p141 = scmp.ne.s32.totalorder %s126, %s140
    %p142 = scmp.eq.s32.totalorder %s22, 0
    %p143 = por %p141, %p142
    %s145 = sadd.s32 %s144, 1
    %p148 = scmp.eq.s32.totalorder %s16, 1
    %p149 = scmp.ne.s32.totalorder %s144, %s146
    %p150 = scmp.eq.s32.totalorder %s16, 0
    %p151 = por %p149, %p150
    %p152 = scmp.ne.s32.totalorder %s144, %s146
    %p153 = scmp.eq.s32.totalorder %s21, 1
    %p154 = por %p152, %p153
    %p155 = scmp.ne.s32.totalorder %s146, %s147
    %p156 = scmp.eq.s32.totalorder %s21, 0
    %p157 = por %p155, %p156
    %p158 = scmp.ne.s32.totalorder %s146, %s147
    %p159 = scmp.eq.s32.totalorder %s22, 1
    %p160 = por %p158, %p159
    %p162 = scmp.ne.s32.totalorder %s147, %s161
    %p163 = scmp.eq.s32.totalorder %s22, 0
    %p164 = por %p162, %p163
    %s166 = sadd.s32 %s165, 1
    %p169 = scmp.eq.s32.totalorder %s16, 1
    %p170 = scmp.ne.s32.totalorder %s165, %s167
    %p171 = scmp.eq.s32.totalorder %s16, 0
    %p172 = por %p170, %p171
    %p173 = scmp.ne.s32.totalorder %s165, %s167
    %p174 = scmp.eq.s32.totalorder %s21, 1
    %p175 = por %p173, %p174
    %p176 = scmp.ne.s32.totalorder %s167, %s168
    %p177 = scmp.eq.s32.totalorder %s21, 0
    %p178 = por %p176, %p177
    %p179 = scmp.ne.s32.totalorder %s167, %s168
    %p180 = scmp.eq.s32.totalorder %s22, 1
    %p181 = por %p179, %p180
    %p183 = scmp.ne.s32.totalorder %s168, %s182
    %p184 = scmp.eq.s32.totalorder %s22, 0
    %p185 = por %p183, %p184
    %s187 = sadd.s32 %s186, 1
    %p190 = scmp.eq.s32.totalorder %s16, 1
    %p191 = scmp.ne.s32.totalorder %s186, %s188
    %p192 = scmp.eq.s32.totalorder %s16, 0
    %p193 = por %p191, %p192
    %p194 = scmp.ne.s32.totalorder %s186, %s188
    %p195 = scmp.eq.s32.totalorder %s21, 1
    %p196 = por %p194, %p195
    %p197 = scmp.ne.s32.totalorder %s188, %s189
    %p198 = scmp.eq.s32.totalorder %s21, 0
    %p199 = por %p197, %p198
    %p200 = scmp.ne.s32.totalorder %s188, %s189
    %p201 = scmp.eq.s32.totalorder %s22, 1
    %p202 = por %p200, %p201
    %p204 = scmp.ne.s32.totalorder %s189, %s203
    %p205 = scmp.eq.s32.totalorder %s22, 0
    %p206 = por %p204, %p205
    %s208 = sadd.s32 %s207, 1
    %p211 = scmp.eq.s32.totalorder %s16, 1
    %p212 = scmp.ne.s32.totalorder %s207, %s209
    %p213 = scmp.eq.s32.totalorder %s16, 0
    %p214 = por %p212, %p213
    %p215 = scmp.ne.s32.totalorder %s207, %s209
    %p216 = scmp.eq.s32.totalorder %s21, 1
    %p217 = por %p215, %p216
    %p218 = scmp.ne.s32.totalorder %s209, %s210
    %p219 = scmp.eq.s32.totalorder %s21, 0
    %p220 = por %p218, %p219
    %p221 = scmp.ne.s32.totalorder %s209, %s210
    %p222 = scmp.eq.s32.totalorder %s22, 1
    %p223 = por %p221, %p222
    %p225 = scmp.ne.s32.totalorder %s210, %s224
    %p226 = scmp.eq.s32.totalorder %s22, 0
    %p227 = por %p225, %p226
    %s228 = ssub.s32 %s16, %s23
    %p229 = scmp.eq.s32.totalorder %s228, 0
    %s231 = sadd.s32 %s230, 1
    %s232 = scalar_select %p229, %s230, %s231
    %p235 = pneg %p229
    %p236 = scmp.eq.s32.totalorder %s16, 1
    %p237 = por %p235, %p236
    %p238 = scmp.ne.s32.totalorder %s230, %s233
    %p239 = scmp.eq.s32.totalorder %s16, 0
    %p240 = por %p238, %p239
    %p241 = scmp.ne.s32.totalorder %s230, %s233
    %p242 = scmp.eq.s32.totalorder %s21, 1
    %p243 = por %p241, %p242
    %p244 = scmp.ne.s32.totalorder %s233, %s234
    %p245 = scmp.eq.s32.totalorder %s21, 0
    %p246 = por %p244, %p245
    %p247 = scmp.ne.s32.totalorder %s233, %s234
    %p248 = scmp.eq.s32.totalorder %s22, 1
    %p249 = por %p247, %p248
    %p251 = scmp.ne.s32.totalorder %s234, %s250
    %p252 = scmp.eq.s32.totalorder %s22, 0
    %p253 = por %p251, %p252
    %s254 = ssub.s32 %s16, %s23
    %p255 = scmp.eq.s32.totalorder %s254, 0
    %s257 = sadd.s32 %s256, 1
    %s258 = scalar_select %p255, %s256, %s257
    %p261 = pneg %p255
    %p262 = scmp.eq.s32.totalorder %s16, 1
    %p263 = por %p261, %p262
    %p264 = scmp.ne.s32.totalorder %s256, %s259
    %p265 = scmp.eq.s32.totalorder %s16, 0
    %p266 = por %p264, %p265
    %p267 = scmp.ne.s32.totalorder %s256, %s259
    %p268 = scmp.eq.s32.totalorder %s21, 1
    %p269 = por %p267, %p268
    %p270 = scmp.ne.s32.totalorder %s259, %s260
    %p271 = scmp.eq.s32.totalorder %s21, 0
    %p272 = por %p270, %p271
    %p273 = scmp.ne.s32.totalorder %s259, %s260
    %p274 = scmp.eq.s32.totalorder %s22, 1
    %p275 = por %p273, %p274
    %p277 = scmp.ne.s32.totalorder %s260, %s276
    %p278 = scmp.eq.s32.totalorder %s22, 0
    %p279 = por %p277, %p278
    %p280 = scmp.le.s32.totalorder 1, %s16
    %p281 = scmp.lt.s32.totalorder %s16, 3
    %p282 = pnand %p280, %p281
    %p283 = pneg %p282
    // Predicated region
    $region9: #{decoder_forward.35} parent=5 // pred_check
      _
    $region10: #{decoder_forward.35} parent=5 // pred_check_branch
      %285 = sbr.rel (%p282) target = $region12
    $region11: #{decoder_forward.35} parent=5 // pred_region
      %s286 = ssub.s32 %s16, 1
      // Predicated region
      $region13: #{decoder_forward.35} parent=11 // pred_check
        %p287 = pneg %p115
      $region14: #{decoder_forward.35} parent=11 // pred_check_branch
        %289 = sbr.rel (%p287) target = $region16
      $region15: #{decoder_forward.35} parent=11 // pred_region
        _
      $region16: #{decoder_forward.35} parent=11 // pred_fallthru
        _
      // Predicated region
      $region17: #{decoder_forward.35} parent=11 // pred_check
        %p290 = pneg %p136
      $region18: #{decoder_forward.35} parent=11 // pred_check_branch
        %292 = sbr.rel (%p290) target = $region20
      $region19: #{decoder_forward.35} parent=11 // pred_region
        _
      $region20: #{decoder_forward.35} parent=11 // pred_fallthru
        _
      // Predicated region
      $region21: #{decoder_forward.35} parent=11 // pred_check
        %p293 = pneg %p157
      $region22: #{decoder_forward.35} parent=11 // pred_check_branch
        %295 = sbr.rel (%p293) target = $region24
      $region23: #{decoder_forward.35} parent=11 // pred_region
        _
      $region24: #{decoder_forward.35} parent=11 // pred_fallthru
        _
      // Predicated region
      $region25: #{decoder_forward.35} parent=11 // pred_check
        %p296 = pneg %p178
      $region26: #{decoder_forward.35} parent=11 // pred_check_branch
        %298 = sbr.rel (%p296) target = $region28
      $region27: #{decoder_forward.35} parent=11 // pred_region
        _
      $region28: #{decoder_forward.35} parent=11 // pred_fallthru
        _
      // Predicated region
      $region29: #{decoder_forward.35} parent=11 // pred_check
        %p299 = pneg %p199
      $region30: #{decoder_forward.35} parent=11 // pred_check_branch
        %301 = sbr.rel (%p299) target = $region32
      $region31: #{decoder_forward.35} parent=11 // pred_region
        _
      $region32: #{decoder_forward.35} parent=11 // pred_fallthru
        _
      // Predicated region
      $region33: #{decoder_forward.35} parent=11 // pred_check
        %p302 = pneg %p220
      $region34: #{decoder_forward.35} parent=11 // pred_check_branch
        %304 = sbr.rel (%p302) target = $region36
      $region35: #{decoder_forward.35} parent=11 // pred_region
        _
      $region36: #{decoder_forward.35} parent=11 // pred_fallthru
        _
    $region12: #{decoder_forward.35} parent=5 // pred_fallthru
      _
    %p305 = scmp.lt.s32.totalorder %s16, 2
    // Predicated region
    $region37: #{decoder_forward.35} parent=5 // pred_check
      %p306 = pneg %p305
    $region38: #{decoder_forward.35} parent=5 // pred_check_branch
      %308 = sbr.rel (%p306) target = $region40
    $region39: #{decoder_forward.35} parent=5 // pred_region
      // Predicated region
      $region41: #{decoder_forward.35} parent=39 // pred_check
        %p309 = pneg %p36
      $region42: #{decoder_forward.35} parent=39 // pred_check_branch
        %311 = sbr.rel (%p309) target = $region44
      $region43: #{decoder_forward.35} parent=39 // pred_region
        %p312 = scmp.lt.s32.totalorder %s16, 1
        %s313 = scalar_select %p312, %s16, 1
        %s314 = smul.addr %s313, 2
        %s315 = smul.addr %s314, 8
        %s316 = scalar_lea.vmem %s0, %s315
      $region44: #{decoder_forward.35} parent=39 // pred_fallthru
        _
      // Predicated region
      $region45: #{decoder_forward.35} parent=39 // pred_check
        %p317 = pneg %p62
      $region46: #{decoder_forward.35} parent=39 // pred_check_branch
        %319 = sbr.rel (%p317) target = $region48
      $region47: #{decoder_forward.35} parent=39 // pred_region
        %p320 = scmp.lt.s32.totalorder %s16, 1
        %s321 = scalar_select %p320, %s16, 1
        %s322 = smul.addr %s321, 4
        %s323 = smul.addr %s322, 8
        %s324 = scalar_lea.vmem %s1, %s323
      $region48: #{decoder_forward.35} parent=39 // pred_fallthru
        _
      // Predicated region
      $region49: #{decoder_forward.35} parent=39 // pred_check
        %p325 = pneg %p88
      $region50: #{decoder_forward.35} parent=39 // pred_check_branch
        %327 = sbr.rel (%p325) target = $region52
      $region51: #{decoder_forward.35} parent=39 // pred_region
        %p328 = scmp.lt.s32.totalorder %s16, 1
        %s329 = scalar_select %p328, %s16, 1
        %s330 = smul.addr %s329, 4
        %s331 = smul.addr %s330, 8
        %s332 = scalar_lea.vmem %s2, %s331
      $region52: #{decoder_forward.35} parent=39 // pred_fallthru
        _
      // Predicated region
      $region53: #{decoder_forward.35} parent=39 // pred_check
        %p333 = pneg %p240
      $region54: #{decoder_forward.35} parent=39 // pred_check_branch
        %335 = sbr.rel (%p333) target = $region56
      $region55: #{decoder_forward.35} parent=39 // pred_region
        %p336 = scmp.lt.s32.totalorder %s16, 1
        %s337 = scalar_select %p336, %s16, 1
        %s338 = smul.addr %s337, 2
        %s339 = smul.addr %s338, 8
        %s340 = scalar_lea.vmem %s9, %s339
      $region56: #{decoder_forward.35} parent=39 // pred_fallthru
        _
    $region40: #{decoder_forward.35} parent=5 // pred_fallthru
      _
    %p341 = scmp.le.s32.totalorder 1, %s16
    %p342 = scmp.lt.s32.totalorder %s16, 3
    %p343 = pnand %p341, %p342
    %p344 = pneg %p343
    // Predicated region
    $region57: #{decoder_forward.35} parent=5 // pred_check
      _
    $region58: #{decoder_forward.35} parent=5 // pred_check_branch
      %346 = sbr.rel (%p343) target = $region60
    $region59: #{decoder_forward.35} parent=5 // pred_region
      %s347 = ssub.s32 %s16, 1
      %p348 = scmp.lt.s32.totalorder %s21, 1
      %s349 = scalar_select %p348, %s21, 1
      %s350 = smul.addr %s349, 2
      %s351 = smul.addr %s350, 8
      %s352 = scalar_lea.vmem %s0, %s351
      %p353 = pneg %p42
      %p354 = pneg %p39
      %p355 = scmp.lt.s32.totalorder %s21, 1
      %s356 = scalar_select %p355, %s21, 1
      %s357 = smul.addr %s356, 4
      %s358 = smul.addr %s357, 8
      %s359 = scalar_lea.vmem %s1, %s358
      %p360 = pneg %p68
      %p361 = pneg %p65
      %p362 = scmp.lt.s32.totalorder %s21, 1
      %s363 = scalar_select %p362, %s21, 1
      %s364 = smul.addr %s363, 4
      %s365 = smul.addr %s364, 8
      %s366 = scalar_lea.vmem %s2, %s365
      %p367 = pneg %p94
      %p368 = pneg %p91
      %p369 = pneg %p115
      %p370 = pneg %p112
      %p371 = pneg %p136
      %p372 = pneg %p133
      %p373 = pneg %p157
      %p374 = pneg %p154
      %p375 = pneg %p178
      %p376 = pneg %p175
      %p377 = pneg %p199
      %p378 = pneg %p196
      %p379 = pneg %p220
      %p380 = pneg %p217
      %p381 = scmp.lt.s32.totalorder %s21, 1
      %s382 = scalar_select %p381, %s21, 1
      %s383 = smul.addr %s382, 2
      %s384 = smul.addr %s383, 8
      %s385 = scalar_lea.vmem %s9, %s384
      %p386 = pneg %p246
      %p387 = pneg %p243
      %p388 = pneg %p272
      %p389 = pneg %p269
      %p390 = scmp.lt.s32.totalorder %s21, 1
      %s391 = scalar_select %p390, %s21, 1
      %s392 = smul.addr %s391, 2
      %s393 = smul.addr %s392, 8
      %s394 = scalar_lea.vmem %s10, %s393
      %p395 = scmp.lt.s32.totalorder %s21, 1
      %s396 = scalar_select %p395, %s21, 1
      %s397 = smul.addr %s396, 2
      %s398 = smul.addr %s397, 8
      %s399 = scalar_lea.vmem %s0, %s398
      %p400 = scmp.lt.s32.totalorder %s21, 1
      %s401 = scalar_select %p400, %s21, 1
      %s402 = smul.addr %s401, 4
      %s403 = smul.addr %s402, 8
      %s404 = scalar_lea.vmem %s1, %s403
      %p405 = scmp.lt.s32.totalorder %s21, 1
      %s406 = scalar_select %p405, %s21, 1
      %s407 = smul.addr %s406, 4
      %s408 = smul.addr %s407, 8
      %s409 = scalar_lea.vmem %s2, %s408
      %p410 = scmp.lt.s32.totalorder %s21, 1
      %s411 = scalar_select %p410, %s21, 1
      %s412 = smul.addr %s411, 2
      %s413 = smul.addr %s412, 8
      %s414 = scalar_lea.vmem %s9, %s413
      %p415 = scmp.lt.s32.totalorder %s21, 1
      %s416 = scalar_select %p415, %s21, 1
      %s417 = smul.addr %s416, 2
      %s418 = smul.addr %s417, 8
      %s419 = scalar_lea.vmem %s10, %s418
      %v421 = vld [vmem:[%s399] sm:$0xff]
      %v422 = vld [vmem:[%s399 + $0x8] sm:$0xff]
      %v423 = vld [vmem:[%s404] sm:$0xff]
      %v424 = vld [vmem:[%s404 + $0x8] sm:$0xff]
      %v425 = vld [vmem:[%s404 + $0x10] sm:$0xff]
      %v426 = vld [vmem:[%s404 + $0x18] sm:$0xff]
      %v427 = vld [vmem:[%s409] sm:$0xff]
      %v428 = vld [vmem:[%s409 + $0x8] sm:$0xff]
      %v429 = vld [vmem:[%s409 + $0x10] sm:$0xff]
      %v430 = vld [vmem:[%s409 + $0x18] sm:$0xff]
      %v431 = vpack.c.bf16 %v428, %v427
      %v432 = vpack.c.bf16 %v430, %v429
      %v433 = vld [vmem:[%s3] sm:$0xff]
      %v434 = vld [vmem:[%s3 + $0x8] sm:$0xff]
      %v435 = vld [vmem:[%s4] sm:$0xff]
      %v436 = vld [vmem:[%s4 + $0x8] sm:$0xff]
      %v437 = vld [vmem:[%s5] sm:$0xff]
      %v438 = vld [vmem:[%s5 + $0x8] sm:$0xff]
      %v439 = vld [vmem:[%s5 + $0x10] sm:$0xff]
      %v440 = vld [vmem:[%s5 + $0x18] sm:$0xff]
      %v441 = vld [vmem:[%s6] sm:$0xff]
      %v442 = vld [vmem:[%s6 + $0x8] sm:$0xff]
      %v443 = vld [vmem:[%s6 + $0x10] sm:$0xff]
      %v444 = vld [vmem:[%s6 + $0x18] sm:$0xff]
      %v445 = vsub.f32 0.0, %v421
      %v446 = vsub.f32 0.0, %v422
      %449 = vrot.lane.b32.xlu0 %v445, 120
      %v450 = vpop.permute.xlu0 %449
      %451 = vrot.lane.b32.xlu0 %v446, 120
      %v452 = vpop.permute.xlu0 %451
      %457 = vrot.lane.b32.xlu0 %v421, 8
      %v458 = vpop.permute.xlu0 %457
      %459 = vrot.lane.b32.xlu0 %v422, 8
      %v460 = vpop.permute.xlu0 %459
      %vm463 = vcmask 64512
      %v464 = vsel %vm463, %v450, %v458
      %v465 = vsel %vm463, %v452, %v460
      %v466 = vmul.f32 %v421, %v433
      %v467 = vmul.f32 %v422, %v434
      %v468 = vmul.f32 %v464, %v435
      %v469 = vmul.f32 %v465, %v436
      %v470 = vadd.f32 %v466, %v468
      %v471 = vadd.f32 %v467, %v469
      %v472 = vmul.f32 %v470, 0.25
      %v473 = vmul.f32 %v471, 0.25
      %v474 = vpack.c.bf16 %v473, %v472
      %v475 = vsub.f32 0.0, %v423
      %v476 = vsub.f32 0.0, %v424
      %v477 = vsub.f32 0.0, %v425
      %v478 = vsub.f32 0.0, %v426
      %483 = vrot.lane.b32.xlu0 %v475, 120
      %v484 = vpop.permute.xlu0 %483
      %485 = vrot.lane.b32.xlu0 %v476, 120
      %v486 = vpop.permute.xlu0 %485
      %487 = vrot.lane.b32.xlu0 %v477, 120
      %v488 = vpop.permute.xlu0 %487
      %489 = vrot.lane.b32.xlu0 %v478, 120
      %v490 = vpop.permute.xlu0 %489
      %499 = vrot.lane.b32.xlu0 %v423, 8
      %v500 = vpop.permute.xlu0 %499
      %501 = vrot.lane.b32.xlu0 %v424, 8
      %v502 = vpop.permute.xlu0 %501
      %503 = vrot.lane.b32.xlu0 %v425, 8
      %v504 = vpop.permute.xlu0 %503
      %505 = vrot.lane.b32.xlu0 %v426, 8
      %v506 = vpop.permute.xlu0 %505
      %v511 = vsel %vm463, %v484, %v500
      %v512 = vsel %vm463, %v486, %v502
      %v513 = vsel %vm463, %v488, %v504
      %v514 = vsel %vm463, %v490, %v506
      %v515 = vmul.f32 %v423, %v437
      %v516 = vmul.f32 %v424, %v438
      %v517 = vmul.f32 %v425, %v439
      %v518 = vmul.f32 %v426, %v440
      %v519 = vmul.f32 %v511, %v441
      %v520 = vmul.f32 %v512, %v442
      %v521 = vmul.f32 %v513, %v443
      %v522 = vmul.f32 %v514, %v444
      %v523 = vadd.f32 %v515, %v519
      %v524 = vadd.f32 %v516, %v520
      %v525 = vadd.f32 %v517, %v521
      %v526 = vadd.f32 %v518, %v522
      %v527 = vpack.c.bf16 %v524, %v523
      %v528 = vpack.c.bf16 %v526, %v525
      %vm529 = vcmask 130048
      %v531 = vsel %vm529, %v474, 0
      %v534 = vsel %vm529, %v527, 0
      %v537 = vsel %vm529, %v528, 0
      %539 = vmatprep.subr.bf16.mxu0 0
      %540 = vmatpush1.bf16.xpose.msra.mxu0 %v534
      %541 = vmatprep.subr.bf16.mxu0 0
      %542 = vmatpush1.bf16.xpose.msra.mxu0 %v537
      %543 = vmatprep.subr.bf16.mxu0 0
      %544 = vmatpush1.bf16.xpose.msra.mxu0 0
      %545 = vmatprep.subr.bf16.mxu0 0
      %546 = vmatpush1.bf16.xpose.msra.mxu0 0
      %547 = vmatprep.subr.bf16.mxu0 0
      %548 = vmatpush1.bf16.xpose.msra.mxu0 0
      %549 = vmatprep.subr.bf16.mxu0 0
      %550 = vmatpush1.bf16.xpose.msra.mxu0 0
      %551 = vmatprep.subr.bf16.mxu0 0
      %552 = vmatpush1.bf16.xpose.msra.mxu0 0
      %553 = vmatprep.subr.bf16.mxu0 0
      %554 = vmatpush1.bf16.xpose.msra.mxu0 0
      %555 = vmatprep.subr.bf16.mxu0 0
      %556 = vmatpush1.bf16.xpose.msra.mxu0 0
      %557 = vmatprep.subr.bf16.mxu0 0
      %558 = vmatpush1.bf16.xpose.msra.mxu0 0
      %559 = vmatprep.subr.bf16.mxu0 0
      %560 = vmatpush1.bf16.xpose.msra.mxu0 0
      %561 = vmatprep.subr.bf16.mxu0 0
      %562 = vmatpush1.bf16.xpose.msra.mxu0 0
      %563 = vmatprep.subr.bf16.mxu0 0
      %564 = vmatpush1.bf16.xpose.msra.mxu0 0
      %565 = vmatprep.subr.bf16.mxu0 0
      %566 = vmatpush1.bf16.xpose.msra.mxu0 0
      %567 = vmatprep.subr.bf16.mxu0 0
      %568 = vmatpush1.bf16.xpose.msra.mxu0 0
      %569 = vmatprep.subr.bf16.mxu0 0
      %570 = vmatpush1.bf16.xpose.msra.mxu0 0
      %571 = vmatprep.mubr.bf16.mxu0 0
      %572 = vmatmul.mubr.bf16.gmra.mrb[0].mxu0 %v531
      %v573 = vpop.f32.mrb[0].mxu0
      %v574 = vadd.f32 0.0, %v573
      %v575 = vpop.f32.mrb[0].mxu0
      %v576 = vpop.f32.mrb[0].mxu0
      %v577 = vadd.f32 0.0, %v576
      %v578 = vpop.f32.mrb[0].mxu0
      %579 = vdwg.mxu0
      %vm580 = vcmask 261120
      %v581 = vsel %vm580, %v574, -inf
      %582 = vmax.xlane.f32.xlu0 %v581
      %v583 = vpop.xlane.xlu0 %582
      %v584 = vsel %vm580, %v577, -inf
      %585 = vmax.xlane.f32.xlu0 %v584
      %v586 = vpop.xlane.xlu0 %585
      %v587 = vsub.f32 %v574, %v583
      %v588 = vsub.f32 %v577, %v586
      %v589 = vmul.f32 %v587, 1.442695
      %v590 = vpow.pop %v589
      %v591 = vmul.f32 %v588, 1.442695
      %v592 = vpow.pop %v591
      %v593 = vsel %vm580, %v590, 0.0
      %594 = vadd.xlane.f32.xlu0 %v593
      %v595 = vpop.xlane.xlu0 %594
      %v596 = vsel %vm580, %v592, 0.0
      %597 = vadd.xlane.f32.xlu0 %v596
      %v598 = vpop.xlane.xlu0 %597
      %v599 = vrcp.pop %v595
      %v600 = vrcp.pop %v598
      %v601 = vmul.f32 %v590, %v599
      %v602 = vmul.f32 %v592, %v600
      %v603 = vpack.c.bf16 %v602, %v601
      %v605 = vsel %vm580, %v603, 0
      %607 = vmatprep.subr.bf16.mxu0 0
      %608 = vmatpush1.bf16.msra.mxu0 %v431
      %609 = vmatprep.subr.bf16.mxu0 0
      %610 = vmatpush1.bf16.msra.mxu0 %v432
      %611 = vmatprep.subr.bf16.mxu0 0
      %612 = vmatpush1.bf16.msra.mxu0 0
      %613 = vmatprep.subr.bf16.mxu0 0
      %614 = vmatpush1.bf16.msra.mxu0 0
      %615 = vmatprep.subr.bf16.mxu0 0
      %616 = vmatpush1.bf16.msra.mxu0 0
      %617 = vmatprep.subr.bf16.mxu0 0
      %618 = vmatpush1.bf16.msra.mxu0 0
      %619 = vmatprep.subr.bf16.mxu0 0
      %620 = vmatpush1.bf16.msra.mxu0 0
      %621 = vmatprep.subr.bf16.mxu0 0
      %622 = vmatpush1.bf16.msra.mxu0 0
      %623 = vmatprep.subr.bf16.mxu0 0
      %624 = vmatpush1.bf16.msra.mxu0 0
      %625 = vmatprep.subr.bf16.mxu0 0
      %626 = vmatpush1.bf16.msra.mxu0 0
      %627 = vmatprep.subr.bf16.mxu0 0
      %628 = vmatpush1.bf16.msra.mxu0 0
      %629 = vmatprep.subr.bf16.mxu0 0
      %630 = vmatpush1.bf16.msra.mxu0 0
      %631 = vmatprep.subr.bf16.mxu0 0
      %632 = vmatpush1.bf16.msra.mxu0 0
      %633 = vmatprep.subr.bf16.mxu0 0
      %634 = vmatpush1.bf16.msra.mxu0 0
      %635 = vmatprep.subr.bf16.mxu0 0
      %636 = vmatpush1.bf16.msra.mxu0 0
      %637 = vmatprep.subr.bf16.mxu0 0
      %638 = vmatpush1.bf16.msra.mxu0 0
      %639 = vmatprep.mubr.bf16.mxu0 0
      %640 = vmatmul.mubr.bf16.gmra.mrb[0].mxu0 %v605
      %v641 = vpop.f32.mrb[0].mxu0
      %v642 = vadd.f32 0.0, %v641
      %v643 = vpop.f32.mrb[0].mxu0
      %v644 = vpop.f32.mrb[0].mxu0
      %v645 = vadd.f32 0.0, %v644
      %v646 = vpop.f32.mrb[0].mxu0
      %647 = vdwg.mxu0
      %648 = vrot.lane.b32.xlu0 %v445, 104
      %v649 = vpop.permute.xlu0 %648
      %650 = vrot.lane.b32.xlu0 %v446, 104
      %v651 = vpop.permute.xlu0 %650
      %654 = vrot.lane.b32.xlu0 %v421, 120
      %v655 = vpop.permute.xlu0 %654
      %656 = vrot.lane.b32.xlu0 %v422, 120
      %v657 = vpop.permute.xlu0 %656
      %v660 = vsel %vm463, %v649, %v655
      %v661 = vsel %vm463, %v651, %v657
      %664 = vrot.lane.b32.xlu0 %v433, 16
      %v665 = vpop.permute.xlu0 %664
      %666 = vrot.lane.b32.xlu0 %v434, 16
      %v667 = vpop.permute.xlu0 %666
      %v670 = vmul.f32 %v421, %v665
      %v671 = vmul.f32 %v422, %v667
      %v672 = vmul.f32 %v660, %v435
      %v673 = vmul.f32 %v661, %v436
      %676 = vrot.lane.b32.xlu0 %v672, 16
      %v677 = vpop.permute.xlu0 %676
      %678 = vrot.lane.b32.xlu0 %v673, 16
      %v679 = vpop.permute.xlu0 %678
      %v682 = vadd.f32 %v670, %v677
      %v683 = vadd.f32 %v671, %v679
      %v684 = vmul.f32 %v682, 0.25
      %v685 = vmul.f32 %v683, 0.25
      %v686 = vpack.c.bf16 %v685, %v684
      %687 = vrot.lane.b32.xlu0 %v475, 104
      %v688 = vpop.permute.xlu0 %687
      %689 = vrot.lane.b32.xlu0 %v476, 104
      %v690 = vpop.permute.xlu0 %689
      %691 = vrot.lane.b32.xlu0 %v477, 104
      %v692 = vpop.permute.xlu0 %691
      %693 = vrot.lane.b32.xlu0 %v478, 104
      %v694 = vpop.permute.xlu0 %693
      %699 = vrot.lane.b32.xlu0 %v423, 120
      %v700 = vpop.permute.xlu0 %699
      %701 = vrot.lane.b32.xlu0 %v424, 120
      %v702 = vpop.permute.xlu0 %701
      %703 = vrot.lane.b32.xlu0 %v425, 120
      %v704 = vpop.permute.xlu0 %703
      %705 = vrot.lane.b32.xlu0 %v426, 120
      %v706 = vpop.permute.xlu0 %705
      %v711 = vsel %vm463, %v688, %v700
      %v712 = vsel %vm463, %v690, %v702
      %v713 = vsel %vm463, %v692, %v704
      %v714 = vsel %vm463, %v694, %v706
      %719 = vrot.lane.b32.xlu0 %v437, 16
      %v720 = vpop.permute.xlu0 %719
      %721 = vrot.lane.b32.xlu0 %v438, 16
      %v722 = vpop.permute.xlu0 %721
      %723 = vrot.lane.b32.xlu0 %v439, 16
      %v724 = vpop.permute.xlu0 %723
      %725 = vrot.lane.b32.xlu0 %v440, 16
      %v726 = vpop.permute.xlu0 %725
      %v731 = vmul.f32 %v423, %v720
      %v732 = vmul.f32 %v424, %v722
      %v733 = vmul.f32 %v425, %v724
      %v734 = vmul.f32 %v426, %v726
      %v735 = vmul.f32 %v711, %v441
      %v736 = vmul.f32 %v712, %v442
      %v737 = vmul.f32 %v713, %v443
      %v738 = vmul.f32 %v714, %v444
      %743 = vrot.lane.b32.xlu0 %v735, 16
      %v744 = vpop.permute.xlu0 %743
      %745 = vrot.lane.b32.xlu0 %v736, 16
      %v746 = vpop.permute.xlu0 %745
      %747 = vrot.lane.b32.xlu0 %v737, 16
      %v748 = vpop.permute.xlu0 %747
      %749 = vrot.lane.b32.xlu0 %v738, 16
      %v750 = vpop.permute.xlu0 %749
      %v755 = vadd.f32 %v731, %v744
      %v756 = vadd.f32 %v732, %v746
      %v757 = vadd.f32 %v733, %v748
      %v758 = vadd.f32 %v734, %v750
      %v759 = vpack.c.bf16 %v756, %v755
      %v760 = vpack.c.bf16 %v758, %v757
      %762 = vrot.lane.b32.xlu0 %v686, 112
      %v763 = vpop.permute.xlu0 %762
      %766 = vrot.lane.b32.xlu0 %v759, 112
      %v767 = vpop.permute.xlu0 %766
      %768 = vrot.lane.b32.xlu0 %v760, 112
      %v769 = vpop.permute.xlu0 %768
      %v771 = vsel %vm529, %v763, 0
      %v774 = vsel %vm529, %v767, 0
      %v777 = vsel %vm529, %v769, 0
      %779 = vmatprep.subr.bf16.mxu0 0
      %780 = vmatpush1.bf16.xpose.msra.mxu0 %v774
      %781 = vmatprep.subr.bf16.mxu0 0
      %782 = vmatpush1.bf16.xpose.msra.mxu0 %v777
      %783 = vmatprep.subr.bf16.mxu0 0
      %784 = vmatpush1.bf16.xpose.msra.mxu0 0
      %785 = vmatprep.subr.bf16.mxu0 0
      %786 = vmatpush1.bf16.xpose.msra.mxu0 0
      %787 = vmatprep.subr.bf16.mxu0 0
      %788 = vmatpush1.bf16.xpose.msra.mxu0 0
      %789 = vmatprep.subr.bf16.mxu0 0
      %790 = vmatpush1.bf16.xpose.msra.mxu0 0
      %791 = vmatprep.subr.bf16.mxu0 0
      %792 = vmatpush1.bf16.xpose.msra.mxu0 0
      %793 = vmatprep.subr.bf16.mxu0 0
      %794 = vmatpush1.bf16.xpose.msra.mxu0 0
      %795 = vmatprep.subr.bf16.mxu0 0
      %796 = vmatpush1.bf16.xpose.msra.mxu0 0
      %797 = vmatprep.subr.bf16.mxu0 0
      %798 = vmatpush1.bf16.xpose.msra.mxu0 0
      %799 = vmatprep.subr.bf16.mxu0 0
      %800 = vmatpush1.bf16.xpose.msra.mxu0 0
      %801 = vmatprep.subr.bf16.mxu0 0
      %802 = vmatpush1.bf16.xpose.msra.mxu0 0
      %803 = vmatprep.subr.bf16.mxu0 0
      %804 = vmatpush1.bf16.xpose.msra.mxu0 0
      %805 = vmatprep.subr.bf16.mxu0 0
      %806 = vmatpush1.bf16.xpose.msra.mxu0 0
      %807 = vmatprep.subr.bf16.mxu0 0
      %808 = vmatpush1.bf16.xpose.msra.mxu0 0
      %809 = vmatprep.subr.bf16.mxu0 0
      %810 = vmatpush1.bf16.xpose.msra.mxu0 0
      %811 = vmatprep.mubr.bf16.mxu0 0
      %812 = vmatmul.mubr.bf16.gmra.mrb[0].mxu0 %v771
      %v813 = vpop.f32.mrb[0].mxu0
      %v814 = vadd.f32 0.0, %v813
      %v815 = vpop.f32.mrb[0].mxu0
      %v816 = vpop.f32.mrb[0].mxu0
      %v817 = vadd.f32 0.0, %v816
      %v818 = vpop.f32.mrb[0].mxu0
      %819 = vdwg.mxu0
      %v820 = vsel %vm580, %v814, -inf
      %821 = vmax.xlane.f32.xlu0 %v820
      %v822 = vpop.xlane.xlu0 %821
      %v823 = vsel %vm580, %v817, -inf
      %824 = vmax.xlane.f32.xlu0 %v823
      %v825 = vpop.xlane.xlu0 %824
      %v826 = vsub.f32 %v814, %v822
      %v827 = vsub.f32 %v817, %v825
      %v828 = vmul.f32 %v826, 1.442695
      %v829 = vpow.pop %v828
      %v830 = vmul.f32 %v827, 1.442695
      %v831 = vpow.pop %v830
      %v832 = vsel %vm580, %v829, 0.0
      %833 = vadd.xlane.f32.xlu0 %v832
      %v834 = vpop.xlane.xlu0 %833
      %v835 = vsel %vm580, %v831, 0.0
      %836 = vadd.xlane.f32.xlu0 %v835
      %v837 = vpop.xlane.xlu0 %836
      %v838 = vrcp.pop %v834
      %v839 = vrcp.pop %v837
      %v840 = vmul.f32 %v829, %v838
      %v841 = vmul.f32 %v831, %v839
      %v842 = vpack.c.bf16 %v841, %v840
      %845 = vrot.lane.b32.xlu0 %v431, 112
      %v846 = vpop.permute.xlu0 %845
      %847 = vrot.lane.b32.xlu0 %v432, 112
      %v848 = vpop.permute.xlu0 %847
      %v852 = vsel %vm580, %v842, 0
      %854 = vmatprep.subr.bf16.mxu0 0
      %855 = vmatpush1.bf16.msra.mxu0 %v846
      %856 = vmatprep.subr.bf16.mxu0 0
      %857 = vmatpush1.bf16.msra.mxu0 %v848
      %858 = vmatprep.subr.bf16.mxu0 0
      %859 = vmatpush1.bf16.msra.mxu0 0
      %860 = vmatprep.subr.bf16.mxu0 0
      %861 = vmatpush1.bf16.msra.mxu0 0
      %862 = vmatprep.subr.bf16.mxu0 0
      %863 = vmatpush1.bf16.msra.mxu0 0
      %864 = vmatprep.subr.bf16.mxu0 0
      %865 = vmatpush1.bf16.msra.mxu0 0
      %866 = vmatprep.subr.bf16.mxu0 0
      %867 = vmatpush1.bf16.msra.mxu0 0
      %868 = vmatprep.subr.bf16.mxu0 0
      %869 = vmatpush1.bf16.msra.mxu0 0
      %870 = vmatprep.subr.bf16.mxu0 0
      %871 = vmatpush1.bf16.msra.mxu0 0
      %872 = vmatprep.subr.bf16.mxu0 0
      %873 = vmatpush1.bf16.msra.mxu0 0
      %874 = vmatprep.subr.bf16.mxu0 0
      %875 = vmatpush1.bf16.msra.mxu0 0
      %876 = vmatprep.subr.bf16.mxu0 0
      %877 = vmatpush1.bf16.msra.mxu0 0
      %878 = vmatprep.subr.bf16.mxu0 0
      %879 = vmatpush1.bf16.msra.mxu0 0
      %880 = vmatprep.subr.bf16.mxu0 0
      %881 = vmatpush1.bf16.msra.mxu0 0
      %882 = vmatprep.subr.bf16.mxu0 0
      %883 = vmatpush1.bf16.msra.mxu0 0
      %884 = vmatprep.subr.bf16.mxu0 0
      %885 = vmatpush1.bf16.msra.mxu0 0
      %886 = vmatprep.mubr.bf16.mxu0 0
      %887 = vmatmul.mubr.bf16.gmra.mrb[0].mxu0 %v852
      %v888 = vpop.f32.mrb[0].mxu0
      %v889 = vadd.f32 0.0, %v888
      %v890 = vpop.f32.mrb[0].mxu0
      %v891 = vpop.f32.mrb[0].mxu0
      %v892 = vadd.f32 0.0, %v891
      %v893 = vpop.f32.mrb[0].mxu0
      %894 = vdwg.mxu0
      %895 = vrot.lane.b32.xlu0 %v445, 88
      %v896 = vpop.permute.xlu0 %895
      %897 = vrot.lane.b32.xlu0 %v446, 88
      %v898 = vpop.permute.xlu0 %897
      %901 = vrot.lane.b32.xlu0 %v421, 104
      %v902 = vpop.permute.xlu0 %901
      %903 = vrot.lane.b32.xlu0 %v422, 104
      %v904 = vpop.permute.xlu0 %903
      %v907 = vsel %vm463, %v896, %v902
      %v908 = vsel %vm463, %v898, %v904
      %909 = vrot.lane.b32.xlu0 %v433, 32
      %v910 = vpop.permute.xlu0 %909
      %911 = vrot.lane.b32.xlu0 %v434, 32
      %v912 = vpop.permute.xlu0 %911
      %v915 = vmul.f32 %v421, %v910
      %v916 = vmul.f32 %v422, %v912
      %v917 = vmul.f32 %v907, %v435
      %v918 = vmul.f32 %v908, %v436
      %921 = vrot.lane.b32.xlu0 %v917, 32
      %v922 = vpop.permute.xlu0 %921
      %923 = vrot.lane.b32.xlu0 %v918, 32
      %v924 = vpop.permute.xlu0 %923
      %v927 = vadd.f32 %v915, %v922
      %v928 = vadd.f32 %v916, %v924
      %v929 = vmul.f32 %v927, 0.25
      %v930 = vmul.f32 %v928, 0.25
      %v931 = vpack.c.bf16 %v930, %v929
      %932 = vrot.lane.b32.xlu0 %v475, 88
      %v933 = vpop.permute.xlu0 %932
      %934 = vrot.lane.b32.xlu0 %v476, 88
      %v935 = vpop.permute.xlu0 %934
      %936 = vrot.lane.b32.xlu0 %v477, 88
      %v937 = vpop.permute.xlu0 %936
      %938 = vrot.lane.b32.xlu0 %v478, 88
      %v939 = vpop.permute.xlu0 %938
      %944 = vrot.lane.b32.xlu0 %v423, 104
      %v945 = vpop.permute.xlu0 %944
      %946 = vrot.lane.b32.xlu0 %v424, 104
      %v947 = vpop.permute.xlu0 %946
      %948 = vrot.lane.b32.xlu0 %v425, 104
      %v949 = vpop.permute.xlu0 %948
      %950 = vrot.lane.b32.xlu0 %v426, 104
      %v951 = vpop.permute.xlu0 %950
      %v956 = vsel %vm463, %v933, %v945
      %v957 = vsel %vm463, %v935, %v947
      %v958 = vsel %vm463, %v937, %v949
      %v959 = vsel %vm463, %v939, %v951
      %960 = vrot.lane.b32.xlu0 %v437, 32
      %v961 = vpop.permute.xlu0 %960
      %962 = vrot.lane.b32.xlu0 %v438, 32
      %v963 = vpop.permute.xlu0 %962
      %964 = vrot.lane.b32.xlu0 %v439, 32
      %v965 = vpop.permute.xlu0 %964
      %966 = vrot.lane.b32.xlu0 %v440, 32
      %v967 = vpop.permute.xlu0 %966
      %v972 = vmul.f32 %v423, %v961
      %v973 = vmul.f32 %v424, %v963
      %v974 = vmul.f32 %v425, %v965
      %v975 = vmul.f32 %v426, %v967
      %v976 = vmul.f32 %v956, %v441
      %v977 = vmul.f32 %v957, %v442
      %v978 = vmul.f32 %v958, %v443
      %v979 = vmul.f32 %v959, %v444
      %984 = vrot.lane.b32.xlu0 %v976, 32
      %v985 = vpop.permute.xlu0 %984
      %986 = vrot.lane.b32.xlu0 %v977, 32
      %v987 = vpop.permute.xlu0 %986
      %988 = vrot.lane.b32.xlu0 %v978, 32
      %v989 = vpop.permute.xlu0 %988
      %990 = vrot.lane.b32.xlu0 %v979, 32
      %v991 = vpop.permute.xlu0 %990
      %v996 = vadd.f32 %v972, %v985
      %v997 = vadd.f32 %v973, %v987
      %v998 = vadd.f32 %v974, %v989
      %v999 = vadd.f32 %v975, %v991
      %v1000 = vpack.c.bf16 %v997, %v996
      %v1001 = vpack.c.bf16 %v999, %v998
      %1003 = vrot.lane.b32.xlu0 %v931, 96
      %v1004 = vpop.permute.xlu0 %1003
      %1007 = vrot.lane.b32.xlu0 %v1000, 96
      %v1008 = vpop.permute.xlu0 %1007
      %1009 = vrot.lane.b32.xlu0 %v1001, 96
      %v1010 = vpop.permute.xlu0 %1009
      %v1012 = vsel %vm529, %v1004, 0
      %v1015 = vsel %vm529, %v1008, 0
      %v1018 = vsel %vm529, %v1010, 0
      %1020 = vmatprep.subr.bf16.mxu0 0
      %1021 = vmatpush1.bf16.xpose.msra.mxu0 %v1015
      %1022 = vmatprep.subr.bf16.mxu0 0
      %1023 = vmatpush1.bf16.xpose.msra.mxu0 %v1018
      %1024 = vmatprep.subr.bf16.mxu0 0
      %1025 = vmatpush1.bf16.xpose.msra.mxu0 0
      %1026 = vmatprep.subr.bf16.mxu0 0
      %1027 = vmatpush1.bf16.xpose.msra.mxu0 0
      %1028 = vmatprep.subr.bf16.mxu0 0
      %1029 = vmatpush1.bf16.xpose.msra.mxu0 0
      %1030 = vmatprep.subr.bf16.mxu0 0
      %1031 = vmatpush1.bf16.xpose.msra.mxu0 0
      %1032 = vmatprep.subr.bf16.mxu0 0
      %1033 = vmatpush1.bf16.xpose.msra.mxu0 0
      %1034 = vmatprep.subr.bf16.mxu0 0
      %1035 = vmatpush1.bf16.xpose.msra.mxu0 0
      %1036 = vmatprep.subr.bf16.mxu0 0
      %1037 = vmatpush1.bf16.xpose.msra.mxu0 0
      %1038 = vmatprep.subr.bf16.mxu0 0
      %1039 = vmatpush1.bf16.xpose.msra.mxu0 0
      %1040 = vmatprep.subr.bf16.mxu0 0
      %1041 = vmatpush1.bf16.xpose.msra.mxu0 0
      %1042 = vmatprep.subr.bf16.mxu0 0
      %1043 = vmatpush1.bf16.xpose.msra.mxu0 0
      %1044 = vmatprep.subr.bf16.mxu0 0
      %1045 = vmatpush1.bf16.xpose.msra.mxu0 0
      %1046 = vmatprep.subr.bf16.mxu0 0
      %1047 = vmatpush1.bf16.xpose.msra.mxu0 0
      %1048 = vmatprep.subr.bf16.mxu0 0
      %1049 = vmatpush1.bf16.xpose.msra.mxu0 0
      %1050 = vmatprep.subr.bf16.mxu0 0
      %1051 = vmatpush1.bf16.xpose.msra.mxu0 0
      %1052 = vmatprep.mubr.bf16.mxu0 0
      %1053 = vmatmul.mubr.bf16.gmra.mrb[0].mxu0 %v1012
      %v1054 = vpop.f32.mrb[0].mxu0
      %v1055 = vadd.f32 0.0, %v1054
      %v1056 = vpop.f32.mrb[0].mxu0
      %v1057 = vpop.f32.mrb[0].mxu0
      %v1058 = vadd.f32 0.0, %v1057
      %v1059 = vpop.f32.mrb[0].mxu0
      %1060 = vdwg.mxu0
      %v1061 = vsel %vm580, %v1055, -inf
      %1062 = vmax.xlane.f32.xlu0 %v1061
      %v1063 = vpop.xlane.xlu0 %1062
      %v1064 = vsel %vm580, %v1058, -inf
      %1065 = vmax.xlane.f32.xlu0 %v1064
      %v1066 = vpop.xlane.xlu0 %1065
      %v1067 = vsub.f32 %v1055, %v1063
      %v1068 = vsub.f32 %v1058, %v1066
      %v1069 = vmul.f32 %v1067, 1.442695
      %v1070 = vpow.pop %v1069
      %v1071 = vmul.f32 %v1068, 1.442695
      %v1072 = vpow.pop %v1071
      %v1073 = vsel %vm580, %v1070, 0.0
      %1074 = vadd.xlane.f32.xlu0 %v1073
      %v1075 = vpop.xlane.xlu0 %1074
      %v1076 = vsel %vm580, %v1072, 0.0
      %1077 = vadd.xlane.f32.xlu0 %v1076
      %v1078 = vpop.xlane.xlu0 %1077
      %v1079 = vrcp.pop %v1075
      %v1080 = vrcp.pop %v1078
      %v1081 = vmul.f32 %v1070, %v1079
      %v1082 = vmul.f32 %v1072, %v1080
      %v1083 = vpack.c.bf16 %v1082, %v1081
      %1084 = vrot.lane.b32.xlu0 %v431, 96
      %v1085 = vpop.permute.xlu0 %1084
      %1086 = vrot.lane.b32.xlu0 %v432, 96
      %v1087 = vpop.permute.xlu0 %1086
      %v1091 = vsel %vm580, %v1083, 0
      %1093 = vmatprep.subr.bf16.mxu0 0
      %1094 = vmatpush1.bf16.msra.mxu0 %v1085
      %1095 = vmatprep.subr.bf16.mxu0 0
      %1096 = vmatpush1.bf16.msra.mxu0 %v1087
      %1097 = vmatprep.subr.bf16.mxu0 0
      %1098 = vmatpush1.bf16.msra.mxu0 0
      %1099 = vmatprep.subr.bf16.mxu0 0
      %1100 = vmatpush1.bf16.msra.mxu0 0
      %1101 = vmatprep.subr.bf16.mxu0 0
      %1102 = vmatpush1.bf16.msra.mxu0 0
      %1103 = vmatprep.subr.bf16.mxu0 0
      %1104 = vmatpush1.bf16.msra.mxu0 0
      %1105 = vmatprep.subr.bf16.mxu0 0
      %1106 = vmatpush1.bf16.msra.mxu0 0
      %1107 = vmatprep.subr.bf16.mxu0 0
      %1108 = vmatpush1.bf16.msra.mxu0 0
      %1109 = vmatprep.subr.bf16.mxu0 0
      %1110 = vmatpush1.bf16.msra.mxu0 0
      %1111 = vmatprep.subr.bf16.mxu0 0
      %1112 = vmatpush1.bf16.msra.mxu0 0
      %1113 = vmatprep.subr.bf16.mxu0 0
      %1114 = vmatpush1.bf16.msra.mxu0 0
      %1115 = vmatprep.subr.bf16.mxu0 0
      %1116 = vmatpush1.bf16.msra.mxu0 0
      %1117 = vmatprep.subr.bf16.mxu0 0
      %1118 = vmatpush1.bf16.msra.mxu0 0
      %1119 = vmatprep.subr.bf16.mxu0 0
      %1120 = vmatpush1.bf16.msra.mxu0 0
      %1121 = vmatprep.subr.bf16.mxu0 0
      %1122 = vmatpush1.bf16.msra.mxu0 0
      %1123 = vmatprep.subr.bf16.mxu0 0
      %1124 = vmatpush1.bf16.msra.mxu0 0
      %1125 = vmatprep.mubr.bf16.mxu0 0
      %1126 = vmatmul.mubr.bf16.gmra.mrb[0].mxu0 %v1091
      %v1127 = vpop.f32.mrb[0].mxu0
      %v1128 = vadd.f32 0.0, %v1127
      %v1129 = vpop.f32.mrb[0].mxu0
      %v1130 = vpop.f32.mrb[0].mxu0
      %v1131 = vadd.f32 0.0, %v1130
      %v1132 = vpop.f32.mrb[0].mxu0
      %1133 = vdwg.mxu0
      %1134 = vrot.lane.b32.xlu0 %v445, 72
      %v1135 = vpop.permute.xlu0 %1134
      %1136 = vrot.lane.b32.xlu0 %v446, 72
      %v1137 = vpop.permute.xlu0 %1136
      %1140 = vrot.lane.b32.xlu0 %v421, 88
      %v1141 = vpop.permute.xlu0 %1140
      %1142 = vrot.lane.b32.xlu0 %v422, 88
      %v1143 = vpop.permute.xlu0 %1142
      %v1146 = vsel %vm463, %v1135, %v1141
      %v1147 = vsel %vm463, %v1137, %v1143
      %1148 = vrot.lane.b32.xlu0 %v433, 48
      %v1149 = vpop.permute.xlu0 %1148
      %1150 = vrot.lane.b32.xlu0 %v434, 48
      %v1151 = vpop.permute.xlu0 %1150
      %v1154 = vmul.f32 %v421, %v1149
      %v1155 = vmul.f32 %v422, %v1151
      %v1156 = vmul.f32 %v1146, %v435
      %v1157 = vmul.f32 %v1147, %v436
      %1160 = vrot.lane.b32.xlu0 %v1156, 48
      %v1161 = vpop.permute.xlu0 %1160
      %1162 = vrot.lane.b32.xlu0 %v1157, 48
      %v1163 = vpop.permute.xlu0 %1162
      %v1166 = vadd.f32 %v1154, %v1161
      %v1167 = vadd.f32 %v1155, %v1163
      %v1168 = vmul.f32 %v1166, 0.25
      %v1169 = vmul.f32 %v1167, 0.25
      %v1170 = vpack.c.bf16 %v1169, %v1168
      %1171 = vrot.lane.b32.xlu0 %v475, 72
      %v1172 = vpop.permute.xlu0 %1171
      %1173 = vrot.lane.b32.xlu0 %v476, 72
      %v1174 = vpop.permute.xlu0 %1173
      %1175 = vrot.lane.b32.xlu0 %v477, 72
      %v1176 = vpop.permute.xlu0 %1175
      %1177 = vrot.lane.b32.xlu0 %v478, 72
      %v1178 = vpop.permute.xlu0 %1177
      %1183 = vrot.lane.b32.xlu0 %v423, 88
      %v1184 = vpop.permute.xlu0 %1183
      %1185 = vrot.lane.b32.xlu0 %v424, 88
      %v1186 = vpop.permute.xlu0 %1185
      %1187 = vrot.lane.b32.xlu0 %v425, 88
      %v1188 = vpop.permute.xlu0 %1187
      %1189 = vrot.lane.b32.xlu0 %v426, 88
      %v1190 = vpop.permute.xlu0 %1189
      %v1195 = vsel %vm463, %v1172, %v1184
      %v1196 = vsel %vm463, %v1174, %v1186
      %v1197 = vsel %vm463, %v1176, %v1188
      %v1198 = vsel %vm463, %v1178, %v1190
      %1199 = vrot.lane.b32.xlu0 %v437, 48
      %v1200 = vpop.permute.xlu0 %1199
      %1201 = vrot.lane.b32.xlu0 %v438, 48
      %v1202 = vpop.permute.xlu0 %1201
      %1203 = vrot.lane.b32.xlu0 %v439, 48
      %v1204 = vpop.permute.xlu0 %1203
      %1205 = vrot.lane.b32.xlu0 %v440, 48
      %v1206 = vpop.permute.xlu0 %1205
      %v1211 = vmul.f32 %v423, %v1200
      %v1212 = vmul.f32 %v424, %v1202
      %v1213 = vmul.f32 %v425, %v1204
      %v1214 = vmul.f32 %v426, %v1206
      %v1215 = vmul.f32 %v1195, %v441
      %v1216 = vmul.f32 %v1196, %v442
      %v1217 = vmul.f32 %v1197, %v443
      %v1218 = vmul.f32 %v1198, %v444
      %1223 = vrot.lane.b32.xlu0 %v1215, 48
      %v1224 = vpop.permute.xlu0 %1223
      %1225 = vrot.lane.b32.xlu0 %v1216, 48
      %v1226 = vpop.permute.xlu0 %1225
      %1227 = vrot.lane.b32.xlu0 %v1217, 48
      %v1228 = vpop.permute.xlu0 %1227
      %1229 = vrot.lane.b32.xlu0 %v1218, 48
      %v1230 = vpop.permute.xlu0 %1229
      %v1235 = vadd.f32 %v1211, %v1224
      %v1236 = vadd.f32 %v1212, %v1226
      %v1237 = vadd.f32 %v1213, %v1228
      %v1238 = vadd.f32 %v1214, %v1230
      %v1239 = vpack.c.bf16 %v1236, %v1235
      %v1240 = vpack.c.bf16 %v1238, %v1237
      %1242 = vrot.lane.b32.xlu0 %v1170, 80
      %v1243 = vpop.permute.xlu0 %1242
      %1246 = vrot.lane.b32.xlu0 %v1239, 80
      %v1247 = vpop.permute.xlu0 %1246
      %1248 = vrot.lane.b32.xlu0 %v1240, 80
      %v1249 = vpop.permute.xlu0 %1248
      %v1251 = vsel %vm529, %v1243, 0
      %v1254 = vsel %vm529, %v1247, 0
      %v1257 = vsel %vm529, %v1249, 0
      %1259 = vmatprep.subr.bf16.mxu0 0
      %1260 = vmatpush1.bf16.xpose.msra.mxu0 %v1254
      %1261 = vmatprep.subr.bf16.mxu0 0
      %1262 = vmatpush1.bf16.xpose.msra.mxu0 %v1257
      %1263 = vmatprep.subr.bf16.mxu0 0
      %1264 = vmatpush1.bf16.xpose.msra.mxu0 0
      %1265 = vmatprep.subr.bf16.mxu0 0
      %1266 = vmatpush1.bf16.xpose.msra.mxu0 0
      %1267 = vmatprep.subr.bf16.mxu0 0
      %1268 = vmatpush1.bf16.xpose.msra.mxu0 0
      %1269 = vmatprep.subr.bf16.mxu0 0
      %1270 = vmatpush1.bf16.xpose.msra.mxu0 0
      %1271 = vmatprep.subr.bf16.mxu0 0
      %1272 = vmatpush1.bf16.xpose.msra.mxu0 0
      %1273 = vmatprep.subr.bf16.mxu0 0
      %1274 = vmatpush1.bf16.xpose.msra.mxu0 0
      %1275 = vmatprep.subr.bf16.mxu0 0
      %1276 = vmatpush1.bf16.xpose.msra.mxu0 0
      %1277 = vmatprep.subr.bf16.mxu0 0
      %1278 = vmatpush1.bf16.xpose.msra.mxu0 0
      %1279 = vmatprep.subr.bf16.mxu0 0
      %1280 = vmatpush1.bf16.xpose.msra.mxu0 0
      %1281 = vmatprep.subr.bf16.mxu0 0
      %1282 = vmatpush1.bf16.xpose.msra.mxu0 0
      %1283 = vmatprep.subr.bf16.mxu0 0
      %1284 = vmatpush1.bf16.xpose.msra.mxu0 0
      %1285 = vmatprep.subr.bf16.mxu0 0
      %1286 = vmatpush1.bf16.xpose.msra.mxu0 0
      %1287 = vmatprep.subr.bf16.mxu0 0
      %1288 = vmatpush1.bf16.xpose.msra.mxu0 0
      %1289 = vmatprep.subr.bf16.mxu0 0
      %1290 = vmatpush1.bf16.xpose.msra.mxu0 0
      %1291 = vmatprep.mubr.bf16.mxu0 0
      %1292 = vmatmul.mubr.bf16.gmra.mrb[0].mxu0 %v1251
      %v1293 = vpop.f32.mrb[0].mxu0
      %v1294 = vadd.f32 0.0, %v1293
      %v1295 = vpop.f32.mrb[0].mxu0
      %v1296 = vpop.f32.mrb[0].mxu0
      %v1297 = vadd.f32 0.0, %v1296
      %v1298 = vpop.f32.mrb[0].mxu0
      %1299 = vdwg.mxu0
      %v1300 = vsel %vm580, %v1294, -inf
      %1301 = vmax.xlane.f32.xlu0 %v1300
      %v1302 = vpop.xlane.xlu0 %1301
      %v1303 = vsel %vm580, %v1297, -inf
      %1304 = vmax.xlane.f32.xlu0 %v1303
      %v1305 = vpop.xlane.xlu0 %1304
      %v1306 = vsub.f32 %v1294, %v1302
      %v1307 = vsub.f32 %v1297, %v1305
      %v1308 = vmul.f32 %v1306, 1.442695
      %v1309 = vpow.pop %v1308
      %v1310 = vmul.f32 %v1307, 1.442695
      %v1311 = vpow.pop %v1310
      %v1312 = vsel %vm580, %v1309, 0.0
      %1313 = vadd.xlane.f32.xlu0 %v1312
      %v1314 = vpop.xlane.xlu0 %1313
      %v1315 = vsel %vm580, %v1311, 0.0
      %1316 = vadd.xlane.f32.xlu0 %v1315
      %v1317 = vpop.xlane.xlu0 %1316
      %v1318 = vrcp.pop %v1314
      %v1319 = vrcp.pop %v1317
      %v1320 = vmul.f32 %v1309, %v1318
      %v1321 = vmul.f32 %v1311, %v1319
      %v1322 = vpack.c.bf16 %v1321, %v1320
      %1323 = vrot.lane.b32.xlu0 %v431, 80
      %v1324 = vpop.permute.xlu0 %1323
      %1325 = vrot.lane.b32.xlu0 %v432, 80
      %v1326 = vpop.permute.xlu0 %1325
      %v1330 = vsel %vm580, %v1322, 0
      %1332 = vmatprep.subr.bf16.mxu0 0
      %1333 = vmatpush1.bf16.msra.mxu0 %v1324
      %1334 = vmatprep.subr.bf16.mxu0 0
      %1335 = vmatpush1.bf16.msra.mxu0 %v1326
      %1336 = vmatprep.subr.bf16.mxu0 0
      %1337 = vmatpush1.bf16.msra.mxu0 0
      %1338 = vmatprep.subr.bf16.mxu0 0
      %1339 = vmatpush1.bf16.msra.mxu0 0
      %1340 = vmatprep.subr.bf16.mxu0 0
      %1341 = vmatpush1.bf16.msra.mxu0 0
      %1342 = vmatprep.subr.bf16.mxu0 0
      %1343 = vmatpush1.bf16.msra.mxu0 0
      %1344 = vmatprep.subr.bf16.mxu0 0
      %1345 = vmatpush1.bf16.msra.mxu0 0
      %1346 = vmatprep.subr.bf16.mxu0 0
      %1347 = vmatpush1.bf16.msra.mxu0 0
      %1348 = vmatprep.subr.bf16.mxu0 0
      %1349 = vmatpush1.bf16.msra.mxu0 0
      %1350 = vmatprep.subr.bf16.mxu0 0
      %1351 = vmatpush1.bf16.msra.mxu0 0
      %1352 = vmatprep.subr.bf16.mxu0 0
      %1353 = vmatpush1.bf16.msra.mxu0 0
      %1354 = vmatprep.subr.bf16.mxu0 0
      %1355 = vmatpush1.bf16.msra.mxu0 0
      %1356 = vmatprep.subr.bf16.mxu0 0
      %1357 = vmatpush1.bf16.msra.mxu0 0
      %1358 = vmatprep.subr.bf16.mxu0 0
      %1359 = vmatpush1.bf16.msra.mxu0 0
      %1360 = vmatprep.subr.bf16.mxu0 0
      %1361 = vmatpush1.bf16.msra.mxu0 0
      %1362 = vmatprep.subr.bf16.mxu0 0
      %1363 = vmatpush1.bf16.msra.mxu0 0
      %1364 = vmatprep.mubr.bf16.mxu0 0
      %1365 = vmatmul.mubr.bf16.gmra.mrb[0].mxu0 %v1330
      %v1366 = vpop.f32.mrb[0].mxu0
      %v1367 = vadd.f32 0.0, %v1366
      %v1368 = vpop.f32.mrb[0].mxu0
      %v1369 = vpop.f32.mrb[0].mxu0
      %v1370 = vadd.f32 0.0, %v1369
      %v1371 = vpop.f32.mrb[0].mxu0
      %1372 = vdwg.mxu0
      %1375 = vrot.lane.b32.xlu0 %v889, 16
      %v1376 = vpop.permute.xlu0 %1375
      %1377 = vrot.lane.b32.xlu0 %v892, 16
      %v1378 = vpop.permute.xlu0 %1377
      %1383 = vrot.lane.b32.xlu0 %v1128, 32
      %v1384 = vpop.permute.xlu0 %1383
      %1385 = vrot.lane.b32.xlu0 %v1131, 32
      %v1386 = vpop.permute.xlu0 %1385
      %1391 = vrot.lane.b32.xlu0 %v1367, 48
      %v1392 = vpop.permute.xlu0 %1391
      %1393 = vrot.lane.b32.xlu0 %v1370, 48
      %v1394 = vpop.permute.xlu0 %1393
      %v1397 = vsel %vm529, %v642, %v1376
      %v1398 = vsel %vm529, %v645, %v1378
      %v1399 = vsel %vm580, %v1397, %v1384
      %v1400 = vsel %vm580, %v1398, %v1386
      %vm1401 = vcmask 392192
      %v1402 = vsel %vm1401, %v1399, %v1392
      %v1403 = vsel %vm1401, %v1400, %v1394
      %v1404 = vpack.c.bf16 %v1403, %v1402
      %v1405 = vld [vmem:[%s7] sm:$0xf]
      %v1406 = vld [vmem:[%s7 + $0x4] sm:$0xf]
      %v1407 = vld [vmem:[%s7 + $0x8] sm:$0xf]
      %v1408 = vld [vmem:[%s7 + $0xc] sm:$0xf]
      %v1409 = vld [vmem:[%s7 + $0x10] sm:$0xf]
      %v1410 = vld [vmem:[%s7 + $0x14] sm:$0xf]
      %v1411 = vld [vmem:[%s7 + $0x18] sm:$0xf]
      %v1412 = vld [vmem:[%s7 + $0x1c] sm:$0xf]
      %v1413 = vld [vmem:[%s8] sm:$0x1]
      %v1415 = vlaneseq
      %v1416 = vshrl.u32 %v1415, 7
      %v1417 = vsub.s32 0, %v1416
      %v1418 = vrot.slane %v1413, %v1417
      %v1428 = vunpack.c.l.b16 %v1405
      %v1429 = vunpack.c.l.b16 %v1406
      %v1430 = vunpack.c.l.b16 %v1407
      %v1431 = vunpack.c.l.b16 %v1408
      %v1432 = vunpack.c.l.b16 %v1409
      %v1433 = vunpack.c.l.b16 %v1410
      %v1434 = vunpack.c.l.b16 %v1411
      %v1435 = vunpack.c.l.b16 %v1412
      %v1436 = vpack.c.b16 %v1429, %v1428
      %v1437 = vpack.c.b16 %v1431, %v1430
      %v1438 = vpack.c.b16 %v1433, %v1432
      %v1439 = vpack.c.b16 %v1435, %v1434
      %vm1444 = vcmask 523264
      %v1446 = vsel %vm1444, %v1404, 0
      %1448 = vmatprep.subr.bf16.mxu0 0
      %1449 = vmatpush1.bf16.msra.mxu0 %v1436
      %1450 = vmatprep.subr.bf16.mxu0 0
      %1451 = vmatpush1.bf16.msra.mxu0 %v1437
      %1452 = vmatprep.subr.bf16.mxu0 0
      %1453 = vmatpush1.bf16.msra.mxu0 %v1438
      %1454 = vmatprep.subr.bf16.mxu0 0
      %1455 = vmatpush1.bf16.msra.mxu0 %v1439
      %1456 = vmatprep.subr.bf16.mxu0 0
      %1457 = vmatpush1.bf16.msra.mxu0 0
      %1458 = vmatprep.subr.bf16.mxu0 0
      %1459 = vmatpush1.bf16.msra.mxu0 0
      %1460 = vmatprep.subr.bf16.mxu0 0
      %1461 = vmatpush1.bf16.msra.mxu0 0
      %1462 = vmatprep.subr.bf16.mxu0 0
      %1463 = vmatpush1.bf16.msra.mxu0 0
      %1464 = vmatprep.subr.bf16.mxu0 0
      %1465 = vmatpush1.bf16.msra.mxu0 0
      %1466 = vmatprep.subr.bf16.mxu0 0
      %1467 = vmatpush1.bf16.msra.mxu0 0
      %1468 = vmatprep.subr.bf16.mxu0 0
      %1469 = vmatpush1.bf16.msra.mxu0 0
      %1470 = vmatprep.subr.bf16.mxu0 0
      %1471 = vmatpush1.bf16.msra.mxu0 0
      %1472 = vmatprep.subr.bf16.mxu0 0
      %1473 = vmatpush1.bf16.msra.mxu0 0
      %1474 = vmatprep.subr.bf16.mxu0 0
      %1475 = vmatpush1.bf16.msra.mxu0 0
      %1476 = vmatprep.subr.bf16.mxu0 0
      %1477 = vmatpush1.bf16.msra.mxu0 0
      %1478 = vmatprep.subr.bf16.mxu0 0
      %1479 = vmatpush1.bf16.msra.mxu0 0
      %1480 = vmatprep.mubr.bf16.mxu0 0
      %1481 = vmatmul.mubr.bf16.gmra.mrb[0].mxu0 %v1446
      %v1482 = vpop.f32.mrb[0].mxu0
      %v1483 = vadd.f32 %v1418, %v1482
      %v1484 = vpop.f32.mrb[0].mxu0
      %v1485 = vpop.f32.mrb[0].mxu0
      %v1486 = vadd.f32 %v1418, %v1485
      %v1487 = vpop.f32.mrb[0].mxu0
      %1488 = vdwg.mxu0
      %v1489 = vld [vmem:[%s414] sm:$0xff]
      %v1490 = vld [vmem:[%s414 + $0x8] sm:$0xff]
      %v1491 = vadd.f32 %v1483, %v1489
      %v1492 = vadd.f32 %v1486, %v1490
      %1493 = vst.msk [vmem:[%s419] sm:$0xff] %vm1444, %v1491
      %1494 = vst.msk [vmem:[%s419 + $0x8] sm:$0xff] %vm1444, %v1492
      %p1495 = scmp.lt.s32.totalorder %s21, 1
      %s1496 = scalar_select %p1495, %s21, 1
      %s1497 = smul.addr %s1496, 2
      %s1498 = smul.addr %s1497, 8
      %s1499 = scalar_lea.vmem %s10, %s1498
      // Predicated region
      $region61: #{decoder_forward.35} parent=59 // pred_check
        %p1500 = pneg %p269
      $region62: #{decoder_forward.35} parent=59 // pred_check_branch
        %1502 = sbr.rel (%p1500) target = $region64
      $region63: #{decoder_forward.35} parent=59 // pred_region
        _
      $region64: #{decoder_forward.35} parent=59 // pred_fallthru
        _
    $region60: #{decoder_forward.35} parent=5 // pred_fallthru
      _
    %p1503 = scmp.le.s32.totalorder 2, %s16
    // Predicated region
    $region65: #{decoder_forward.35} parent=5 // pred_check
      %p1504 = pneg %p1503
    $region66: #{decoder_forward.35} parent=5 // pred_check_branch
      %1506 = sbr.rel (%p1504) target = $region68
    $region67: #{decoder_forward.35} parent=5 // pred_region
      %s1507 = ssub.s32 %s16, 2
      // Predicated region
      $region69: #{decoder_forward.35} parent=67 // pred_check
        %p1508 = pneg %p275
      $region70: #{decoder_forward.35} parent=67 // pred_check_branch
        %1510 = sbr.rel (%p1508) target = $region72
      $region71: #{decoder_forward.35} parent=67 // pred_region
        %p1511 = scmp.lt.s32.totalorder %s22, 1
        %s1512 = scalar_select %p1511, %s22, 1
        %s1513 = smul.addr %s1512, 2
        %s1514 = smul.addr %s1513, 8
        %s1515 = scalar_lea.vmem %s10, %s1514
      $region72: #{decoder_forward.35} parent=67 // pred_fallthru
        _
    $region68: #{decoder_forward.35} parent=5 // pred_fallthru
      _
  $region6: #{decoder_forward.35} parent=0 // loop_footer
    %s20 = sadd.s32 1, %s16
  $region7: #{decoder_forward.35} parent=0 // loop_footer_branch
    %15 = sbr.rel target = $region3
  $region8: #{decoder_forward.35} parent=0 // loop_exit
    _

</llo_original>
